<compile_context>
chip_gen: v7x
topology: tpu7x:2x2x1
jax: 0.10.0
libtpu: 0.0.40
codegen_flags: <defaults>
</compile_context>

<pallas_src>
import functools

import numpy as np

import jax
import jax.numpy as jnp
from jax.experimental import pallas as pl
from jax.experimental.pallas import tpu as pltpu

ITERATIONS = 5
TOTAL_FM = 128
TOTAL_HMS = 25
TOTAL_PAFS = 72

_LANE = 128  # channel padding granularity (lane width)


def _round_up(a, m):
    return -(-a // m) * m


def _tpu_mem_params():
    # v5e/v6e: 128 MiB VMEM per TensorCore, v7x: 64 MiB -> derive scoped limit
    # and M-tile target per generation instead of hard-coding.
    try:
        cap = int(pltpu.get_tpu_info().vmem_capacity_bytes)
    except Exception:
        cap = 64 << 20
    vmem_limit = max(min((cap * 3) // 4, 96 << 20), 32 << 20)
    tm_target = 1024 if cap >= (100 << 20) else 512
    return vmem_limit, tm_target


_VMEM_LIMIT, _TM_TARGET = _tpu_mem_params()


# ----------------------------- Pallas kernels ------------------------------

def _ring_keep(tm, wp, hp):
    # Interior mask recomputed in-kernel from the flat row index (no mask DMA).
    # Uses f32 div/floor (exact for our index ranges) to stay on well-supported
    # VPU ops instead of vector integer div/mod.
    base = pl.program_id(0) * tm
    r = (base + jax.lax.broadcasted_iota(jnp.int32, (tm, 1), 0)).astype(
        jnp.float32)
    q = jnp.floor(r / wp)                    # global padded-row index
    x = r - q * wp                           # column inside the padded row
    y = q - jnp.floor(q / hp) * hp           # row inside the padded image
    return (x >= 1.0) & (x <= wp - 2.0) & (y >= 1.0) & (y <= hp - 2.0)


def _finish(acc, b_ref, al_ref, o_ref, *, act, tm, wp, hp):
    y = acc + b_ref[...]
    if act == "relu":
        y = jnp.maximum(y, 0.0)
    elif act == "prelu":
        y = jnp.where(y >= 0.0, y, al_ref[...] * y)
    keep = _ring_keep(tm, wp, hp)            # (tm, 1), broadcasts over lanes
    o_ref[...] = jnp.where(keep, y, 0.0).astype(o_ref.dtype)


def _conv3x3_kernel(*refs, nseg, wp, hp, th, tm, act):
    # refs: [xp,xc,xn] per segment | w per segment | b | alpha | out |
    #       window scratch per segment | f32 acc scratch
    xs = refs[:3 * nseg]
    ws = refs[3 * nseg:4 * nseg]
    b_ref = refs[4 * nseg]
    al_ref = refs[4 * nseg + 1]
    o_ref = refs[4 * nseg + 2]
    wins = refs[4 * nseg + 3:4 * nseg + 3 + nseg]
    acc_ref = refs[4 * nseg + 3 + nseg]

    # Stage each segment's (halo | center | halo) rows once into one bf16 VMEM
    # window (aligned stores); tap (dy,dx) is then a static row-slice of it.
    for s in range(nseg):
        xp, xc, xn = xs[3 * s], xs[3 * s + 1], xs[3 * s + 2]
        win = wins[s]
        win[0:th, :] = xp[...]
        win[th:th + tm, :] = xc[...]
        win[th + tm:th + tm + th, :] = xn[...]

    first = True
    for s in range(nseg):
        win = wins[s]
        w = ws[s]
        for t in range(9):
            dy, dx = t // 3, t % 3
            sh = (dy - 1) * wp + (dx - 1)
            a = win[th + sh:th + sh + tm, :]          # bf16, feeds MXU directly
            d = jnp.dot(a, w[t], preferred_element_type=jnp.float32)
            if first:
                acc_ref[...] = d
                first = False
            else:
                acc_ref[...] += d
    _finish(acc_ref[...], b_ref, al_ref, o_ref, act=act, tm=tm, wp=wp, hp=hp)


def _conv1x1_kernel(*refs, nseg, wp, hp, tm, act):
    xs = refs[:nseg]
    ws = refs[nseg:2 * nseg]
    b_ref = refs[2 * nseg]
    al_ref = refs[2 * nseg + 1]
    o_ref = refs[2 * nseg + 2]
    acc = None
    for s in range(nseg):
        d = jnp.dot(xs[s][...], ws[s][0], preferred_element_type=jnp.float32)
        acc = d if acc is None else acc + d
    _finish(acc, b_ref, al_ref, o_ref, act=act, tm=tm, wp=wp, hp=hp)


def _max4_kernel(a_ref, b_ref, c_ref, d_ref, o_ref):
    o_ref[...] = jnp.maximum(jnp.maximum(a_ref[...], b_ref[...]),
                             jnp.maximum(c_ref[...], d_ref[...]))


# ------------------------------ op wrappers --------------------------------

def _pick_tiles(R, blk):
    """M-tile (multiple of blk) near the gen-dependent target, >=2 grid tiles
    whenever the slab allows it (keeps both v7x TensorCores busy)."""
    nblk = max(1, _round_up(R, blk) // blk)
    tgt_blk = max(1, _round_up(_TM_TARGET, blk) // blk)
    bpt = min(tgt_blk, -(-nblk // 2)) if nblk >= 2 else 1
    tm = bpt * blk
    nt = -(-R // tm)
    return tm, nt


@functools.partial(jax.jit, static_argnames=("n", "hp", "wp", "act", "ksize"))
def conv_op(xs, ws, b, alpha, *, n, hp, wp, act, ksize):
    """Fused conv(ksize)+bias+activation on padded-flat (R, Cin) slabs.

    xs: tuple of input segments (channel-concat inputs without any HBM concat),
    ws: matching per-segment weights (k*k, cin_seg, cpad)."""
    xs, ws = tuple(xs), tuple(ws)
    nseg = len(xs)
    R = xs[0].shape[0]
    cins = tuple(x.shape[1] for x in xs)
    cpad = ws[0].shape[-1]
    assert R == n * hp * wp

    in_specs, args = [], []
    if ksize == 3:
        th = _round_up(wp + 1, 16)          # minimal halo, bf16 sublane packed
        assert th >= wp + 1                 # halo must cover one padded row +1
        tm, nt = _pick_tiles(R, th)
        rb = tm // th
        nbh = -(-R // th)
        kern = functools.partial(_conv3x3_kernel, nseg=nseg, wp=wp, hp=hp,
                                 th=th, tm=tm, act=act)
        for x, cin in zip(xs, cins):
            in_specs += [
                pl.BlockSpec((th, cin),
                             lambda i, rb=rb: (jnp.maximum(i * rb - 1, 0), 0)),
                pl.BlockSpec((tm, cin), lambda i: (i, 0)),
                pl.BlockSpec((th, cin),
                             lambda i, rb=rb, nbh=nbh:
                             (jnp.minimum((i + 1) * rb, nbh - 1), 0)),
            ]
            args += [x, x, x]
        scratch = [pltpu.VMEM((2 * th + tm, cin), jnp.bfloat16)
                   for cin in cins]
        scratch.append(pltpu.VMEM((tm, cpad), jnp.float32))
    else:
        tm, nt = _pick_tiles(R, 16)
        kern = functools.partial(_conv1x1_kernel, nseg=nseg, wp=wp, hp=hp,
                                 tm=tm, act=act)
        for x, cin in zip(xs, cins):
            in_specs.append(pl.BlockSpec((tm, cin), lambda i: (i, 0)))
            args.append(x)
        scratch = []

    for w in ws:
        # TODO(synk): single-buffer these constant blocks (pl.Buffered(1)).
        in_specs.append(pl.BlockSpec(w.shape, lambda i: (0, 0, 0)))
        args.append(w)
    in_specs += [pl.BlockSpec((1, cpad), lambda i: (0, 0))] * 2
    args += [b, alpha]

    return pl.pallas_call(
        kern,
        out_shape=jax.ShapeDtypeStruct((R, cpad), jnp.bfloat16),
        grid=(nt,),
        in_specs=in_specs,
        out_specs=pl.BlockSpec((tm, cpad), lambda i: (i, 0)),
        scratch_shapes=scratch,
        compiler_params=pltpu.CompilerParams(
            dimension_semantics=("parallel",),
            vmem_limit_bytes=_VMEM_LIMIT),
    )(*args)


@functools.partial(jax.jit, static_argnames=("n", "h", "w"))
def maxpool_op(x, *, n, h, w):
    """2x2/stride-2 max pool on the padded slab; output re-padded (zero ring)."""
    c = x.shape[1]
    hp, wp = h + 2, w + 2
    ho, wo = h // 2, w // 2
    x4 = x.reshape(n, hp, wp, c)[:, 1:h + 1, 1:w + 1, :]
    # TODO(synk): fuse the strided gather + re-pad into the Pallas kernel.
    subs = [x4[:, dy::2, dx::2, :].reshape(n * ho * wo, c)
            for dy in range(2) for dx in range(2)]
    m = n * ho * wo
    if m <= 32:
        tm = m
    else:
        tm = min(1024, _round_up(-(-m // 2), 16))   # >=2 tiles (v7x megacore)
    nt = -(-m // tm)
    out = pl.pallas_call(
        _max4_kernel,
        out_shape=jax.ShapeDtypeStruct((m, c), x.dtype),
        grid=(nt,),
        in_specs=[pl.BlockSpec((tm, c), lambda i: (i, 0))] * 4,
        out_specs=pl.BlockSpec((tm, c), lambda i: (i, 0)),
        compiler_params=pltpu.CompilerParams(
            dimension_semantics=("parallel",),
            vmem_limit_bytes=_VMEM_LIMIT),
    )(*subs)
    out4 = jnp.pad(out.reshape(n, ho, wo, c), ((0, 0), (1, 1), (1, 1), (0, 0)))
    return out4.reshape(n * (ho + 2) * (wo + 2), c)


# ---------------------------- parameter init -------------------------------

def _seg(c):
    return (c, _round_up(c, _LANE))


def _init_conv(key, k, in_segs, cout):
    """in_segs: tuple of (real_cin, padded_cin) per input segment."""
    cpad = _round_up(cout, _LANE)
    total_real = sum(r for r, _ in in_segs)
    fan_in = k * k * total_real
    fan_out = k * k * cout
    lim = float(np.sqrt(6.0 / (fan_in + fan_out)))   # xavier_uniform
    ws = []
    for real, padded in in_segs:
        key, sub = jax.random.split(key)
        w = jax.random.uniform(sub, (k * k, real, cout), jnp.float32,
                               -lim, lim)
        w = jnp.pad(w, ((0, 0), (0, padded - real), (0, cpad - cout)))
        ws.append(w.astype(jnp.bfloat16))
    b = jnp.zeros((1, cpad), jnp.float32).at[:, :cout].set(0.01)
    alpha = jnp.zeros((1, cpad), jnp.float32).at[:, :cout].set(0.25)  # PReLU
    return {"k": k, "cout": cout, "ws": ws, "b": b, "alpha": alpha}


def _apply_conv(p, xsegs, act, n, h, w):
    return conv_op(tuple(xsegs), tuple(p["ws"]), p["b"], p["alpha"],
                   n=n, hp=h + 2, wp=w + 2, act=act, ksize=p["k"])


# VGG19 front-end (name, cin, cout, activation)
_VGG_CFG = [
    ("conv1_1", 3, 64, "relu"),
    ("conv1_2", 64, 64, "relu"),
    ("pool1", 0, 0, ""),
    ("conv2_1", 64, 128, "relu"),
    ("conv2_2", 128, 128, "relu"),
    ("pool2", 0, 0, ""),
    ("conv3_1", 128, 256, "relu"),
    ("conv3_2", 256, 256, "relu"),
    ("conv3_3", 256, 256, "relu"),
    ("conv3_4", 256, 256, "relu"),
    ("pool3", 0, 0, ""),
    ("conv4_1", 256, 512, "relu"),
    ("conv4_2", 512, 512, "prelu"),
    ("conv4_3_CPM", 512, 256, "prelu"),
    ("conv4_4_CPM", 256, TOTAL_FM, "prelu"),
]


def init_vgg(key):
    params = {}
    for name, cin, cout, _act in _VGG_CFG:
        if name.startswith("pool"):
            continue
        key, sub = jax.random.split(key)
        seg = (3, 3) if name == "conv1_1" else _seg(cin)
        params[name] = _init_conv(sub, 3, (seg,), cout)
    return params


def apply_vgg(params, x, n, h, w):
    for name, _cin, _cout, act in _VGG_CFG:
        if name.startswith("pool"):
            x = maxpool_op(x, n=n, h=h, w=w)
            h, w = h // 2, w // 2
        else:
            x = _apply_conv(params[name], [x], act, n, h, w)
    return x, h, w


# ResConvBlock / ABlock3x3
def init_rcb(key, in_segs, depth):
    ka, kb, kc = jax.random.split(key, 3)
    d = _seg(depth)
    return {"a": _init_conv(ka, 3, tuple(in_segs), depth),
            "b": _init_conv(kb, 3, (d,), depth),
            "c": _init_conv(kc, 3, (d,), depth)}


def apply_rcb(p, xsegs, n, h, w):
    a = _apply_conv(p["a"], xsegs, "prelu", n, h, w)
    b = _apply_conv(p["b"], [a], "prelu", n, h, w)
    c = _apply_conv(p["c"], [b], "prelu", n, h, w)
    return [a, b, c]          # channel concat == segment list (no HBM copy)


def init_ablock(key, in_segs, cout, depth, subdepth):
    ks = jax.random.split(key, 7)
    d3 = (_seg(depth),) * 3
    rcbs = [init_rcb(ks[0], in_segs, depth)]
    for i in range(1, 5):
        rcbs.append(init_rcb(ks[i], d3, depth))
    return {"rcbs": rcbs,
            "c1": _init_conv(ks[5], 1, d3, subdepth),
            "c2": _init_conv(ks[6], 1, (_seg(subdepth),), cout)}


def apply_ablock(p, xsegs, n, h, w):
    for rcb in p["rcbs"]:
        xsegs = apply_rcb(rcb, xsegs, n, h, w)
    x = _apply_conv(p["c1"], xsegs, "prelu", n, h, w)
    x = _apply_conv(p["c2"], [x], "none", n, h, w)
    return x


# ------------------------------ Body25Shared -------------------------------

def init_body25(key):
    k1, k2, k3, k4, k5 = jax.random.split(key, 5)
    fm, paf, hm = _seg(TOTAL_FM), _seg(TOTAL_PAFS), _seg(TOTAL_HMS)
    return {
        "vgg19": init_vgg(k1),
        "pafA": init_ablock(k2, (fm,), TOTAL_PAFS, 64, 256),
        "hmA": init_ablock(k3, (fm, paf), TOTAL_HMS, 64, 256),
        "pafB": init_ablock(k4, (fm, paf), TOTAL_PAFS, 128, 512),
        "hmB": init_ablock(k5, (fm, hm, paf), TOTAL_HMS, 128, 512),
    }


def _to_padded_slab(x_nchw):
    n, c, h, w = x_nchw.shape
    x = jnp.transpose(x_nchw, (0, 2, 3, 1)).astype(jnp.bfloat16)  # NCHW->NHWC
    x = jnp.pad(x, ((0, 0), (1, 1), (1, 1), (0, 0)))              # zero ring
    return x.reshape(n * (h + 2) * (w + 2), c), n, h, w


def _to_nchw(t, n, h, w, creal):
    t4 = t.reshape(n, h + 2, w + 2, t.shape[1])[:, 1:h + 1, 1:w + 1, :creal]
    return jnp.transpose(t4, (0, 3, 1, 2)).astype(jnp.float32)


def body25_forward(params, x_nchw):
    """Mirrors Body25Shared.forward (mode='3x3'); input/outputs are NCHW."""
    x, n, h, w = _to_padded_slab(x_nchw)
    vgg_out, h, w = apply_vgg(params["vgg19"], x, n, h, w)
    paf_out = apply_ablock(params["pafA"], [vgg_out], n, h, w)
    hm_out = apply_ablock(params["hmA"], [vgg_out, paf_out], n, h, w)
    prev_pafs = [paf_out]
    prev_hms = [hm_out]
    for _ in range(ITERATIONS):
        paf_out = apply_ablock(params["pafB"],
                               [vgg_out, prev_pafs[-1]], n, h, w)
        hm_out = apply_ablock(params["hmB"],
                              [vgg_out, prev_hms[-1], paf_out], n, h, w)
        prev_pafs.append(paf_out)
        prev_hms.append(hm_out)
    return ([_to_nchw(p, n, h, w, TOTAL_PAFS) for p in prev_pafs],
            [_to_nchw(t, n, h, w, TOTAL_HMS) for t in prev_hms])


# ---------------------------------- main ------------------------------------

if __name__ == "__main__":
    key = jax.random.PRNGKey(0)
    pkey, xkey = jax.random.split(key)
    params = init_body25(pkey)

    # PyTorch-style NCHW input; 16x16 spatial -> 2x2 feature maps after 3 pools.
    x = jax.random.normal(xkey, (2, 3, 16, 16), jnp.float32)

    pafs, hms = body25_forward(params, x)
    jax.block_until_ready(pafs[-1])
    jax.block_until_ready(hms[-1])

    assert len(pafs) == ITERATIONS + 1 and len(hms) == ITERATIONS + 1
    assert pafs[-1].shape == (2, TOTAL_PAFS, 2, 2)
    assert hms[-1].shape == (2, TOTAL_HMS, 2, 2)
    print("KERNEL_OK")
</pallas_src>

<mosaic_0001>
module attributes {stable_mosaic.version = 11 : i64} {
  func.func @_conv3x3_kernel(%arg0: i32, %arg1: memref<32x3xbf16, #tpu.memory_space<vmem>>, %arg2: memref<352x3xbf16, #tpu.memory_space<vmem>>, %arg3: memref<32x3xbf16, #tpu.memory_space<vmem>>, %arg4: memref<9x3x128xbf16, #tpu.memory_space<vmem>>, %arg5: memref<1x128xf32, #tpu.memory_space<vmem>>, %arg6: memref<1x128xf32, #tpu.memory_space<vmem>>, %arg7: memref<352x128xbf16, #tpu.memory_space<vmem>>, %arg8: memref<416x3xbf16, #tpu.memory_space<vmem>>, %arg9: memref<352x128xf32, #tpu.memory_space<vmem>>) attributes {dimension_semantics = [#tpu.dimension_semantics<parallel>], iteration_bounds = array<i64: 2>, scalar_prefetch = 0 : i64, scratch_operands = 2 : i64, tpu.core_type = #tpu.core_type<tc>, window_params = [{transform_indices = @transform_0, window_bounds = array<i64: 32, 3>}, {transform_indices = @transform_1, window_bounds = array<i64: 352, 3>}, {transform_indices = @transform_2, window_bounds = array<i64: 32, 3>}, {pipeline_mode = #tpu.pipeline_mode<synchronous>, transform_indices = @transform_3, window_bounds = array<i64: 9, 3, 128>}, {pipeline_mode = #tpu.pipeline_mode<synchronous>, transform_indices = @transform_4, window_bounds = array<i64: 1, 128>}, {pipeline_mode = #tpu.pipeline_mode<synchronous>, transform_indices = @transform_5, window_bounds = array<i64: 1, 128>}, {transform_indices = @transform_6, window_bounds = array<i64: 352, 128>}]} {
    %c0 = arith.constant 0 : index
    %c0_0 = arith.constant 0 : index
    %0 = vector.load %arg1[%c0, %c0_0] : memref<32x3xbf16, #tpu.memory_space<vmem>>, vector<32x3xbf16>
    %c0_1 = arith.constant 0 : index
    %c0_2 = arith.constant 0 : index
    %1 = vector.load %arg8[%c0_1, %c0_2] : memref<416x3xbf16, #tpu.memory_space<vmem>>, vector<32x3xbf16>
    tpu.vector_store %arg8[%c0_1, %c0_2], %0 {strides = array<i32>} : memref<416x3xbf16, #tpu.memory_space<vmem>>, vector<32x3xbf16>,
    %c0_3 = arith.constant 0 : index
    %c0_4 = arith.constant 0 : index
    %2 = vector.load %arg2[%c0_3, %c0_4] : memref<352x3xbf16, #tpu.memory_space<vmem>>, vector<352x3xbf16>
    %c32 = arith.constant 32 : index
    %c0_5 = arith.constant 0 : index
    %3 = vector.load %arg8[%c32, %c0_5] : memref<416x3xbf16, #tpu.memory_space<vmem>>, vector<352x3xbf16>
    tpu.vector_store %arg8[%c32, %c0_5], %2 {strides = array<i32>} : memref<416x3xbf16, #tpu.memory_space<vmem>>, vector<352x3xbf16>,
    %c0_6 = arith.constant 0 : index
    %c0_7 = arith.constant 0 : index
    %4 = vector.load %arg3[%c0_6, %c0_7] : memref<32x3xbf16, #tpu.memory_space<vmem>>, vector<32x3xbf16>
    %c384 = arith.constant 384 : index
    %c0_8 = arith.constant 0 : index
    %5 = vector.load %arg8[%c384, %c0_8] : memref<416x3xbf16, #tpu.memory_space<vmem>>, vector<32x3xbf16>
    tpu.vector_store %arg8[%c384, %c0_8], %4 {strides = array<i32>} : memref<416x3xbf16, #tpu.memory_space<vmem>>, vector<32x3xbf16>,
    %c13 = arith.constant 13 : index
    %c0_9 = arith.constant 0 : index
    %6 = vector.load %arg8[%c13, %c0_9] : memref<416x3xbf16, #tpu.memory_space<vmem>>, vector<352x3xbf16>
    %c0_10 = arith.constant 0 : index
    %c0_11 = arith.constant 0 : index
    %c0_12 = arith.constant 0 : index
    %7 = vector.load %arg4[%c0_10, %c0_11, %c0_12] : memref<9x3x128xbf16, #tpu.memory_space<vmem>>, vector<1x3x128xbf16>
    %8 = vector.shape_cast %7 : vector<1x3x128xbf16> to vector<3x128xbf16>
    %cst = arith.constant dense<0.000000e+00> : vector<352x128xf32>
    %9 = tpu.matmul %6, %8, %cst {dimension_numbers = #tpu.dot_dimension_numbers<[1], [0], [0], [1], [0, 0, 1, 1], [], []>} : vector<352x3xbf16>, vector<3x128xbf16>, vector<352x128xf32> -> vector<352x128xf32>
    %c0_13 = arith.constant 0 : index
    %c0_14 = arith.constant 0 : index
    %10 = vector.load %arg9[%c0_13, %c0_14] : memref<352x128xf32, #tpu.memory_space<vmem>>, vector<352x128xf32>
    tpu.vector_store %arg9[%c0_13, %c0_14], %9 {strides = array<i32>} : memref<352x128xf32, #tpu.memory_space<vmem>>, vector<352x128xf32>,
    %c14 = arith.constant 14 : index
    %c0_15 = arith.constant 0 : index
    %11 = vector.load %arg8[%c14, %c0_15] : memref<416x3xbf16, #tpu.memory_space<vmem>>, vector<352x3xbf16>
    %c1 = arith.constant 1 : index
    %c0_16 = arith.constant 0 : index
    %c0_17 = arith.constant 0 : index
    %12 = vector.load %arg4[%c1, %c0_16, %c0_17] : memref<9x3x128xbf16, #tpu.memory_space<vmem>>, vector<1x3x128xbf16>
    %13 = vector.shape_cast %12 : vector<1x3x128xbf16> to vector<3x128xbf16>
    %cst_18 = arith.constant dense<0.000000e+00> : vector<352x128xf32>
    %14 = tpu.matmul %11, %13, %cst_18 {dimension_numbers = #tpu.dot_dimension_numbers<[1], [0], [0], [1], [0, 0, 1, 1], [], []>} : vector<352x3xbf16>, vector<3x128xbf16>, vector<352x128xf32> -> vector<352x128xf32>
    %c0_19 = arith.constant 0 : index
    %c0_20 = arith.constant 0 : index
    %15 = vector.load %arg9[%c0_19, %c0_20] : memref<352x128xf32, #tpu.memory_space<vmem>>, vector<352x128xf32>
    %16 = arith.addf %15, %14 : vector<352x128xf32>
    %c0_21 = arith.constant 0 : index
    %c0_22 = arith.constant 0 : index
    %17 = vector.load %arg9[%c0_21, %c0_22] : memref<352x128xf32, #tpu.memory_space<vmem>>, vector<352x128xf32>
    tpu.vector_store %arg9[%c0_21, %c0_22], %16 {strides = array<i32>} : memref<352x128xf32, #tpu.memory_space<vmem>>, vector<352x128xf32>,
    %c15 = arith.constant 15 : index
    %c0_23 = arith.constant 0 : index
    %18 = vector.load %arg8[%c15, %c0_23] : memref<416x3xbf16, #tpu.memory_space<vmem>>, vector<352x3xbf16>
    %c2 = arith.constant 2 : index
    %c0_24 = arith.constant 0 : index
    %c0_25 = arith.constant 0 : index
    %19 = vector.load %arg4[%c2, %c0_24, %c0_25] : memref<9x3x128xbf16, #tpu.memory_space<vmem>>, vector<1x3x128xbf16>
    %20 = vector.shape_cast %19 : vector<1x3x128xbf16> to vector<3x128xbf16>
    %cst_26 = arith.constant dense<0.000000e+00> : vector<352x128xf32>
    %21 = tpu.matmul %18, %20, %cst_26 {dimension_numbers = #tpu.dot_dimension_numbers<[1], [0], [0], [1], [0, 0, 1, 1], [], []>} : vector<352x3xbf16>, vector<3x128xbf16>, vector<352x128xf32> -> vector<352x128xf32>
    %c0_27 = arith.constant 0 : index
    %c0_28 = arith.constant 0 : index
    %22 = vector.load %arg9[%c0_27, %c0_28] : memref<352x128xf32, #tpu.memory_space<vmem>>, vector<352x128xf32>
    %23 = arith.addf %22, %21 : vector<352x128xf32>
    %c0_29 = arith.constant 0 : index
    %c0_30 = arith.constant 0 : index
    %24 = vector.load %arg9[%c0_29, %c0_30] : memref<352x128xf32, #tpu.memory_space<vmem>>, vector<352x128xf32>
    tpu.vector_store %arg9[%c0_29, %c0_30], %23 {strides = array<i32>} : memref<352x128xf32, #tpu.memory_space<vmem>>, vector<352x128xf32>,
    %c31 = arith.constant 31 : index
    %c0_31 = arith.constant 0 : index
    %25 = vector.load %arg8[%c31, %c0_31] : memref<416x3xbf16, #tpu.memory_space<vmem>>, vector<352x3xbf16>
    %c3 = arith.constant 3 : index
    %c0_32 = arith.constant 0 : index
    %c0_33 = arith.constant 0 : index
    %26 = vector.load %arg4[%c3, %c0_32, %c0_33] : memref<9x3x128xbf16, #tpu.memory_space<vmem>>, vector<1x3x128xbf16>
    %27 = vector.shape_cast %26 : vector<1x3x128xbf16> to vector<3x128xbf16>
    %cst_34 = arith.constant dense<0.000000e+00> : vector<352x128xf32>
    %28 = tpu.matmul %25, %27, %cst_34 {dimension_numbers = #tpu.dot_dimension_numbers<[1], [0], [0], [1], [0, 0, 1, 1], [], []>} : vector<352x3xbf16>, vector<3x128xbf16>, vector<352x128xf32> -> vector<352x128xf32>
    %c0_35 = arith.constant 0 : index
    %c0_36 = arith.constant 0 : index
    %29 = vector.load %arg9[%c0_35, %c0_36] : memref<352x128xf32, #tpu.memory_space<vmem>>, vector<352x128xf32>
    %30 = arith.addf %29, %28 : vector<352x128xf32>
    %c0_37 = arith.constant 0 : index
    %c0_38 = arith.constant 0 : index
    %31 = vector.load %arg9[%c0_37, %c0_38] : memref<352x128xf32, #tpu.memory_space<vmem>>, vector<352x128xf32>
    tpu.vector_store %arg9[%c0_37, %c0_38], %30 {strides = array<i32>} : memref<352x128xf32, #tpu.memory_space<vmem>>, vector<352x128xf32>,
    %c32_39 = arith.constant 32 : index
    %c0_40 = arith.constant 0 : index
    %32 = vector.load %arg8[%c32_39, %c0_40] : memref<416x3xbf16, #tpu.memory_space<vmem>>, vector<352x3xbf16>
    %c4 = arith.constant 4 : index
    %c0_41 = arith.constant 0 : index
    %c0_42 = arith.constant 0 : index
    %33 = vector.load %arg4[%c4, %c0_41, %c0_42] : memref<9x3x128xbf16, #tpu.memory_space<vmem>>, vector<1x3x128xbf16>
    %34 = vector.shape_cast %33 : vector<1x3x128xbf16> to vector<3x128xbf16>
    %cst_43 = arith.constant dense<0.000000e+00> : vector<352x128xf32>
    %35 = tpu.matmul %32, %34, %cst_43 {dimension_numbers = #tpu.dot_dimension_numbers<[1], [0], [0], [1], [0, 0, 1, 1], [], []>} : vector<352x3xbf16>, vector<3x128xbf16>, vector<352x128xf32> -> vector<352x128xf32>
    %c0_44 = arith.constant 0 : index
    %c0_45 = arith.constant 0 : index
    %36 = vector.load %arg9[%c0_44, %c0_45] : memref<352x128xf32, #tpu.memory_space<vmem>>, vector<352x128xf32>
    %37 = arith.addf %36, %35 : vector<352x128xf32>
    %c0_46 = arith.constant 0 : index
    %c0_47 = arith.constant 0 : index
    %38 = vector.load %arg9[%c0_46, %c0_47] : memref<352x128xf32, #tpu.memory_space<vmem>>, vector<352x128xf32>
    tpu.vector_store %arg9[%c0_46, %c0_47], %37 {strides = array<i32>} : memref<352x128xf32, #tpu.memory_space<vmem>>, vector<352x128xf32>,
    %c33 = arith.constant 33 : index
    %c0_48 = arith.constant 0 : index
    %39 = vector.load %arg8[%c33, %c0_48] : memref<416x3xbf16, #tpu.memory_space<vmem>>, vector<352x3xbf16>
    %c5 = arith.constant 5 : index
    %c0_49 = arith.constant 0 : index
    %c0_50 = arith.constant 0 : index
    %40 = vector.load %arg4[%c5, %c0_49, %c0_50] : memref<9x3x128xbf16, #tpu.memory_space<vmem>>, vector<1x3x128xbf16>
    %41 = vector.shape_cast %40 : vector<1x3x128xbf16> to vector<3x128xbf16>
    %cst_51 = arith.constant dense<0.000000e+00> : vector<352x128xf32>
    %42 = tpu.matmul %39, %41, %cst_51 {dimension_numbers = #tpu.dot_dimension_numbers<[1], [0], [0], [1], [0, 0, 1, 1], [], []>} : vector<352x3xbf16>, vector<3x128xbf16>, vector<352x128xf32> -> vector<352x128xf32>
    %c0_52 = arith.constant 0 : index
    %c0_53 = arith.constant 0 : index
    %43 = vector.load %arg9[%c0_52, %c0_53] : memref<352x128xf32, #tpu.memory_space<vmem>>, vector<352x128xf32>
    %44 = arith.addf %43, %42 : vector<352x128xf32>
    %c0_54 = arith.constant 0 : index
    %c0_55 = arith.constant 0 : index
    %45 = vector.load %arg9[%c0_54, %c0_55] : memref<352x128xf32, #tpu.memory_space<vmem>>, vector<352x128xf32>
    tpu.vector_store %arg9[%c0_54, %c0_55], %44 {strides = array<i32>} : memref<352x128xf32, #tpu.memory_space<vmem>>, vector<352x128xf32>,
    %c49 = arith.constant 49 : index
    %c0_56 = arith.constant 0 : index
    %46 = vector.load %arg8[%c49, %c0_56] : memref<416x3xbf16, #tpu.memory_space<vmem>>, vector<352x3xbf16>
    %c6 = arith.constant 6 : index
    %c0_57 = arith.constant 0 : index
    %c0_58 = arith.constant 0 : index
    %47 = vector.load %arg4[%c6, %c0_57, %c0_58] : memref<9x3x128xbf16, #tpu.memory_space<vmem>>, vector<1x3x128xbf16>
    %48 = vector.shape_cast %47 : vector<1x3x128xbf16> to vector<3x128xbf16>
    %cst_59 = arith.constant dense<0.000000e+00> : vector<352x128xf32>
    %49 = tpu.matmul %46, %48, %cst_59 {dimension_numbers = #tpu.dot_dimension_numbers<[1], [0], [0], [1], [0, 0, 1, 1], [], []>} : vector<352x3xbf16>, vector<3x128xbf16>, vector<352x128xf32> -> vector<352x128xf32>
    %c0_60 = arith.constant 0 : index
    %c0_61 = arith.constant 0 : index
    %50 = vector.load %arg9[%c0_60, %c0_61] : memref<352x128xf32, #tpu.memory_space<vmem>>, vector<352x128xf32>
    %51 = arith.addf %50, %49 : vector<352x128xf32>
    %c0_62 = arith.constant 0 : index
    %c0_63 = arith.constant 0 : index
    %52 = vector.load %arg9[%c0_62, %c0_63] : memref<352x128xf32, #tpu.memory_space<vmem>>, vector<352x128xf32>
    tpu.vector_store %arg9[%c0_62, %c0_63], %51 {strides = array<i32>} : memref<352x128xf32, #tpu.memory_space<vmem>>, vector<352x128xf32>,
    %c50 = arith.constant 50 : index
    %c0_64 = arith.constant 0 : index
    %53 = vector.load %arg8[%c50, %c0_64] : memref<416x3xbf16, #tpu.memory_space<vmem>>, vector<352x3xbf16>
    %c7 = arith.constant 7 : index
    %c0_65 = arith.constant 0 : index
    %c0_66 = arith.constant 0 : index
    %54 = vector.load %arg4[%c7, %c0_65, %c0_66] : memref<9x3x128xbf16, #tpu.memory_space<vmem>>, vector<1x3x128xbf16>
    %55 = vector.shape_cast %54 : vector<1x3x128xbf16> to vector<3x128xbf16>
    %cst_67 = arith.constant dense<0.000000e+00> : vector<352x128xf32>
    %56 = tpu.matmul %53, %55, %cst_67 {dimension_numbers = #tpu.dot_dimension_numbers<[1], [0], [0], [1], [0, 0, 1, 1], [], []>} : vector<352x3xbf16>, vector<3x128xbf16>, vector<352x128xf32> -> vector<352x128xf32>
    %c0_68 = arith.constant 0 : index
    %c0_69 = arith.constant 0 : index
    %57 = vector.load %arg9[%c0_68, %c0_69] : memref<352x128xf32, #tpu.memory_space<vmem>>, vector<352x128xf32>
    %58 = arith.addf %57, %56 : vector<352x128xf32>
    %c0_70 = arith.constant 0 : index
    %c0_71 = arith.constant 0 : index
    %59 = vector.load %arg9[%c0_70, %c0_71] : memref<352x128xf32, #tpu.memory_space<vmem>>, vector<352x128xf32>
    tpu.vector_store %arg9[%c0_70, %c0_71], %58 {strides = array<i32>} : memref<352x128xf32, #tpu.memory_space<vmem>>, vector<352x128xf32>,
    %c51 = arith.constant 51 : index
    %c0_72 = arith.constant 0 : index
    %60 = vector.load %arg8[%c51, %c0_72] : memref<416x3xbf16, #tpu.memory_space<vmem>>, vector<352x3xbf16>
    %c8 = arith.constant 8 : index
    %c0_73 = arith.constant 0 : index
    %c0_74 = arith.constant 0 : index
    %61 = vector.load %arg4[%c8, %c0_73, %c0_74] : memref<9x3x128xbf16, #tpu.memory_space<vmem>>, vector<1x3x128xbf16>
    %62 = vector.shape_cast %61 : vector<1x3x128xbf16> to vector<3x128xbf16>
    %cst_75 = arith.constant dense<0.000000e+00> : vector<352x128xf32>
    %63 = tpu.matmul %60, %62, %cst_75 {dimension_numbers = #tpu.dot_dimension_numbers<[1], [0], [0], [1], [0, 0, 1, 1], [], []>} : vector<352x3xbf16>, vector<3x128xbf16>, vector<352x128xf32> -> vector<352x128xf32>
    %c0_76 = arith.constant 0 : index
    %c0_77 = arith.constant 0 : index
    %64 = vector.load %arg9[%c0_76, %c0_77] : memref<352x128xf32, #tpu.memory_space<vmem>>, vector<352x128xf32>
    %65 = arith.addf %64, %63 : vector<352x128xf32>
    %c0_78 = arith.constant 0 : index
    %c0_79 = arith.constant 0 : index
    %66 = vector.load %arg9[%c0_78, %c0_79] : memref<352x128xf32, #tpu.memory_space<vmem>>, vector<352x128xf32>
    tpu.vector_store %arg9[%c0_78, %c0_79], %65 {strides = array<i32>} : memref<352x128xf32, #tpu.memory_space<vmem>>, vector<352x128xf32>,
    %c0_80 = arith.constant 0 : index
    %c0_81 = arith.constant 0 : index
    %67 = vector.load %arg9[%c0_80, %c0_81] : memref<352x128xf32, #tpu.memory_space<vmem>>, vector<352x128xf32>
    %c0_82 = arith.constant 0 : index
    %c0_83 = arith.constant 0 : index
    %68 = vector.load %arg5[%c0_82, %c0_83] : memref<1x128xf32, #tpu.memory_space<vmem>>, vector<1x128xf32>
    %69 = vector.broadcast %68 : vector<1x128xf32> to vector<352x128xf32>
    %70 = arith.addf %67, %69 : vector<352x128xf32>
    %cst_84 = arith.constant 0.000000e+00 : f32
    %71 = vector.broadcast %cst_84 : f32 to vector<352x128xf32>
    %72 = arith.maximumf %70, %71 : vector<352x128xf32>
    %c352_i32 = arith.constant 352 : i32
    %73 = arith.muli %arg0, %c352_i32 : i32
    %74 = tpu.iota {dimensions = array<i32: 0>} : vector<352x1xi32>
    %75 = vector.broadcast %73 : i32 to vector<352x1xi32>
    %76 = arith.addi %75, %74 : vector<352x1xi32>
    %77 = arith.sitofp %76 : vector<352x1xi32> to vector<352x1xf32>
    %cst_85 = arith.constant 1.800000e+01 : f32
    %78 = vector.broadcast %cst_85 : f32 to vector<352x1xf32>
    %79 = arith.divf %77, %78 : vector<352x1xf32>
    %80 = math.floor %79 : vector<352x1xf32>
    %cst_86 = arith.constant 1.800000e+01 : f32
    %81 = vector.broadcast %cst_86 : f32 to vector<352x1xf32>
    %82 = arith.mulf %80, %81 : vector<352x1xf32>
    %83 = arith.subf %77, %82 : vector<352x1xf32>
    %cst_87 = arith.constant 1.800000e+01 : f32
    %84 = vector.broadcast %cst_87 : f32 to vector<352x1xf32>
    %85 = arith.divf %80, %84 : vector<352x1xf32>
    %86 = math.floor %85 : vector<352x1xf32>
    %cst_88 = arith.constant 1.800000e+01 : f32
    %87 = vector.broadcast %cst_88 : f32 to vector<352x1xf32>
    %88 = arith.mulf %86, %87 : vector<352x1xf32>
    %89 = arith.subf %80, %88 : vector<352x1xf32>
    %cst_89 = arith.constant 1.000000e+00 : f32
    %90 = vector.broadcast %cst_89 : f32 to vector<352x1xf32>
    %91 = arith.cmpf oge, %83, %90 : vector<352x1xf32>
    %cst_90 = arith.constant 1.600000e+01 : f32
    %92 = vector.broadcast %cst_90 : f32 to vector<352x1xf32>
    %93 = arith.cmpf ole, %83, %92 : vector<352x1xf32>
    %94 = arith.andi %91, %93 : vector<352x1xi1>
    %cst_91 = arith.constant 1.000000e+00 : f32
    %95 = vector.broadcast %cst_91 : f32 to vector<352x1xf32>
    %96 = arith.cmpf oge, %89, %95 : vector<352x1xf32>
    %97 = arith.andi %94, %96 : vector<352x1xi1>
    %cst_92 = arith.constant 1.600000e+01 : f32
    %98 = vector.broadcast %cst_92 : f32 to vector<352x1xf32>
    %99 = arith.cmpf ole, %89, %98 : vector<352x1xf32>
    %100 = arith.andi %97, %99 : vector<352x1xi1>
    %cst_93 = arith.constant 0.000000e+00 : f32
    %101 = vector.shape_cast %100 : vector<352x1xi1> to vector<352x1xi1>
    %102 = vector.broadcast %101 : vector<352x1xi1> to vector<352x128xi1>
    %103 = vector.broadcast %cst_93 : f32 to vector<352x128xf32>
    %104 = arith.select %102, %72, %103 : vector<352x128xi1>, vector<352x128xf32>
    %105 = arith.truncf %104 : vector<352x128xf32> to vector<352x128xbf16>
    %c0_94 = arith.constant 0 : index
    %c0_95 = arith.constant 0 : index
    %106 = vector.load %arg7[%c0_94, %c0_95] : memref<352x128xbf16, #tpu.memory_space<vmem>>, vector<352x128xbf16>
    tpu.vector_store %arg7[%c0_94, %c0_95], %105 {strides = array<i32>} : memref<352x128xbf16, #tpu.memory_space<vmem>>, vector<352x128xbf16>,
    return
  }
  func.func @transform_0(%arg0: i32) -> (i32, i32) {
    %c11_i32 = arith.constant 11 : i32
    %0 = arith.muli %arg0, %c11_i32 : i32
    %c1_i32 = arith.constant 1 : i32
    %1 = arith.subi %0, %c1_i32 : i32
    %c0_i32 = arith.constant 0 : i32
    %2 = arith.maxsi %1, %c0_i32 : i32
    %c0_i32_0 = arith.constant 0 : i32
    %c0_i32_1 = arith.constant 0 : i32
    return %2, %c0_i32_0 : i32, i32
  }
  func.func @transform_1(%arg0: i32) -> (i32, i32) {
    %c0_i32 = arith.constant 0 : i32
    %c0_i32_0 = arith.constant 0 : i32
    return %arg0, %c0_i32 : i32, i32
  }
  func.func @transform_2(%arg0: i32) -> (i32, i32) {
    %c1_i32 = arith.constant 1 : i32
    %0 = arith.addi %arg0, %c1_i32 : i32
    %c11_i32 = arith.constant 11 : i32
    %1 = arith.muli %0, %c11_i32 : i32
    %c20_i32 = arith.constant 20 : i32
    %2 = arith.minsi %1, %c20_i32 : i32
    %c0_i32 = arith.constant 0 : i32
    %c0_i32_0 = arith.constant 0 : i32
    return %2, %c0_i32 : i32, i32
  }
  func.func @transform_3(%arg0: i32) -> (i32, i32, i32) {
    %c0_i32 = arith.constant 0 : i32
    %c0_i32_0 = arith.constant 0 : i32
    %c0_i32_1 = arith.constant 0 : i32
    %c0_i32_2 = arith.constant 0 : i32
    return %c0_i32, %c0_i32_0, %c0_i32_1 : i32, i32, i32
  }
  func.func @transform_4(%arg0: i32) -> (i32, i32) {
    %c0_i32 = arith.constant 0 : i32
    %c0_i32_0 = arith.constant 0 : i32
    %c0_i32_1 = arith.constant 0 : i32
    return %c0_i32, %c0_i32_0 : i32, i32
  }
  func.func @transform_5(%arg0: i32) -> (i32, i32) {
    %c0_i32 = arith.constant 0 : i32
    %c0_i32_0 = arith.constant 0 : i32
    %c0_i32_1 = arith.constant 0 : i32
    return %c0_i32, %c0_i32_0 : i32, i32
  }
  func.func @transform_6(%arg0: i32) -> (i32, i32) {
    %c0_i32 = arith.constant 0 : i32
    %c0_i32_0 = arith.constant 0 : i32
    return %arg0, %c0_i32 : i32, i32
  }
}

</mosaic_0001>

<llo_original>
// kernel: conv_op.1
$region0: #{conv_op.1}
  #allocation0 [shape = 'u32[]', space=smem, size = 0x4, offset = 0x4, fixed_abs, tag = 'smem constant byte address 0x4 - core index']
  #allocation1 [shape = 'u32[144,128]{1,0:T(1,128)}', space=vmem, size = 0x12000, scoped, tag = 'internal scratch']
  #allocation2 [shape = 'bf16[416,3]{1,0:T(16,128)(2,1)}', space=vmem, size = 0x1a000, scoped, tag = 'scratch operand']
  #allocation3 [shape = 'f32[352,128]{1,0:T(8,128)}', space=vmem, size = 0x2c000, scoped, tag = 'scratch operand']
  %s0 = inlined_call_operand.vmem [shape: bf16[648,3], index: 0, kind: input, shape index: {}, may-alias: {0,1,2}]
  %s1 = inlined_call_operand.vmem [shape: bf16[648,3], index: 1, kind: input, shape index: {}, may-alias: {0,1,2}]
  %s2 = inlined_call_operand.vmem [shape: bf16[648,3], index: 2, kind: input, shape index: {}, may-alias: {0,1,2}]
  %s3 = inlined_call_operand.vmem [shape: bf16[9,3,128], index: 3, kind: input, shape index: {}]
  %s4 = inlined_call_operand.vmem [shape: f32[1,128], index: 4, kind: input, shape index: {}]
  %s5 = inlined_call_operand.vmem [shape: f32[1,128], index: 5, kind: input, shape index: {}]
  %s6 = inlined_call_operand.hbm [shape: bf16[648,128], index: 6, kind: output, shape index: {}]
  %s7 = sld [smem:[#allocation0]]
  $region57: #{conv_op.1} parent=0
    _
  %s9 = ssub.s32 1, %s7
  %s10 = scalar_select 0, %s9, %s7
  $region1: #{conv_op.1} parent=0
    #allocation4 [shape = 'u8[180224]{0}', space=vmem, size = 0x2c000, scoped, tag = 'output window, operand 0']
    #allocation5 [shape = 's32[2]{0}', space=sflag, size = 0x8, scoped, tag = 'scoped memory for conv_op.1']
    %11 = vsyncpa [#allocation5], 0
    %s12 = scalar_lea.sflag [#allocation5], 1
    %13 = vsyncpa %s12, 0
    loop: start=0, step=1, limit=4
    $region2: #{conv_op.1} parent=1 // loop_pre_header
      _
    $region3: #{conv_op.1} parent=1 // loop_header
      %s15 = sphi 0, %s19
      %p16 = scmp.ge.s32.totalorder %s15, 4
      %s33 = sphi 0, %s35
      %s36 = sphi 0, %s33
      %s37 = sphi 0, %s36
      %s53 = sphi 0, %s37
      %s59 = sphi 0, %s61
      %s62 = sphi 0, %s59
      %s63 = sphi 0, %s62
      %s79 = sphi 0, %s63
      %s93 = sphi 0, %s95
      %s96 = sphi 0, %s93
      %s97 = sphi 0, %s96
      %s113 = sphi 0, %s97
      %s117 = sphi 0, %s117
      %s119 = sphi 0, %s117
      %s120 = sphi 0, %s119
      %s134 = sphi 0, %s120
      %s138 = sphi 0, %s138
      %s140 = sphi 0, %s138
      %s141 = sphi 0, %s140
      %s155 = sphi 0, %s141
      %s159 = sphi 0, %s159
      %s161 = sphi 0, %s159
      %s162 = sphi 0, %s161
      %s176 = sphi 0, %s162
      %s182 = sphi 0, %s184
      %s185 = sphi 0, %s182
      %s186 = sphi 0, %s185
      %s202 = sphi 0, %s186
    $region4: #{conv_op.1} parent=1 // loop_header_branch
      %18 = sbr.rel (%p16) target = $region8
    $region5: #{conv_op.1} parent=1 // loop_body
      %s20 = ssub.s32 %s15, 1
      %s21 = ssub.s32 %s15, 2
      %s22 = sadd.s32 %s15, 1
      %s23 = smul.u32 %s15, 11
      %s24 = ssub.s32 %s23, 1
      %p25 = scmp.gt.s32.totalorder %s24, 0
      %s26 = scalar_select %p25, %s24, 0
      %s27 = smul.u32 %s22, 11
      %s28 = ssub.s32 %s27, 1
      %p29 = scmp.gt.s32.totalorder %s28, 0
      %s30 = scalar_select %p29, %s28, 0
      %s31 = ssub.s32 %s26, %s30
      %p32 = scmp.eq.s32.totalorder %s31, 0
      %s34 = sadd.s32 %s33, 1
      %s35 = scalar_select %p32, %s33, %s34
      %p38 = pneg %p32
      %p39 = scmp.eq.s32.totalorder %s15, 1
      %p40 = por %p38, %p39
      %p41 = scmp.ne.s32.totalorder %s33, %s36
      %p42 = scmp.eq.s32.totalorder %s15, 0
      %p43 = por %p41, %p42
      %p44 = scmp.ne.s32.totalorder %s33, %s36
      %p45 = scmp.eq.s32.totalorder %s20, 1
      %p46 = por %p44, %p45
      %p47 = scmp.ne.s32.totalorder %s36, %s37
      %p48 = scmp.eq.s32.totalorder %s20, 0
      %p49 = por %p47, %p48
      %p50 = scmp.ne.s32.totalorder %s36, %s37
      %p51 = scmp.eq.s32.totalorder %s21, 1
      %p52 = por %p50, %p51
      %p54 = scmp.ne.s32.totalorder %s37, %s53
      %p55 = scmp.eq.s32.totalorder %s21, 0
      %p56 = por %p54, %p55
      %s57 = ssub.s32 %s15, %s22
      %p58 = scmp.eq.s32.totalorder %s57, 0
      %s60 = sadd.s32 %s59, 1
      %s61 = scalar_select %p58, %s59, %s60
      %p64 = pneg %p58
      %p65 = scmp.eq.s32.totalorder %s15, 1
      %p66 = por %p64, %p65
      %p67 = scmp.ne.s32.totalorder %s59, %s62
      %p68 = scmp.eq.s32.totalorder %s15, 0
      %p69 = por %p67, %p68
      %p70 = scmp.ne.s32.totalorder %s59, %s62
      %p71 = scmp.eq.s32.totalorder %s20, 1
      %p72 = por %p70, %p71
      %p73 = scmp.ne.s32.totalorder %s62, %s63
      %p74 = scmp.eq.s32.totalorder %s20, 0
      %p75 = por %p73, %p74
      %p76 = scmp.ne.s32.totalorder %s62, %s63
      %p77 = scmp.eq.s32.totalorder %s21, 1
      %p78 = por %p76, %p77
      %p80 = scmp.ne.s32.totalorder %s63, %s79
      %p81 = scmp.eq.s32.totalorder %s21, 0
      %p82 = por %p80, %p81
      %s83 = sadd.s32 %s15, 1
      %s84 = smul.u32 %s83, 11
      %p85 = scmp.lt.s32.totalorder %s84, 20
      %s86 = scalar_select %p85, %s84, 20
      %s87 = sadd.s32 %s22, 1
      %s88 = smul.u32 %s87, 11
      %p89 = scmp.lt.s32.totalorder %s88, 20
      %s90 = scalar_select %p89, %s88, 20
      %s91 = ssub.s32 %s86, %s90
      %p92 = scmp.eq.s32.totalorder %s91, 0
      %s94 = sadd.s32 %s93, 1
      %s95 = scalar_select %p92, %s93, %s94
      %p98 = pneg %p92
      %p99 = scmp.eq.s32.totalorder %s15, 1
      %p100 = por %p98, %p99
      %p101 = scmp.ne.s32.totalorder %s93, %s96
      %p102 = scmp.eq.s32.totalorder %s15, 0
      %p103 = por %p101, %p102
      %p104 = scmp.ne.s32.totalorder %s93, %s96
      %p105 = scmp.eq.s32.totalorder %s20, 1
      %p106 = por %p104, %p105
      %p107 = scmp.ne.s32.totalorder %s96, %s97
      %p108 = scmp.eq.s32.totalorder %s20, 0
      %p109 = por %p107, %p108
      %p110 = scmp.ne.s32.totalorder %s96, %s97
      %p111 = scmp.eq.s32.totalorder %s21, 1
      %p112 = por %p110, %p111
      %p114 = scmp.ne.s32.totalorder %s97, %s113
      %p115 = scmp.eq.s32.totalorder %s21, 0
      %p116 = por %p114, %p115
      %s118 = sadd.s32 %s117, 1
      %p121 = scmp.eq.s32.totalorder %s15, 1
      %p122 = scmp.ne.s32.totalorder %s117, %s119
      %p123 = scmp.eq.s32.totalorder %s15, 0
      %p124 = por %p122, %p123
      %p125 = scmp.ne.s32.totalorder %s117, %s119
      %p126 = scmp.eq.s32.totalorder %s20, 1
      %p127 = por %p125, %p126
      %p128 = scmp.ne.s32.totalorder %s119, %s120
      %p129 = scmp.eq.s32.totalorder %s20, 0
      %p130 = por %p128, %p129
      %p131 = scmp.ne.s32.totalorder %s119, %s120
      %p132 = scmp.eq.s32.totalorder %s21, 1
      %p133 = por %p131, %p132
      %p135 = scmp.ne.s32.totalorder %s120, %s134
      %p136 = scmp.eq.s32.totalorder %s21, 0
      %p137 = por %p135, %p136
      %s139 = sadd.s32 %s138, 1
      %p142 = scmp.eq.s32.totalorder %s15, 1
      %p143 = scmp.ne.s32.totalorder %s138, %s140
      %p144 = scmp.eq.s32.totalorder %s15, 0
      %p145 = por %p143, %p144
      %p146 = scmp.ne.s32.totalorder %s138, %s140
      %p147 = scmp.eq.s32.totalorder %s20, 1
      %p148 = por %p146, %p147
      %p149 = scmp.ne.s32.totalorder %s140, %s141
      %p150 = scmp.eq.s32.totalorder %s20, 0
      %p151 = por %p149, %p150
      %p152 = scmp.ne.s32.totalorder %s140, %s141
      %p153 = scmp.eq.s32.totalorder %s21, 1
      %p154 = por %p152, %p153
      %p156 = scmp.ne.s32.totalorder %s141, %s155
      %p157 = scmp.eq.s32.totalorder %s21, 0
      %p158 = por %p156, %p157
      %s160 = sadd.s32 %s159, 1
      %p163 = scmp.eq.s32.totalorder %s15, 1
      %p164 = scmp.ne.s32.totalorder %s159, %s161
      %p165 = scmp.eq.s32.totalorder %s15, 0
      %p166 = por %p164, %p165
      %p167 = scmp.ne.s32.totalorder %s159, %s161
      %p168 = scmp.eq.s32.totalorder %s20, 1
      %p169 = por %p167, %p168
      %p170 = scmp.ne.s32.totalorder %s161, %s162
      %p171 = scmp.eq.s32.totalorder %s20, 0
      %p172 = por %p170, %p171
      %p173 = scmp.ne.s32.totalorder %s161, %s162
      %p174 = scmp.eq.s32.totalorder %s21, 1
      %p175 = por %p173, %p174
      %p177 = scmp.ne.s32.totalorder %s162, %s176
      %p178 = scmp.eq.s32.totalorder %s21, 0
      %p179 = por %p177, %p178
      %s180 = ssub.s32 %s15, %s22
      %p181 = scmp.eq.s32.totalorder %s180, 0
      %s183 = sadd.s32 %s182, 1
      %s184 = scalar_select %p181, %s182, %s183
      %p187 = pneg %p181
      %p188 = scmp.eq.s32.totalorder %s15, 1
      %p189 = por %p187, %p188
      %p190 = scmp.ne.s32.totalorder %s182, %s185
      %p191 = scmp.eq.s32.totalorder %s15, 0
      %p192 = por %p190, %p191
      %p193 = scmp.ne.s32.totalorder %s182, %s185
      %p194 = scmp.eq.s32.totalorder %s20, 1
      %p195 = por %p193, %p194
      %p196 = scmp.ne.s32.totalorder %s185, %s186
      %p197 = scmp.eq.s32.totalorder %s20, 0
      %p198 = por %p196, %p197
      %p199 = scmp.ne.s32.totalorder %s185, %s186
      %p200 = scmp.eq.s32.totalorder %s21, 1
      %p201 = por %p199, %p200
      %p203 = scmp.ne.s32.totalorder %s186, %s202
      %p204 = scmp.eq.s32.totalorder %s21, 0
      %p205 = por %p203, %p204
      %p206 = scmp.le.s32.totalorder 1, %s15
      %p207 = scmp.lt.s32.totalorder %s15, 3
      %p208 = pnand %p206, %p207
      %p209 = pneg %p208
      // Predicated region
      $region9: #{conv_op.1} parent=5 // pred_check
        _
      $region10: #{conv_op.1} parent=5 // pred_check_branch
        %211 = sbr.rel (%p208) target = $region12
      $region11: #{conv_op.1} parent=5 // pred_region
        %s212 = ssub.s32 %s15, 1
        // Predicated region
        $region13: #{conv_op.1} parent=11 // pred_check
          %p213 = pneg %p130
        $region14: #{conv_op.1} parent=11 // pred_check_branch
          %215 = sbr.rel (%p213) target = $region16
        $region15: #{conv_op.1} parent=11 // pred_region
          _
        $region16: #{conv_op.1} parent=11 // pred_fallthru
          _
        // Predicated region
        $region17: #{conv_op.1} parent=11 // pred_check
          %p216 = pneg %p151
        $region18: #{conv_op.1} parent=11 // pred_check_branch
          %218 = sbr.rel (%p216) target = $region20
        $region19: #{conv_op.1} parent=11 // pred_region
          _
        $region20: #{conv_op.1} parent=11 // pred_fallthru
          _
        // Predicated region
        $region21: #{conv_op.1} parent=11 // pred_check
          %p219 = pneg %p172
        $region22: #{conv_op.1} parent=11 // pred_check_branch
          %221 = sbr.rel (%p219) target = $region24
        $region23: #{conv_op.1} parent=11 // pred_region
          _
        $region24: #{conv_op.1} parent=11 // pred_fallthru
          _
      $region12: #{conv_op.1} parent=5 // pred_fallthru
        _
      %p222 = scmp.lt.s32.totalorder %s15, 2
      // Predicated region
      $region25: #{conv_op.1} parent=5 // pred_check
        %p223 = pneg %p222
      $region26: #{conv_op.1} parent=5 // pred_check_branch
        %225 = sbr.rel (%p223) target = $region28
      $region27: #{conv_op.1} parent=5 // pred_region
        // Predicated region
        $region29: #{conv_op.1} parent=27 // pred_check
          %p226 = pneg %p43
        $region30: #{conv_op.1} parent=27 // pred_check_branch
          %228 = sbr.rel (%p226) target = $region32
        $region31: #{conv_op.1} parent=27 // pred_region
          %s229 = smul.u32 %s15, 11
          %s230 = ssub.s32 %s229, 1
          %p231 = scmp.gt.s32.totalorder %s230, 0
          %s232 = scalar_select %p231, %s230, 0
          %s233 = smul.u32 4, %s232
          %s234 = ssub.s32 81, %s233
          %p235 = scmp.lt.s32.totalorder %s234, 4
          %s236 = scalar_select %p235, %s234, 4
          %s237 = smul.u32 64, %s236
          %p238 = scmp.lt.s32.totalorder %s233, 80
          %s239 = scalar_select %p238, %s233, 80
          %s240 = smul.addr %s239, 4
          %s241 = scalar_lea.vmem %s0, %s240
          %s242 = smul.u32 %s15, 11
          %s243 = ssub.s32 %s242, 1
          %p244 = scmp.gt.s32.totalorder %s243, 0
          %s245 = scalar_select %p244, %s243, 0
          %s246 = smul.u32 4, %s245
          %s247 = ssub.s32 81, %s246
          %p248 = scmp.lt.s32.totalorder %s247, 4
          %s249 = scalar_select %p248, %s247, 4
          %s250 = smul.u32 64, %s249
        $region32: #{conv_op.1} parent=27 // pred_fallthru
          _
        // Predicated region
        $region33: #{conv_op.1} parent=27 // pred_check
          %p251 = pneg %p69
        $region34: #{conv_op.1} parent=27 // pred_check_branch
          %253 = sbr.rel (%p251) target = $region36
        $region35: #{conv_op.1} parent=27 // pred_region
          %s254 = smul.u32 44, %s15
          %s255 = ssub.s32 81, %s254
          %p256 = scmp.lt.s32.totalorder %s255, 44
          %s257 = scalar_select %p256, %s255, 44
          %s258 = smul.u32 64, %s257
          %p259 = scmp.lt.s32.totalorder %s254, 80
          %s260 = scalar_select %p259, %s254, 80
          %s261 = smul.addr %s260, 4
          %s262 = scalar_lea.vmem %s1, %s261
          %s263 = smul.u32 44, %s15
          %s264 = ssub.s32 81, %s263
          %p265 = scmp.lt.s32.totalorder %s264, 44
          %s266 = scalar_select %p265, %s264, 44
          %s267 = smul.u32 64, %s266
        $region36: #{conv_op.1} parent=27 // pred_fallthru
          _
        // Predicated region
        $region37: #{conv_op.1} parent=27 // pred_check
          %p268 = pneg %p103
        $region38: #{conv_op.1} parent=27 // pred_check_branch
          %270 = sbr.rel (%p268) target = $region40
        $region39: #{conv_op.1} parent=27 // pred_region
          %s271 = sadd.s32 %s15, 1
          %s272 = smul.u32 %s271, 11
          %p273 = scmp.lt.s32.totalorder %s272, 20
          %s274 = scalar_select %p273, %s272, 20
          %s275 = smul.u32 4, %s274
          %s276 = ssub.s32 81, %s275
          %p277 = scmp.lt.s32.totalorder %s276, 4
          %s278 = scalar_select %p277, %s276, 4
          %s279 = smul.u32 64, %s278
          %p280 = scmp.lt.s32.totalorder %s275, 80
          %s281 = scalar_select %p280, %s275, 80
          %s282 = smul.addr %s281, 4
          %s283 = scalar_lea.vmem %s2, %s282
          %s284 = sadd.s32 %s15, 1
          %s285 = smul.u32 %s284, 11
          %p286 = scmp.lt.s32.totalorder %s285, 20
          %s287 = scalar_select %p286, %s285, 20
          %s288 = smul.u32 4, %s287
          %s289 = ssub.s32 81, %s288
          %p290 = scmp.lt.s32.totalorder %s289, 4
          %s291 = scalar_select %p290, %s289, 4
          %s292 = smul.u32 64, %s291
        $region40: #{conv_op.1} parent=27 // pred_fallthru
          _
      $region28: #{conv_op.1} parent=5 // pred_fallthru
        _
      %p293 = scmp.le.s32.totalorder 1, %s15
      %p294 = scmp.lt.s32.totalorder %s15, 3
      %p295 = pnand %p293, %p294
      %p296 = pneg %p295
      // Predicated region
      $region41: #{conv_op.1} parent=5 // pred_check
        _
      $region42: #{conv_op.1} parent=5 // pred_check_branch
        %298 = sbr.rel (%p295) target = $region44
      $region43: #{conv_op.1} parent=5 // pred_region
        %s299 = ssub.s32 %s15, 1
        %s300 = smul.u32 %s20, 11
        %s301 = ssub.s32 %s300, 1
        %p302 = scmp.gt.s32.totalorder %s301, 0
        %s303 = scalar_select %p302, %s301, 0
        %s304 = smul.u32 4, %s303
        %s305 = ssub.s32 81, %s304
        %p306 = scmp.lt.s32.totalorder %s305, 4
        %s307 = scalar_select %p306, %s305, 4
        %s308 = smul.u32 64, %s307
        %p309 = scmp.lt.s32.totalorder %s304, 80
        %s310 = scalar_select %p309, %s304, 80
        %s311 = smul.addr %s310, 4
        %s312 = scalar_lea.vmem %s0, %s311
        %p313 = pneg %p49
        %p314 = pneg %p46
        %s315 = smul.u32 44, %s20
        %s316 = ssub.s32 81, %s315
        %p317 = scmp.lt.s32.totalorder %s316, 44
        %s318 = scalar_select %p317, %s316, 44
        %s319 = smul.u32 64, %s318
        %p320 = scmp.lt.s32.totalorder %s315, 80
        %s321 = scalar_select %p320, %s315, 80
        %s322 = smul.addr %s321, 4
        %s323 = scalar_lea.vmem %s1, %s322
        %p324 = pneg %p75
        %p325 = pneg %p72
        %s326 = sadd.s32 %s20, 1
        %s327 = smul.u32 %s326, 11
        %p328 = scmp.lt.s32.totalorder %s327, 20
        %s329 = scalar_select %p328, %s327, 20
        %s330 = smul.u32 4, %s329
        %s331 = ssub.s32 81, %s330
        %p332 = scmp.lt.s32.totalorder %s331, 4
        %s333 = scalar_select %p332, %s331, 4
        %s334 = smul.u32 64, %s333
        %p335 = scmp.lt.s32.totalorder %s330, 80
        %s336 = scalar_select %p335, %s330, 80
        %s337 = smul.addr %s336, 4
        %s338 = scalar_lea.vmem %s2, %s337
        %p339 = pneg %p109
        %p340 = pneg %p106
        %p341 = pneg %p130
        %p342 = pneg %p127
        %p343 = pneg %p151
        %p344 = pneg %p148
        %p345 = pneg %p172
        %p346 = pneg %p169
        %p347 = pneg %p198
        %p348 = pneg %p195
        %s349 = sand.u32 %s185, 1
        %s350 = scalar_lea.sflag [#allocation5], %s349
        %s351 = sand.u32 %s185, 1
        %s352 = smul.addr %s351, 176
        %s353 = scalar_lea.vmem [#allocation4], %s352
        %s354 = smul.u32 %s20, 11
        %s355 = ssub.s32 %s354, 1
        %p356 = scmp.gt.s32.totalorder %s355, 0
        %s357 = scalar_select %p356, %s355, 0
        %s358 = smul.u32 4, %s357
        %s359 = ssub.s32 81, %s358
        %p360 = scmp.lt.s32.totalorder %s359, 4
        %s361 = scalar_select %p360, %s359, 4
        %s362 = smul.u32 64, %s361
        %p363 = scmp.lt.s32.totalorder %s358, 80
        %s364 = scalar_select %p363, %s358, 80
        %s365 = smul.addr %s364, 4
        %s366 = scalar_lea.vmem %s0, %s365
        %s367 = smul.u32 %s20, 11
        %s368 = ssub.s32 %s367, 1
        %p369 = scmp.gt.s32.totalorder %s368, 0
        %s370 = scalar_select %p369, %s368, 0
        %s371 = smul.u32 4, %s370
        %s372 = ssub.s32 81, %s371
        %p373 = scmp.lt.s32.totalorder %s372, 4
        %s374 = scalar_select %p373, %s372, 4
        %s375 = smul.u32 64, %s374
        %s376 = smul.u32 44, %s20
        %s377 = ssub.s32 81, %s376
        %p378 = scmp.lt.s32.totalorder %s377, 44
        %s379 = scalar_select %p378, %s377, 44
        %s380 = smul.u32 64, %s379
        %p381 = scmp.lt.s32.totalorder %s376, 80
        %s382 = scalar_select %p381, %s376, 80
        %s383 = smul.addr %s382, 4
        %s384 = scalar_lea.vmem %s1, %s383
        %s385 = smul.u32 44, %s20
        %s386 = ssub.s32 81, %s385
        %p387 = scmp.lt.s32.totalorder %s386, 44
        %s388 = scalar_select %p387, %s386, 44
        %s389 = smul.u32 64, %s388
        %s390 = sadd.s32 %s20, 1
        %s391 = smul.u32 %s390, 11
        %p392 = scmp.lt.s32.totalorder %s391, 20
        %s393 = scalar_select %p392, %s391, 20
        %s394 = smul.u32 4, %s393
        %s395 = ssub.s32 81, %s394
        %p396 = scmp.lt.s32.totalorder %s395, 4
        %s397 = scalar_select %p396, %s395, 4
        %s398 = smul.u32 64, %s397
        %p399 = scmp.lt.s32.totalorder %s394, 80
        %s400 = scalar_select %p399, %s394, 80
        %s401 = smul.addr %s400, 4
        %s402 = scalar_lea.vmem %s2, %s401
        %s403 = sadd.s32 %s20, 1
        %s404 = smul.u32 %s403, 11
        %p405 = scmp.lt.s32.totalorder %s404, 20
        %s406 = scalar_select %p405, %s404, 20
        %s407 = smul.u32 4, %s406
        %s408 = ssub.s32 81, %s407
        %p409 = scmp.lt.s32.totalorder %s408, 4
        %s410 = scalar_select %p409, %s408, 4
        %s411 = smul.u32 64, %s410
        %s412 = smul.u32 44, %s20
        %s413 = ssub.s32 81, %s412
        %p414 = scmp.lt.s32.totalorder %s413, 44
        %s415 = scalar_select %p414, %s413, 44
        %s416 = smul.u32 64, %s415
        %v418 = vld [vmem:[%s366] sm:$0xf]
        %v419 = vld [vmem:[%s366 + $0x4] sm:$0xf]
        %v420 = vld [vmem:[%s366 + $0x8] sm:$0xf]
        %v421 = vld [vmem:[%s366 + $0xc] sm:$0xf]
        %v426 = vunpack.c.l.b16 %v418
        %v427 = vunpack.c.l.b16 %v419
        %v428 = vunpack.c.l.b16 %v420
        %v429 = vunpack.c.l.b16 %v421
        %v430 = vpack.c.b16 %v427, %v426
        %v431 = vpack.c.b16 %v429, %v428
        %vm434 = vcmask 23552
        %435 = vst.msk [vmem:[#allocation2] sm:$0xff] %vm434, %v430
        %436 = vst.msk [vmem:[#allocation2 + $0x8] sm:$0xff] %vm434, %v431
        %v437 = vld [vmem:[%s384] sm:$0xf]
        %v438 = vld [vmem:[%s384 + $0x4] sm:$0xf]
        %v439 = vld [vmem:[%s384 + $0x8] sm:$0xf]
        %v440 = vld [vmem:[%s384 + $0xc] sm:$0xf]
        %v441 = vld [vmem:[%s384 + $0x10] sm:$0xf]
        %v442 = vld [vmem:[%s384 + $0x14] sm:$0xf]
        %v443 = vld [vmem:[%s384 + $0x18] sm:$0xf]
        %v444 = vld [vmem:[%s384 + $0x1c] sm:$0xf]
        %v445 = vld [vmem:[%s384 + $0x20] sm:$0xf]
        %v446 = vld [vmem:[%s384 + $0x24] sm:$0xf]
        %v447 = vld [vmem:[%s384 + $0x28] sm:$0xf]
        %v448 = vld [vmem:[%s384 + $0x2c] sm:$0xf]
        %v449 = vld [vmem:[%s384 + $0x30] sm:$0xf]
        %v450 = vld [vmem:[%s384 + $0x34] sm:$0xf]
        %v451 = vld [vmem:[%s384 + $0x38] sm:$0xf]
        %v452 = vld [vmem:[%s384 + $0x3c] sm:$0xf]
        %v453 = vld [vmem:[%s384 + $0x40] sm:$0xf]
        %v454 = vld [vmem:[%s384 + $0x44] sm:$0xf]
        %v455 = vld [vmem:[%s384 + $0x48] sm:$0xf]
        %v456 = vld [vmem:[%s384 + $0x4c] sm:$0xf]
        %v457 = vld [vmem:[%s384 + $0x50] sm:$0xf]
        %v458 = vld [vmem:[%s384 + $0x54] sm:$0xf]
        %v459 = vld [vmem:[%s384 + $0x58] sm:$0xf]
        %v460 = vld [vmem:[%s384 + $0x5c] sm:$0xf]
        %v461 = vld [vmem:[%s384 + $0x60] sm:$0xf]
        %v462 = vld [vmem:[%s384 + $0x64] sm:$0xf]
        %v463 = vld [vmem:[%s384 + $0x68] sm:$0xf]
        %v464 = vld [vmem:[%s384 + $0x6c] sm:$0xf]
        %v465 = vld [vmem:[%s384 + $0x70] sm:$0xf]
        %v466 = vld [vmem:[%s384 + $0x74] sm:$0xf]
        %v467 = vld [vmem:[%s384 + $0x78] sm:$0xf]
        %v468 = vld [vmem:[%s384 + $0x7c] sm:$0xf]
        %v469 = vld [vmem:[%s384 + $0x80] sm:$0xf]
        %v470 = vld [vmem:[%s384 + $0x84] sm:$0xf]
        %v471 = vld [vmem:[%s384 + $0x88] sm:$0xf]
        %v472 = vld [vmem:[%s384 + $0x8c] sm:$0xf]
        %v473 = vld [vmem:[%s384 + $0x90] sm:$0xf]
        %v474 = vld [vmem:[%s384 + $0x94] sm:$0xf]
        %v475 = vld [vmem:[%s384 + $0x98] sm:$0xf]
        %v476 = vld [vmem:[%s384 + $0x9c] sm:$0xf]
        %v477 = vld [vmem:[%s384 + $0xa0] sm:$0xf]
        %v478 = vld [vmem:[%s384 + $0xa4] sm:$0xf]
        %v479 = vld [vmem:[%s384 + $0xa8] sm:$0xf]
        %v480 = vld [vmem:[%s384 + $0xac] sm:$0xf]
        %v525 = vunpack.c.l.b16 %v437
        %v526 = vunpack.c.l.b16 %v438
        %v527 = vunpack.c.l.b16 %v439
        %v528 = vunpack.c.l.b16 %v440
        %v529 = vunpack.c.l.b16 %v441
        %v530 = vunpack.c.l.b16 %v442
        %v531 = vunpack.c.l.b16 %v443
        %v532 = vunpack.c.l.b16 %v444
        %v533 = vunpack.c.l.b16 %v445
        %v534 = vunpack.c.l.b16 %v446
        %v535 = vunpack.c.l.b16 %v447
        %v536 = vunpack.c.l.b16 %v448
        %v537 = vunpack.c.l.b16 %v449
        %v538 = vunpack.c.l.b16 %v450
        %v539 = vunpack.c.l.b16 %v451
        %v540 = vunpack.c.l.b16 %v452
        %v541 = vunpack.c.l.b16 %v453
        %v542 = vunpack.c.l.b16 %v454
        %v543 = vunpack.c.l.b16 %v455
        %v544 = vunpack.c.l.b16 %v456
        %v545 = vunpack.c.l.b16 %v457
        %v546 = vunpack.c.l.b16 %v458
        %v547 = vunpack.c.l.b16 %v459
        %v548 = vunpack.c.l.b16 %v460
        %v549 = vunpack.c.l.b16 %v461
        %v550 = vunpack.c.l.b16 %v462
        %v551 = vunpack.c.l.b16 %v463
        %v552 = vunpack.c.l.b16 %v464
        %v553 = vunpack.c.l.b16 %v465
        %v554 = vunpack.c.l.b16 %v466
        %v555 = vunpack.c.l.b16 %v467
        %v556 = vunpack.c.l.b16 %v468
        %v557 = vunpack.c.l.b16 %v469
        %v558 = vunpack.c.l.b16 %v470
        %v559 = vunpack.c.l.b16 %v471
        %v560 = vunpack.c.l.b16 %v472
        %v561 = vunpack.c.l.b16 %v473
        %v562 = vunpack.c.l.b16 %v474
        %v563 = vunpack.c.l.b16 %v475
        %v564 = vunpack.c.l.b16 %v476
        %v565 = vunpack.c.l.b16 %v477
        %v566 = vunpack.c.l.b16 %v478
        %v567 = vunpack.c.l.b16 %v479
        %v568 = vunpack.c.l.b16 %v480
        %v569 = vpack.c.b16 %v526, %v525
        %v570 = vpack.c.b16 %v528, %v527
        %v571 = vpack.c.b16 %v530, %v529
        %v572 = vpack.c.b16 %v532, %v531
        %v573 = vpack.c.b16 %v534, %v533
        %v574 = vpack.c.b16 %v536, %v535
        %v575 = vpack.c.b16 %v538, %v537
        %v576 = vpack.c.b16 %v540, %v539
        %v577 = vpack.c.b16 %v542, %v541
        %v578 = vpack.c.b16 %v544, %v543
        %v579 = vpack.c.b16 %v546, %v545
        %v580 = vpack.c.b16 %v548, %v547
        %v581 = vpack.c.b16 %v550, %v549
        %v582 = vpack.c.b16 %v552, %v551
        %v583 = vpack.c.b16 %v554, %v553
        %v584 = vpack.c.b16 %v556, %v555
        %v585 = vpack.c.b16 %v558, %v557
        %v586 = vpack.c.b16 %v560, %v559
        %v587 = vpack.c.b16 %v562, %v561
        %v588 = vpack.c.b16 %v564, %v563
        %v589 = vpack.c.b16 %v566, %v565
        %v590 = vpack.c.b16 %v568, %v567
        %613 = vst.msk [vmem:[#allocation2 + $0x10] sm:$0xff] %vm434, %v569
        %614 = vst.msk [vmem:[#allocation2 + $0x18] sm:$0xff] %vm434, %v570
        %615 = vst.msk [vmem:[#allocation2 + $0x20] sm:$0xff] %vm434, %v571
        %616 = vst.msk [vmem:[#allocation2 + $0x28] sm:$0xff] %vm434, %v572
        %617 = vst.msk [vmem:[#allocation2 + $0x30] sm:$0xff] %vm434, %v573
        %618 = vst.msk [vmem:[#allocation2 + $0x38] sm:$0xff] %vm434, %v574
        %619 = vst.msk [vmem:[#allocation2 + $0x40] sm:$0xff] %vm434, %v575
        %620 = vst.msk [vmem:[#allocation2 + $0x48] sm:$0xff] %vm434, %v576
        %621 = vst.msk [vmem:[#allocation2 + $0x50] sm:$0xff] %vm434, %v577
        %622 = vst.msk [vmem:[#allocation2 + $0x58] sm:$0xff] %vm434, %v578
        %623 = vst.msk [vmem:[#allocation2 + $0x60] sm:$0xff] %vm434, %v579
        %624 = vst.msk [vmem:[#allocation2 + $0x68] sm:$0xff] %vm434, %v580
        %625 = vst.msk [vmem:[#allocation2 + $0x70] sm:$0xff] %vm434, %v581
        %626 = vst.msk [vmem:[#allocation2 + $0x78] sm:$0xff] %vm434, %v582
        %627 = vst.msk [vmem:[#allocation2 + $0x80] sm:$0xff] %vm434, %v583
        %628 = vst.msk [vmem:[#allocation2 + $0x88] sm:$0xff] %vm434, %v584
        %629 = vst.msk [vmem:[#allocation2 + $0x90] sm:$0xff] %vm434, %v585
        %630 = vst.msk [vmem:[#allocation2 + $0x98] sm:$0xff] %vm434, %v586
        %631 = vst.msk [vmem:[#allocation2 + $0xa0] sm:$0xff] %vm434, %v587
        %632 = vst.msk [vmem:[#allocation2 + $0xa8] sm:$0xff] %vm434, %v588
        %633 = vst.msk [vmem:[#allocation2 + $0xb0] sm:$0xff] %vm434, %v589
        %634 = vst.msk [vmem:[#allocation2 + $0xb8] sm:$0xff] %vm434, %v590
        %v635 = vld [vmem:[%s402] sm:$0xf]
        %v636 = vld [vmem:[%s402 + $0x4] sm:$0xf]
        %v637 = vld [vmem:[%s402 + $0x8] sm:$0xf]
        %v638 = vld [vmem:[%s402 + $0xc] sm:$0xf]
        %v643 = vunpack.c.l.b16 %v635
        %v644 = vunpack.c.l.b16 %v636
        %v645 = vunpack.c.l.b16 %v637
        %v646 = vunpack.c.l.b16 %v638
        %v647 = vpack.c.b16 %v644, %v643
        %v648 = vpack.c.b16 %v646, %v645
        %651 = vst.msk [vmem:[#allocation2 + $0xc0] sm:$0xff] %vm434, %v647
        %652 = vst.msk [vmem:[#allocation2 + $0xc8] sm:$0xff] %vm434, %v648
        %v653 = vld [vmem:[#allocation2] sm:$0xc0]
        %v654 = vld [vmem:[#allocation2 + $0x8] sm:$0xff]
        %v655 = vld [vmem:[#allocation2 + $0x10] sm:$0xff]
        %v656 = vld [vmem:[#allocation2 + $0x18] sm:$0xff]
        %v657 = vld [vmem:[#allocation2 + $0x20] sm:$0xff]
        %v658 = vld [vmem:[#allocation2 + $0x28] sm:$0xff]
        %v659 = vld [vmem:[#allocation2 + $0x30] sm:$0xff]
        %v660 = vld [vmem:[#allocation2 + $0x38] sm:$0xff]
        %v661 = vld [vmem:[#allocation2 + $0x40] sm:$0xff]
        %v662 = vld [vmem:[#allocation2 + $0x48] sm:$0xff]
        %v663 = vld [vmem:[#allocation2 + $0x50] sm:$0xff]
        %v664 = vld [vmem:[#allocation2 + $0x58] sm:$0xff]
        %v665 = vld [vmem:[#allocation2 + $0x60] sm:$0xff]
        %v666 = vld [vmem:[#allocation2 + $0x68] sm:$0xff]
        %v667 = vld [vmem:[#allocation2 + $0x70] sm:$0xff]
        %v668 = vld [vmem:[#allocation2 + $0x78] sm:$0xff]
        %v669 = vld [vmem:[#allocation2 + $0x80] sm:$0xff]
        %v670 = vld [vmem:[#allocation2 + $0x88] sm:$0xff]
        %v671 = vld [vmem:[#allocation2 + $0x90] sm:$0xff]
        %v672 = vld [vmem:[#allocation2 + $0x98] sm:$0xff]
        %v673 = vld [vmem:[#allocation2 + $0xa0] sm:$0xff]
        %v674 = vld [vmem:[#allocation2 + $0xa8] sm:$0xff]
        %v675 = vld [vmem:[#allocation2 + $0xb0] sm:$0x7f]
        %v676 = vld [vmem:[%s3] sm:$0x3]
        %vm677 = vsmask.f32 1280
        %v679 = vshrl.u32 %v653, 16
        %v681 = vrot.slane %v679, 6
        %v682 = vshll.u32 %v653, 16
        %v684 = vrot.slane %v682, 7
        %v685 = vor.u32 %v681, %v684
        %v687 = vshrl.u32 %v654, 16
        %v689 = vrot.slane %v687, 6
        %v690 = vshll.u32 %v654, 16
        %v692 = vrot.slane %v690, 7
        %v693 = vor.u32 %v689, %v692
        %v694 = vsel %vm677, %v685, %v693
        %v696 = vshrl.u32 %v655, 16
        %v698 = vrot.slane %v696, 6
        %v699 = vshll.u32 %v655, 16
        %v701 = vrot.slane %v699, 7
        %v702 = vor.u32 %v698, %v701
        %v703 = vsel %vm677, %v693, %v702
        %v705 = vshrl.u32 %v656, 16
        %v707 = vrot.slane %v705, 6
        %v708 = vshll.u32 %v656, 16
        %v710 = vrot.slane %v708, 7
        %v711 = vor.u32 %v707, %v710
        %v712 = vsel %vm677, %v702, %v711
        %v714 = vshrl.u32 %v657, 16
        %v716 = vrot.slane %v714, 6
        %v717 = vshll.u32 %v657, 16
        %v719 = vrot.slane %v717, 7
        %v720 = vor.u32 %v716, %v719
        %v721 = vsel %vm677, %v711, %v720
        %v723 = vshrl.u32 %v658, 16
        %v725 = vrot.slane %v723, 6
        %v726 = vshll.u32 %v658, 16
        %v728 = vrot.slane %v726, 7
        %v729 = vor.u32 %v725, %v728
        %v730 = vsel %vm677, %v720, %v729
        %v732 = vshrl.u32 %v659, 16
        %v734 = vrot.slane %v732, 6
        %v735 = vshll.u32 %v659, 16
        %v737 = vrot.slane %v735, 7
        %v738 = vor.u32 %v734, %v737
        %v739 = vsel %vm677, %v729, %v738
        %v741 = vshrl.u32 %v660, 16
        %v743 = vrot.slane %v741, 6
        %v744 = vshll.u32 %v660, 16
        %v746 = vrot.slane %v744, 7
        %v747 = vor.u32 %v743, %v746
        %v748 = vsel %vm677, %v738, %v747
        %v750 = vshrl.u32 %v661, 16
        %v752 = vrot.slane %v750, 6
        %v753 = vshll.u32 %v661, 16
        %v755 = vrot.slane %v753, 7
        %v756 = vor.u32 %v752, %v755
        %v757 = vsel %vm677, %v747, %v756
        %v759 = vshrl.u32 %v662, 16
        %v761 = vrot.slane %v759, 6
        %v762 = vshll.u32 %v662, 16
        %v764 = vrot.slane %v762, 7
        %v765 = vor.u32 %v761, %v764
        %v766 = vsel %vm677, %v756, %v765
        %v768 = vshrl.u32 %v663, 16
        %v770 = vrot.slane %v768, 6
        %v771 = vshll.u32 %v663, 16
        %v773 = vrot.slane %v771, 7
        %v774 = vor.u32 %v770, %v773
        %v775 = vsel %vm677, %v765, %v774
        %v777 = vshrl.u32 %v664, 16
        %v779 = vrot.slane %v777, 6
        %v780 = vshll.u32 %v664, 16
        %v782 = vrot.slane %v780, 7
        %v783 = vor.u32 %v779, %v782
        %v784 = vsel %vm677, %v774, %v783
        %v786 = vshrl.u32 %v665, 16
        %v788 = vrot.slane %v786, 6
        %v789 = vshll.u32 %v665, 16
        %v791 = vrot.slane %v789, 7
        %v792 = vor.u32 %v788, %v791
        %v793 = vsel %vm677, %v783, %v792
        %v795 = vshrl.u32 %v666, 16
        %v797 = vrot.slane %v795, 6
        %v798 = vshll.u32 %v666, 16
        %v800 = vrot.slane %v798, 7
        %v801 = vor.u32 %v797, %v800
        %v802 = vsel %vm677, %v792, %v801
        %v804 = vshrl.u32 %v667, 16
        %v806 = vrot.slane %v804, 6
        %v807 = vshll.u32 %v667, 16
        %v809 = vrot.slane %v807, 7
        %v810 = vor.u32 %v806, %v809
        %v811 = vsel %vm677, %v801, %v810
        %v813 = vshrl.u32 %v668, 16
        %v815 = vrot.slane %v813, 6
        %v816 = vshll.u32 %v668, 16
        %v818 = vrot.slane %v816, 7
        %v819 = vor.u32 %v815, %v818
        %v820 = vsel %vm677, %v810, %v819
        %v822 = vshrl.u32 %v669, 16
        %v824 = vrot.slane %v822, 6
        %v825 = vshll.u32 %v669, 16
        %v827 = vrot.slane %v825, 7
        %v828 = vor.u32 %v824, %v827
        %v829 = vsel %vm677, %v819, %v828
        %v831 = vshrl.u32 %v670, 16
        %v833 = vrot.slane %v831, 6
        %v834 = vshll.u32 %v670, 16
        %v836 = vrot.slane %v834, 7
        %v837 = vor.u32 %v833, %v836
        %v838 = vsel %vm677, %v828, %v837
        %v840 = vshrl.u32 %v671, 16
        %v842 = vrot.slane %v840, 6
        %v843 = vshll.u32 %v671, 16
        %v845 = vrot.slane %v843, 7
        %v846 = vor.u32 %v842, %v845
        %v847 = vsel %vm677, %v837, %v846
        %v849 = vshrl.u32 %v672, 16
        %v851 = vrot.slane %v849, 6
        %v852 = vshll.u32 %v672, 16
        %v854 = vrot.slane %v852, 7
        %v855 = vor.u32 %v851, %v854
        %v856 = vsel %vm677, %v846, %v855
        %v858 = vshrl.u32 %v673, 16
        %v860 = vrot.slane %v858, 6
        %v861 = vshll.u32 %v673, 16
        %v863 = vrot.slane %v861, 7
        %v864 = vor.u32 %v860, %v863
        %v865 = vsel %vm677, %v855, %v864
        %v867 = vshrl.u32 %v674, 16
        %v869 = vrot.slane %v867, 6
        %v870 = vshll.u32 %v674, 16
        %v872 = vrot.slane %v870, 7
        %v873 = vor.u32 %v869, %v872
        %v874 = vsel %vm677, %v864, %v873
        %v876 = vshrl.u32 %v675, 16
        %v878 = vrot.slane %v876, 6
        %v879 = vshll.u32 %v675, 16
        %v881 = vrot.slane %v879, 7
        %v882 = vor.u32 %v878, %v881
        %v883 = vsel %vm677, %v873, %v882
        %v885 = vsel %vm434, %v694, 0
        %v888 = vsel %vm434, %v703, 0
        %v891 = vsel %vm434, %v712, 0
        %v894 = vsel %vm434, %v721, 0
        %v897 = vsel %vm434, %v730, 0
        %v900 = vsel %vm434, %v739, 0
        %v903 = vsel %vm434, %v748, 0
        %v906 = vsel %vm434, %v757, 0
        %v909 = vsel %vm434, %v766, 0
        %v912 = vsel %vm434, %v775, 0
        %v915 = vsel %vm434, %v784, 0
        %v918 = vsel %vm434, %v793, 0
        %v921 = vsel %vm434, %v802, 0
        %v924 = vsel %vm434, %v811, 0
        %v927 = vsel %vm434, %v820, 0
        %v930 = vsel %vm434, %v829, 0
        %v933 = vsel %vm434, %v838, 0
        %v936 = vsel %vm434, %v847, 0
        %v939 = vsel %vm434, %v856, 0
        %v942 = vsel %vm434, %v865, 0
        %v945 = vsel %vm434, %v874, 0
        %v948 = vsel %vm434, %v883, 0
        %vm950 = vcmask 1040384
        %vm951 = vcmask 1041408
        %v952 = vsel %vm950, 4294967295, 65535
        %v953 = vsel %vm951, %v952, 0
        %v955 = vand.u32 %v676, %v953
        %957 = vmatprep.subr.bf16.mxu0 0
        %958 = vmatpush1.bf16.msra.mxu0 %v955
        %959 = vmatprep.subr.bf16.mxu0 0
        %960 = vmatpush1.bf16.msra.mxu0 0
        %961 = vmatprep.subr.bf16.mxu0 0
        %962 = vmatpush1.bf16.msra.mxu0 0
        %963 = vmatprep.subr.bf16.mxu0 0
        %964 = vmatpush1.bf16.msra.mxu0 0
        %965 = vmatprep.subr.bf16.mxu0 0
        %966 = vmatpush1.bf16.msra.mxu0 0
        %967 = vmatprep.subr.bf16.mxu0 0
        %968 = vmatpush1.bf16.msra.mxu0 0
        %969 = vmatprep.subr.bf16.mxu0 0
        %970 = vmatpush1.bf16.msra.mxu0 0
        %971 = vmatprep.subr.bf16.mxu0 0
        %972 = vmatpush1.bf16.msra.mxu0 0
        %973 = vmatprep.subr.bf16.mxu0 0
        %974 = vmatpush1.bf16.msra.mxu0 0
        %975 = vmatprep.subr.bf16.mxu0 0
        %976 = vmatpush1.bf16.msra.mxu0 0
        %977 = vmatprep.subr.bf16.mxu0 0
        %978 = vmatpush1.bf16.msra.mxu0 0
        %979 = vmatprep.subr.bf16.mxu0 0
        %980 = vmatpush1.bf16.msra.mxu0 0
        %981 = vmatprep.subr.bf16.mxu0 0
        %982 = vmatpush1.bf16.msra.mxu0 0
        %983 = vmatprep.subr.bf16.mxu0 0
        %984 = vmatpush1.bf16.msra.mxu0 0
        %985 = vmatprep.subr.bf16.mxu0 0
        %986 = vmatpush1.bf16.msra.mxu0 0
        %987 = vmatprep.subr.bf16.mxu0 0
        %988 = vmatpush1.bf16.msra.mxu0 0
        %989 = vmatprep.mubr.bf16.mxu0 0
        %990 = vmatmul.mubr.bf16.gmra.mrb[0].mxu0 %v885
        %v991 = vpop.f32.mrb[0].mxu0
        %v992 = vadd.f32 0.0, %v991
        %v993 = vpop.f32.mrb[0].mxu0
        %v994 = vpop.f32.mrb[0].mxu0
        %v995 = vadd.f32 0.0, %v994
        %v996 = vpop.f32.mrb[0].mxu0
        %997 = vmatprep.mubr.bf16.mxu0 0
        %998 = vmatmul.mubr.bf16.gmra.mrb[0].mxu0 %v888
        %v999 = vpop.f32.mrb[0].mxu0
        %v1000 = vadd.f32 0.0, %v999
        %v1001 = vpop.f32.mrb[0].mxu0
        %v1002 = vpop.f32.mrb[0].mxu0
        %v1003 = vadd.f32 0.0, %v1002
        %v1004 = vpop.f32.mrb[0].mxu0
        %1005 = vmatprep.mubr.bf16.mxu0 0
        %1006 = vmatmul.mubr.bf16.gmra.mrb[0].mxu0 %v891
        %v1007 = vpop.f32.mrb[0].mxu0
        %v1008 = vadd.f32 0.0, %v1007
        %v1009 = vpop.f32.mrb[0].mxu0
        %v1010 = vpop.f32.mrb[0].mxu0
        %v1011 = vadd.f32 0.0, %v1010
        %v1012 = vpop.f32.mrb[0].mxu0
        %1013 = vmatprep.mubr.bf16.mxu0 0
        %1014 = vmatmul.mubr.bf16.gmra.mrb[0].mxu0 %v894
        %v1015 = vpop.f32.mrb[0].mxu0
        %v1016 = vadd.f32 0.0, %v1015
        %v1017 = vpop.f32.mrb[0].mxu0
        %v1018 = vpop.f32.mrb[0].mxu0
        %v1019 = vadd.f32 0.0, %v1018
        %v1020 = vpop.f32.mrb[0].mxu0
        %1021 = vmatprep.mubr.bf16.mxu0 0
        %1022 = vmatmul.mubr.bf16.gmra.mrb[0].mxu0 %v897
        %v1023 = vpop.f32.mrb[0].mxu0
        %v1024 = vadd.f32 0.0, %v1023
        %v1025 = vpop.f32.mrb[0].mxu0
        %v1026 = vpop.f32.mrb[0].mxu0
        %v1027 = vadd.f32 0.0, %v1026
        %v1028 = vpop.f32.mrb[0].mxu0
        %1029 = vmatprep.mubr.bf16.mxu0 0
        %1030 = vmatmul.mubr.bf16.gmra.mrb[0].mxu0 %v900
        %v1031 = vpop.f32.mrb[0].mxu0
        %v1032 = vadd.f32 0.0, %v1031
        %v1033 = vpop.f32.mrb[0].mxu0
        %v1034 = vpop.f32.mrb[0].mxu0
        %v1035 = vadd.f32 0.0, %v1034
        %v1036 = vpop.f32.mrb[0].mxu0
        %1037 = vmatprep.mubr.bf16.mxu0 0
        %1038 = vmatmul.mubr.bf16.gmra.mrb[0].mxu0 %v903
        %v1039 = vpop.f32.mrb[0].mxu0
        %v1040 = vadd.f32 0.0, %v1039
        %v1041 = vpop.f32.mrb[0].mxu0
        %v1042 = vpop.f32.mrb[0].mxu0
        %v1043 = vadd.f32 0.0, %v1042
        %v1044 = vpop.f32.mrb[0].mxu0
        %1045 = vmatprep.mubr.bf16.mxu0 0
        %1046 = vmatmul.mubr.bf16.gmra.mrb[0].mxu0 %v906
        %v1047 = vpop.f32.mrb[0].mxu0
        %v1048 = vadd.f32 0.0, %v1047
        %v1049 = vpop.f32.mrb[0].mxu0
        %v1050 = vpop.f32.mrb[0].mxu0
        %v1051 = vadd.f32 0.0, %v1050
        %v1052 = vpop.f32.mrb[0].mxu0
        %1053 = vmatprep.mubr.bf16.mxu0 0
        %1054 = vmatmul.mubr.bf16.gmra.mrb[0].mxu0 %v909
        %v1055 = vpop.f32.mrb[0].mxu0
        %v1056 = vadd.f32 0.0, %v1055
        %v1057 = vpop.f32.mrb[0].mxu0
        %v1058 = vpop.f32.mrb[0].mxu0
        %v1059 = vadd.f32 0.0, %v1058
        %v1060 = vpop.f32.mrb[0].mxu0
        %1061 = vmatprep.mubr.bf16.mxu0 0
        %1062 = vmatmul.mubr.bf16.gmra.mrb[0].mxu0 %v912
        %v1063 = vpop.f32.mrb[0].mxu0
        %v1064 = vadd.f32 0.0, %v1063
        %v1065 = vpop.f32.mrb[0].mxu0
        %v1066 = vpop.f32.mrb[0].mxu0
        %v1067 = vadd.f32 0.0, %v1066
        %v1068 = vpop.f32.mrb[0].mxu0
        %1069 = vmatprep.mubr.bf16.mxu0 0
        %1070 = vmatmul.mubr.bf16.gmra.mrb[0].mxu0 %v915
        %v1071 = vpop.f32.mrb[0].mxu0
        %v1072 = vadd.f32 0.0, %v1071
        %v1073 = vpop.f32.mrb[0].mxu0
        %v1074 = vpop.f32.mrb[0].mxu0
        %v1075 = vadd.f32 0.0, %v1074
        %v1076 = vpop.f32.mrb[0].mxu0
        %1077 = vmatprep.mubr.bf16.mxu0 0
        %1078 = vmatmul.mubr.bf16.gmra.mrb[0].mxu0 %v918
        %v1079 = vpop.f32.mrb[0].mxu0
        %v1080 = vadd.f32 0.0, %v1079
        %v1081 = vpop.f32.mrb[0].mxu0
        %v1082 = vpop.f32.mrb[0].mxu0
        %v1083 = vadd.f32 0.0, %v1082
        %v1084 = vpop.f32.mrb[0].mxu0
        %1085 = vmatprep.mubr.bf16.mxu0 0
        %1086 = vmatmul.mubr.bf16.gmra.mrb[0].mxu0 %v921
        %v1087 = vpop.f32.mrb[0].mxu0
        %v1088 = vadd.f32 0.0, %v1087
        %v1089 = vpop.f32.mrb[0].mxu0
        %v1090 = vpop.f32.mrb[0].mxu0
        %v1091 = vadd.f32 0.0, %v1090
        %v1092 = vpop.f32.mrb[0].mxu0
        %1093 = vmatprep.mubr.bf16.mxu0 0
        %1094 = vmatmul.mubr.bf16.gmra.mrb[0].mxu0 %v924
        %v1095 = vpop.f32.mrb[0].mxu0
        %v1096 = vadd.f32 0.0, %v1095
        %v1097 = vpop.f32.mrb[0].mxu0
        %v1098 = vpop.f32.mrb[0].mxu0
        %v1099 = vadd.f32 0.0, %v1098
        %v1100 = vpop.f32.mrb[0].mxu0
        %1101 = vmatprep.mubr.bf16.mxu0 0
        %1102 = vmatmul.mubr.bf16.gmra.mrb[0].mxu0 %v927
        %v1103 = vpop.f32.mrb[0].mxu0
        %v1104 = vadd.f32 0.0, %v1103
        %v1105 = vpop.f32.mrb[0].mxu0
        %v1106 = vpop.f32.mrb[0].mxu0
        %v1107 = vadd.f32 0.0, %v1106
        %v1108 = vpop.f32.mrb[0].mxu0
        %1109 = vmatprep.mubr.bf16.mxu0 0
        %1110 = vmatmul.mubr.bf16.gmra.mrb[0].mxu0 %v930
        %v1111 = vpop.f32.mrb[0].mxu0
        %v1112 = vadd.f32 0.0, %v1111
        %v1113 = vpop.f32.mrb[0].mxu0
        %v1114 = vpop.f32.mrb[0].mxu0
        %v1115 = vadd.f32 0.0, %v1114
        %v1116 = vpop.f32.mrb[0].mxu0
        %1117 = vmatprep.mubr.bf16.mxu0 0
        %1118 = vmatmul.mubr.bf16.gmra.mrb[0].mxu0 %v933
        %v1119 = vpop.f32.mrb[0].mxu0
        %v1120 = vadd.f32 0.0, %v1119
        %v1121 = vpop.f32.mrb[0].mxu0
        %v1122 = vpop.f32.mrb[0].mxu0
        %v1123 = vadd.f32 0.0, %v1122
        %v1124 = vpop.f32.mrb[0].mxu0
        %1125 = vmatprep.mubr.bf16.mxu0 0
        %1126 = vmatmul.mubr.bf16.gmra.mrb[0].mxu0 %v936
        %v1127 = vpop.f32.mrb[0].mxu0
        %v1128 = vadd.f32 0.0, %v1127
        %v1129 = vpop.f32.mrb[0].mxu0
        %v1130 = vpop.f32.mrb[0].mxu0
        %v1131 = vadd.f32 0.0, %v1130
        %v1132 = vpop.f32.mrb[0].mxu0
        %1133 = vmatprep.mubr.bf16.mxu0 0
        %1134 = vmatmul.mubr.bf16.gmra.mrb[0].mxu0 %v939
        %v1135 = vpop.f32.mrb[0].mxu0
        %v1136 = vadd.f32 0.0, %v1135
        %v1137 = vpop.f32.mrb[0].mxu0
        %v1138 = vpop.f32.mrb[0].mxu0
        %v1139 = vadd.f32 0.0, %v1138
        %v1140 = vpop.f32.mrb[0].mxu0
        %1141 = vmatprep.mubr.bf16.mxu0 0
        %1142 = vmatmul.mubr.bf16.gmra.mrb[0].mxu0 %v942
        %v1143 = vpop.f32.mrb[0].mxu0
        %v1144 = vadd.f32 0.0, %v1143
        %v1145 = vpop.f32.mrb[0].mxu0
        %v1146 = vpop.f32.mrb[0].mxu0
        %v1147 = vadd.f32 0.0, %v1146
        %v1148 = vpop.f32.mrb[0].mxu0
        %1149 = vmatprep.mubr.bf16.mxu0 0
        %1150 = vmatmul.mubr.bf16.gmra.mrb[0].mxu0 %v945
        %v1151 = vpop.f32.mrb[0].mxu0
        %v1152 = vadd.f32 0.0, %v1151
        %v1153 = vpop.f32.mrb[0].mxu0
        %v1154 = vpop.f32.mrb[0].mxu0
        %v1155 = vadd.f32 0.0, %v1154
        %v1156 = vpop.f32.mrb[0].mxu0
        %1157 = vmatprep.mubr.bf16.mxu0 0
        %1158 = vmatmul.mubr.bf16.gmra.mrb[0].mxu0 %v948
        %v1159 = vpop.f32.mrb[0].mxu0
        %v1160 = vadd.f32 0.0, %v1159
        %v1161 = vpop.f32.mrb[0].mxu0
        %v1162 = vpop.f32.mrb[0].mxu0
        %v1163 = vadd.f32 0.0, %v1162
        %v1164 = vpop.f32.mrb[0].mxu0
        %1165 = vdwg.mxu0
        %1166 = vst [vmem:[#allocation3] sm:$0xff] %v992
        %1167 = vst [vmem:[#allocation3 + $0x8] sm:$0xff] %v995
        %1168 = vst [vmem:[#allocation3 + $0x10] sm:$0xff] %v1000
        %1169 = vst [vmem:[#allocation3 + $0x18] sm:$0xff] %v1003
        %1170 = vst [vmem:[#allocation3 + $0x20] sm:$0xff] %v1008
        %1171 = vst [vmem:[#allocation3 + $0x28] sm:$0xff] %v1011
        %1172 = vst [vmem:[#allocation3 + $0x30] sm:$0xff] %v1016
        %1173 = vst [vmem:[#allocation3 + $0x38] sm:$0xff] %v1019
        %1174 = vst [vmem:[#allocation3 + $0x40] sm:$0xff] %v1024
        %1175 = vst [vmem:[#allocation3 + $0x48] sm:$0xff] %v1027
        %1176 = vst [vmem:[#allocation3 + $0x50] sm:$0xff] %v1032
        %1177 = vst [vmem:[#allocation3 + $0x58] sm:$0xff] %v1035
        %1178 = vst [vmem:[#allocation3 + $0x60] sm:$0xff] %v1040
        %1179 = vst [vmem:[#allocation3 + $0x68] sm:$0xff] %v1043
        %1180 = vst [vmem:[#allocation3 + $0x70] sm:$0xff] %v1048
        %1181 = vst [vmem:[#allocation3 + $0x78] sm:$0xff] %v1051
        %1182 = vst [vmem:[#allocation3 + $0x80] sm:$0xff] %v1056
        %1183 = vst [vmem:[#allocation3 + $0x88] sm:$0xff] %v1059
        %1184 = vst [vmem:[#allocation3 + $0x90] sm:$0xff] %v1064
        %1185 = vst [vmem:[#allocation3 + $0x98] sm:$0xff] %v1067
        %1186 = vst [vmem:[#allocation3 + $0xa0] sm:$0xff] %v1072
        %1187 = vst [vmem:[#allocation3 + $0xa8] sm:$0xff] %v1075
        %1188 = vst [vmem:[#allocation3 + $0xb0] sm:$0xff] %v1080
        %1189 = vst [vmem:[#allocation3 + $0xb8] sm:$0xff] %v1083
        %1190 = vst [vmem:[#allocation3 + $0xc0] sm:$0xff] %v1088
        %1191 = vst [vmem:[#allocation3 + $0xc8] sm:$0xff] %v1091
        %1192 = vst [vmem:[#allocation3 + $0xd0] sm:$0xff] %v1096
        %1193 = vst [vmem:[#allocation3 + $0xd8] sm:$0xff] %v1099
        %1194 = vst [vmem:[#allocation3 + $0xe0] sm:$0xff] %v1104
        %1195 = vst [vmem:[#allocation3 + $0xe8] sm:$0xff] %v1107
        %1196 = vst [vmem:[#allocation3 + $0xf0] sm:$0xff] %v1112
        %1197 = vst [vmem:[#allocation3 + $0xf8] sm:$0xff] %v1115
        %1198 = vst [vmem:[#allocation3 + $0x100] sm:$0xff] %v1120
        %1199 = vst [vmem:[#allocation3 + $0x108] sm:$0xff] %v1123
        %1200 = vst [vmem:[#allocation3 + $0x110] sm:$0xff] %v1128
        %1201 = vst [vmem:[#allocation3 + $0x118] sm:$0xff] %v1131
        %1202 = vst [vmem:[#allocation3 + $0x120] sm:$0xff] %v1136
        %1203 = vst [vmem:[#allocation3 + $0x128] sm:$0xff] %v1139
        %1204 = vst [vmem:[#allocation3 + $0x130] sm:$0xff] %v1144
        %1205 = vst [vmem:[#allocation3 + $0x138] sm:$0xff] %v1147
        %1206 = vst [vmem:[#allocation3 + $0x140] sm:$0xff] %v1152
        %1207 = vst [vmem:[#allocation3 + $0x148] sm:$0xff] %v1155
        %1208 = vst [vmem:[#allocation3 + $0x150] sm:$0xff] %v1160
        %1209 = vst [vmem:[#allocation3 + $0x158] sm:$0xff] %v1163
        %v1210 = vld [vmem:[#allocation2] sm:$0x80]
        %v1211 = vld [vmem:[#allocation2 + $0x8] sm:$0xff]
        %v1212 = vld [vmem:[#allocation2 + $0x10] sm:$0xff]
        %v1213 = vld [vmem:[#allocation2 + $0x18] sm:$0xff]
        %v1214 = vld [vmem:[#allocation2 + $0x20] sm:$0xff]
        %v1215 = vld [vmem:[#allocation2 + $0x28] sm:$0xff]
        %v1216 = vld [vmem:[#allocation2 + $0x30] sm:$0xff]
        %v1217 = vld [vmem:[#allocation2 + $0x38] sm:$0xff]
        %v1218 = vld [vmem:[#allocation2 + $0x40] sm:$0xff]
        %v1219 = vld [vmem:[#allocation2 + $0x48] sm:$0xff]
        %v1220 = vld [vmem:[#allocation2 + $0x50] sm:$0xff]
        %v1221 = vld [vmem:[#allocation2 + $0x58] sm:$0xff]
        %v1222 = vld [vmem:[#allocation2 + $0x60] sm:$0xff]
        %v1223 = vld [vmem:[#allocation2 + $0x68] sm:$0xff]
        %v1224 = vld [vmem:[#allocation2 + $0x70] sm:$0xff]
        %v1225 = vld [vmem:[#allocation2 + $0x78] sm:$0xff]
        %v1226 = vld [vmem:[#allocation2 + $0x80] sm:$0xff]
        %v1227 = vld [vmem:[#allocation2 + $0x88] sm:$0xff]
        %v1228 = vld [vmem:[#allocation2 + $0x90] sm:$0xff]
        %v1229 = vld [vmem:[#allocation2 + $0x98] sm:$0xff]
        %v1230 = vld [vmem:[#allocation2 + $0xa0] sm:$0xff]
        %v1231 = vld [vmem:[#allocation2 + $0xa8] sm:$0xff]
        %v1232 = vld [vmem:[#allocation2 + $0xb0] sm:$0x7f]
        %s1233 = scalar_lea.vmem %s3, 2
        %v1234 = vld [vmem:[%s1233] sm:$0x3]
        %vm1258 = vcmask 1040384
        %v1259 = vrot.slane %v1210, 7
        %v1260 = vrot.slane %v1211, 7
        %v1261 = vsel %vm1258, %v1259, %v1260
        %v1262 = vrot.slane %v1212, 7
        %v1263 = vsel %vm1258, %v1260, %v1262
        %v1264 = vrot.slane %v1213, 7
        %v1265 = vsel %vm1258, %v1262, %v1264
        %v1266 = vrot.slane %v1214, 7
        %v1267 = vsel %vm1258, %v1264, %v1266
        %v1268 = vrot.slane %v1215, 7
        %v1269 = vsel %vm1258, %v1266, %v1268
        %v1270 = vrot.slane %v1216, 7
        %v1271 = vsel %vm1258, %v1268, %v1270
        %v1272 = vrot.slane %v1217, 7
        %v1273 = vsel %vm1258, %v1270, %v1272
        %v1274 = vrot.slane %v1218, 7
        %v1275 = vsel %vm1258, %v1272, %v1274
        %v1276 = vrot.slane %v1219, 7
        %v1277 = vsel %vm1258, %v1274, %v1276
        %v1278 = vrot.slane %v1220, 7
        %v1279 = vsel %vm1258, %v1276, %v1278
        %v1280 = vrot.slane %v1221, 7
        %v1281 = vsel %vm1258, %v1278, %v1280
        %v1282 = vrot.slane %v1222, 7
        %v1283 = vsel %vm1258, %v1280, %v1282
        %v1284 = vrot.slane %v1223, 7
        %v1285 = vsel %vm1258, %v1282, %v1284
        %v1286 = vrot.slane %v1224, 7
        %v1287 = vsel %vm1258, %v1284, %v1286
        %v1288 = vrot.slane %v1225, 7
        %v1289 = vsel %vm1258, %v1286, %v1288
        %v1290 = vrot.slane %v1226, 7
        %v1291 = vsel %vm1258, %v1288, %v1290
        %v1292 = vrot.slane %v1227, 7
        %v1293 = vsel %vm1258, %v1290, %v1292
        %v1294 = vrot.slane %v1228, 7
        %v1295 = vsel %vm1258, %v1292, %v1294
        %v1296 = vrot.slane %v1229, 7
        %v1297 = vsel %vm1258, %v1294, %v1296
        %v1298 = vrot.slane %v1230, 7
        %v1299 = vsel %vm1258, %v1296, %v1298
        %v1300 = vrot.slane %v1231, 7
        %v1301 = vsel %vm1258, %v1298, %v1300
        %v1302 = vrot.slane %v1232, 7
        %v1303 = vsel %vm1258, %v1300, %v1302
        %v1305 = vsel %vm434, %v1261, 0
        %v1308 = vsel %vm434, %v1263, 0
        %v1311 = vsel %vm434, %v1265, 0
        %v1314 = vsel %vm434, %v1267, 0
        %v1317 = vsel %vm434, %v1269, 0
        %v1320 = vsel %vm434, %v1271, 0
        %v1323 = vsel %vm434, %v1273, 0
        %v1326 = vsel %vm434, %v1275, 0
        %v1329 = vsel %vm434, %v1277, 0
        %v1332 = vsel %vm434, %v1279, 0
        %v1335 = vsel %vm434, %v1281, 0
        %v1338 = vsel %vm434, %v1283, 0
        %v1341 = vsel %vm434, %v1285, 0
        %v1344 = vsel %vm434, %v1287, 0
        %v1347 = vsel %vm434, %v1289, 0
        %v1350 = vsel %vm434, %v1291, 0
        %v1353 = vsel %vm434, %v1293, 0
        %v1356 = vsel %vm434, %v1295, 0
        %v1359 = vsel %vm434, %v1297, 0
        %v1362 = vsel %vm434, %v1299, 0
        %v1365 = vsel %vm434, %v1301, 0
        %v1368 = vsel %vm434, %v1303, 0
        %v1371 = vand.u32 %v1234, %v953
        %1373 = vmatprep.subr.bf16.mxu0 0
        %1374 = vmatpush1.bf16.msra.mxu0 %v1371
        %1375 = vmatprep.subr.bf16.mxu0 0
        %1376 = vmatpush1.bf16.msra.mxu0 0
        %1377 = vmatprep.subr.bf16.mxu0 0
        %1378 = vmatpush1.bf16.msra.mxu0 0
        %1379 = vmatprep.subr.bf16.mxu0 0
        %1380 = vmatpush1.bf16.msra.mxu0 0
        %1381 = vmatprep.subr.bf16.mxu0 0
        %1382 = vmatpush1.bf16.msra.mxu0 0
        %1383 = vmatprep.subr.bf16.mxu0 0
        %1384 = vmatpush1.bf16.msra.mxu0 0
        %1385 = vmatprep.subr.bf16.mxu0 0
        %1386 = vmatpush1.bf16.msra.mxu0 0
        %1387 = vmatprep.subr.bf16.mxu0 0
        %1388 = vmatpush1.bf16.msra.mxu0 0
        %1389 = vmatprep.subr.bf16.mxu0 0
        %1390 = vmatpush1.bf16.msra.mxu0 0
        %1391 = vmatprep.subr.bf16.mxu0 0
        %1392 = vmatpush1.bf16.msra.mxu0 0
        %1393 = vmatprep.subr.bf16.mxu0 0
        %1394 = vmatpush1.bf16.msra.mxu0 0
        %1395 = vmatprep.subr.bf16.mxu0 0
        %1396 = vmatpush1.bf16.msra.mxu0 0
        %1397 = vmatprep.subr.bf16.mxu0 0
        %1398 = vmatpush1.bf16.msra.mxu0 0
        %1399 = vmatprep.subr.bf16.mxu0 0
        %1400 = vmatpush1.bf16.msra.mxu0 0
        %1401 = vmatprep.subr.bf16.mxu0 0
        %1402 = vmatpush1.bf16.msra.mxu0 0
        %1403 = vmatprep.subr.bf16.mxu0 0
        %1404 = vmatpush1.bf16.msra.mxu0 0
        %1405 = vmatprep.mubr.bf16.mxu0 0
        %1406 = vmatmul.mubr.bf16.gmra.mrb[0].mxu0 %v1305
        %v1407 = vpop.f32.mrb[0].mxu0
        %v1408 = vadd.f32 0.0, %v1407
        %v1409 = vpop.f32.mrb[0].mxu0
        %v1410 = vpop.f32.mrb[0].mxu0
        %v1411 = vadd.f32 0.0, %v1410
        %v1412 = vpop.f32.mrb[0].mxu0
        %1413 = vmatprep.mubr.bf16.mxu0 0
        %1414 = vmatmul.mubr.bf16.gmra.mrb[0].mxu0 %v1308
        %v1415 = vpop.f32.mrb[0].mxu0
        %v1416 = vadd.f32 0.0, %v1415
        %v1417 = vpop.f32.mrb[0].mxu0
        %v1418 = vpop.f32.mrb[0].mxu0
        %v1419 = vadd.f32 0.0, %v1418
        %v1420 = vpop.f32.mrb[0].mxu0
        %1421 = vmatprep.mubr.bf16.mxu0 0
        %1422 = vmatmul.mubr.bf16.gmra.mrb[0].mxu0 %v1311
        %v1423 = vpop.f32.mrb[0].mxu0
        %v1424 = vadd.f32 0.0, %v1423
        %v1425 = vpop.f32.mrb[0].mxu0
        %v1426 = vpop.f32.mrb[0].mxu0
        %v1427 = vadd.f32 0.0, %v1426
        %v1428 = vpop.f32.mrb[0].mxu0
        %1429 = vmatprep.mubr.bf16.mxu0 0
        %1430 = vmatmul.mubr.bf16.gmra.mrb[0].mxu0 %v1314
        %v1431 = vpop.f32.mrb[0].mxu0
        %v1432 = vadd.f32 0.0, %v1431
        %v1433 = vpop.f32.mrb[0].mxu0
        %v1434 = vpop.f32.mrb[0].mxu0
        %v1435 = vadd.f32 0.0, %v1434
        %v1436 = vpop.f32.mrb[0].mxu0
        %1437 = vmatprep.mubr.bf16.mxu0 0
        %1438 = vmatmul.mubr.bf16.gmra.mrb[0].mxu0 %v1317
        %v1439 = vpop.f32.mrb[0].mxu0
        %v1440 = vadd.f32 0.0, %v1439
        %v1441 = vpop.f32.mrb[0].mxu0
        %v1442 = vpop.f32.mrb[0].mxu0
        %v1443 = vadd.f32 0.0, %v1442
        %v1444 = vpop.f32.mrb[0].mxu0
        %1445 = vmatprep.mubr.bf16.mxu0 0
        %1446 = vmatmul.mubr.bf16.gmra.mrb[0].mxu0 %v1320
        %v1447 = vpop.f32.mrb[0].mxu0
        %v1448 = vadd.f32 0.0, %v1447
        %v1449 = vpop.f32.mrb[0].mxu0
        %v1450 = vpop.f32.mrb[0].mxu0
        %v1451 = vadd.f32 0.0, %v1450
        %v1452 = vpop.f32.mrb[0].mxu0
        %1453 = vmatprep.mubr.bf16.mxu0 0
        %1454 = vmatmul.mubr.bf16.gmra.mrb[0].mxu0 %v1323
        %v1455 = vpop.f32.mrb[0].mxu0
        %v1456 = vadd.f32 0.0, %v1455
        %v1457 = vpop.f32.mrb[0].mxu0
        %v1458 = vpop.f32.mrb[0].mxu0
        %v1459 = vadd.f32 0.0, %v1458
        %v1460 = vpop.f32.mrb[0].mxu0
        %1461 = vmatprep.mubr.bf16.mxu0 0
        %1462 = vmatmul.mubr.bf16.gmra.mrb[0].mxu0 %v1326
        %v1463 = vpop.f32.mrb[0].mxu0
        %v1464 = vadd.f32 0.0, %v1463
        %v1465 = vpop.f32.mrb[0].mxu0
        %v1466 = vpop.f32.mrb[0].mxu0
        %v1467 = vadd.f32 0.0, %v1466
        %v1468 = vpop.f32.mrb[0].mxu0
        %1469 = vmatprep.mubr.bf16.mxu0 0
        %1470 = vmatmul.mubr.bf16.gmra.mrb[0].mxu0 %v1329
        %v1471 = vpop.f32.mrb[0].mxu0
        %v1472 = vadd.f32 0.0, %v1471
        %v1473 = vpop.f32.mrb[0].mxu0
        %v1474 = vpop.f32.mrb[0].mxu0
        %v1475 = vadd.f32 0.0, %v1474
        %v1476 = vpop.f32.mrb[0].mxu0
        %1477 = vmatprep.mubr.bf16.mxu0 0
        %1478 = vmatmul.mubr.bf16.gmra.mrb[0].mxu0 %v1332
        %v1479 = vpop.f32.mrb[0].mxu0
        %v1480 = vadd.f32 0.0, %v1479
        %v1481 = vpop.f32.mrb[0].mxu0
        %v1482 = vpop.f32.mrb[0].mxu0
        %v1483 = vadd.f32 0.0, %v1482
        %v1484 = vpop.f32.mrb[0].mxu0
        %1485 = vmatprep.mubr.bf16.mxu0 0
        %1486 = vmatmul.mubr.bf16.gmra.mrb[0].mxu0 %v1335
        %v1487 = vpop.f32.mrb[0].mxu0
        %v1488 = vadd.f32 0.0, %v1487
        %v1489 = vpop.f32.mrb[0].mxu0
        %v1490 = vpop.f32.mrb[0].mxu0
        %v1491 = vadd.f32 0.0, %v1490
        %v1492 = vpop.f32.mrb[0].mxu0
        %1493 = vmatprep.mubr.bf16.mxu0 0
        %1494 = vmatmul.mubr.bf16.gmra.mrb[0].mxu0 %v1338
        %v1495 = vpop.f32.mrb[0].mxu0
        %v1496 = vadd.f32 0.0, %v1495
        %v1497 = vpop.f32.mrb[0].mxu0
        %v1498 = vpop.f32.mrb[0].mxu0
        %v1499 = vadd.f32 0.0, %v1498
        %v1500 = vpop.f32.mrb[0].mxu0
        %1501 = vmatprep.mubr.bf16.mxu0 0
        %1502 = vmatmul.mubr.bf16.gmra.mrb[0].mxu0 %v1341
        %v1503 = vpop.f32.mrb[0].mxu0
        %v1504 = vadd.f32 0.0, %v1503
        %v1505 = vpop.f32.mrb[0].mxu0
        %v1506 = vpop.f32.mrb[0].mxu0
        %v1507 = vadd.f32 0.0, %v1506
        %v1508 = vpop.f32.mrb[0].mxu0
        %1509 = vmatprep.mubr.bf16.mxu0 0
        %1510 = vmatmul.mubr.bf16.gmra.mrb[0].mxu0 %v1344
        %v1511 = vpop.f32.mrb[0].mxu0
        %v1512 = vadd.f32 0.0, %v1511
        %v1513 = vpop.f32.mrb[0].mxu0
        %v1514 = vpop.f32.mrb[0].mxu0
        %v1515 = vadd.f32 0.0, %v1514
        %v1516 = vpop.f32.mrb[0].mxu0
        %1517 = vmatprep.mubr.bf16.mxu0 0
        %1518 = vmatmul.mubr.bf16.gmra.mrb[0].mxu0 %v1347
        %v1519 = vpop.f32.mrb[0].mxu0
        %v1520 = vadd.f32 0.0, %v1519
        %v1521 = vpop.f32.mrb[0].mxu0
        %v1522 = vpop.f32.mrb[0].mxu0
        %v1523 = vadd.f32 0.0, %v1522
        %v1524 = vpop.f32.mrb[0].mxu0
        %1525 = vmatprep.mubr.bf16.mxu0 0
        %1526 = vmatmul.mubr.bf16.gmra.mrb[0].mxu0 %v1350
        %v1527 = vpop.f32.mrb[0].mxu0
        %v1528 = vadd.f32 0.0, %v1527
        %v1529 = vpop.f32.mrb[0].mxu0
        %v1530 = vpop.f32.mrb[0].mxu0
        %v1531 = vadd.f32 0.0, %v1530
        %v1532 = vpop.f32.mrb[0].mxu0
        %1533 = vmatprep.mubr.bf16.mxu0 0
        %1534 = vmatmul.mubr.bf16.gmra.mrb[0].mxu0 %v1353
        %v1535 = vpop.f32.mrb[0].mxu0
        %v1536 = vadd.f32 0.0, %v1535
        %v1537 = vpop.f32.mrb[0].mxu0
        %v1538 = vpop.f32.mrb[0].mxu0
        %v1539 = vadd.f32 0.0, %v1538
        %v1540 = vpop.f32.mrb[0].mxu0
        %1541 = vmatprep.mubr.bf16.mxu0 0
        %1542 = vmatmul.mubr.bf16.gmra.mrb[0].mxu0 %v1356
        %v1543 = vpop.f32.mrb[0].mxu0
        %v1544 = vadd.f32 0.0, %v1543
        %v1545 = vpop.f32.mrb[0].mxu0
        %v1546 = vpop.f32.mrb[0].mxu0
        %v1547 = vadd.f32 0.0, %v1546
        %v1548 = vpop.f32.mrb[0].mxu0
        %1549 = vmatprep.mubr.bf16.mxu0 0
        %1550 = vmatmul.mubr.bf16.gmra.mrb[0].mxu0 %v1359
        %v1551 = vpop.f32.mrb[0].mxu0
        %v1552 = vadd.f32 0.0, %v1551
        %v1553 = vpop.f32.mrb[0].mxu0
        %v1554 = vpop.f32.mrb[0].mxu0
        %v1555 = vadd.f32 0.0, %v1554
        %v1556 = vpop.f32.mrb[0].mxu0
        %1557 = vmatprep.mubr.bf16.mxu0 0
        %1558 = vmatmul.mubr.bf16.gmra.mrb[0].mxu0 %v1362
        %v1559 = vpop.f32.mrb[0].mxu0
        %v1560 = vadd.f32 0.0, %v1559
        %v1561 = vpop.f32.mrb[0].mxu0
        %v1562 = vpop.f32.mrb[0].mxu0
        %v1563 = vadd.f32 0.0, %v1562
        %v1564 = vpop.f32.mrb[0].mxu0
        %1565 = vmatprep.mubr.bf16.mxu0 0
        %1566 = vmatmul.mubr.bf16.gmra.mrb[0].mxu0 %v1365
        %v1567 = vpop.f32.mrb[0].mxu0
        %v1568 = vadd.f32 0.0, %v1567
        %v1569 = vpop.f32.mrb[0].mxu0
        %v1570 = vpop.f32.mrb[0].mxu0
        %v1571 = vadd.f32 0.0, %v1570
        %v1572 = vpop.f32.mrb[0].mxu0
        %1573 = vmatprep.mubr.bf16.mxu0 0
        %1574 = vmatmul.mubr.bf16.gmra.mrb[0].mxu0 %v1368
        %v1575 = vpop.f32.mrb[0].mxu0
        %v1576 = vadd.f32 0.0, %v1575
        %v1577 = vpop.f32.mrb[0].mxu0
        %v1578 = vpop.f32.mrb[0].mxu0
        %v1579 = vadd.f32 0.0, %v1578
        %v1580 = vpop.f32.mrb[0].mxu0
        %1581 = vdwg.mxu0
        %v1582 = vld [vmem:[#allocation3] sm:$0xff]
        %v1583 = vld [vmem:[#allocation3 + $0x8] sm:$0xff]
        %v1584 = vld [vmem:[#allocation3 + $0x10] sm:$0xff]
        %v1585 = vld [vmem:[#allocation3 + $0x18] sm:$0xff]
        %v1586 = vld [vmem:[#allocation3 + $0x20] sm:$0xff]
        %v1587 = vld [vmem:[#allocation3 + $0x28] sm:$0xff]
        %v1588 = vld [vmem:[#allocation3 + $0x30] sm:$0xff]
        %v1589 = vld [vmem:[#allocation3 + $0x38] sm:$0xff]
        %v1590 = vld [vmem:[#allocation3 + $0x40] sm:$0xff]
        %v1591 = vld [vmem:[#allocation3 + $0x48] sm:$0xff]
        %v1592 = vld [vmem:[#allocation3 + $0x50] sm:$0xff]
        %v1593 = vld [vmem:[#allocation3 + $0x58] sm:$0xff]
        %v1594 = vld [vmem:[#allocation3 + $0x60] sm:$0xff]
        %v1595 = vld [vmem:[#allocation3 + $0x68] sm:$0xff]
        %v1596 = vld [vmem:[#allocation3 + $0x70] sm:$0xff]
        %v1597 = vld [vmem:[#allocation3 + $0x78] sm:$0xff]
        %v1598 = vld [vmem:[#allocation3 + $0x80] sm:$0xff]
        %v1599 = vld [vmem:[#allocation3 + $0x88] sm:$0xff]
        %v1600 = vld [vmem:[#allocation3 + $0x90] sm:$0xff]
        %v1601 = vld [vmem:[#allocation3 + $0x98] sm:$0xff]
        %v1602 = vld [vmem:[#allocation3 + $0xa0] sm:$0xff]
        %v1603 = vld [vmem:[#allocation3 + $0xa8] sm:$0xff]
        %v1604 = vld [vmem:[#allocation3 + $0xb0] sm:$0xff]
        %v1605 = vld [vmem:[#allocation3 + $0xb8] sm:$0xff]
        %v1606 = vld [vmem:[#allocation3 + $0xc0] sm:$0xff]
        %v1607 = vld [vmem:[#allocation3 + $0xc8] sm:$0xff]
        %v1608 = vld [vmem:[#allocation3 + $0xd0] sm:$0xff]
        %v1609 = vld [vmem:[#allocation3 + $0xd8] sm:$0xff]
        %v1610 = vld [vmem:[#allocation3 + $0xe0] sm:$0xff]
        %v1611 = vld [vmem:[#allocation3 + $0xe8] sm:$0xff]
        %v1612 = vld [vmem:[#allocation3 + $0xf0] sm:$0xff]
        %v1613 = vld [vmem:[#allocation3 + $0xf8] sm:$0xff]
        %v1614 = vld [vmem:[#allocation3 + $0x100] sm:$0xff]
        %v1615 = vld [vmem:[#allocation3 + $0x108] sm:$0xff]
        %v1616 = vld [vmem:[#allocation3 + $0x110] sm:$0xff]
        %v1617 = vld [vmem:[#allocation3 + $0x118] sm:$0xff]
        %v1618 = vld [vmem:[#allocation3 + $0x120] sm:$0xff]
        %v1619 = vld [vmem:[#allocation3 + $0x128] sm:$0xff]
        %v1620 = vld [vmem:[#allocation3 + $0x130] sm:$0xff]
        %v1621 = vld [vmem:[#allocation3 + $0x138] sm:$0xff]
        %v1622 = vld [vmem:[#allocation3 + $0x140] sm:$0xff]
        %v1623 = vld [vmem:[#allocation3 + $0x148] sm:$0xff]
        %v1624 = vld [vmem:[#allocation3 + $0x150] sm:$0xff]
        %v1625 = vld [vmem:[#allocation3 + $0x158] sm:$0xff]
        %v1626 = vadd.f32 %v1582, %v1408
        %v1627 = vadd.f32 %v1583, %v1411
        %v1628 = vadd.f32 %v1584, %v1416
        %v1629 = vadd.f32 %v1585, %v1419
        %v1630 = vadd.f32 %v1586, %v1424
        %v1631 = vadd.f32 %v1587, %v1427
        %v1632 = vadd.f32 %v1588, %v1432
        %v1633 = vadd.f32 %v1589, %v1435
        %v1634 = vadd.f32 %v1590, %v1440
        %v1635 = vadd.f32 %v1591, %v1443
        %v1636 = vadd.f32 %v1592, %v1448
        %v1637 = vadd.f32 %v1593, %v1451
        %v1638 = vadd.f32 %v1594, %v1456
        %v1639 = vadd.f32 %v1595, %v1459
        %v1640 = vadd.f32 %v1596, %v1464
        %v1641 = vadd.f32 %v1597, %v1467
        %v1642 = vadd.f32 %v1598, %v1472
        %v1643 = vadd.f32 %v1599, %v1475
        %v1644 = vadd.f32 %v1600, %v1480
        %v1645 = vadd.f32 %v1601, %v1483
        %v1646 = vadd.f32 %v1602, %v1488
        %v1647 = vadd.f32 %v1603, %v1491
        %v1648 = vadd.f32 %v1604, %v1496
        %v1649 = vadd.f32 %v1605, %v1499
        %v1650 = vadd.f32 %v1606, %v1504
        %v1651 = vadd.f32 %v1607, %v1507
        %v1652 = vadd.f32 %v1608, %v1512
        %v1653 = vadd.f32 %v1609, %v1515
        %v1654 = vadd.f32 %v1610, %v1520
        %v1655 = vadd.f32 %v1611, %v1523
        %v1656 = vadd.f32 %v1612, %v1528
        %v1657 = vadd.f32 %v1613, %v1531
        %v1658 = vadd.f32 %v1614, %v1536
        %v1659 = vadd.f32 %v1615, %v1539
        %v1660 = vadd.f32 %v1616, %v1544
        %v1661 = vadd.f32 %v1617, %v1547
        %v1662 = vadd.f32 %v1618, %v1552
        %v1663 = vadd.f32 %v1619, %v1555
        %v1664 = vadd.f32 %v1620, %v1560
        %v1665 = vadd.f32 %v1621, %v1563
        %v1666 = vadd.f32 %v1622, %v1568
        %v1667 = vadd.f32 %v1623, %v1571
        %v1668 = vadd.f32 %v1624, %v1576
        %v1669 = vadd.f32 %v1625, %v1579
        %1670 = vst [vmem:[#allocation3] sm:$0xff] %v1626
        %1671 = vst [vmem:[#allocation3 + $0x8] sm:$0xff] %v1627
        %1672 = vst [vmem:[#allocation3 + $0x10] sm:$0xff] %v1628
        %1673 = vst [vmem:[#allocation3 + $0x18] sm:$0xff] %v1629
        %1674 = vst [vmem:[#allocation3 + $0x20] sm:$0xff] %v1630
        %1675 = vst [vmem:[#allocation3 + $0x28] sm:$0xff] %v1631
        %1676 = vst [vmem:[#allocation3 + $0x30] sm:$0xff] %v1632
        %1677 = vst [vmem:[#allocation3 + $0x38] sm:$0xff] %v1633
        %1678 = vst [vmem:[#allocation3 + $0x40] sm:$0xff] %v1634
        %1679 = vst [vmem:[#allocation3 + $0x48] sm:$0xff] %v1635
        %1680 = vst [vmem:[#allocation3 + $0x50] sm:$0xff] %v1636
        %1681 = vst [vmem:[#allocation3 + $0x58] sm:$0xff] %v1637
        %1682 = vst [vmem:[#allocation3 + $0x60] sm:$0xff] %v1638
        %1683 = vst [vmem:[#allocation3 + $0x68] sm:$0xff] %v1639
        %1684 = vst [vmem:[#allocation3 + $0x70] sm:$0xff] %v1640
        %1685 = vst [vmem:[#allocation3 + $0x78] sm:$0xff] %v1641
        %1686 = vst [vmem:[#allocation3 + $0x80] sm:$0xff] %v1642
        %1687 = vst [vmem:[#allocation3 + $0x88] sm:$0xff] %v1643
        %1688 = vst [vmem:[#allocation3 + $0x90] sm:$0xff] %v1644
        %1689 = vst [vmem:[#allocation3 + $0x98] sm:$0xff] %v1645
        %1690 = vst [vmem:[#allocation3 + $0xa0] sm:$0xff] %v1646
        %1691 = vst [vmem:[#allocation3 + $0xa8] sm:$0xff] %v1647
        %1692 = vst [vmem:[#allocation3 + $0xb0] sm:$0xff] %v1648
        %1693 = vst [vmem:[#allocation3 + $0xb8] sm:$0xff] %v1649
        %1694 = vst [vmem:[#allocation3 + $0xc0] sm:$0xff] %v1650
        %1695 = vst [vmem:[#allocation3 + $0xc8] sm:$0xff] %v1651
        %1696 = vst [vmem:[#allocation3 + $0xd0] sm:$0xff] %v1652
        %1697 = vst [vmem:[#allocation3 + $0xd8] sm:$0xff] %v1653
        %1698 = vst [vmem:[#allocation3 + $0xe0] sm:$0xff] %v1654
        %1699 = vst [vmem:[#allocation3 + $0xe8] sm:$0xff] %v1655
        %1700 = vst [vmem:[#allocation3 + $0xf0] sm:$0xff] %v1656
        %1701 = vst [vmem:[#allocation3 + $0xf8] sm:$0xff] %v1657
        %1702 = vst [vmem:[#allocation3 + $0x100] sm:$0xff] %v1658
        %1703 = vst [vmem:[#allocation3 + $0x108] sm:$0xff] %v1659
        %1704 = vst [vmem:[#allocation3 + $0x110] sm:$0xff] %v1660
        %1705 = vst [vmem:[#allocation3 + $0x118] sm:$0xff] %v1661
        %1706 = vst [vmem:[#allocation3 + $0x120] sm:$0xff] %v1662
        %1707 = vst [vmem:[#allocation3 + $0x128] sm:$0xff] %v1663
        %1708 = vst [vmem:[#allocation3 + $0x130] sm:$0xff] %v1664
        %1709 = vst [vmem:[#allocation3 + $0x138] sm:$0xff] %v1665
        %1710 = vst [vmem:[#allocation3 + $0x140] sm:$0xff] %v1666
        %1711 = vst [vmem:[#allocation3 + $0x148] sm:$0xff] %v1667
        %1712 = vst [vmem:[#allocation3 + $0x150] sm:$0xff] %v1668
        %1713 = vst [vmem:[#allocation3 + $0x158] sm:$0xff] %v1669
        %v1714 = vld [vmem:[#allocation2] sm:$0x80]
        %v1715 = vld [vmem:[#allocation2 + $0x8] sm:$0xff]
        %v1716 = vld [vmem:[#allocation2 + $0x10] sm:$0xff]
        %v1717 = vld [vmem:[#allocation2 + $0x18] sm:$0xff]
        %v1718 = vld [vmem:[#allocation2 + $0x20] sm:$0xff]
        %v1719 = vld [vmem:[#allocation2 + $0x28] sm:$0xff]
        %v1720 = vld [vmem:[#allocation2 + $0x30] sm:$0xff]
        %v1721 = vld [vmem:[#allocation2 + $0x38] sm:$0xff]
        %v1722 = vld [vmem:[#allocation2 + $0x40] sm:$0xff]
        %v1723 = vld [vmem:[#allocation2 + $0x48] sm:$0xff]
        %v1724 = vld [vmem:[#allocation2 + $0x50] sm:$0xff]
        %v1725 = vld [vmem:[#allocation2 + $0x58] sm:$0xff]
        %v1726 = vld [vmem:[#allocation2 + $0x60] sm:$0xff]
        %v1727 = vld [vmem:[#allocation2 + $0x68] sm:$0xff]
        %v1728 = vld [vmem:[#allocation2 + $0x70] sm:$0xff]
        %v1729 = vld [vmem:[#allocation2 + $0x78] sm:$0xff]
        %v1730 = vld [vmem:[#allocation2 + $0x80] sm:$0xff]
        %v1731 = vld [vmem:[#allocation2 + $0x88] sm:$0xff]
        %v1732 = vld [vmem:[#allocation2 + $0x90] sm:$0xff]
        %v1733 = vld [vmem:[#allocation2 + $0x98] sm:$0xff]
        %v1734 = vld [vmem:[#allocation2 + $0xa0] sm:$0xff]
        %v1735 = vld [vmem:[#allocation2 + $0xa8] sm:$0xff]
        %v1736 = vld [vmem:[#allocation2 + $0xb0] sm:$0xff]
        %s1737 = scalar_lea.vmem %s3, 4
        %v1738 = vld [vmem:[%s1737] sm:$0x3]
        %vm1739 = vsmask.f32 256
        %v1741 = vshrl.u32 %v1714, 16
        %v1743 = vrot.slane %v1741, 7
        %v1745 = vshrl.u32 %v1715, 16
        %v1747 = vrot.slane %v1745, 7
        %v1748 = vshll.u32 %v1715, 16
        %v1750 = vor.u32 %v1747, %v1748
        %v1751 = vsel %vm1739, %v1743, %v1750
        %v1753 = vshrl.u32 %v1716, 16
        %v1755 = vrot.slane %v1753, 7
        %v1756 = vshll.u32 %v1716, 16
        %v1758 = vor.u32 %v1755, %v1756
        %v1759 = vsel %vm1739, %v1747, %v1758
        %v1761 = vshrl.u32 %v1717, 16
        %v1763 = vrot.slane %v1761, 7
        %v1764 = vshll.u32 %v1717, 16
        %v1766 = vor.u32 %v1763, %v1764
        %v1767 = vsel %vm1739, %v1755, %v1766
        %v1769 = vshrl.u32 %v1718, 16
        %v1771 = vrot.slane %v1769, 7
        %v1772 = vshll.u32 %v1718, 16
        %v1774 = vor.u32 %v1771, %v1772
        %v1775 = vsel %vm1739, %v1763, %v1774
        %v1777 = vshrl.u32 %v1719, 16
        %v1779 = vrot.slane %v1777, 7
        %v1780 = vshll.u32 %v1719, 16
        %v1782 = vor.u32 %v1779, %v1780
        %v1783 = vsel %vm1739, %v1771, %v1782
        %v1785 = vshrl.u32 %v1720, 16
        %v1787 = vrot.slane %v1785, 7
        %v1788 = vshll.u32 %v1720, 16
        %v1790 = vor.u32 %v1787, %v1788
        %v1791 = vsel %vm1739, %v1779, %v1790
        %v1793 = vshrl.u32 %v1721, 16
        %v1795 = vrot.slane %v1793, 7
        %v1796 = vshll.u32 %v1721, 16
        %v1798 = vor.u32 %v1795, %v1796
        %v1799 = vsel %vm1739, %v1787, %v1798
        %v1801 = vshrl.u32 %v1722, 16
        %v1803 = vrot.slane %v1801, 7
        %v1804 = vshll.u32 %v1722, 16
        %v1806 = vor.u32 %v1803, %v1804
        %v1807 = vsel %vm1739, %v1795, %v1806
        %v1809 = vshrl.u32 %v1723, 16
        %v1811 = vrot.slane %v1809, 7
        %v1812 = vshll.u32 %v1723, 16
        %v1814 = vor.u32 %v1811, %v1812
        %v1815 = vsel %vm1739, %v1803, %v1814
        %v1817 = vshrl.u32 %v1724, 16
        %v1819 = vrot.slane %v1817, 7
        %v1820 = vshll.u32 %v1724, 16
        %v1822 = vor.u32 %v1819, %v1820
        %v1823 = vsel %vm1739, %v1811, %v1822
        %v1825 = vshrl.u32 %v1725, 16
        %v1827 = vrot.slane %v1825, 7
        %v1828 = vshll.u32 %v1725, 16
        %v1830 = vor.u32 %v1827, %v1828
        %v1831 = vsel %vm1739, %v1819, %v1830
        %v1833 = vshrl.u32 %v1726, 16
        %v1835 = vrot.slane %v1833, 7
        %v1836 = vshll.u32 %v1726, 16
        %v1838 = vor.u32 %v1835, %v1836
        %v1839 = vsel %vm1739, %v1827, %v1838
        %v1841 = vshrl.u32 %v1727, 16
        %v1843 = vrot.slane %v1841, 7
        %v1844 = vshll.u32 %v1727, 16
        %v1846 = vor.u32 %v1843, %v1844
        %v1847 = vsel %vm1739, %v1835, %v1846
        %v1849 = vshrl.u32 %v1728, 16
        %v1851 = vrot.slane %v1849, 7
        %v1852 = vshll.u32 %v1728, 16
        %v1854 = vor.u32 %v1851, %v1852
        %v1855 = vsel %vm1739, %v1843, %v1854
        %v1857 = vshrl.u32 %v1729, 16
        %v1859 = vrot.slane %v1857, 7
        %v1860 = vshll.u32 %v1729, 16
        %v1862 = vor.u32 %v1859, %v1860
        %v1863 = vsel %vm1739, %v1851, %v1862
        %v1865 = vshrl.u32 %v1730, 16
        %v1867 = vrot.slane %v1865, 7
        %v1868 = vshll.u32 %v1730, 16
        %v1870 = vor.u32 %v1867, %v1868
        %v1871 = vsel %vm1739, %v1859, %v1870
        %v1873 = vshrl.u32 %v1731, 16
        %v1875 = vrot.slane %v1873, 7
        %v1876 = vshll.u32 %v1731, 16
        %v1878 = vor.u32 %v1875, %v1876
        %v1879 = vsel %vm1739, %v1867, %v1878
        %v1881 = vshrl.u32 %v1732, 16
        %v1883 = vrot.slane %v1881, 7
        %v1884 = vshll.u32 %v1732, 16
        %v1886 = vor.u32 %v1883, %v1884
        %v1887 = vsel %vm1739, %v1875, %v1886
        %v1889 = vshrl.u32 %v1733, 16
        %v1891 = vrot.slane %v1889, 7
        %v1892 = vshll.u32 %v1733, 16
        %v1894 = vor.u32 %v1891, %v1892
        %v1895 = vsel %vm1739, %v1883, %v1894
        %v1897 = vshrl.u32 %v1734, 16
        %v1899 = vrot.slane %v1897, 7
        %v1900 = vshll.u32 %v1734, 16
        %v1902 = vor.u32 %v1899, %v1900
        %v1903 = vsel %vm1739, %v1891, %v1902
        %v1905 = vshrl.u32 %v1735, 16
        %v1907 = vrot.slane %v1905, 7
        %v1908 = vshll.u32 %v1735, 16
        %v1910 = vor.u32 %v1907, %v1908
        %v1911 = vsel %vm1739, %v1899, %v1910
        %v1913 = vshrl.u32 %v1736, 16
        %v1915 = vrot.slane %v1913, 7
        %v1916 = vshll.u32 %v1736, 16
        %v1918 = vor.u32 %v1915, %v1916
        %v1919 = vsel %vm1739, %v1907, %v1918
        %v1921 = vsel %vm434, %v1751, 0
        %v1924 = vsel %vm434, %v1759, 0
        %v1927 = vsel %vm434, %v1767, 0
        %v1930 = vsel %vm434, %v1775, 0
        %v1933 = vsel %vm434, %v1783, 0
        %v1936 = vsel %vm434, %v1791, 0
        %v1939 = vsel %vm434, %v1799, 0
        %v1942 = vsel %vm434, %v1807, 0
        %v1945 = vsel %vm434, %v1815, 0
        %v1948 = vsel %vm434, %v1823, 0
        %v1951 = vsel %vm434, %v1831, 0
        %v1954 = vsel %vm434, %v1839, 0
        %v1957 = vsel %vm434, %v1847, 0
        %v1960 = vsel %vm434, %v1855, 0
        %v1963 = vsel %vm434, %v1863, 0
        %v1966 = vsel %vm434, %v1871, 0
        %v1969 = vsel %vm434, %v1879, 0
        %v1972 = vsel %vm434, %v1887, 0
        %v1975 = vsel %vm434, %v1895, 0
        %v1978 = vsel %vm434, %v1903, 0
        %v1981 = vsel %vm434, %v1911, 0
        %v1984 = vsel %vm434, %v1919, 0
        %v1987 = vand.u32 %v1738, %v953
        %1989 = vmatprep.subr.bf16.mxu0 0
        %1990 = vmatpush1.bf16.msra.mxu0 %v1987
        %1991 = vmatprep.subr.bf16.mxu0 0
        %1992 = vmatpush1.bf16.msra.mxu0 0
        %1993 = vmatprep.subr.bf16.mxu0 0
        %1994 = vmatpush1.bf16.msra.mxu0 0
        %1995 = vmatprep.subr.bf16.mxu0 0
        %1996 = vmatpush1.bf16.msra.mxu0 0
        %1997 = vmatprep.subr.bf16.mxu0 0
        %1998 = vmatpush1.bf16.msra.mxu0 0
        %1999 = vmatprep.subr.bf16.mxu0 0
        %2000 = vmatpush1.bf16.msra.mxu0 0
        %2001 = vmatprep.subr.bf16.mxu0 0
        %2002 = vmatpush1.bf16.msra.mxu0 0
        %2003 = vmatprep.subr.bf16.mxu0 0
        %2004 = vmatpush1.bf16.msra.mxu0 0
        %2005 = vmatprep.subr.bf16.mxu0 0
        %2006 = vmatpush1.bf16.msra.mxu0 0
        %2007 = vmatprep.subr.bf16.mxu0 0
        %2008 = vmatpush1.bf16.msra.mxu0 0
        %2009 = vmatprep.subr.bf16.mxu0 0
        %2010 = vmatpush1.bf16.msra.mxu0 0
        %2011 = vmatprep.subr.bf16.mxu0 0
        %2012 = vmatpush1.bf16.msra.mxu0 0
        %2013 = vmatprep.subr.bf16.mxu0 0
        %2014 = vmatpush1.bf16.msra.mxu0 0
        %2015 = vmatprep.subr.bf16.mxu0 0
        %2016 = vmatpush1.bf16.msra.mxu0 0
        %2017 = vmatprep.subr.bf16.mxu0 0
        %2018 = vmatpush1.bf16.msra.mxu0 0
        %2019 = vmatprep.subr.bf16.mxu0 0
        %2020 = vmatpush1.bf16.msra.mxu0 0
        %2021 = vmatprep.mubr.bf16.mxu0 0
        %2022 = vmatmul.mubr.bf16.gmra.mrb[0].mxu0 %v1921
        %v2023 = vpop.f32.mrb[0].mxu0
        %v2024 = vadd.f32 0.0, %v2023
        %v2025 = vpop.f32.mrb[0].mxu0
        %v2026 = vpop.f32.mrb[0].mxu0
        %v2027 = vadd.f32 0.0, %v2026
        %v2028 = vpop.f32.mrb[0].mxu0
        %2029 = vmatprep.mubr.bf16.mxu0 0
        %2030 = vmatmul.mubr.bf16.gmra.mrb[0].mxu0 %v1924
        %v2031 = vpop.f32.mrb[0].mxu0
        %v2032 = vadd.f32 0.0, %v2031
        %v2033 = vpop.f32.mrb[0].mxu0
        %v2034 = vpop.f32.mrb[0].mxu0
        %v2035 = vadd.f32 0.0, %v2034
        %v2036 = vpop.f32.mrb[0].mxu0
        %2037 = vmatprep.mubr.bf16.mxu0 0
        %2038 = vmatmul.mubr.bf16.gmra.mrb[0].mxu0 %v1927
        %v2039 = vpop.f32.mrb[0].mxu0
        %v2040 = vadd.f32 0.0, %v2039
        %v2041 = vpop.f32.mrb[0].mxu0
        %v2042 = vpop.f32.mrb[0].mxu0
        %v2043 = vadd.f32 0.0, %v2042
        %v2044 = vpop.f32.mrb[0].mxu0
        %2045 = vmatprep.mubr.bf16.mxu0 0
        %2046 = vmatmul.mubr.bf16.gmra.mrb[0].mxu0 %v1930
        %v2047 = vpop.f32.mrb[0].mxu0
        %v2048 = vadd.f32 0.0, %v2047
        %v2049 = vpop.f32.mrb[0].mxu0
        %v2050 = vpop.f32.mrb[0].mxu0
        %v2051 = vadd.f32 0.0, %v2050
        %v2052 = vpop.f32.mrb[0].mxu0
        %2053 = vmatprep.mubr.bf16.mxu0 0
        %2054 = vmatmul.mubr.bf16.gmra.mrb[0].mxu0 %v1933
        %v2055 = vpop.f32.mrb[0].mxu0
        %v2056 = vadd.f32 0.0, %v2055
        %v2057 = vpop.f32.mrb[0].mxu0
        %v2058 = vpop.f32.mrb[0].mxu0
        %v2059 = vadd.f32 0.0, %v2058
        %v2060 = vpop.f32.mrb[0].mxu0
        %2061 = vmatprep.mubr.bf16.mxu0 0
        %2062 = vmatmul.mubr.bf16.gmra.mrb[0].mxu0 %v1936
        %v2063 = vpop.f32.mrb[0].mxu0
        %v2064 = vadd.f32 0.0, %v2063
        %v2065 = vpop.f32.mrb[0].mxu0
        %v2066 = vpop.f32.mrb[0].mxu0
        %v2067 = vadd.f32 0.0, %v2066
        %v2068 = vpop.f32.mrb[0].mxu0
        %2069 = vmatprep.mubr.bf16.mxu0 0
        %2070 = vmatmul.mubr.bf16.gmra.mrb[0].mxu0 %v1939
        %v2071 = vpop.f32.mrb[0].mxu0
        %v2072 = vadd.f32 0.0, %v2071
        %v2073 = vpop.f32.mrb[0].mxu0
        %v2074 = vpop.f32.mrb[0].mxu0
        %v2075 = vadd.f32 0.0, %v2074
        %v2076 = vpop.f32.mrb[0].mxu0
        %2077 = vmatprep.mubr.bf16.mxu0 0
        %2078 = vmatmul.mubr.bf16.gmra.mrb[0].mxu0 %v1942
        %v2079 = vpop.f32.mrb[0].mxu0
        %v2080 = vadd.f32 0.0, %v2079
        %v2081 = vpop.f32.mrb[0].mxu0
        %v2082 = vpop.f32.mrb[0].mxu0
        %v2083 = vadd.f32 0.0, %v2082
        %v2084 = vpop.f32.mrb[0].mxu0
        %2085 = vmatprep.mubr.bf16.mxu0 0
        %2086 = vmatmul.mubr.bf16.gmra.mrb[0].mxu0 %v1945
        %v2087 = vpop.f32.mrb[0].mxu0
        %v2088 = vadd.f32 0.0, %v2087
        %v2089 = vpop.f32.mrb[0].mxu0
        %v2090 = vpop.f32.mrb[0].mxu0
        %v2091 = vadd.f32 0.0, %v2090
        %v2092 = vpop.f32.mrb[0].mxu0
        %2093 = vmatprep.mubr.bf16.mxu0 0
        %2094 = vmatmul.mubr.bf16.gmra.mrb[0].mxu0 %v1948
        %v2095 = vpop.f32.mrb[0].mxu0
        %v2096 = vadd.f32 0.0, %v2095
        %v2097 = vpop.f32.mrb[0].mxu0
        %v2098 = vpop.f32.mrb[0].mxu0
        %v2099 = vadd.f32 0.0, %v2098
        %v2100 = vpop.f32.mrb[0].mxu0
        %2101 = vmatprep.mubr.bf16.mxu0 0
        %2102 = vmatmul.mubr.bf16.gmra.mrb[0].mxu0 %v1951
        %v2103 = vpop.f32.mrb[0].mxu0
        %v2104 = vadd.f32 0.0, %v2103
        %v2105 = vpop.f32.mrb[0].mxu0
        %v2106 = vpop.f32.mrb[0].mxu0
        %v2107 = vadd.f32 0.0, %v2106
        %v2108 = vpop.f32.mrb[0].mxu0
        %2109 = vmatprep.mubr.bf16.mxu0 0
        %2110 = vmatmul.mubr.bf16.gmra.mrb[0].mxu0 %v1954
        %v2111 = vpop.f32.mrb[0].mxu0
        %v2112 = vadd.f32 0.0, %v2111
        %v2113 = vpop.f32.mrb[0].mxu0
        %v2114 = vpop.f32.mrb[0].mxu0
        %v2115 = vadd.f32 0.0, %v2114
        %v2116 = vpop.f32.mrb[0].mxu0
        %2117 = vmatprep.mubr.bf16.mxu0 0
        %2118 = vmatmul.mubr.bf16.gmra.mrb[0].mxu0 %v1957
        %v2119 = vpop.f32.mrb[0].mxu0
        %v2120 = vadd.f32 0.0, %v2119
        %v2121 = vpop.f32.mrb[0].mxu0
        %v2122 = vpop.f32.mrb[0].mxu0
        %v2123 = vadd.f32 0.0, %v2122
        %v2124 = vpop.f32.mrb[0].mxu0
        %2125 = vmatprep.mubr.bf16.mxu0 0
        %2126 = vmatmul.mubr.bf16.gmra.mrb[0].mxu0 %v1960
        %v2127 = vpop.f32.mrb[0].mxu0
        %v2128 = vadd.f32 0.0, %v2127
        %v2129 = vpop.f32.mrb[0].mxu0
        %v2130 = vpop.f32.mrb[0].mxu0
        %v2131 = vadd.f32 0.0, %v2130
        %v2132 = vpop.f32.mrb[0].mxu0
        %2133 = vmatprep.mubr.bf16.mxu0 0
        %2134 = vmatmul.mubr.bf16.gmra.mrb[0].mxu0 %v1963
        %v2135 = vpop.f32.mrb[0].mxu0
        %v2136 = vadd.f32 0.0, %v2135
        %v2137 = vpop.f32.mrb[0].mxu0
        %v2138 = vpop.f32.mrb[0].mxu0
        %v2139 = vadd.f32 0.0, %v2138
        %v2140 = vpop.f32.mrb[0].mxu0
        %2141 = vmatprep.mubr.bf16.mxu0 0
        %2142 = vmatmul.mubr.bf16.gmra.mrb[0].mxu0 %v1966
        %v2143 = vpop.f32.mrb[0].mxu0
        %v2144 = vadd.f32 0.0, %v2143
        %v2145 = vpop.f32.mrb[0].mxu0
        %v2146 = vpop.f32.mrb[0].mxu0
        %v2147 = vadd.f32 0.0, %v2146
        %v2148 = vpop.f32.mrb[0].mxu0
        %2149 = vmatprep.mubr.bf16.mxu0 0
        %2150 = vmatmul.mubr.bf16.gmra.mrb[0].mxu0 %v1969
        %v2151 = vpop.f32.mrb[0].mxu0
        %v2152 = vadd.f32 0.0, %v2151
        %v2153 = vpop.f32.mrb[0].mxu0
        %v2154 = vpop.f32.mrb[0].mxu0
        %v2155 = vadd.f32 0.0, %v2154
        %v2156 = vpop.f32.mrb[0].mxu0
        %2157 = vmatprep.mubr.bf16.mxu0 0
        %2158 = vmatmul.mubr.bf16.gmra.mrb[0].mxu0 %v1972
        %v2159 = vpop.f32.mrb[0].mxu0
        %v2160 = vadd.f32 0.0, %v2159
        %v2161 = vpop.f32.mrb[0].mxu0
        %v2162 = vpop.f32.mrb[0].mxu0
        %v2163 = vadd.f32 0.0, %v2162
        %v2164 = vpop.f32.mrb[0].mxu0
        %2165 = vmatprep.mubr.bf16.mxu0 0
        %2166 = vmatmul.mubr.bf16.gmra.mrb[0].mxu0 %v1975
        %v2167 = vpop.f32.mrb[0].mxu0
        %v2168 = vadd.f32 0.0, %v2167
        %v2169 = vpop.f32.mrb[0].mxu0
        %v2170 = vpop.f32.mrb[0].mxu0
        %v2171 = vadd.f32 0.0, %v2170
        %v2172 = vpop.f32.mrb[0].mxu0
        %2173 = vmatprep.mubr.bf16.mxu0 0
        %2174 = vmatmul.mubr.bf16.gmra.mrb[0].mxu0 %v1978
        %v2175 = vpop.f32.mrb[0].mxu0
        %v2176 = vadd.f32 0.0, %v2175
        %v2177 = vpop.f32.mrb[0].mxu0
        %v2178 = vpop.f32.mrb[0].mxu0
        %v2179 = vadd.f32 0.0, %v2178
        %v2180 = vpop.f32.mrb[0].mxu0
        %2181 = vmatprep.mubr.bf16.mxu0 0
        %2182 = vmatmul.mubr.bf16.gmra.mrb[0].mxu0 %v1981
        %v2183 = vpop.f32.mrb[0].mxu0
        %v2184 = vadd.f32 0.0, %v2183
        %v2185 = vpop.f32.mrb[0].mxu0
        %v2186 = vpop.f32.mrb[0].mxu0
        %v2187 = vadd.f32 0.0, %v2186
        %v2188 = vpop.f32.mrb[0].mxu0
        %2189 = vmatprep.mubr.bf16.mxu0 0
        %2190 = vmatmul.mubr.bf16.gmra.mrb[0].mxu0 %v1984
        %v2191 = vpop.f32.mrb[0].mxu0
        %v2192 = vadd.f32 0.0, %v2191
        %v2193 = vpop.f32.mrb[0].mxu0
        %v2194 = vpop.f32.mrb[0].mxu0
        %v2195 = vadd.f32 0.0, %v2194
        %v2196 = vpop.f32.mrb[0].mxu0
        %2197 = vdwg.mxu0
        %v2198 = vld [vmem:[#allocation3] sm:$0xff]
        %v2199 = vld [vmem:[#allocation3 + $0x8] sm:$0xff]
        %v2200 = vld [vmem:[#allocation3 + $0x10] sm:$0xff]
        %v2201 = vld [vmem:[#allocation3 + $0x18] sm:$0xff]
        %v2202 = vld [vmem:[#allocation3 + $0x20] sm:$0xff]
        %v2203 = vld [vmem:[#allocation3 + $0x28] sm:$0xff]
        %v2204 = vld [vmem:[#allocation3 + $0x30] sm:$0xff]
        %v2205 = vld [vmem:[#allocation3 + $0x38] sm:$0xff]
        %v2206 = vld [vmem:[#allocation3 + $0x40] sm:$0xff]
        %v2207 = vld [vmem:[#allocation3 + $0x48] sm:$0xff]
        %v2208 = vld [vmem:[#allocation3 + $0x50] sm:$0xff]
        %v2209 = vld [vmem:[#allocation3 + $0x58] sm:$0xff]
        %v2210 = vld [vmem:[#allocation3 + $0x60] sm:$0xff]
        %v2211 = vld [vmem:[#allocation3 + $0x68] sm:$0xff]
        %v2212 = vld [vmem:[#allocation3 + $0x70] sm:$0xff]
        %v2213 = vld [vmem:[#allocation3 + $0x78] sm:$0xff]
        %v2214 = vld [vmem:[#allocation3 + $0x80] sm:$0xff]
        %v2215 = vld [vmem:[#allocation3 + $0x88] sm:$0xff]
        %v2216 = vld [vmem:[#allocation3 + $0x90] sm:$0xff]
        %v2217 = vld [vmem:[#allocation3 + $0x98] sm:$0xff]
        %v2218 = vld [vmem:[#allocation3 + $0xa0] sm:$0xff]
        %v2219 = vld [vmem:[#allocation3 + $0xa8] sm:$0xff]
        %v2220 = vld [vmem:[#allocation3 + $0xb0] sm:$0xff]
        %v2221 = vld [vmem:[#allocation3 + $0xb8] sm:$0xff]
        %v2222 = vld [vmem:[#allocation3 + $0xc0] sm:$0xff]
        %v2223 = vld [vmem:[#allocation3 + $0xc8] sm:$0xff]
        %v2224 = vld [vmem:[#allocation3 + $0xd0] sm:$0xff]
        %v2225 = vld [vmem:[#allocation3 + $0xd8] sm:$0xff]
        %v2226 = vld [vmem:[#allocation3 + $0xe0] sm:$0xff]
        %v2227 = vld [vmem:[#allocation3 + $0xe8] sm:$0xff]
        %v2228 = vld [vmem:[#allocation3 + $0xf0] sm:$0xff]
        %v2229 = vld [vmem:[#allocation3 + $0xf8] sm:$0xff]
        %v2230 = vld [vmem:[#allocation3 + $0x100] sm:$0xff]
        %v2231 = vld [vmem:[#allocation3 + $0x108] sm:$0xff]
        %v2232 = vld [vmem:[#allocation3 + $0x110] sm:$0xff]
        %v2233 = vld [vmem:[#allocation3 + $0x118] sm:$0xff]
        %v2234 = vld [vmem:[#allocation3 + $0x120] sm:$0xff]
        %v2235 = vld [vmem:[#allocation3 + $0x128] sm:$0xff]
        %v2236 = vld [vmem:[#allocation3 + $0x130] sm:$0xff]
        %v2237 = vld [vmem:[#allocation3 + $0x138] sm:$0xff]
        %v2238 = vld [vmem:[#allocation3 + $0x140] sm:$0xff]
        %v2239 = vld [vmem:[#allocation3 + $0x148] sm:$0xff]
        %v2240 = vld [vmem:[#allocation3 + $0x150] sm:$0xff]
        %v2241 = vld [vmem:[#allocation3 + $0x158] sm:$0xff]
        %v2242 = vadd.f32 %v2198, %v2024
        %v2243 = vadd.f32 %v2199, %v2027
        %v2244 = vadd.f32 %v2200, %v2032
        %v2245 = vadd.f32 %v2201, %v2035
        %v2246 = vadd.f32 %v2202, %v2040
        %v2247 = vadd.f32 %v2203, %v2043
        %v2248 = vadd.f32 %v2204, %v2048
        %v2249 = vadd.f32 %v2205, %v2051
        %v2250 = vadd.f32 %v2206, %v2056
        %v2251 = vadd.f32 %v2207, %v2059
        %v2252 = vadd.f32 %v2208, %v2064
        %v2253 = vadd.f32 %v2209, %v2067
        %v2254 = vadd.f32 %v2210, %v2072
        %v2255 = vadd.f32 %v2211, %v2075
        %v2256 = vadd.f32 %v2212, %v2080
        %v2257 = vadd.f32 %v2213, %v2083
        %v2258 = vadd.f32 %v2214, %v2088
        %v2259 = vadd.f32 %v2215, %v2091
        %v2260 = vadd.f32 %v2216, %v2096
        %v2261 = vadd.f32 %v2217, %v2099
        %v2262 = vadd.f32 %v2218, %v2104
        %v2263 = vadd.f32 %v2219, %v2107
        %v2264 = vadd.f32 %v2220, %v2112
        %v2265 = vadd.f32 %v2221, %v2115
        %v2266 = vadd.f32 %v2222, %v2120
        %v2267 = vadd.f32 %v2223, %v2123
        %v2268 = vadd.f32 %v2224, %v2128
        %v2269 = vadd.f32 %v2225, %v2131
        %v2270 = vadd.f32 %v2226, %v2136
        %v2271 = vadd.f32 %v2227, %v2139
        %v2272 = vadd.f32 %v2228, %v2144
        %v2273 = vadd.f32 %v2229, %v2147
        %v2274 = vadd.f32 %v2230, %v2152
        %v2275 = vadd.f32 %v2231, %v2155
        %v2276 = vadd.f32 %v2232, %v2160
        %v2277 = vadd.f32 %v2233, %v2163
        %v2278 = vadd.f32 %v2234, %v2168
        %v2279 = vadd.f32 %v2235, %v2171
        %v2280 = vadd.f32 %v2236, %v2176
        %v2281 = vadd.f32 %v2237, %v2179
        %v2282 = vadd.f32 %v2238, %v2184
        %v2283 = vadd.f32 %v2239, %v2187
        %v2284 = vadd.f32 %v2240, %v2192
        %v2285 = vadd.f32 %v2241, %v2195
        %2286 = vst [vmem:[#allocation3] sm:$0xff] %v2242
        %2287 = vst [vmem:[#allocation3 + $0x8] sm:$0xff] %v2243
        %2288 = vst [vmem:[#allocation3 + $0x10] sm:$0xff] %v2244
        %2289 = vst [vmem:[#allocation3 + $0x18] sm:$0xff] %v2245
        %2290 = vst [vmem:[#allocation3 + $0x20] sm:$0xff] %v2246
        %2291 = vst [vmem:[#allocation3 + $0x28] sm:$0xff] %v2247
        %2292 = vst [vmem:[#allocation3 + $0x30] sm:$0xff] %v2248
        %2293 = vst [vmem:[#allocation3 + $0x38] sm:$0xff] %v2249
        %2294 = vst [vmem:[#allocation3 + $0x40] sm:$0xff] %v2250
        %2295 = vst [vmem:[#allocation3 + $0x48] sm:$0xff] %v2251
        %2296 = vst [vmem:[#allocation3 + $0x50] sm:$0xff] %v2252
        %2297 = vst [vmem:[#allocation3 + $0x58] sm:$0xff] %v2253
        %2298 = vst [vmem:[#allocation3 + $0x60] sm:$0xff] %v2254
        %2299 = vst [vmem:[#allocation3 + $0x68] sm:$0xff] %v2255
        %2300 = vst [vmem:[#allocation3 + $0x70] sm:$0xff] %v2256
        %2301 = vst [vmem:[#allocation3 + $0x78] sm:$0xff] %v2257
        %2302 = vst [vmem:[#allocation3 + $0x80] sm:$0xff] %v2258
        %2303 = vst [vmem:[#allocation3 + $0x88] sm:$0xff] %v2259
        %2304 = vst [vmem:[#allocation3 + $0x90] sm:$0xff] %v2260
        %2305 = vst [vmem:[#allocation3 + $0x98] sm:$0xff] %v2261
        %2306 = vst [vmem:[#allocation3 + $0xa0] sm:$0xff] %v2262
        %2307 = vst [vmem:[#allocation3 + $0xa8] sm:$0xff] %v2263
        %2308 = vst [vmem:[#allocation3 + $0xb0] sm:$0xff] %v2264
        %2309 = vst [vmem:[#allocation3 + $0xb8] sm:$0xff] %v2265
        %2310 = vst [vmem:[#allocation3 + $0xc0] sm:$0xff] %v2266
        %2311 = vst [vmem:[#allocation3 + $0xc8] sm:$0xff] %v2267
        %2312 = vst [vmem:[#allocation3 + $0xd0] sm:$0xff] %v2268
        %2313 = vst [vmem:[#allocation3 + $0xd8] sm:$0xff] %v2269
        %2314 = vst [vmem:[#allocation3 + $0xe0] sm:$0xff] %v2270
        %2315 = vst [vmem:[#allocation3 + $0xe8] sm:$0xff] %v2271
        %2316 = vst [vmem:[#allocation3 + $0xf0] sm:$0xff] %v2272
        %2317 = vst [vmem:[#allocation3 + $0xf8] sm:$0xff] %v2273
        %2318 = vst [vmem:[#allocation3 + $0x100] sm:$0xff] %v2274
        %2319 = vst [vmem:[#allocation3 + $0x108] sm:$0xff] %v2275
        %2320 = vst [vmem:[#allocation3 + $0x110] sm:$0xff] %v2276
        %2321 = vst [vmem:[#allocation3 + $0x118] sm:$0xff] %v2277
        %2322 = vst [vmem:[#allocation3 + $0x120] sm:$0xff] %v2278
        %2323 = vst [vmem:[#allocation3 + $0x128] sm:$0xff] %v2279
        %2324 = vst [vmem:[#allocation3 + $0x130] sm:$0xff] %v2280
        %2325 = vst [vmem:[#allocation3 + $0x138] sm:$0xff] %v2281
        %2326 = vst [vmem:[#allocation3 + $0x140] sm:$0xff] %v2282
        %2327 = vst [vmem:[#allocation3 + $0x148] sm:$0xff] %v2283
        %2328 = vst [vmem:[#allocation3 + $0x150] sm:$0xff] %v2284
        %2329 = vst [vmem:[#allocation3 + $0x158] sm:$0xff] %v2285
        %v2330 = vld [vmem:[#allocation2 + $0x8] sm:$0x80]
        %v2331 = vld [vmem:[#allocation2 + $0x10] sm:$0xff]
        %v2332 = vld [vmem:[#allocation2 + $0x18] sm:$0xff]
        %v2333 = vld [vmem:[#allocation2 + $0x20] sm:$0xff]
        %v2334 = vld [vmem:[#allocation2 + $0x28] sm:$0xff]
        %v2335 = vld [vmem:[#allocation2 + $0x30] sm:$0xff]
        %v2336 = vld [vmem:[#allocation2 + $0x38] sm:$0xff]
        %v2337 = vld [vmem:[#allocation2 + $0x40] sm:$0xff]
        %v2338 = vld [vmem:[#allocation2 + $0x48] sm:$0xff]
        %v2339 = vld [vmem:[#allocation2 + $0x50] sm:$0xff]
        %v2340 = vld [vmem:[#allocation2 + $0x58] sm:$0xff]
        %v2341 = vld [vmem:[#allocation2 + $0x60] sm:$0xff]
        %v2342 = vld [vmem:[#allocation2 + $0x68] sm:$0xff]
        %v2343 = vld [vmem:[#allocation2 + $0x70] sm:$0xff]
        %v2344 = vld [vmem:[#allocation2 + $0x78] sm:$0xff]
        %v2345 = vld [vmem:[#allocation2 + $0x80] sm:$0xff]
        %v2346 = vld [vmem:[#allocation2 + $0x88] sm:$0xff]
        %v2347 = vld [vmem:[#allocation2 + $0x90] sm:$0xff]
        %v2348 = vld [vmem:[#allocation2 + $0x98] sm:$0xff]
        %v2349 = vld [vmem:[#allocation2 + $0xa0] sm:$0xff]
        %v2350 = vld [vmem:[#allocation2 + $0xa8] sm:$0xff]
        %v2351 = vld [vmem:[#allocation2 + $0xb0] sm:$0xff]
        %v2352 = vld [vmem:[#allocation2 + $0xb8] sm:$0xff]
        %s2353 = scalar_lea.vmem %s3, 6
        %v2354 = vld [vmem:[%s2353] sm:$0x3]
        %v2356 = vshrl.u32 %v2330, 16
        %v2358 = vrot.slane %v2356, 7
        %v2360 = vshrl.u32 %v2331, 16
        %v2362 = vrot.slane %v2360, 7
        %v2363 = vshll.u32 %v2331, 16
        %v2365 = vor.u32 %v2362, %v2363
        %v2366 = vsel %vm1739, %v2358, %v2365
        %v2368 = vshrl.u32 %v2332, 16
        %v2370 = vrot.slane %v2368, 7
        %v2371 = vshll.u32 %v2332, 16
        %v2373 = vor.u32 %v2370, %v2371
        %v2374 = vsel %vm1739, %v2362, %v2373
        %v2376 = vshrl.u32 %v2333, 16
        %v2378 = vrot.slane %v2376, 7
        %v2379 = vshll.u32 %v2333, 16
        %v2381 = vor.u32 %v2378, %v2379
        %v2382 = vsel %vm1739, %v2370, %v2381
        %v2384 = vshrl.u32 %v2334, 16
        %v2386 = vrot.slane %v2384, 7
        %v2387 = vshll.u32 %v2334, 16
        %v2389 = vor.u32 %v2386, %v2387
        %v2390 = vsel %vm1739, %v2378, %v2389
        %v2392 = vshrl.u32 %v2335, 16
        %v2394 = vrot.slane %v2392, 7
        %v2395 = vshll.u32 %v2335, 16
        %v2397 = vor.u32 %v2394, %v2395
        %v2398 = vsel %vm1739, %v2386, %v2397
        %v2400 = vshrl.u32 %v2336, 16
        %v2402 = vrot.slane %v2400, 7
        %v2403 = vshll.u32 %v2336, 16
        %v2405 = vor.u32 %v2402, %v2403
        %v2406 = vsel %vm1739, %v2394, %v2405
        %v2408 = vshrl.u32 %v2337, 16
        %v2410 = vrot.slane %v2408, 7
        %v2411 = vshll.u32 %v2337, 16
        %v2413 = vor.u32 %v2410, %v2411
        %v2414 = vsel %vm1739, %v2402, %v2413
        %v2416 = vshrl.u32 %v2338, 16
        %v2418 = vrot.slane %v2416, 7
        %v2419 = vshll.u32 %v2338, 16
        %v2421 = vor.u32 %v2418, %v2419
        %v2422 = vsel %vm1739, %v2410, %v2421
        %v2424 = vshrl.u32 %v2339, 16
        %v2426 = vrot.slane %v2424, 7
        %v2427 = vshll.u32 %v2339, 16
        %v2429 = vor.u32 %v2426, %v2427
        %v2430 = vsel %vm1739, %v2418, %v2429
        %v2432 = vshrl.u32 %v2340, 16
        %v2434 = vrot.slane %v2432, 7
        %v2435 = vshll.u32 %v2340, 16
        %v2437 = vor.u32 %v2434, %v2435
        %v2438 = vsel %vm1739, %v2426, %v2437
        %v2440 = vshrl.u32 %v2341, 16
        %v2442 = vrot.slane %v2440, 7
        %v2443 = vshll.u32 %v2341, 16
        %v2445 = vor.u32 %v2442, %v2443
        %v2446 = vsel %vm1739, %v2434, %v2445
        %v2448 = vshrl.u32 %v2342, 16
        %v2450 = vrot.slane %v2448, 7
        %v2451 = vshll.u32 %v2342, 16
        %v2453 = vor.u32 %v2450, %v2451
        %v2454 = vsel %vm1739, %v2442, %v2453
        %v2456 = vshrl.u32 %v2343, 16
        %v2458 = vrot.slane %v2456, 7
        %v2459 = vshll.u32 %v2343, 16
        %v2461 = vor.u32 %v2458, %v2459
        %v2462 = vsel %vm1739, %v2450, %v2461
        %v2464 = vshrl.u32 %v2344, 16
        %v2466 = vrot.slane %v2464, 7
        %v2467 = vshll.u32 %v2344, 16
        %v2469 = vor.u32 %v2466, %v2467
        %v2470 = vsel %vm1739, %v2458, %v2469
        %v2472 = vshrl.u32 %v2345, 16
        %v2474 = vrot.slane %v2472, 7
        %v2475 = vshll.u32 %v2345, 16
        %v2477 = vor.u32 %v2474, %v2475
        %v2478 = vsel %vm1739, %v2466, %v2477
        %v2480 = vshrl.u32 %v2346, 16
        %v2482 = vrot.slane %v2480, 7
        %v2483 = vshll.u32 %v2346, 16
        %v2485 = vor.u32 %v2482, %v2483
        %v2486 = vsel %vm1739, %v2474, %v2485
        %v2488 = vshrl.u32 %v2347, 16
        %v2490 = vrot.slane %v2488, 7
        %v2491 = vshll.u32 %v2347, 16
        %v2493 = vor.u32 %v2490, %v2491
        %v2494 = vsel %vm1739, %v2482, %v2493
        %v2496 = vshrl.u32 %v2348, 16
        %v2498 = vrot.slane %v2496, 7
        %v2499 = vshll.u32 %v2348, 16
        %v2501 = vor.u32 %v2498, %v2499
        %v2502 = vsel %vm1739, %v2490, %v2501
        %v2504 = vshrl.u32 %v2349, 16
        %v2506 = vrot.slane %v2504, 7
        %v2507 = vshll.u32 %v2349, 16
        %v2509 = vor.u32 %v2506, %v2507
        %v2510 = vsel %vm1739, %v2498, %v2509
        %v2512 = vshrl.u32 %v2350, 16
        %v2514 = vrot.slane %v2512, 7
        %v2515 = vshll.u32 %v2350, 16
        %v2517 = vor.u32 %v2514, %v2515
        %v2518 = vsel %vm1739, %v2506, %v2517
        %v2520 = vshrl.u32 %v2351, 16
        %v2522 = vrot.slane %v2520, 7
        %v2523 = vshll.u32 %v2351, 16
        %v2525 = vor.u32 %v2522, %v2523
        %v2526 = vsel %vm1739, %v2514, %v2525
        %v2528 = vshrl.u32 %v2352, 16
        %v2530 = vrot.slane %v2528, 7
        %v2531 = vshll.u32 %v2352, 16
        %v2533 = vor.u32 %v2530, %v2531
        %v2534 = vsel %vm1739, %v2522, %v2533
        %v2536 = vsel %vm434, %v2366, 0
        %v2539 = vsel %vm434, %v2374, 0
        %v2542 = vsel %vm434, %v2382, 0
        %v2545 = vsel %vm434, %v2390, 0
        %v2548 = vsel %vm434, %v2398, 0
        %v2551 = vsel %vm434, %v2406, 0
        %v2554 = vsel %vm434, %v2414, 0
        %v2557 = vsel %vm434, %v2422, 0
        %v2560 = vsel %vm434, %v2430, 0
        %v2563 = vsel %vm434, %v2438, 0
        %v2566 = vsel %vm434, %v2446, 0
        %v2569 = vsel %vm434, %v2454, 0
        %v2572 = vsel %vm434, %v2462, 0
        %v2575 = vsel %vm434, %v2470, 0
        %v2578 = vsel %vm434, %v2478, 0
        %v2581 = vsel %vm434, %v2486, 0
        %v2584 = vsel %vm434, %v2494, 0
        %v2587 = vsel %vm434, %v2502, 0
        %v2590 = vsel %vm434, %v2510, 0
        %v2593 = vsel %vm434, %v2518, 0
        %v2596 = vsel %vm434, %v2526, 0
        %v2599 = vsel %vm434, %v2534, 0
        %v2602 = vand.u32 %v2354, %v953
        %2604 = vmatprep.subr.bf16.mxu0 0
        %2605 = vmatpush1.bf16.msra.mxu0 %v2602
        %2606 = vmatprep.subr.bf16.mxu0 0
        %2607 = vmatpush1.bf16.msra.mxu0 0
        %2608 = vmatprep.subr.bf16.mxu0 0
        %2609 = vmatpush1.bf16.msra.mxu0 0
        %2610 = vmatprep.subr.bf16.mxu0 0
        %2611 = vmatpush1.bf16.msra.mxu0 0
        %2612 = vmatprep.subr.bf16.mxu0 0
        %2613 = vmatpush1.bf16.msra.mxu0 0
        %2614 = vmatprep.subr.bf16.mxu0 0
        %2615 = vmatpush1.bf16.msra.mxu0 0
        %2616 = vmatprep.subr.bf16.mxu0 0
        %2617 = vmatpush1.bf16.msra.mxu0 0
        %2618 = vmatprep.subr.bf16.mxu0 0
        %2619 = vmatpush1.bf16.msra.mxu0 0
        %2620 = vmatprep.subr.bf16.mxu0 0
        %2621 = vmatpush1.bf16.msra.mxu0 0
        %2622 = vmatprep.subr.bf16.mxu0 0
        %2623 = vmatpush1.bf16.msra.mxu0 0
        %2624 = vmatprep.subr.bf16.mxu0 0
        %2625 = vmatpush1.bf16.msra.mxu0 0
        %2626 = vmatprep.subr.bf16.mxu0 0
        %2627 = vmatpush1.bf16.msra.mxu0 0
        %2628 = vmatprep.subr.bf16.mxu0 0
        %2629 = vmatpush1.bf16.msra.mxu0 0
        %2630 = vmatprep.subr.bf16.mxu0 0
        %2631 = vmatpush1.bf16.msra.mxu0 0
        %2632 = vmatprep.subr.bf16.mxu0 0
        %2633 = vmatpush1.bf16.msra.mxu0 0
        %2634 = vmatprep.subr.bf16.mxu0 0
        %2635 = vmatpush1.bf16.msra.mxu0 0
        %2636 = vmatprep.mubr.bf16.mxu0 0
        %2637 = vmatmul.mubr.bf16.gmra.mrb[0].mxu0 %v2536
        %v2638 = vpop.f32.mrb[0].mxu0
        %v2639 = vadd.f32 0.0, %v2638
        %v2640 = vpop.f32.mrb[0].mxu0
        %v2641 = vpop.f32.mrb[0].mxu0
        %v2642 = vadd.f32 0.0, %v2641
        %v2643 = vpop.f32.mrb[0].mxu0
        %2644 = vmatprep.mubr.bf16.mxu0 0
        %2645 = vmatmul.mubr.bf16.gmra.mrb[0].mxu0 %v2539
        %v2646 = vpop.f32.mrb[0].mxu0
        %v2647 = vadd.f32 0.0, %v2646
        %v2648 = vpop.f32.mrb[0].mxu0
        %v2649 = vpop.f32.mrb[0].mxu0
        %v2650 = vadd.f32 0.0, %v2649
        %v2651 = vpop.f32.mrb[0].mxu0
        %2652 = vmatprep.mubr.bf16.mxu0 0
        %2653 = vmatmul.mubr.bf16.gmra.mrb[0].mxu0 %v2542
        %v2654 = vpop.f32.mrb[0].mxu0
        %v2655 = vadd.f32 0.0, %v2654
        %v2656 = vpop.f32.mrb[0].mxu0
        %v2657 = vpop.f32.mrb[0].mxu0
        %v2658 = vadd.f32 0.0, %v2657
        %v2659 = vpop.f32.mrb[0].mxu0
        %2660 = vmatprep.mubr.bf16.mxu0 0
        %2661 = vmatmul.mubr.bf16.gmra.mrb[0].mxu0 %v2545
        %v2662 = vpop.f32.mrb[0].mxu0
        %v2663 = vadd.f32 0.0, %v2662
        %v2664 = vpop.f32.mrb[0].mxu0
        %v2665 = vpop.f32.mrb[0].mxu0
        %v2666 = vadd.f32 0.0, %v2665
        %v2667 = vpop.f32.mrb[0].mxu0
        %2668 = vmatprep.mubr.bf16.mxu0 0
        %2669 = vmatmul.mubr.bf16.gmra.mrb[0].mxu0 %v2548
        %v2670 = vpop.f32.mrb[0].mxu0
        %v2671 = vadd.f32 0.0, %v2670
        %v2672 = vpop.f32.mrb[0].mxu0
        %v2673 = vpop.f32.mrb[0].mxu0
        %v2674 = vadd.f32 0.0, %v2673
        %v2675 = vpop.f32.mrb[0].mxu0
        %2676 = vmatprep.mubr.bf16.mxu0 0
        %2677 = vmatmul.mubr.bf16.gmra.mrb[0].mxu0 %v2551
        %v2678 = vpop.f32.mrb[0].mxu0
        %v2679 = vadd.f32 0.0, %v2678
        %v2680 = vpop.f32.mrb[0].mxu0
        %v2681 = vpop.f32.mrb[0].mxu0
        %v2682 = vadd.f32 0.0, %v2681
        %v2683 = vpop.f32.mrb[0].mxu0
        %2684 = vmatprep.mubr.bf16.mxu0 0
        %2685 = vmatmul.mubr.bf16.gmra.mrb[0].mxu0 %v2554
        %v2686 = vpop.f32.mrb[0].mxu0
        %v2687 = vadd.f32 0.0, %v2686
        %v2688 = vpop.f32.mrb[0].mxu0
        %v2689 = vpop.f32.mrb[0].mxu0
        %v2690 = vadd.f32 0.0, %v2689
        %v2691 = vpop.f32.mrb[0].mxu0
        %2692 = vmatprep.mubr.bf16.mxu0 0
        %2693 = vmatmul.mubr.bf16.gmra.mrb[0].mxu0 %v2557
        %v2694 = vpop.f32.mrb[0].mxu0
        %v2695 = vadd.f32 0.0, %v2694
        %v2696 = vpop.f32.mrb[0].mxu0
        %v2697 = vpop.f32.mrb[0].mxu0
        %v2698 = vadd.f32 0.0, %v2697
        %v2699 = vpop.f32.mrb[0].mxu0
        %2700 = vmatprep.mubr.bf16.mxu0 0
        %2701 = vmatmul.mubr.bf16.gmra.mrb[0].mxu0 %v2560
        %v2702 = vpop.f32.mrb[0].mxu0
        %v2703 = vadd.f32 0.0, %v2702
        %v2704 = vpop.f32.mrb[0].mxu0
        %v2705 = vpop.f32.mrb[0].mxu0
        %v2706 = vadd.f32 0.0, %v2705
        %v2707 = vpop.f32.mrb[0].mxu0
        %2708 = vmatprep.mubr.bf16.mxu0 0
        %2709 = vmatmul.mubr.bf16.gmra.mrb[0].mxu0 %v2563
        %v2710 = vpop.f32.mrb[0].mxu0
        %v2711 = vadd.f32 0.0, %v2710
        %v2712 = vpop.f32.mrb[0].mxu0
        %v2713 = vpop.f32.mrb[0].mxu0
        %v2714 = vadd.f32 0.0, %v2713
        %v2715 = vpop.f32.mrb[0].mxu0
        %2716 = vmatprep.mubr.bf16.mxu0 0
        %2717 = vmatmul.mubr.bf16.gmra.mrb[0].mxu0 %v2566
        %v2718 = vpop.f32.mrb[0].mxu0
        %v2719 = vadd.f32 0.0, %v2718
        %v2720 = vpop.f32.mrb[0].mxu0
        %v2721 = vpop.f32.mrb[0].mxu0
        %v2722 = vadd.f32 0.0, %v2721
        %v2723 = vpop.f32.mrb[0].mxu0
        %2724 = vmatprep.mubr.bf16.mxu0 0
        %2725 = vmatmul.mubr.bf16.gmra.mrb[0].mxu0 %v2569
        %v2726 = vpop.f32.mrb[0].mxu0
        %v2727 = vadd.f32 0.0, %v2726
        %v2728 = vpop.f32.mrb[0].mxu0
        %v2729 = vpop.f32.mrb[0].mxu0
        %v2730 = vadd.f32 0.0, %v2729
        %v2731 = vpop.f32.mrb[0].mxu0
        %2732 = vmatprep.mubr.bf16.mxu0 0
        %2733 = vmatmul.mubr.bf16.gmra.mrb[0].mxu0 %v2572
        %v2734 = vpop.f32.mrb[0].mxu0
        %v2735 = vadd.f32 0.0, %v2734
        %v2736 = vpop.f32.mrb[0].mxu0
        %v2737 = vpop.f32.mrb[0].mxu0
        %v2738 = vadd.f32 0.0, %v2737
        %v2739 = vpop.f32.mrb[0].mxu0
        %2740 = vmatprep.mubr.bf16.mxu0 0
        %2741 = vmatmul.mubr.bf16.gmra.mrb[0].mxu0 %v2575
        %v2742 = vpop.f32.mrb[0].mxu0
        %v2743 = vadd.f32 0.0, %v2742
        %v2744 = vpop.f32.mrb[0].mxu0
        %v2745 = vpop.f32.mrb[0].mxu0
        %v2746 = vadd.f32 0.0, %v2745
        %v2747 = vpop.f32.mrb[0].mxu0
        %2748 = vmatprep.mubr.bf16.mxu0 0
        %2749 = vmatmul.mubr.bf16.gmra.mrb[0].mxu0 %v2578
        %v2750 = vpop.f32.mrb[0].mxu0
        %v2751 = vadd.f32 0.0, %v2750
        %v2752 = vpop.f32.mrb[0].mxu0
        %v2753 = vpop.f32.mrb[0].mxu0
        %v2754 = vadd.f32 0.0, %v2753
        %v2755 = vpop.f32.mrb[0].mxu0
        %2756 = vmatprep.mubr.bf16.mxu0 0
        %2757 = vmatmul.mubr.bf16.gmra.mrb[0].mxu0 %v2581
        %v2758 = vpop.f32.mrb[0].mxu0
        %v2759 = vadd.f32 0.0, %v2758
        %v2760 = vpop.f32.mrb[0].mxu0
        %v2761 = vpop.f32.mrb[0].mxu0
        %v2762 = vadd.f32 0.0, %v2761
        %v2763 = vpop.f32.mrb[0].mxu0
        %2764 = vmatprep.mubr.bf16.mxu0 0
        %2765 = vmatmul.mubr.bf16.gmra.mrb[0].mxu0 %v2584
        %v2766 = vpop.f32.mrb[0].mxu0
        %v2767 = vadd.f32 0.0, %v2766
        %v2768 = vpop.f32.mrb[0].mxu0
        %v2769 = vpop.f32.mrb[0].mxu0
        %v2770 = vadd.f32 0.0, %v2769
        %v2771 = vpop.f32.mrb[0].mxu0
        %2772 = vmatprep.mubr.bf16.mxu0 0
        %2773 = vmatmul.mubr.bf16.gmra.mrb[0].mxu0 %v2587
        %v2774 = vpop.f32.mrb[0].mxu0
        %v2775 = vadd.f32 0.0, %v2774
        %v2776 = vpop.f32.mrb[0].mxu0
        %v2777 = vpop.f32.mrb[0].mxu0
        %v2778 = vadd.f32 0.0, %v2777
        %v2779 = vpop.f32.mrb[0].mxu0
        %2780 = vmatprep.mubr.bf16.mxu0 0
        %2781 = vmatmul.mubr.bf16.gmra.mrb[0].mxu0 %v2590
        %v2782 = vpop.f32.mrb[0].mxu0
        %v2783 = vadd.f32 0.0, %v2782
        %v2784 = vpop.f32.mrb[0].mxu0
        %v2785 = vpop.f32.mrb[0].mxu0
        %v2786 = vadd.f32 0.0, %v2785
        %v2787 = vpop.f32.mrb[0].mxu0
        %2788 = vmatprep.mubr.bf16.mxu0 0
        %2789 = vmatmul.mubr.bf16.gmra.mrb[0].mxu0 %v2593
        %v2790 = vpop.f32.mrb[0].mxu0
        %v2791 = vadd.f32 0.0, %v2790
        %v2792 = vpop.f32.mrb[0].mxu0
        %v2793 = vpop.f32.mrb[0].mxu0
        %v2794 = vadd.f32 0.0, %v2793
        %v2795 = vpop.f32.mrb[0].mxu0
        %2796 = vmatprep.mubr.bf16.mxu0 0
        %2797 = vmatmul.mubr.bf16.gmra.mrb[0].mxu0 %v2596
        %v2798 = vpop.f32.mrb[0].mxu0
        %v2799 = vadd.f32 0.0, %v2798
        %v2800 = vpop.f32.mrb[0].mxu0
        %v2801 = vpop.f32.mrb[0].mxu0
        %v2802 = vadd.f32 0.0, %v2801
        %v2803 = vpop.f32.mrb[0].mxu0
        %2804 = vmatprep.mubr.bf16.mxu0 0
        %2805 = vmatmul.mubr.bf16.gmra.mrb[0].mxu0 %v2599
        %v2806 = vpop.f32.mrb[0].mxu0
        %v2807 = vadd.f32 0.0, %v2806
        %v2808 = vpop.f32.mrb[0].mxu0
        %v2809 = vpop.f32.mrb[0].mxu0
        %v2810 = vadd.f32 0.0, %v2809
        %v2811 = vpop.f32.mrb[0].mxu0
        %2812 = vdwg.mxu0
        %v2813 = vld [vmem:[#allocation3] sm:$0xff]
        %v2814 = vld [vmem:[#allocation3 + $0x8] sm:$0xff]
        %v2815 = vld [vmem:[#allocation3 + $0x10] sm:$0xff]
        %v2816 = vld [vmem:[#allocation3 + $0x18] sm:$0xff]
        %v2817 = vld [vmem:[#allocation3 + $0x20] sm:$0xff]
        %v2818 = vld [vmem:[#allocation3 + $0x28] sm:$0xff]
        %v2819 = vld [vmem:[#allocation3 + $0x30] sm:$0xff]
        %v2820 = vld [vmem:[#allocation3 + $0x38] sm:$0xff]
        %v2821 = vld [vmem:[#allocation3 + $0x40] sm:$0xff]
        %v2822 = vld [vmem:[#allocation3 + $0x48] sm:$0xff]
        %v2823 = vld [vmem:[#allocation3 + $0x50] sm:$0xff]
        %v2824 = vld [vmem:[#allocation3 + $0x58] sm:$0xff]
        %v2825 = vld [vmem:[#allocation3 + $0x60] sm:$0xff]
        %v2826 = vld [vmem:[#allocation3 + $0x68] sm:$0xff]
        %v2827 = vld [vmem:[#allocation3 + $0x70] sm:$0xff]
        %v2828 = vld [vmem:[#allocation3 + $0x78] sm:$0xff]
        %v2829 = vld [vmem:[#allocation3 + $0x80] sm:$0xff]
        %v2830 = vld [vmem:[#allocation3 + $0x88] sm:$0xff]
        %v2831 = vld [vmem:[#allocation3 + $0x90] sm:$0xff]
        %v2832 = vld [vmem:[#allocation3 + $0x98] sm:$0xff]
        %v2833 = vld [vmem:[#allocation3 + $0xa0] sm:$0xff]
        %v2834 = vld [vmem:[#allocation3 + $0xa8] sm:$0xff]
        %v2835 = vld [vmem:[#allocation3 + $0xb0] sm:$0xff]
        %v2836 = vld [vmem:[#allocation3 + $0xb8] sm:$0xff]
        %v2837 = vld [vmem:[#allocation3 + $0xc0] sm:$0xff]
        %v2838 = vld [vmem:[#allocation3 + $0xc8] sm:$0xff]
        %v2839 = vld [vmem:[#allocation3 + $0xd0] sm:$0xff]
        %v2840 = vld [vmem:[#allocation3 + $0xd8] sm:$0xff]
        %v2841 = vld [vmem:[#allocation3 + $0xe0] sm:$0xff]
        %v2842 = vld [vmem:[#allocation3 + $0xe8] sm:$0xff]
        %v2843 = vld [vmem:[#allocation3 + $0xf0] sm:$0xff]
        %v2844 = vld [vmem:[#allocation3 + $0xf8] sm:$0xff]
        %v2845 = vld [vmem:[#allocation3 + $0x100] sm:$0xff]
        %v2846 = vld [vmem:[#allocation3 + $0x108] sm:$0xff]
        %v2847 = vld [vmem:[#allocation3 + $0x110] sm:$0xff]
        %v2848 = vld [vmem:[#allocation3 + $0x118] sm:$0xff]
        %v2849 = vld [vmem:[#allocation3 + $0x120] sm:$0xff]
        %v2850 = vld [vmem:[#allocation3 + $0x128] sm:$0xff]
        %v2851 = vld [vmem:[#allocation3 + $0x130] sm:$0xff]
        %v2852 = vld [vmem:[#allocation3 + $0x138] sm:$0xff]
        %v2853 = vld [vmem:[#allocation3 + $0x140] sm:$0xff]
        %v2854 = vld [vmem:[#allocation3 + $0x148] sm:$0xff]
        %v2855 = vld [vmem:[#allocation3 + $0x150] sm:$0xff]
        %v2856 = vld [vmem:[#allocation3 + $0x158] sm:$0xff]
        %v2857 = vadd.f32 %v2813, %v2639
        %v2858 = vadd.f32 %v2814, %v2642
        %v2859 = vadd.f32 %v2815, %v2647
        %v2860 = vadd.f32 %v2816, %v2650
        %v2861 = vadd.f32 %v2817, %v2655
        %v2862 = vadd.f32 %v2818, %v2658
        %v2863 = vadd.f32 %v2819, %v2663
        %v2864 = vadd.f32 %v2820, %v2666
        %v2865 = vadd.f32 %v2821, %v2671
        %v2866 = vadd.f32 %v2822, %v2674
        %v2867 = vadd.f32 %v2823, %v2679
        %v2868 = vadd.f32 %v2824, %v2682
        %v2869 = vadd.f32 %v2825, %v2687
        %v2870 = vadd.f32 %v2826, %v2690
        %v2871 = vadd.f32 %v2827, %v2695
        %v2872 = vadd.f32 %v2828, %v2698
        %v2873 = vadd.f32 %v2829, %v2703
        %v2874 = vadd.f32 %v2830, %v2706
        %v2875 = vadd.f32 %v2831, %v2711
        %v2876 = vadd.f32 %v2832, %v2714
        %v2877 = vadd.f32 %v2833, %v2719
        %v2878 = vadd.f32 %v2834, %v2722
        %v2879 = vadd.f32 %v2835, %v2727
        %v2880 = vadd.f32 %v2836, %v2730
        %v2881 = vadd.f32 %v2837, %v2735
        %v2882 = vadd.f32 %v2838, %v2738
        %v2883 = vadd.f32 %v2839, %v2743
        %v2884 = vadd.f32 %v2840, %v2746
        %v2885 = vadd.f32 %v2841, %v2751
        %v2886 = vadd.f32 %v2842, %v2754
        %v2887 = vadd.f32 %v2843, %v2759
        %v2888 = vadd.f32 %v2844, %v2762
        %v2889 = vadd.f32 %v2845, %v2767
        %v2890 = vadd.f32 %v2846, %v2770
        %v2891 = vadd.f32 %v2847, %v2775
        %v2892 = vadd.f32 %v2848, %v2778
        %v2893 = vadd.f32 %v2849, %v2783
        %v2894 = vadd.f32 %v2850, %v2786
        %v2895 = vadd.f32 %v2851, %v2791
        %v2896 = vadd.f32 %v2852, %v2794
        %v2897 = vadd.f32 %v2853, %v2799
        %v2898 = vadd.f32 %v2854, %v2802
        %v2899 = vadd.f32 %v2855, %v2807
        %v2900 = vadd.f32 %v2856, %v2810
        %2901 = vst [vmem:[#allocation3] sm:$0xff] %v2857
        %2902 = vst [vmem:[#allocation3 + $0x8] sm:$0xff] %v2858
        %2903 = vst [vmem:[#allocation3 + $0x10] sm:$0xff] %v2859
        %2904 = vst [vmem:[#allocation3 + $0x18] sm:$0xff] %v2860
        %2905 = vst [vmem:[#allocation3 + $0x20] sm:$0xff] %v2861
        %2906 = vst [vmem:[#allocation3 + $0x28] sm:$0xff] %v2862
        %2907 = vst [vmem:[#allocation3 + $0x30] sm:$0xff] %v2863
        %2908 = vst [vmem:[#allocation3 + $0x38] sm:$0xff] %v2864
        %2909 = vst [vmem:[#allocation3 + $0x40] sm:$0xff] %v2865
        %2910 = vst [vmem:[#allocation3 + $0x48] sm:$0xff] %v2866
        %2911 = vst [vmem:[#allocation3 + $0x50] sm:$0xff] %v2867
        %2912 = vst [vmem:[#allocation3 + $0x58] sm:$0xff] %v2868
        %2913 = vst [vmem:[#allocation3 + $0x60] sm:$0xff] %v2869
        %2914 = vst [vmem:[#allocation3 + $0x68] sm:$0xff] %v2870
        %2915 = vst [vmem:[#allocation3 + $0x70] sm:$0xff] %v2871
        %2916 = vst [vmem:[#allocation3 + $0x78] sm:$0xff] %v2872
        %2917 = vst [vmem:[#allocation3 + $0x80] sm:$0xff] %v2873
        %2918 = vst [vmem:[#allocation3 + $0x88] sm:$0xff] %v2874
        %2919 = vst [vmem:[#allocation3 + $0x90] sm:$0xff] %v2875
        %2920 = vst [vmem:[#allocation3 + $0x98] sm:$0xff] %v2876
        %2921 = vst [vmem:[#allocation3 + $0xa0] sm:$0xff] %v2877
        %2922 = vst [vmem:[#allocation3 + $0xa8] sm:$0xff] %v2878
        %2923 = vst [vmem:[#allocation3 + $0xb0] sm:$0xff] %v2879
        %2924 = vst [vmem:[#allocation3 + $0xb8] sm:$0xff] %v2880
        %2925 = vst [vmem:[#allocation3 + $0xc0] sm:$0xff] %v2881
        %2926 = vst [vmem:[#allocation3 + $0xc8] sm:$0xff] %v2882
        %2927 = vst [vmem:[#allocation3 + $0xd0] sm:$0xff] %v2883
        %2928 = vst [vmem:[#allocation3 + $0xd8] sm:$0xff] %v2884
        %2929 = vst [vmem:[#allocation3 + $0xe0] sm:$0xff] %v2885
        %2930 = vst [vmem:[#allocation3 + $0xe8] sm:$0xff] %v2886
        %2931 = vst [vmem:[#allocation3 + $0xf0] sm:$0xff] %v2887
        %2932 = vst [vmem:[#allocation3 + $0xf8] sm:$0xff] %v2888
        %2933 = vst [vmem:[#allocation3 + $0x100] sm:$0xff] %v2889
        %2934 = vst [vmem:[#allocation3 + $0x108] sm:$0xff] %v2890
        %2935 = vst [vmem:[#allocation3 + $0x110] sm:$0xff] %v2891
        %2936 = vst [vmem:[#allocation3 + $0x118] sm:$0xff] %v2892
        %2937 = vst [vmem:[#allocation3 + $0x120] sm:$0xff] %v2893
        %2938 = vst [vmem:[#allocation3 + $0x128] sm:$0xff] %v2894
        %2939 = vst [vmem:[#allocation3 + $0x130] sm:$0xff] %v2895
        %2940 = vst [vmem:[#allocation3 + $0x138] sm:$0xff] %v2896
        %2941 = vst [vmem:[#allocation3 + $0x140] sm:$0xff] %v2897
        %2942 = vst [vmem:[#allocation3 + $0x148] sm:$0xff] %v2898
        %2943 = vst [vmem:[#allocation3 + $0x150] sm:$0xff] %v2899
        %2944 = vst [vmem:[#allocation3 + $0x158] sm:$0xff] %v2900
        %v2945 = vld [vmem:[#allocation2 + $0x10] sm:$0xff]
        %v2946 = vld [vmem:[#allocation2 + $0x18] sm:$0xff]
        %v2947 = vld [vmem:[#allocation2 + $0x20] sm:$0xff]
        %v2948 = vld [vmem:[#allocation2 + $0x28] sm:$0xff]
        %v2949 = vld [vmem:[#allocation2 + $0x30] sm:$0xff]
        %v2950 = vld [vmem:[#allocation2 + $0x38] sm:$0xff]
        %v2951 = vld [vmem:[#allocation2 + $0x40] sm:$0xff]
        %v2952 = vld [vmem:[#allocation2 + $0x48] sm:$0xff]
        %v2953 = vld [vmem:[#allocation2 + $0x50] sm:$0xff]
        %v2954 = vld [vmem:[#allocation2 + $0x58] sm:$0xff]
        %v2955 = vld [vmem:[#allocation2 + $0x60] sm:$0xff]
        %v2956 = vld [vmem:[#allocation2 + $0x68] sm:$0xff]
        %v2957 = vld [vmem:[#allocation2 + $0x70] sm:$0xff]
        %v2958 = vld [vmem:[#allocation2 + $0x78] sm:$0xff]
        %v2959 = vld [vmem:[#allocation2 + $0x80] sm:$0xff]
        %v2960 = vld [vmem:[#allocation2 + $0x88] sm:$0xff]
        %v2961 = vld [vmem:[#allocation2 + $0x90] sm:$0xff]
        %v2962 = vld [vmem:[#allocation2 + $0x98] sm:$0xff]
        %v2963 = vld [vmem:[#allocation2 + $0xa0] sm:$0xff]
        %v2964 = vld [vmem:[#allocation2 + $0xa8] sm:$0xff]
        %v2965 = vld [vmem:[#allocation2 + $0xb0] sm:$0xff]
        %v2966 = vld [vmem:[#allocation2 + $0xb8] sm:$0xff]
        %s2967 = scalar_lea.vmem %s3, 8
        %v2968 = vld [vmem:[%s2967] sm:$0x3]
        %v2970 = vsel %vm434, %v2945, 0
        %v2973 = vsel %vm434, %v2946, 0
        %v2976 = vsel %vm434, %v2947, 0
        %v2979 = vsel %vm434, %v2948, 0
        %v2982 = vsel %vm434, %v2949, 0
        %v2985 = vsel %vm434, %v2950, 0
        %v2988 = vsel %vm434, %v2951, 0
        %v2991 = vsel %vm434, %v2952, 0
        %v2994 = vsel %vm434, %v2953, 0
        %v2997 = vsel %vm434, %v2954, 0
        %v3000 = vsel %vm434, %v2955, 0
        %v3003 = vsel %vm434, %v2956, 0
        %v3006 = vsel %vm434, %v2957, 0
        %v3009 = vsel %vm434, %v2958, 0
        %v3012 = vsel %vm434, %v2959, 0
        %v3015 = vsel %vm434, %v2960, 0
        %v3018 = vsel %vm434, %v2961, 0
        %v3021 = vsel %vm434, %v2962, 0
        %v3024 = vsel %vm434, %v2963, 0
        %v3027 = vsel %vm434, %v2964, 0
        %v3030 = vsel %vm434, %v2965, 0
        %v3033 = vsel %vm434, %v2966, 0
        %v3036 = vand.u32 %v2968, %v953
        %3038 = vmatprep.subr.bf16.mxu0 0
        %3039 = vmatpush1.bf16.msra.mxu0 %v3036
        %3040 = vmatprep.subr.bf16.mxu0 0
        %3041 = vmatpush1.bf16.msra.mxu0 0
        %3042 = vmatprep.subr.bf16.mxu0 0
        %3043 = vmatpush1.bf16.msra.mxu0 0
        %3044 = vmatprep.subr.bf16.mxu0 0
        %3045 = vmatpush1.bf16.msra.mxu0 0
        %3046 = vmatprep.subr.bf16.mxu0 0
        %3047 = vmatpush1.bf16.msra.mxu0 0
        %3048 = vmatprep.subr.bf16.mxu0 0
        %3049 = vmatpush1.bf16.msra.mxu0 0
        %3050 = vmatprep.subr.bf16.mxu0 0
        %3051 = vmatpush1.bf16.msra.mxu0 0
        %3052 = vmatprep.subr.bf16.mxu0 0
        %3053 = vmatpush1.bf16.msra.mxu0 0
        %3054 = vmatprep.subr.bf16.mxu0 0
        %3055 = vmatpush1.bf16.msra.mxu0 0
        %3056 = vmatprep.subr.bf16.mxu0 0
        %3057 = vmatpush1.bf16.msra.mxu0 0
        %3058 = vmatprep.subr.bf16.mxu0 0
        %3059 = vmatpush1.bf16.msra.mxu0 0
        %3060 = vmatprep.subr.bf16.mxu0 0
        %3061 = vmatpush1.bf16.msra.mxu0 0
        %3062 = vmatprep.subr.bf16.mxu0 0
        %3063 = vmatpush1.bf16.msra.mxu0 0
        %3064 = vmatprep.subr.bf16.mxu0 0
        %3065 = vmatpush1.bf16.msra.mxu0 0
        %3066 = vmatprep.subr.bf16.mxu0 0
        %3067 = vmatpush1.bf16.msra.mxu0 0
        %3068 = vmatprep.subr.bf16.mxu0 0
        %3069 = vmatpush1.bf16.msra.mxu0 0
        %3070 = vmatprep.mubr.bf16.mxu0 0
        %3071 = vmatmul.mubr.bf16.gmra.mrb[0].mxu0 %v2970
        %v3072 = vpop.f32.mrb[0].mxu0
        %v3073 = vadd.f32 0.0, %v3072
        %v3074 = vpop.f32.mrb[0].mxu0
        %v3075 = vpop.f32.mrb[0].mxu0
        %v3076 = vadd.f32 0.0, %v3075
        %v3077 = vpop.f32.mrb[0].mxu0
        %3078 = vmatprep.mubr.bf16.mxu0 0
        %3079 = vmatmul.mubr.bf16.gmra.mrb[0].mxu0 %v2973
        %v3080 = vpop.f32.mrb[0].mxu0
        %v3081 = vadd.f32 0.0, %v3080
        %v3082 = vpop.f32.mrb[0].mxu0
        %v3083 = vpop.f32.mrb[0].mxu0
        %v3084 = vadd.f32 0.0, %v3083
        %v3085 = vpop.f32.mrb[0].mxu0
        %3086 = vmatprep.mubr.bf16.mxu0 0
        %3087 = vmatmul.mubr.bf16.gmra.mrb[0].mxu0 %v2976
        %v3088 = vpop.f32.mrb[0].mxu0
        %v3089 = vadd.f32 0.0, %v3088
        %v3090 = vpop.f32.mrb[0].mxu0
        %v3091 = vpop.f32.mrb[0].mxu0
        %v3092 = vadd.f32 0.0, %v3091
        %v3093 = vpop.f32.mrb[0].mxu0
        %3094 = vmatprep.mubr.bf16.mxu0 0
        %3095 = vmatmul.mubr.bf16.gmra.mrb[0].mxu0 %v2979
        %v3096 = vpop.f32.mrb[0].mxu0
        %v3097 = vadd.f32 0.0, %v3096
        %v3098 = vpop.f32.mrb[0].mxu0
        %v3099 = vpop.f32.mrb[0].mxu0
        %v3100 = vadd.f32 0.0, %v3099
        %v3101 = vpop.f32.mrb[0].mxu0
        %3102 = vmatprep.mubr.bf16.mxu0 0
        %3103 = vmatmul.mubr.bf16.gmra.mrb[0].mxu0 %v2982
        %v3104 = vpop.f32.mrb[0].mxu0
        %v3105 = vadd.f32 0.0, %v3104
        %v3106 = vpop.f32.mrb[0].mxu0
        %v3107 = vpop.f32.mrb[0].mxu0
        %v3108 = vadd.f32 0.0, %v3107
        %v3109 = vpop.f32.mrb[0].mxu0
        %3110 = vmatprep.mubr.bf16.mxu0 0
        %3111 = vmatmul.mubr.bf16.gmra.mrb[0].mxu0 %v2985
        %v3112 = vpop.f32.mrb[0].mxu0
        %v3113 = vadd.f32 0.0, %v3112
        %v3114 = vpop.f32.mrb[0].mxu0
        %v3115 = vpop.f32.mrb[0].mxu0
        %v3116 = vadd.f32 0.0, %v3115
        %v3117 = vpop.f32.mrb[0].mxu0
        %3118 = vmatprep.mubr.bf16.mxu0 0
        %3119 = vmatmul.mubr.bf16.gmra.mrb[0].mxu0 %v2988
        %v3120 = vpop.f32.mrb[0].mxu0
        %v3121 = vadd.f32 0.0, %v3120
        %v3122 = vpop.f32.mrb[0].mxu0
        %v3123 = vpop.f32.mrb[0].mxu0
        %v3124 = vadd.f32 0.0, %v3123
        %v3125 = vpop.f32.mrb[0].mxu0
        %3126 = vmatprep.mubr.bf16.mxu0 0
        %3127 = vmatmul.mubr.bf16.gmra.mrb[0].mxu0 %v2991
        %v3128 = vpop.f32.mrb[0].mxu0
        %v3129 = vadd.f32 0.0, %v3128
        %v3130 = vpop.f32.mrb[0].mxu0
        %v3131 = vpop.f32.mrb[0].mxu0
        %v3132 = vadd.f32 0.0, %v3131
        %v3133 = vpop.f32.mrb[0].mxu0
        %3134 = vmatprep.mubr.bf16.mxu0 0
        %3135 = vmatmul.mubr.bf16.gmra.mrb[0].mxu0 %v2994
        %v3136 = vpop.f32.mrb[0].mxu0
        %v3137 = vadd.f32 0.0, %v3136
        %v3138 = vpop.f32.mrb[0].mxu0
        %v3139 = vpop.f32.mrb[0].mxu0
        %v3140 = vadd.f32 0.0, %v3139
        %v3141 = vpop.f32.mrb[0].mxu0
        %3142 = vmatprep.mubr.bf16.mxu0 0
        %3143 = vmatmul.mubr.bf16.gmra.mrb[0].mxu0 %v2997
        %v3144 = vpop.f32.mrb[0].mxu0
        %v3145 = vadd.f32 0.0, %v3144
        %v3146 = vpop.f32.mrb[0].mxu0
        %v3147 = vpop.f32.mrb[0].mxu0
        %v3148 = vadd.f32 0.0, %v3147
        %v3149 = vpop.f32.mrb[0].mxu0
        %3150 = vmatprep.mubr.bf16.mxu0 0
        %3151 = vmatmul.mubr.bf16.gmra.mrb[0].mxu0 %v3000
        %v3152 = vpop.f32.mrb[0].mxu0
        %v3153 = vadd.f32 0.0, %v3152
        %v3154 = vpop.f32.mrb[0].mxu0
        %v3155 = vpop.f32.mrb[0].mxu0
        %v3156 = vadd.f32 0.0, %v3155
        %v3157 = vpop.f32.mrb[0].mxu0
        %3158 = vmatprep.mubr.bf16.mxu0 0
        %3159 = vmatmul.mubr.bf16.gmra.mrb[0].mxu0 %v3003
        %v3160 = vpop.f32.mrb[0].mxu0
        %v3161 = vadd.f32 0.0, %v3160
        %v3162 = vpop.f32.mrb[0].mxu0
        %v3163 = vpop.f32.mrb[0].mxu0
        %v3164 = vadd.f32 0.0, %v3163
        %v3165 = vpop.f32.mrb[0].mxu0
        %3166 = vmatprep.mubr.bf16.mxu0 0
        %3167 = vmatmul.mubr.bf16.gmra.mrb[0].mxu0 %v3006
        %v3168 = vpop.f32.mrb[0].mxu0
        %v3169 = vadd.f32 0.0, %v3168
        %v3170 = vpop.f32.mrb[0].mxu0
        %v3171 = vpop.f32.mrb[0].mxu0
        %v3172 = vadd.f32 0.0, %v3171
        %v3173 = vpop.f32.mrb[0].mxu0
        %3174 = vmatprep.mubr.bf16.mxu0 0
        %3175 = vmatmul.mubr.bf16.gmra.mrb[0].mxu0 %v3009
        %v3176 = vpop.f32.mrb[0].mxu0
        %v3177 = vadd.f32 0.0, %v3176
        %v3178 = vpop.f32.mrb[0].mxu0
        %v3179 = vpop.f32.mrb[0].mxu0
        %v3180 = vadd.f32 0.0, %v3179
        %v3181 = vpop.f32.mrb[0].mxu0
        %3182 = vmatprep.mubr.bf16.mxu0 0
        %3183 = vmatmul.mubr.bf16.gmra.mrb[0].mxu0 %v3012
        %v3184 = vpop.f32.mrb[0].mxu0
        %v3185 = vadd.f32 0.0, %v3184
        %v3186 = vpop.f32.mrb[0].mxu0
        %v3187 = vpop.f32.mrb[0].mxu0
        %v3188 = vadd.f32 0.0, %v3187
        %v3189 = vpop.f32.mrb[0].mxu0
        %3190 = vmatprep.mubr.bf16.mxu0 0
        %3191 = vmatmul.mubr.bf16.gmra.mrb[0].mxu0 %v3015
        %v3192 = vpop.f32.mrb[0].mxu0
        %v3193 = vadd.f32 0.0, %v3192
        %v3194 = vpop.f32.mrb[0].mxu0
        %v3195 = vpop.f32.mrb[0].mxu0
        %v3196 = vadd.f32 0.0, %v3195
        %v3197 = vpop.f32.mrb[0].mxu0
        %3198 = vmatprep.mubr.bf16.mxu0 0
        %3199 = vmatmul.mubr.bf16.gmra.mrb[0].mxu0 %v3018
        %v3200 = vpop.f32.mrb[0].mxu0
        %v3201 = vadd.f32 0.0, %v3200
        %v3202 = vpop.f32.mrb[0].mxu0
        %v3203 = vpop.f32.mrb[0].mxu0
        %v3204 = vadd.f32 0.0, %v3203
        %v3205 = vpop.f32.mrb[0].mxu0
        %3206 = vmatprep.mubr.bf16.mxu0 0
        %3207 = vmatmul.mubr.bf16.gmra.mrb[0].mxu0 %v3021
        %v3208 = vpop.f32.mrb[0].mxu0
        %v3209 = vadd.f32 0.0, %v3208
        %v3210 = vpop.f32.mrb[0].mxu0
        %v3211 = vpop.f32.mrb[0].mxu0
        %v3212 = vadd.f32 0.0, %v3211
        %v3213 = vpop.f32.mrb[0].mxu0
        %3214 = vmatprep.mubr.bf16.mxu0 0
        %3215 = vmatmul.mubr.bf16.gmra.mrb[0].mxu0 %v3024
        %v3216 = vpop.f32.mrb[0].mxu0
        %v3217 = vadd.f32 0.0, %v3216
        %v3218 = vpop.f32.mrb[0].mxu0
        %v3219 = vpop.f32.mrb[0].mxu0
        %v3220 = vadd.f32 0.0, %v3219
        %v3221 = vpop.f32.mrb[0].mxu0
        %3222 = vmatprep.mubr.bf16.mxu0 0
        %3223 = vmatmul.mubr.bf16.gmra.mrb[0].mxu0 %v3027
        %v3224 = vpop.f32.mrb[0].mxu0
        %v3225 = vadd.f32 0.0, %v3224
        %v3226 = vpop.f32.mrb[0].mxu0
        %v3227 = vpop.f32.mrb[0].mxu0
        %v3228 = vadd.f32 0.0, %v3227
        %v3229 = vpop.f32.mrb[0].mxu0
        %3230 = vmatprep.mubr.bf16.mxu0 0
        %3231 = vmatmul.mubr.bf16.gmra.mrb[0].mxu0 %v3030
        %v3232 = vpop.f32.mrb[0].mxu0
        %v3233 = vadd.f32 0.0, %v3232
        %v3234 = vpop.f32.mrb[0].mxu0
        %v3235 = vpop.f32.mrb[0].mxu0
        %v3236 = vadd.f32 0.0, %v3235
        %v3237 = vpop.f32.mrb[0].mxu0
        %3238 = vmatprep.mubr.bf16.mxu0 0
        %3239 = vmatmul.mubr.bf16.gmra.mrb[0].mxu0 %v3033
        %v3240 = vpop.f32.mrb[0].mxu0
        %v3241 = vadd.f32 0.0, %v3240
        %v3242 = vpop.f32.mrb[0].mxu0
        %v3243 = vpop.f32.mrb[0].mxu0
        %v3244 = vadd.f32 0.0, %v3243
        %v3245 = vpop.f32.mrb[0].mxu0
        %3246 = vdwg.mxu0
        %v3247 = vld [vmem:[#allocation3] sm:$0xff]
        %v3248 = vld [vmem:[#allocation3 + $0x8] sm:$0xff]
        %v3249 = vld [vmem:[#allocation3 + $0x10] sm:$0xff]
        %v3250 = vld [vmem:[#allocation3 + $0x18] sm:$0xff]
        %v3251 = vld [vmem:[#allocation3 + $0x20] sm:$0xff]
        %v3252 = vld [vmem:[#allocation3 + $0x28] sm:$0xff]
        %v3253 = vld [vmem:[#allocation3 + $0x30] sm:$0xff]
        %v3254 = vld [vmem:[#allocation3 + $0x38] sm:$0xff]
        %v3255 = vld [vmem:[#allocation3 + $0x40] sm:$0xff]
        %v3256 = vld [vmem:[#allocation3 + $0x48] sm:$0xff]
        %v3257 = vld [vmem:[#allocation3 + $0x50] sm:$0xff]
        %v3258 = vld [vmem:[#allocation3 + $0x58] sm:$0xff]
        %v3259 = vld [vmem:[#allocation3 + $0x60] sm:$0xff]
        %v3260 = vld [vmem:[#allocation3 + $0x68] sm:$0xff]
        %v3261 = vld [vmem:[#allocation3 + $0x70] sm:$0xff]
        %v3262 = vld [vmem:[#allocation3 + $0x78] sm:$0xff]
        %v3263 = vld [vmem:[#allocation3 + $0x80] sm:$0xff]
        %v3264 = vld [vmem:[#allocation3 + $0x88] sm:$0xff]
        %v3265 = vld [vmem:[#allocation3 + $0x90] sm:$0xff]
        %v3266 = vld [vmem:[#allocation3 + $0x98] sm:$0xff]
        %v3267 = vld [vmem:[#allocation3 + $0xa0] sm:$0xff]
        %v3268 = vld [vmem:[#allocation3 + $0xa8] sm:$0xff]
        %v3269 = vld [vmem:[#allocation3 + $0xb0] sm:$0xff]
        %v3270 = vld [vmem:[#allocation3 + $0xb8] sm:$0xff]
        %v3271 = vld [vmem:[#allocation3 + $0xc0] sm:$0xff]
        %v3272 = vld [vmem:[#allocation3 + $0xc8] sm:$0xff]
        %v3273 = vld [vmem:[#allocation3 + $0xd0] sm:$0xff]
        %v3274 = vld [vmem:[#allocation3 + $0xd8] sm:$0xff]
        %v3275 = vld [vmem:[#allocation3 + $0xe0] sm:$0xff]
        %v3276 = vld [vmem:[#allocation3 + $0xe8] sm:$0xff]
        %v3277 = vld [vmem:[#allocation3 + $0xf0] sm:$0xff]
        %v3278 = vld [vmem:[#allocation3 + $0xf8] sm:$0xff]
        %v3279 = vld [vmem:[#allocation3 + $0x100] sm:$0xff]
        %v3280 = vld [vmem:[#allocation3 + $0x108] sm:$0xff]
        %v3281 = vld [vmem:[#allocation3 + $0x110] sm:$0xff]
        %v3282 = vld [vmem:[#allocation3 + $0x118] sm:$0xff]
        %v3283 = vld [vmem:[#allocation3 + $0x120] sm:$0xff]
        %v3284 = vld [vmem:[#allocation3 + $0x128] sm:$0xff]
        %v3285 = vld [vmem:[#allocation3 + $0x130] sm:$0xff]
        %v3286 = vld [vmem:[#allocation3 + $0x138] sm:$0xff]
        %v3287 = vld [vmem:[#allocation3 + $0x140] sm:$0xff]
        %v3288 = vld [vmem:[#allocation3 + $0x148] sm:$0xff]
        %v3289 = vld [vmem:[#allocation3 + $0x150] sm:$0xff]
        %v3290 = vld [vmem:[#allocation3 + $0x158] sm:$0xff]
        %v3291 = vadd.f32 %v3247, %v3073
        %v3292 = vadd.f32 %v3248, %v3076
        %v3293 = vadd.f32 %v3249, %v3081
        %v3294 = vadd.f32 %v3250, %v3084
        %v3295 = vadd.f32 %v3251, %v3089
        %v3296 = vadd.f32 %v3252, %v3092
        %v3297 = vadd.f32 %v3253, %v3097
        %v3298 = vadd.f32 %v3254, %v3100
        %v3299 = vadd.f32 %v3255, %v3105
        %v3300 = vadd.f32 %v3256, %v3108
        %v3301 = vadd.f32 %v3257, %v3113
        %v3302 = vadd.f32 %v3258, %v3116
        %v3303 = vadd.f32 %v3259, %v3121
        %v3304 = vadd.f32 %v3260, %v3124
        %v3305 = vadd.f32 %v3261, %v3129
        %v3306 = vadd.f32 %v3262, %v3132
        %v3307 = vadd.f32 %v3263, %v3137
        %v3308 = vadd.f32 %v3264, %v3140
        %v3309 = vadd.f32 %v3265, %v3145
        %v3310 = vadd.f32 %v3266, %v3148
        %v3311 = vadd.f32 %v3267, %v3153
        %v3312 = vadd.f32 %v3268, %v3156
        %v3313 = vadd.f32 %v3269, %v3161
        %v3314 = vadd.f32 %v3270, %v3164
        %v3315 = vadd.f32 %v3271, %v3169
        %v3316 = vadd.f32 %v3272, %v3172
        %v3317 = vadd.f32 %v3273, %v3177
        %v3318 = vadd.f32 %v3274, %v3180
        %v3319 = vadd.f32 %v3275, %v3185
        %v3320 = vadd.f32 %v3276, %v3188
        %v3321 = vadd.f32 %v3277, %v3193
        %v3322 = vadd.f32 %v3278, %v3196
        %v3323 = vadd.f32 %v3279, %v3201
        %v3324 = vadd.f32 %v3280, %v3204
        %v3325 = vadd.f32 %v3281, %v3209
        %v3326 = vadd.f32 %v3282, %v3212
        %v3327 = vadd.f32 %v3283, %v3217
        %v3328 = vadd.f32 %v3284, %v3220
        %v3329 = vadd.f32 %v3285, %v3225
        %v3330 = vadd.f32 %v3286, %v3228
        %v3331 = vadd.f32 %v3287, %v3233
        %v3332 = vadd.f32 %v3288, %v3236
        %v3333 = vadd.f32 %v3289, %v3241
        %v3334 = vadd.f32 %v3290, %v3244
        %3335 = vst [vmem:[#allocation3] sm:$0xff] %v3291
        %3336 = vst [vmem:[#allocation3 + $0x8] sm:$0xff] %v3292
        %3337 = vst [vmem:[#allocation3 + $0x10] sm:$0xff] %v3293
        %3338 = vst [vmem:[#allocation3 + $0x18] sm:$0xff] %v3294
        %3339 = vst [vmem:[#allocation3 + $0x20] sm:$0xff] %v3295
        %3340 = vst [vmem:[#allocation3 + $0x28] sm:$0xff] %v3296
        %3341 = vst [vmem:[#allocation3 + $0x30] sm:$0xff] %v3297
        %3342 = vst [vmem:[#allocation3 + $0x38] sm:$0xff] %v3298
        %3343 = vst [vmem:[#allocation3 + $0x40] sm:$0xff] %v3299
        %3344 = vst [vmem:[#allocation3 + $0x48] sm:$0xff] %v3300
        %3345 = vst [vmem:[#allocation3 + $0x50] sm:$0xff] %v3301
        %3346 = vst [vmem:[#allocation3 + $0x58] sm:$0xff] %v3302
        %3347 = vst [vmem:[#allocation3 + $0x60] sm:$0xff] %v3303
        %3348 = vst [vmem:[#allocation3 + $0x68] sm:$0xff] %v3304
        %3349 = vst [vmem:[#allocation3 + $0x70] sm:$0xff] %v3305
        %3350 = vst [vmem:[#allocation3 + $0x78] sm:$0xff] %v3306
        %3351 = vst [vmem:[#allocation3 + $0x80] sm:$0xff] %v3307
        %3352 = vst [vmem:[#allocation3 + $0x88] sm:$0xff] %v3308
        %3353 = vst [vmem:[#allocation3 + $0x90] sm:$0xff] %v3309
        %3354 = vst [vmem:[#allocation3 + $0x98] sm:$0xff] %v3310
        %3355 = vst [vmem:[#allocation3 + $0xa0] sm:$0xff] %v3311
        %3356 = vst [vmem:[#allocation3 + $0xa8] sm:$0xff] %v3312
        %3357 = vst [vmem:[#allocation3 + $0xb0] sm:$0xff] %v3313
        %3358 = vst [vmem:[#allocation3 + $0xb8] sm:$0xff] %v3314
        %3359 = vst [vmem:[#allocation3 + $0xc0] sm:$0xff] %v3315
        %3360 = vst [vmem:[#allocation3 + $0xc8] sm:$0xff] %v3316
        %3361 = vst [vmem:[#allocation3 + $0xd0] sm:$0xff] %v3317
        %3362 = vst [vmem:[#allocation3 + $0xd8] sm:$0xff] %v3318
        %3363 = vst [vmem:[#allocation3 + $0xe0] sm:$0xff] %v3319
        %3364 = vst [vmem:[#allocation3 + $0xe8] sm:$0xff] %v3320
        %3365 = vst [vmem:[#allocation3 + $0xf0] sm:$0xff] %v3321
        %3366 = vst [vmem:[#allocation3 + $0xf8] sm:$0xff] %v3322
        %3367 = vst [vmem:[#allocation3 + $0x100] sm:$0xff] %v3323
        %3368 = vst [vmem:[#allocation3 + $0x108] sm:$0xff] %v3324
        %3369 = vst [vmem:[#allocation3 + $0x110] sm:$0xff] %v3325
        %3370 = vst [vmem:[#allocation3 + $0x118] sm:$0xff] %v3326
        %3371 = vst [vmem:[#allocation3 + $0x120] sm:$0xff] %v3327
        %3372 = vst [vmem:[#allocation3 + $0x128] sm:$0xff] %v3328
        %3373 = vst [vmem:[#allocation3 + $0x130] sm:$0xff] %v3329
        %3374 = vst [vmem:[#allocation3 + $0x138] sm:$0xff] %v3330
        %3375 = vst [vmem:[#allocation3 + $0x140] sm:$0xff] %v3331
        %3376 = vst [vmem:[#allocation3 + $0x148] sm:$0xff] %v3332
        %3377 = vst [vmem:[#allocation3 + $0x150] sm:$0xff] %v3333
        %3378 = vst [vmem:[#allocation3 + $0x158] sm:$0xff] %v3334
        %v3379 = vld [vmem:[#allocation2 + $0x10] sm:$0xff]
        %v3380 = vld [vmem:[#allocation2 + $0x18] sm:$0xff]
        %v3381 = vld [vmem:[#allocation2 + $0x20] sm:$0xff]
        %v3382 = vld [vmem:[#allocation2 + $0x28] sm:$0xff]
        %v3383 = vld [vmem:[#allocation2 + $0x30] sm:$0xff]
        %v3384 = vld [vmem:[#allocation2 + $0x38] sm:$0xff]
        %v3385 = vld [vmem:[#allocation2 + $0x40] sm:$0xff]
        %v3386 = vld [vmem:[#allocation2 + $0x48] sm:$0xff]
        %v3387 = vld [vmem:[#allocation2 + $0x50] sm:$0xff]
        %v3388 = vld [vmem:[#allocation2 + $0x58] sm:$0xff]
        %v3389 = vld [vmem:[#allocation2 + $0x60] sm:$0xff]
        %v3390 = vld [vmem:[#allocation2 + $0x68] sm:$0xff]
        %v3391 = vld [vmem:[#allocation2 + $0x70] sm:$0xff]
        %v3392 = vld [vmem:[#allocation2 + $0x78] sm:$0xff]
        %v3393 = vld [vmem:[#allocation2 + $0x80] sm:$0xff]
        %v3394 = vld [vmem:[#allocation2 + $0x88] sm:$0xff]
        %v3395 = vld [vmem:[#allocation2 + $0x90] sm:$0xff]
        %v3396 = vld [vmem:[#allocation2 + $0x98] sm:$0xff]
        %v3397 = vld [vmem:[#allocation2 + $0xa0] sm:$0xff]
        %v3398 = vld [vmem:[#allocation2 + $0xa8] sm:$0xff]
        %v3399 = vld [vmem:[#allocation2 + $0xb0] sm:$0xff]
        %v3400 = vld [vmem:[#allocation2 + $0xb8] sm:$0xff]
        %v3401 = vld [vmem:[#allocation2 + $0xc0] sm:$0x1]
        %s3402 = scalar_lea.vmem %s3, 10
        %v3403 = vld [vmem:[%s3402] sm:$0x3]
        %vm3404 = vsmask.f32 7424
        %v3406 = vshrl.u32 %v3379, 16
        %v3408 = vshll.u32 %v3379, 16
        %v3410 = vrot.slane %v3408, 1
        %v3411 = vor.u32 %v3406, %v3410
        %v3413 = vshll.u32 %v3380, 16
        %v3415 = vrot.slane %v3413, 1
        %v3416 = vsel %vm3404, %v3411, %v3415
        %v3417 = vshrl.u32 %v3380, 16
        %v3419 = vor.u32 %v3417, %v3415
        %v3421 = vshll.u32 %v3381, 16
        %v3423 = vrot.slane %v3421, 1
        %v3424 = vsel %vm3404, %v3419, %v3423
        %v3425 = vshrl.u32 %v3381, 16
        %v3427 = vor.u32 %v3425, %v3423
        %v3429 = vshll.u32 %v3382, 16
        %v3431 = vrot.slane %v3429, 1
        %v3432 = vsel %vm3404, %v3427, %v3431
        %v3433 = vshrl.u32 %v3382, 16
        %v3435 = vor.u32 %v3433, %v3431
        %v3437 = vshll.u32 %v3383, 16
        %v3439 = vrot.slane %v3437, 1
        %v3440 = vsel %vm3404, %v3435, %v3439
        %v3441 = vshrl.u32 %v3383, 16
        %v3443 = vor.u32 %v3441, %v3439
        %v3445 = vshll.u32 %v3384, 16
        %v3447 = vrot.slane %v3445, 1
        %v3448 = vsel %vm3404, %v3443, %v3447
        %v3449 = vshrl.u32 %v3384, 16
        %v3451 = vor.u32 %v3449, %v3447
        %v3453 = vshll.u32 %v3385, 16
        %v3455 = vrot.slane %v3453, 1
        %v3456 = vsel %vm3404, %v3451, %v3455
        %v3457 = vshrl.u32 %v3385, 16
        %v3459 = vor.u32 %v3457, %v3455
        %v3461 = vshll.u32 %v3386, 16
        %v3463 = vrot.slane %v3461, 1
        %v3464 = vsel %vm3404, %v3459, %v3463
        %v3465 = vshrl.u32 %v3386, 16
        %v3467 = vor.u32 %v3465, %v3463
        %v3469 = vshll.u32 %v3387, 16
        %v3471 = vrot.slane %v3469, 1
        %v3472 = vsel %vm3404, %v3467, %v3471
        %v3473 = vshrl.u32 %v3387, 16
        %v3475 = vor.u32 %v3473, %v3471
        %v3477 = vshll.u32 %v3388, 16
        %v3479 = vrot.slane %v3477, 1
        %v3480 = vsel %vm3404, %v3475, %v3479
        %v3481 = vshrl.u32 %v3388, 16
        %v3483 = vor.u32 %v3481, %v3479
        %v3485 = vshll.u32 %v3389, 16
        %v3487 = vrot.slane %v3485, 1
        %v3488 = vsel %vm3404, %v3483, %v3487
        %v3489 = vshrl.u32 %v3389, 16
        %v3491 = vor.u32 %v3489, %v3487
        %v3493 = vshll.u32 %v3390, 16
        %v3495 = vrot.slane %v3493, 1
        %v3496 = vsel %vm3404, %v3491, %v3495
        %v3497 = vshrl.u32 %v3390, 16
        %v3499 = vor.u32 %v3497, %v3495
        %v3501 = vshll.u32 %v3391, 16
        %v3503 = vrot.slane %v3501, 1
        %v3504 = vsel %vm3404, %v3499, %v3503
        %v3505 = vshrl.u32 %v3391, 16
        %v3507 = vor.u32 %v3505, %v3503
        %v3509 = vshll.u32 %v3392, 16
        %v3511 = vrot.slane %v3509, 1
        %v3512 = vsel %vm3404, %v3507, %v3511
        %v3513 = vshrl.u32 %v3392, 16
        %v3515 = vor.u32 %v3513, %v3511
        %v3517 = vshll.u32 %v3393, 16
        %v3519 = vrot.slane %v3517, 1
        %v3520 = vsel %vm3404, %v3515, %v3519
        %v3521 = vshrl.u32 %v3393, 16
        %v3523 = vor.u32 %v3521, %v3519
        %v3525 = vshll.u32 %v3394, 16
        %v3527 = vrot.slane %v3525, 1
        %v3528 = vsel %vm3404, %v3523, %v3527
        %v3529 = vshrl.u32 %v3394, 16
        %v3531 = vor.u32 %v3529, %v3527
        %v3533 = vshll.u32 %v3395, 16
        %v3535 = vrot.slane %v3533, 1
        %v3536 = vsel %vm3404, %v3531, %v3535
        %v3537 = vshrl.u32 %v3395, 16
        %v3539 = vor.u32 %v3537, %v3535
        %v3541 = vshll.u32 %v3396, 16
        %v3543 = vrot.slane %v3541, 1
        %v3544 = vsel %vm3404, %v3539, %v3543
        %v3545 = vshrl.u32 %v3396, 16
        %v3547 = vor.u32 %v3545, %v3543
        %v3549 = vshll.u32 %v3397, 16
        %v3551 = vrot.slane %v3549, 1
        %v3552 = vsel %vm3404, %v3547, %v3551
        %v3553 = vshrl.u32 %v3397, 16
        %v3555 = vor.u32 %v3553, %v3551
        %v3557 = vshll.u32 %v3398, 16
        %v3559 = vrot.slane %v3557, 1
        %v3560 = vsel %vm3404, %v3555, %v3559
        %v3561 = vshrl.u32 %v3398, 16
        %v3563 = vor.u32 %v3561, %v3559
        %v3565 = vshll.u32 %v3399, 16
        %v3567 = vrot.slane %v3565, 1
        %v3568 = vsel %vm3404, %v3563, %v3567
        %v3569 = vshrl.u32 %v3399, 16
        %v3571 = vor.u32 %v3569, %v3567
        %v3573 = vshll.u32 %v3400, 16
        %v3575 = vrot.slane %v3573, 1
        %v3576 = vsel %vm3404, %v3571, %v3575
        %v3577 = vshrl.u32 %v3400, 16
        %v3579 = vor.u32 %v3577, %v3575
        %v3581 = vshll.u32 %v3401, 16
        %v3583 = vrot.slane %v3581, 1
        %v3584 = vsel %vm3404, %v3579, %v3583
        %v3586 = vsel %vm434, %v3416, 0
        %v3589 = vsel %vm434, %v3424, 0
        %v3592 = vsel %vm434, %v3432, 0
        %v3595 = vsel %vm434, %v3440, 0
        %v3598 = vsel %vm434, %v3448, 0
        %v3601 = vsel %vm434, %v3456, 0
        %v3604 = vsel %vm434, %v3464, 0
        %v3607 = vsel %vm434, %v3472, 0
        %v3610 = vsel %vm434, %v3480, 0
        %v3613 = vsel %vm434, %v3488, 0
        %v3616 = vsel %vm434, %v3496, 0
        %v3619 = vsel %vm434, %v3504, 0
        %v3622 = vsel %vm434, %v3512, 0
        %v3625 = vsel %vm434, %v3520, 0
        %v3628 = vsel %vm434, %v3528, 0
        %v3631 = vsel %vm434, %v3536, 0
        %v3634 = vsel %vm434, %v3544, 0
        %v3637 = vsel %vm434, %v3552, 0
        %v3640 = vsel %vm434, %v3560, 0
        %v3643 = vsel %vm434, %v3568, 0
        %v3646 = vsel %vm434, %v3576, 0
        %v3649 = vsel %vm434, %v3584, 0
        %v3652 = vand.u32 %v3403, %v953
        %3654 = vmatprep.subr.bf16.mxu0 0
        %3655 = vmatpush1.bf16.msra.mxu0 %v3652
        %3656 = vmatprep.subr.bf16.mxu0 0
        %3657 = vmatpush1.bf16.msra.mxu0 0
        %3658 = vmatprep.subr.bf16.mxu0 0
        %3659 = vmatpush1.bf16.msra.mxu0 0
        %3660 = vmatprep.subr.bf16.mxu0 0
        %3661 = vmatpush1.bf16.msra.mxu0 0
        %3662 = vmatprep.subr.bf16.mxu0 0
        %3663 = vmatpush1.bf16.msra.mxu0 0
        %3664 = vmatprep.subr.bf16.mxu0 0
        %3665 = vmatpush1.bf16.msra.mxu0 0
        %3666 = vmatprep.subr.bf16.mxu0 0
        %3667 = vmatpush1.bf16.msra.mxu0 0
        %3668 = vmatprep.subr.bf16.mxu0 0
        %3669 = vmatpush1.bf16.msra.mxu0 0
        %3670 = vmatprep.subr.bf16.mxu0 0
        %3671 = vmatpush1.bf16.msra.mxu0 0
        %3672 = vmatprep.subr.bf16.mxu0 0
        %3673 = vmatpush1.bf16.msra.mxu0 0
        %3674 = vmatprep.subr.bf16.mxu0 0
        %3675 = vmatpush1.bf16.msra.mxu0 0
        %3676 = vmatprep.subr.bf16.mxu0 0
        %3677 = vmatpush1.bf16.msra.mxu0 0
        %3678 = vmatprep.subr.bf16.mxu0 0
        %3679 = vmatpush1.bf16.msra.mxu0 0
        %3680 = vmatprep.subr.bf16.mxu0 0
        %3681 = vmatpush1.bf16.msra.mxu0 0
        %3682 = vmatprep.subr.bf16.mxu0 0
        %3683 = vmatpush1.bf16.msra.mxu0 0
        %3684 = vmatprep.subr.bf16.mxu0 0
        %3685 = vmatpush1.bf16.msra.mxu0 0
        %3686 = vmatprep.mubr.bf16.mxu0 0
        %3687 = vmatmul.mubr.bf16.gmra.mrb[0].mxu0 %v3586
        %v3688 = vpop.f32.mrb[0].mxu0
        %v3689 = vadd.f32 0.0, %v3688
        %v3690 = vpop.f32.mrb[0].mxu0
        %v3691 = vpop.f32.mrb[0].mxu0
        %v3692 = vadd.f32 0.0, %v3691
        %v3693 = vpop.f32.mrb[0].mxu0
        %3694 = vmatprep.mubr.bf16.mxu0 0
        %3695 = vmatmul.mubr.bf16.gmra.mrb[0].mxu0 %v3589
        %v3696 = vpop.f32.mrb[0].mxu0
        %v3697 = vadd.f32 0.0, %v3696
        %v3698 = vpop.f32.mrb[0].mxu0
        %v3699 = vpop.f32.mrb[0].mxu0
        %v3700 = vadd.f32 0.0, %v3699
        %v3701 = vpop.f32.mrb[0].mxu0
        %3702 = vmatprep.mubr.bf16.mxu0 0
        %3703 = vmatmul.mubr.bf16.gmra.mrb[0].mxu0 %v3592
        %v3704 = vpop.f32.mrb[0].mxu0
        %v3705 = vadd.f32 0.0, %v3704
        %v3706 = vpop.f32.mrb[0].mxu0
        %v3707 = vpop.f32.mrb[0].mxu0
        %v3708 = vadd.f32 0.0, %v3707
        %v3709 = vpop.f32.mrb[0].mxu0
        %3710 = vmatprep.mubr.bf16.mxu0 0
        %3711 = vmatmul.mubr.bf16.gmra.mrb[0].mxu0 %v3595
        %v3712 = vpop.f32.mrb[0].mxu0
        %v3713 = vadd.f32 0.0, %v3712
        %v3714 = vpop.f32.mrb[0].mxu0
        %v3715 = vpop.f32.mrb[0].mxu0
        %v3716 = vadd.f32 0.0, %v3715
        %v3717 = vpop.f32.mrb[0].mxu0
        %3718 = vmatprep.mubr.bf16.mxu0 0
        %3719 = vmatmul.mubr.bf16.gmra.mrb[0].mxu0 %v3598
        %v3720 = vpop.f32.mrb[0].mxu0
        %v3721 = vadd.f32 0.0, %v3720
        %v3722 = vpop.f32.mrb[0].mxu0
        %v3723 = vpop.f32.mrb[0].mxu0
        %v3724 = vadd.f32 0.0, %v3723
        %v3725 = vpop.f32.mrb[0].mxu0
        %3726 = vmatprep.mubr.bf16.mxu0 0
        %3727 = vmatmul.mubr.bf16.gmra.mrb[0].mxu0 %v3601
        %v3728 = vpop.f32.mrb[0].mxu0
        %v3729 = vadd.f32 0.0, %v3728
        %v3730 = vpop.f32.mrb[0].mxu0
        %v3731 = vpop.f32.mrb[0].mxu0
        %v3732 = vadd.f32 0.0, %v3731
        %v3733 = vpop.f32.mrb[0].mxu0
        %3734 = vmatprep.mubr.bf16.mxu0 0
        %3735 = vmatmul.mubr.bf16.gmra.mrb[0].mxu0 %v3604
        %v3736 = vpop.f32.mrb[0].mxu0
        %v3737 = vadd.f32 0.0, %v3736
        %v3738 = vpop.f32.mrb[0].mxu0
        %v3739 = vpop.f32.mrb[0].mxu0
        %v3740 = vadd.f32 0.0, %v3739
        %v3741 = vpop.f32.mrb[0].mxu0
        %3742 = vmatprep.mubr.bf16.mxu0 0
        %3743 = vmatmul.mubr.bf16.gmra.mrb[0].mxu0 %v3607
        %v3744 = vpop.f32.mrb[0].mxu0
        %v3745 = vadd.f32 0.0, %v3744
        %v3746 = vpop.f32.mrb[0].mxu0
        %v3747 = vpop.f32.mrb[0].mxu0
        %v3748 = vadd.f32 0.0, %v3747
        %v3749 = vpop.f32.mrb[0].mxu0
        %3750 = vmatprep.mubr.bf16.mxu0 0
        %3751 = vmatmul.mubr.bf16.gmra.mrb[0].mxu0 %v3610
        %v3752 = vpop.f32.mrb[0].mxu0
        %v3753 = vadd.f32 0.0, %v3752
        %v3754 = vpop.f32.mrb[0].mxu0
        %v3755 = vpop.f32.mrb[0].mxu0
        %v3756 = vadd.f32 0.0, %v3755
        %v3757 = vpop.f32.mrb[0].mxu0
        %3758 = vmatprep.mubr.bf16.mxu0 0
        %3759 = vmatmul.mubr.bf16.gmra.mrb[0].mxu0 %v3613
        %v3760 = vpop.f32.mrb[0].mxu0
        %v3761 = vadd.f32 0.0, %v3760
        %v3762 = vpop.f32.mrb[0].mxu0
        %v3763 = vpop.f32.mrb[0].mxu0
        %v3764 = vadd.f32 0.0, %v3763
        %v3765 = vpop.f32.mrb[0].mxu0
        %3766 = vmatprep.mubr.bf16.mxu0 0
        %3767 = vmatmul.mubr.bf16.gmra.mrb[0].mxu0 %v3616
        %v3768 = vpop.f32.mrb[0].mxu0
        %v3769 = vadd.f32 0.0, %v3768
        %v3770 = vpop.f32.mrb[0].mxu0
        %v3771 = vpop.f32.mrb[0].mxu0
        %v3772 = vadd.f32 0.0, %v3771
        %v3773 = vpop.f32.mrb[0].mxu0
        %3774 = vmatprep.mubr.bf16.mxu0 0
        %3775 = vmatmul.mubr.bf16.gmra.mrb[0].mxu0 %v3619
        %v3776 = vpop.f32.mrb[0].mxu0
        %v3777 = vadd.f32 0.0, %v3776
        %v3778 = vpop.f32.mrb[0].mxu0
        %v3779 = vpop.f32.mrb[0].mxu0
        %v3780 = vadd.f32 0.0, %v3779
        %v3781 = vpop.f32.mrb[0].mxu0
        %3782 = vmatprep.mubr.bf16.mxu0 0
        %3783 = vmatmul.mubr.bf16.gmra.mrb[0].mxu0 %v3622
        %v3784 = vpop.f32.mrb[0].mxu0
        %v3785 = vadd.f32 0.0, %v3784
        %v3786 = vpop.f32.mrb[0].mxu0
        %v3787 = vpop.f32.mrb[0].mxu0
        %v3788 = vadd.f32 0.0, %v3787
        %v3789 = vpop.f32.mrb[0].mxu0
        %3790 = vmatprep.mubr.bf16.mxu0 0
        %3791 = vmatmul.mubr.bf16.gmra.mrb[0].mxu0 %v3625
        %v3792 = vpop.f32.mrb[0].mxu0
        %v3793 = vadd.f32 0.0, %v3792
        %v3794 = vpop.f32.mrb[0].mxu0
        %v3795 = vpop.f32.mrb[0].mxu0
        %v3796 = vadd.f32 0.0, %v3795
        %v3797 = vpop.f32.mrb[0].mxu0
        %3798 = vmatprep.mubr.bf16.mxu0 0
        %3799 = vmatmul.mubr.bf16.gmra.mrb[0].mxu0 %v3628
        %v3800 = vpop.f32.mrb[0].mxu0
        %v3801 = vadd.f32 0.0, %v3800
        %v3802 = vpop.f32.mrb[0].mxu0
        %v3803 = vpop.f32.mrb[0].mxu0
        %v3804 = vadd.f32 0.0, %v3803
        %v3805 = vpop.f32.mrb[0].mxu0
        %3806 = vmatprep.mubr.bf16.mxu0 0
        %3807 = vmatmul.mubr.bf16.gmra.mrb[0].mxu0 %v3631
        %v3808 = vpop.f32.mrb[0].mxu0
        %v3809 = vadd.f32 0.0, %v3808
        %v3810 = vpop.f32.mrb[0].mxu0
        %v3811 = vpop.f32.mrb[0].mxu0
        %v3812 = vadd.f32 0.0, %v3811
        %v3813 = vpop.f32.mrb[0].mxu0
        %3814 = vmatprep.mubr.bf16.mxu0 0
        %3815 = vmatmul.mubr.bf16.gmra.mrb[0].mxu0 %v3634
        %v3816 = vpop.f32.mrb[0].mxu0
        %v3817 = vadd.f32 0.0, %v3816
        %v3818 = vpop.f32.mrb[0].mxu0
        %v3819 = vpop.f32.mrb[0].mxu0
        %v3820 = vadd.f32 0.0, %v3819
        %v3821 = vpop.f32.mrb[0].mxu0
        %3822 = vmatprep.mubr.bf16.mxu0 0
        %3823 = vmatmul.mubr.bf16.gmra.mrb[0].mxu0 %v3637
        %v3824 = vpop.f32.mrb[0].mxu0
        %v3825 = vadd.f32 0.0, %v3824
        %v3826 = vpop.f32.mrb[0].mxu0
        %v3827 = vpop.f32.mrb[0].mxu0
        %v3828 = vadd.f32 0.0, %v3827
        %v3829 = vpop.f32.mrb[0].mxu0
        %3830 = vmatprep.mubr.bf16.mxu0 0
        %3831 = vmatmul.mubr.bf16.gmra.mrb[0].mxu0 %v3640
        %v3832 = vpop.f32.mrb[0].mxu0
        %v3833 = vadd.f32 0.0, %v3832
        %v3834 = vpop.f32.mrb[0].mxu0
        %v3835 = vpop.f32.mrb[0].mxu0
        %v3836 = vadd.f32 0.0, %v3835
        %v3837 = vpop.f32.mrb[0].mxu0
        %3838 = vmatprep.mubr.bf16.mxu0 0
        %3839 = vmatmul.mubr.bf16.gmra.mrb[0].mxu0 %v3643
        %v3840 = vpop.f32.mrb[0].mxu0
        %v3841 = vadd.f32 0.0, %v3840
        %v3842 = vpop.f32.mrb[0].mxu0
        %v3843 = vpop.f32.mrb[0].mxu0
        %v3844 = vadd.f32 0.0, %v3843
        %v3845 = vpop.f32.mrb[0].mxu0
        %3846 = vmatprep.mubr.bf16.mxu0 0
        %3847 = vmatmul.mubr.bf16.gmra.mrb[0].mxu0 %v3646
        %v3848 = vpop.f32.mrb[0].mxu0
        %v3849 = vadd.f32 0.0, %v3848
        %v3850 = vpop.f32.mrb[0].mxu0
        %v3851 = vpop.f32.mrb[0].mxu0
        %v3852 = vadd.f32 0.0, %v3851
        %v3853 = vpop.f32.mrb[0].mxu0
        %3854 = vmatprep.mubr.bf16.mxu0 0
        %3855 = vmatmul.mubr.bf16.gmra.mrb[0].mxu0 %v3649
        %v3856 = vpop.f32.mrb[0].mxu0
        %v3857 = vadd.f32 0.0, %v3856
        %v3858 = vpop.f32.mrb[0].mxu0
        %v3859 = vpop.f32.mrb[0].mxu0
        %v3860 = vadd.f32 0.0, %v3859
        %v3861 = vpop.f32.mrb[0].mxu0
        %3862 = vdwg.mxu0
        %v3863 = vld [vmem:[#allocation3] sm:$0xff]
        %v3864 = vld [vmem:[#allocation3 + $0x8] sm:$0xff]
        %v3865 = vld [vmem:[#allocation3 + $0x10] sm:$0xff]
        %v3866 = vld [vmem:[#allocation3 + $0x18] sm:$0xff]
        %v3867 = vld [vmem:[#allocation3 + $0x20] sm:$0xff]
        %v3868 = vld [vmem:[#allocation3 + $0x28] sm:$0xff]
        %v3869 = vld [vmem:[#allocation3 + $0x30] sm:$0xff]
        %v3870 = vld [vmem:[#allocation3 + $0x38] sm:$0xff]
        %v3871 = vld [vmem:[#allocation3 + $0x40] sm:$0xff]
        %v3872 = vld [vmem:[#allocation3 + $0x48] sm:$0xff]
        %v3873 = vld [vmem:[#allocation3 + $0x50] sm:$0xff]
        %v3874 = vld [vmem:[#allocation3 + $0x58] sm:$0xff]
        %v3875 = vld [vmem:[#allocation3 + $0x60] sm:$0xff]
        %v3876 = vld [vmem:[#allocation3 + $0x68] sm:$0xff]
        %v3877 = vld [vmem:[#allocation3 + $0x70] sm:$0xff]
        %v3878 = vld [vmem:[#allocation3 + $0x78] sm:$0xff]
        %v3879 = vld [vmem:[#allocation3 + $0x80] sm:$0xff]
        %v3880 = vld [vmem:[#allocation3 + $0x88] sm:$0xff]
        %v3881 = vld [vmem:[#allocation3 + $0x90] sm:$0xff]
        %v3882 = vld [vmem:[#allocation3 + $0x98] sm:$0xff]
        %v3883 = vld [vmem:[#allocation3 + $0xa0] sm:$0xff]
        %v3884 = vld [vmem:[#allocation3 + $0xa8] sm:$0xff]
        %v3885 = vld [vmem:[#allocation3 + $0xb0] sm:$0xff]
        %v3886 = vld [vmem:[#allocation3 + $0xb8] sm:$0xff]
        %v3887 = vld [vmem:[#allocation3 + $0xc0] sm:$0xff]
        %v3888 = vld [vmem:[#allocation3 + $0xc8] sm:$0xff]
        %v3889 = vld [vmem:[#allocation3 + $0xd0] sm:$0xff]
        %v3890 = vld [vmem:[#allocation3 + $0xd8] sm:$0xff]
        %v3891 = vld [vmem:[#allocation3 + $0xe0] sm:$0xff]
        %v3892 = vld [vmem:[#allocation3 + $0xe8] sm:$0xff]
        %v3893 = vld [vmem:[#allocation3 + $0xf0] sm:$0xff]
        %v3894 = vld [vmem:[#allocation3 + $0xf8] sm:$0xff]
        %v3895 = vld [vmem:[#allocation3 + $0x100] sm:$0xff]
        %v3896 = vld [vmem:[#allocation3 + $0x108] sm:$0xff]
        %v3897 = vld [vmem:[#allocation3 + $0x110] sm:$0xff]
        %v3898 = vld [vmem:[#allocation3 + $0x118] sm:$0xff]
        %v3899 = vld [vmem:[#allocation3 + $0x120] sm:$0xff]
        %v3900 = vld [vmem:[#allocation3 + $0x128] sm:$0xff]
        %v3901 = vld [vmem:[#allocation3 + $0x130] sm:$0xff]
        %v3902 = vld [vmem:[#allocation3 + $0x138] sm:$0xff]
        %v3903 = vld [vmem:[#allocation3 + $0x140] sm:$0xff]
        %v3904 = vld [vmem:[#allocation3 + $0x148] sm:$0xff]
        %v3905 = vld [vmem:[#allocation3 + $0x150] sm:$0xff]
        %v3906 = vld [vmem:[#allocation3 + $0x158] sm:$0xff]
        %v3907 = vadd.f32 %v3863, %v3689
        %v3908 = vadd.f32 %v3864, %v3692
        %v3909 = vadd.f32 %v3865, %v3697
        %v3910 = vadd.f32 %v3866, %v3700
        %v3911 = vadd.f32 %v3867, %v3705
        %v3912 = vadd.f32 %v3868, %v3708
        %v3913 = vadd.f32 %v3869, %v3713
        %v3914 = vadd.f32 %v3870, %v3716
        %v3915 = vadd.f32 %v3871, %v3721
        %v3916 = vadd.f32 %v3872, %v3724
        %v3917 = vadd.f32 %v3873, %v3729
        %v3918 = vadd.f32 %v3874, %v3732
        %v3919 = vadd.f32 %v3875, %v3737
        %v3920 = vadd.f32 %v3876, %v3740
        %v3921 = vadd.f32 %v3877, %v3745
        %v3922 = vadd.f32 %v3878, %v3748
        %v3923 = vadd.f32 %v3879, %v3753
        %v3924 = vadd.f32 %v3880, %v3756
        %v3925 = vadd.f32 %v3881, %v3761
        %v3926 = vadd.f32 %v3882, %v3764
        %v3927 = vadd.f32 %v3883, %v3769
        %v3928 = vadd.f32 %v3884, %v3772
        %v3929 = vadd.f32 %v3885, %v3777
        %v3930 = vadd.f32 %v3886, %v3780
        %v3931 = vadd.f32 %v3887, %v3785
        %v3932 = vadd.f32 %v3888, %v3788
        %v3933 = vadd.f32 %v3889, %v3793
        %v3934 = vadd.f32 %v3890, %v3796
        %v3935 = vadd.f32 %v3891, %v3801
        %v3936 = vadd.f32 %v3892, %v3804
        %v3937 = vadd.f32 %v3893, %v3809
        %v3938 = vadd.f32 %v3894, %v3812
        %v3939 = vadd.f32 %v3895, %v3817
        %v3940 = vadd.f32 %v3896, %v3820
        %v3941 = vadd.f32 %v3897, %v3825
        %v3942 = vadd.f32 %v3898, %v3828
        %v3943 = vadd.f32 %v3899, %v3833
        %v3944 = vadd.f32 %v3900, %v3836
        %v3945 = vadd.f32 %v3901, %v3841
        %v3946 = vadd.f32 %v3902, %v3844
        %v3947 = vadd.f32 %v3903, %v3849
        %v3948 = vadd.f32 %v3904, %v3852
        %v3949 = vadd.f32 %v3905, %v3857
        %v3950 = vadd.f32 %v3906, %v3860
        %3951 = vst [vmem:[#allocation3] sm:$0xff] %v3907
        %3952 = vst [vmem:[#allocation3 + $0x8] sm:$0xff] %v3908
        %3953 = vst [vmem:[#allocation3 + $0x10] sm:$0xff] %v3909
        %3954 = vst [vmem:[#allocation3 + $0x18] sm:$0xff] %v3910
        %3955 = vst [vmem:[#allocation3 + $0x20] sm:$0xff] %v3911
        %3956 = vst [vmem:[#allocation3 + $0x28] sm:$0xff] %v3912
        %3957 = vst [vmem:[#allocation3 + $0x30] sm:$0xff] %v3913
        %3958 = vst [vmem:[#allocation3 + $0x38] sm:$0xff] %v3914
        %3959 = vst [vmem:[#allocation3 + $0x40] sm:$0xff] %v3915
        %3960 = vst [vmem:[#allocation3 + $0x48] sm:$0xff] %v3916
        %3961 = vst [vmem:[#allocation3 + $0x50] sm:$0xff] %v3917
        %3962 = vst [vmem:[#allocation3 + $0x58] sm:$0xff] %v3918
        %3963 = vst [vmem:[#allocation3 + $0x60] sm:$0xff] %v3919
        %3964 = vst [vmem:[#allocation3 + $0x68] sm:$0xff] %v3920
        %3965 = vst [vmem:[#allocation3 + $0x70] sm:$0xff] %v3921
        %3966 = vst [vmem:[#allocation3 + $0x78] sm:$0xff] %v3922
        %3967 = vst [vmem:[#allocation3 + $0x80] sm:$0xff] %v3923
        %3968 = vst [vmem:[#allocation3 + $0x88] sm:$0xff] %v3924
        %3969 = vst [vmem:[#allocation3 + $0x90] sm:$0xff] %v3925
        %3970 = vst [vmem:[#allocation3 + $0x98] sm:$0xff] %v3926
        %3971 = vst [vmem:[#allocation3 + $0xa0] sm:$0xff] %v3927
        %3972 = vst [vmem:[#allocation3 + $0xa8] sm:$0xff] %v3928
        %3973 = vst [vmem:[#allocation3 + $0xb0] sm:$0xff] %v3929
        %3974 = vst [vmem:[#allocation3 + $0xb8] sm:$0xff] %v3930
        %3975 = vst [vmem:[#allocation3 + $0xc0] sm:$0xff] %v3931
        %3976 = vst [vmem:[#allocation3 + $0xc8] sm:$0xff] %v3932
        %3977 = vst [vmem:[#allocation3 + $0xd0] sm:$0xff] %v3933
        %3978 = vst [vmem:[#allocation3 + $0xd8] sm:$0xff] %v3934
        %3979 = vst [vmem:[#allocation3 + $0xe0] sm:$0xff] %v3935
        %3980 = vst [vmem:[#allocation3 + $0xe8] sm:$0xff] %v3936
        %3981 = vst [vmem:[#allocation3 + $0xf0] sm:$0xff] %v3937
        %3982 = vst [vmem:[#allocation3 + $0xf8] sm:$0xff] %v3938
        %3983 = vst [vmem:[#allocation3 + $0x100] sm:$0xff] %v3939
        %3984 = vst [vmem:[#allocation3 + $0x108] sm:$0xff] %v3940
        %3985 = vst [vmem:[#allocation3 + $0x110] sm:$0xff] %v3941
        %3986 = vst [vmem:[#allocation3 + $0x118] sm:$0xff] %v3942
        %3987 = vst [vmem:[#allocation3 + $0x120] sm:$0xff] %v3943
        %3988 = vst [vmem:[#allocation3 + $0x128] sm:$0xff] %v3944
        %3989 = vst [vmem:[#allocation3 + $0x130] sm:$0xff] %v3945
        %3990 = vst [vmem:[#allocation3 + $0x138] sm:$0xff] %v3946
        %3991 = vst [vmem:[#allocation3 + $0x140] sm:$0xff] %v3947
        %3992 = vst [vmem:[#allocation3 + $0x148] sm:$0xff] %v3948
        %3993 = vst [vmem:[#allocation3 + $0x150] sm:$0xff] %v3949
        %3994 = vst [vmem:[#allocation3 + $0x158] sm:$0xff] %v3950
        %v3995 = vld [vmem:[#allocation2 + $0x18] sm:$0xff]
        %v3996 = vld [vmem:[#allocation2 + $0x20] sm:$0xff]
        %v3997 = vld [vmem:[#allocation2 + $0x28] sm:$0xff]
        %v3998 = vld [vmem:[#allocation2 + $0x30] sm:$0xff]
        %v3999 = vld [vmem:[#allocation2 + $0x38] sm:$0xff]
        %v4000 = vld [vmem:[#allocation2 + $0x40] sm:$0xff]
        %v4001 = vld [vmem:[#allocation2 + $0x48] sm:$0xff]
        %v4002 = vld [vmem:[#allocation2 + $0x50] sm:$0xff]
        %v4003 = vld [vmem:[#allocation2 + $0x58] sm:$0xff]
        %v4004 = vld [vmem:[#allocation2 + $0x60] sm:$0xff]
        %v4005 = vld [vmem:[#allocation2 + $0x68] sm:$0xff]
        %v4006 = vld [vmem:[#allocation2 + $0x70] sm:$0xff]
        %v4007 = vld [vmem:[#allocation2 + $0x78] sm:$0xff]
        %v4008 = vld [vmem:[#allocation2 + $0x80] sm:$0xff]
        %v4009 = vld [vmem:[#allocation2 + $0x88] sm:$0xff]
        %v4010 = vld [vmem:[#allocation2 + $0x90] sm:$0xff]
        %v4011 = vld [vmem:[#allocation2 + $0x98] sm:$0xff]
        %v4012 = vld [vmem:[#allocation2 + $0xa0] sm:$0xff]
        %v4013 = vld [vmem:[#allocation2 + $0xa8] sm:$0xff]
        %v4014 = vld [vmem:[#allocation2 + $0xb0] sm:$0xff]
        %v4015 = vld [vmem:[#allocation2 + $0xb8] sm:$0xff]
        %v4016 = vld [vmem:[#allocation2 + $0xc0] sm:$0xff]
        %v4017 = vld [vmem:[#allocation2 + $0xc8] sm:$0x1]
        %s4018 = scalar_lea.vmem %s3, 12
        %v4019 = vld [vmem:[%s4018] sm:$0x3]
        %v4021 = vshrl.u32 %v3995, 16
        %v4023 = vshll.u32 %v3995, 16
        %v4025 = vrot.slane %v4023, 1
        %v4026 = vor.u32 %v4021, %v4025
        %v4028 = vshll.u32 %v3996, 16
        %v4030 = vrot.slane %v4028, 1
        %v4031 = vsel %vm3404, %v4026, %v4030
        %v4032 = vshrl.u32 %v3996, 16
        %v4034 = vor.u32 %v4032, %v4030
        %v4036 = vshll.u32 %v3997, 16
        %v4038 = vrot.slane %v4036, 1
        %v4039 = vsel %vm3404, %v4034, %v4038
        %v4040 = vshrl.u32 %v3997, 16
        %v4042 = vor.u32 %v4040, %v4038
        %v4044 = vshll.u32 %v3998, 16
        %v4046 = vrot.slane %v4044, 1
        %v4047 = vsel %vm3404, %v4042, %v4046
        %v4048 = vshrl.u32 %v3998, 16
        %v4050 = vor.u32 %v4048, %v4046
        %v4052 = vshll.u32 %v3999, 16
        %v4054 = vrot.slane %v4052, 1
        %v4055 = vsel %vm3404, %v4050, %v4054
        %v4056 = vshrl.u32 %v3999, 16
        %v4058 = vor.u32 %v4056, %v4054
        %v4060 = vshll.u32 %v4000, 16
        %v4062 = vrot.slane %v4060, 1
        %v4063 = vsel %vm3404, %v4058, %v4062
        %v4064 = vshrl.u32 %v4000, 16
        %v4066 = vor.u32 %v4064, %v4062
        %v4068 = vshll.u32 %v4001, 16
        %v4070 = vrot.slane %v4068, 1
        %v4071 = vsel %vm3404, %v4066, %v4070
        %v4072 = vshrl.u32 %v4001, 16
        %v4074 = vor.u32 %v4072, %v4070
        %v4076 = vshll.u32 %v4002, 16
        %v4078 = vrot.slane %v4076, 1
        %v4079 = vsel %vm3404, %v4074, %v4078
        %v4080 = vshrl.u32 %v4002, 16
        %v4082 = vor.u32 %v4080, %v4078
        %v4084 = vshll.u32 %v4003, 16
        %v4086 = vrot.slane %v4084, 1
        %v4087 = vsel %vm3404, %v4082, %v4086
        %v4088 = vshrl.u32 %v4003, 16
        %v4090 = vor.u32 %v4088, %v4086
        %v4092 = vshll.u32 %v4004, 16
        %v4094 = vrot.slane %v4092, 1
        %v4095 = vsel %vm3404, %v4090, %v4094
        %v4096 = vshrl.u32 %v4004, 16
        %v4098 = vor.u32 %v4096, %v4094
        %v4100 = vshll.u32 %v4005, 16
        %v4102 = vrot.slane %v4100, 1
        %v4103 = vsel %vm3404, %v4098, %v4102
        %v4104 = vshrl.u32 %v4005, 16
        %v4106 = vor.u32 %v4104, %v4102
        %v4108 = vshll.u32 %v4006, 16
        %v4110 = vrot.slane %v4108, 1
        %v4111 = vsel %vm3404, %v4106, %v4110
        %v4112 = vshrl.u32 %v4006, 16
        %v4114 = vor.u32 %v4112, %v4110
        %v4116 = vshll.u32 %v4007, 16
        %v4118 = vrot.slane %v4116, 1
        %v4119 = vsel %vm3404, %v4114, %v4118
        %v4120 = vshrl.u32 %v4007, 16
        %v4122 = vor.u32 %v4120, %v4118
        %v4124 = vshll.u32 %v4008, 16
        %v4126 = vrot.slane %v4124, 1
        %v4127 = vsel %vm3404, %v4122, %v4126
        %v4128 = vshrl.u32 %v4008, 16
        %v4130 = vor.u32 %v4128, %v4126
        %v4132 = vshll.u32 %v4009, 16
        %v4134 = vrot.slane %v4132, 1
        %v4135 = vsel %vm3404, %v4130, %v4134
        %v4136 = vshrl.u32 %v4009, 16
        %v4138 = vor.u32 %v4136, %v4134
        %v4140 = vshll.u32 %v4010, 16
        %v4142 = vrot.slane %v4140, 1
        %v4143 = vsel %vm3404, %v4138, %v4142
        %v4144 = vshrl.u32 %v4010, 16
        %v4146 = vor.u32 %v4144, %v4142
        %v4148 = vshll.u32 %v4011, 16
        %v4150 = vrot.slane %v4148, 1
        %v4151 = vsel %vm3404, %v4146, %v4150
        %v4152 = vshrl.u32 %v4011, 16
        %v4154 = vor.u32 %v4152, %v4150
        %v4156 = vshll.u32 %v4012, 16
        %v4158 = vrot.slane %v4156, 1
        %v4159 = vsel %vm3404, %v4154, %v4158
        %v4160 = vshrl.u32 %v4012, 16
        %v4162 = vor.u32 %v4160, %v4158
        %v4164 = vshll.u32 %v4013, 16
        %v4166 = vrot.slane %v4164, 1
        %v4167 = vsel %vm3404, %v4162, %v4166
        %v4168 = vshrl.u32 %v4013, 16
        %v4170 = vor.u32 %v4168, %v4166
        %v4172 = vshll.u32 %v4014, 16
        %v4174 = vrot.slane %v4172, 1
        %v4175 = vsel %vm3404, %v4170, %v4174
        %v4176 = vshrl.u32 %v4014, 16
        %v4178 = vor.u32 %v4176, %v4174
        %v4180 = vshll.u32 %v4015, 16
        %v4182 = vrot.slane %v4180, 1
        %v4183 = vsel %vm3404, %v4178, %v4182
        %v4184 = vshrl.u32 %v4015, 16
        %v4186 = vor.u32 %v4184, %v4182
        %v4188 = vshll.u32 %v4016, 16
        %v4190 = vrot.slane %v4188, 1
        %v4191 = vsel %vm3404, %v4186, %v4190
        %v4192 = vshrl.u32 %v4016, 16
        %v4194 = vor.u32 %v4192, %v4190
        %v4196 = vshll.u32 %v4017, 16
        %v4198 = vrot.slane %v4196, 1
        %v4199 = vsel %vm3404, %v4194, %v4198
        %v4201 = vsel %vm434, %v4031, 0
        %v4204 = vsel %vm434, %v4039, 0
        %v4207 = vsel %vm434, %v4047, 0
        %v4210 = vsel %vm434, %v4055, 0
        %v4213 = vsel %vm434, %v4063, 0
        %v4216 = vsel %vm434, %v4071, 0
        %v4219 = vsel %vm434, %v4079, 0
        %v4222 = vsel %vm434, %v4087, 0
        %v4225 = vsel %vm434, %v4095, 0
        %v4228 = vsel %vm434, %v4103, 0
        %v4231 = vsel %vm434, %v4111, 0
        %v4234 = vsel %vm434, %v4119, 0
        %v4237 = vsel %vm434, %v4127, 0
        %v4240 = vsel %vm434, %v4135, 0
        %v4243 = vsel %vm434, %v4143, 0
        %v4246 = vsel %vm434, %v4151, 0
        %v4249 = vsel %vm434, %v4159, 0
        %v4252 = vsel %vm434, %v4167, 0
        %v4255 = vsel %vm434, %v4175, 0
        %v4258 = vsel %vm434, %v4183, 0
        %v4261 = vsel %vm434, %v4191, 0
        %v4264 = vsel %vm434, %v4199, 0
        %v4267 = vand.u32 %v4019, %v953
        %4269 = vmatprep.subr.bf16.mxu0 0
        %4270 = vmatpush1.bf16.msra.mxu0 %v4267
        %4271 = vmatprep.subr.bf16.mxu0 0
        %4272 = vmatpush1.bf16.msra.mxu0 0
        %4273 = vmatprep.subr.bf16.mxu0 0
        %4274 = vmatpush1.bf16.msra.mxu0 0
        %4275 = vmatprep.subr.bf16.mxu0 0
        %4276 = vmatpush1.bf16.msra.mxu0 0
        %4277 = vmatprep.subr.bf16.mxu0 0
        %4278 = vmatpush1.bf16.msra.mxu0 0
        %4279 = vmatprep.subr.bf16.mxu0 0
        %4280 = vmatpush1.bf16.msra.mxu0 0
        %4281 = vmatprep.subr.bf16.mxu0 0
        %4282 = vmatpush1.bf16.msra.mxu0 0
        %4283 = vmatprep.subr.bf16.mxu0 0
        %4284 = vmatpush1.bf16.msra.mxu0 0
        %4285 = vmatprep.subr.bf16.mxu0 0
        %4286 = vmatpush1.bf16.msra.mxu0 0
        %4287 = vmatprep.subr.bf16.mxu0 0
        %4288 = vmatpush1.bf16.msra.mxu0 0
        %4289 = vmatprep.subr.bf16.mxu0 0
        %4290 = vmatpush1.bf16.msra.mxu0 0
        %4291 = vmatprep.subr.bf16.mxu0 0
        %4292 = vmatpush1.bf16.msra.mxu0 0
        %4293 = vmatprep.subr.bf16.mxu0 0
        %4294 = vmatpush1.bf16.msra.mxu0 0
        %4295 = vmatprep.subr.bf16.mxu0 0
        %4296 = vmatpush1.bf16.msra.mxu0 0
        %4297 = vmatprep.subr.bf16.mxu0 0
        %4298 = vmatpush1.bf16.msra.mxu0 0
        %4299 = vmatprep.subr.bf16.mxu0 0
        %4300 = vmatpush1.bf16.msra.mxu0 0
        %4301 = vmatprep.mubr.bf16.mxu0 0
        %4302 = vmatmul.mubr.bf16.gmra.mrb[0].mxu0 %v4201
        %v4303 = vpop.f32.mrb[0].mxu0
        %v4304 = vadd.f32 0.0, %v4303
        %v4305 = vpop.f32.mrb[0].mxu0
        %v4306 = vpop.f32.mrb[0].mxu0
        %v4307 = vadd.f32 0.0, %v4306
        %v4308 = vpop.f32.mrb[0].mxu0
        %4309 = vmatprep.mubr.bf16.mxu0 0
        %4310 = vmatmul.mubr.bf16.gmra.mrb[0].mxu0 %v4204
        %v4311 = vpop.f32.mrb[0].mxu0
        %v4312 = vadd.f32 0.0, %v4311
        %v4313 = vpop.f32.mrb[0].mxu0
        %v4314 = vpop.f32.mrb[0].mxu0
        %v4315 = vadd.f32 0.0, %v4314
        %v4316 = vpop.f32.mrb[0].mxu0
        %4317 = vmatprep.mubr.bf16.mxu0 0
        %4318 = vmatmul.mubr.bf16.gmra.mrb[0].mxu0 %v4207
        %v4319 = vpop.f32.mrb[0].mxu0
        %v4320 = vadd.f32 0.0, %v4319
        %v4321 = vpop.f32.mrb[0].mxu0
        %v4322 = vpop.f32.mrb[0].mxu0
        %v4323 = vadd.f32 0.0, %v4322
        %v4324 = vpop.f32.mrb[0].mxu0
        %4325 = vmatprep.mubr.bf16.mxu0 0
        %4326 = vmatmul.mubr.bf16.gmra.mrb[0].mxu0 %v4210
        %v4327 = vpop.f32.mrb[0].mxu0
        %v4328 = vadd.f32 0.0, %v4327
        %v4329 = vpop.f32.mrb[0].mxu0
        %v4330 = vpop.f32.mrb[0].mxu0
        %v4331 = vadd.f32 0.0, %v4330
        %v4332 = vpop.f32.mrb[0].mxu0
        %4333 = vmatprep.mubr.bf16.mxu0 0
        %4334 = vmatmul.mubr.bf16.gmra.mrb[0].mxu0 %v4213
        %v4335 = vpop.f32.mrb[0].mxu0
        %v4336 = vadd.f32 0.0, %v4335
        %v4337 = vpop.f32.mrb[0].mxu0
        %v4338 = vpop.f32.mrb[0].mxu0
        %v4339 = vadd.f32 0.0, %v4338
        %v4340 = vpop.f32.mrb[0].mxu0
        %4341 = vmatprep.mubr.bf16.mxu0 0
        %4342 = vmatmul.mubr.bf16.gmra.mrb[0].mxu0 %v4216
        %v4343 = vpop.f32.mrb[0].mxu0
        %v4344 = vadd.f32 0.0, %v4343
        %v4345 = vpop.f32.mrb[0].mxu0
        %v4346 = vpop.f32.mrb[0].mxu0
        %v4347 = vadd.f32 0.0, %v4346
        %v4348 = vpop.f32.mrb[0].mxu0
        %4349 = vmatprep.mubr.bf16.mxu0 0
        %4350 = vmatmul.mubr.bf16.gmra.mrb[0].mxu0 %v4219
        %v4351 = vpop.f32.mrb[0].mxu0
        %v4352 = vadd.f32 0.0, %v4351
        %v4353 = vpop.f32.mrb[0].mxu0
        %v4354 = vpop.f32.mrb[0].mxu0
        %v4355 = vadd.f32 0.0, %v4354
        %v4356 = vpop.f32.mrb[0].mxu0
        %4357 = vmatprep.mubr.bf16.mxu0 0
        %4358 = vmatmul.mubr.bf16.gmra.mrb[0].mxu0 %v4222
        %v4359 = vpop.f32.mrb[0].mxu0
        %v4360 = vadd.f32 0.0, %v4359
        %v4361 = vpop.f32.mrb[0].mxu0
        %v4362 = vpop.f32.mrb[0].mxu0
        %v4363 = vadd.f32 0.0, %v4362
        %v4364 = vpop.f32.mrb[0].mxu0
        %4365 = vmatprep.mubr.bf16.mxu0 0
        %4366 = vmatmul.mubr.bf16.gmra.mrb[0].mxu0 %v4225
        %v4367 = vpop.f32.mrb[0].mxu0
        %v4368 = vadd.f32 0.0, %v4367
        %v4369 = vpop.f32.mrb[0].mxu0
        %v4370 = vpop.f32.mrb[0].mxu0
        %v4371 = vadd.f32 0.0, %v4370
        %v4372 = vpop.f32.mrb[0].mxu0
        %4373 = vmatprep.mubr.bf16.mxu0 0
        %4374 = vmatmul.mubr.bf16.gmra.mrb[0].mxu0 %v4228
        %v4375 = vpop.f32.mrb[0].mxu0
        %v4376 = vadd.f32 0.0, %v4375
        %v4377 = vpop.f32.mrb[0].mxu0
        %v4378 = vpop.f32.mrb[0].mxu0
        %v4379 = vadd.f32 0.0, %v4378
        %v4380 = vpop.f32.mrb[0].mxu0
        %4381 = vmatprep.mubr.bf16.mxu0 0
        %4382 = vmatmul.mubr.bf16.gmra.mrb[0].mxu0 %v4231
        %v4383 = vpop.f32.mrb[0].mxu0
        %v4384 = vadd.f32 0.0, %v4383
        %v4385 = vpop.f32.mrb[0].mxu0
        %v4386 = vpop.f32.mrb[0].mxu0
        %v4387 = vadd.f32 0.0, %v4386
        %v4388 = vpop.f32.mrb[0].mxu0
        %4389 = vmatprep.mubr.bf16.mxu0 0
        %4390 = vmatmul.mubr.bf16.gmra.mrb[0].mxu0 %v4234
        %v4391 = vpop.f32.mrb[0].mxu0
        %v4392 = vadd.f32 0.0, %v4391
        %v4393 = vpop.f32.mrb[0].mxu0
        %v4394 = vpop.f32.mrb[0].mxu0
        %v4395 = vadd.f32 0.0, %v4394
        %v4396 = vpop.f32.mrb[0].mxu0
        %4397 = vmatprep.mubr.bf16.mxu0 0
        %4398 = vmatmul.mubr.bf16.gmra.mrb[0].mxu0 %v4237
        %v4399 = vpop.f32.mrb[0].mxu0
        %v4400 = vadd.f32 0.0, %v4399
        %v4401 = vpop.f32.mrb[0].mxu0
        %v4402 = vpop.f32.mrb[0].mxu0
        %v4403 = vadd.f32 0.0, %v4402
        %v4404 = vpop.f32.mrb[0].mxu0
        %4405 = vmatprep.mubr.bf16.mxu0 0
        %4406 = vmatmul.mubr.bf16.gmra.mrb[0].mxu0 %v4240
        %v4407 = vpop.f32.mrb[0].mxu0
        %v4408 = vadd.f32 0.0, %v4407
        %v4409 = vpop.f32.mrb[0].mxu0
        %v4410 = vpop.f32.mrb[0].mxu0
        %v4411 = vadd.f32 0.0, %v4410
        %v4412 = vpop.f32.mrb[0].mxu0
        %4413 = vmatprep.mubr.bf16.mxu0 0
        %4414 = vmatmul.mubr.bf16.gmra.mrb[0].mxu0 %v4243
        %v4415 = vpop.f32.mrb[0].mxu0
        %v4416 = vadd.f32 0.0, %v4415
        %v4417 = vpop.f32.mrb[0].mxu0
        %v4418 = vpop.f32.mrb[0].mxu0
        %v4419 = vadd.f32 0.0, %v4418
        %v4420 = vpop.f32.mrb[0].mxu0
        %4421 = vmatprep.mubr.bf16.mxu0 0
        %4422 = vmatmul.mubr.bf16.gmra.mrb[0].mxu0 %v4246
        %v4423 = vpop.f32.mrb[0].mxu0
        %v4424 = vadd.f32 0.0, %v4423
        %v4425 = vpop.f32.mrb[0].mxu0
        %v4426 = vpop.f32.mrb[0].mxu0
        %v4427 = vadd.f32 0.0, %v4426
        %v4428 = vpop.f32.mrb[0].mxu0
        %4429 = vmatprep.mubr.bf16.mxu0 0
        %4430 = vmatmul.mubr.bf16.gmra.mrb[0].mxu0 %v4249
        %v4431 = vpop.f32.mrb[0].mxu0
        %v4432 = vadd.f32 0.0, %v4431
        %v4433 = vpop.f32.mrb[0].mxu0
        %v4434 = vpop.f32.mrb[0].mxu0
        %v4435 = vadd.f32 0.0, %v4434
        %v4436 = vpop.f32.mrb[0].mxu0
        %4437 = vmatprep.mubr.bf16.mxu0 0
        %4438 = vmatmul.mubr.bf16.gmra.mrb[0].mxu0 %v4252
        %v4439 = vpop.f32.mrb[0].mxu0
        %v4440 = vadd.f32 0.0, %v4439
        %v4441 = vpop.f32.mrb[0].mxu0
        %v4442 = vpop.f32.mrb[0].mxu0
        %v4443 = vadd.f32 0.0, %v4442
        %v4444 = vpop.f32.mrb[0].mxu0
        %4445 = vmatprep.mubr.bf16.mxu0 0
        %4446 = vmatmul.mubr.bf16.gmra.mrb[0].mxu0 %v4255
        %v4447 = vpop.f32.mrb[0].mxu0
        %v4448 = vadd.f32 0.0, %v4447
        %v4449 = vpop.f32.mrb[0].mxu0
        %v4450 = vpop.f32.mrb[0].mxu0
        %v4451 = vadd.f32 0.0, %v4450
        %v4452 = vpop.f32.mrb[0].mxu0
        %4453 = vmatprep.mubr.bf16.mxu0 0
        %4454 = vmatmul.mubr.bf16.gmra.mrb[0].mxu0 %v4258
        %v4455 = vpop.f32.mrb[0].mxu0
        %v4456 = vadd.f32 0.0, %v4455
        %v4457 = vpop.f32.mrb[0].mxu0
        %v4458 = vpop.f32.mrb[0].mxu0
        %v4459 = vadd.f32 0.0, %v4458
        %v4460 = vpop.f32.mrb[0].mxu0
        %4461 = vmatprep.mubr.bf16.mxu0 0
        %4462 = vmatmul.mubr.bf16.gmra.mrb[0].mxu0 %v4261
        %v4463 = vpop.f32.mrb[0].mxu0
        %v4464 = vadd.f32 0.0, %v4463
        %v4465 = vpop.f32.mrb[0].mxu0
        %v4466 = vpop.f32.mrb[0].mxu0
        %v4467 = vadd.f32 0.0, %v4466
        %v4468 = vpop.f32.mrb[0].mxu0
        %4469 = vmatprep.mubr.bf16.mxu0 0
        %4470 = vmatmul.mubr.bf16.gmra.mrb[0].mxu0 %v4264
        %v4471 = vpop.f32.mrb[0].mxu0
        %v4472 = vadd.f32 0.0, %v4471
        %v4473 = vpop.f32.mrb[0].mxu0
        %v4474 = vpop.f32.mrb[0].mxu0
        %v4475 = vadd.f32 0.0, %v4474
        %v4476 = vpop.f32.mrb[0].mxu0
        %4477 = vdwg.mxu0
        %v4478 = vld [vmem:[#allocation3] sm:$0xff]
        %v4479 = vld [vmem:[#allocation3 + $0x8] sm:$0xff]
        %v4480 = vld [vmem:[#allocation3 + $0x10] sm:$0xff]
        %v4481 = vld [vmem:[#allocation3 + $0x18] sm:$0xff]
        %v4482 = vld [vmem:[#allocation3 + $0x20] sm:$0xff]
        %v4483 = vld [vmem:[#allocation3 + $0x28] sm:$0xff]
        %v4484 = vld [vmem:[#allocation3 + $0x30] sm:$0xff]
        %v4485 = vld [vmem:[#allocation3 + $0x38] sm:$0xff]
        %v4486 = vld [vmem:[#allocation3 + $0x40] sm:$0xff]
        %v4487 = vld [vmem:[#allocation3 + $0x48] sm:$0xff]
        %v4488 = vld [vmem:[#allocation3 + $0x50] sm:$0xff]
        %v4489 = vld [vmem:[#allocation3 + $0x58] sm:$0xff]
        %v4490 = vld [vmem:[#allocation3 + $0x60] sm:$0xff]
        %v4491 = vld [vmem:[#allocation3 + $0x68] sm:$0xff]
        %v4492 = vld [vmem:[#allocation3 + $0x70] sm:$0xff]
        %v4493 = vld [vmem:[#allocation3 + $0x78] sm:$0xff]
        %v4494 = vld [vmem:[#allocation3 + $0x80] sm:$0xff]
        %v4495 = vld [vmem:[#allocation3 + $0x88] sm:$0xff]
        %v4496 = vld [vmem:[#allocation3 + $0x90] sm:$0xff]
        %v4497 = vld [vmem:[#allocation3 + $0x98] sm:$0xff]
        %v4498 = vld [vmem:[#allocation3 + $0xa0] sm:$0xff]
        %v4499 = vld [vmem:[#allocation3 + $0xa8] sm:$0xff]
        %v4500 = vld [vmem:[#allocation3 + $0xb0] sm:$0xff]
        %v4501 = vld [vmem:[#allocation3 + $0xb8] sm:$0xff]
        %v4502 = vld [vmem:[#allocation3 + $0xc0] sm:$0xff]
        %v4503 = vld [vmem:[#allocation3 + $0xc8] sm:$0xff]
        %v4504 = vld [vmem:[#allocation3 + $0xd0] sm:$0xff]
        %v4505 = vld [vmem:[#allocation3 + $0xd8] sm:$0xff]
        %v4506 = vld [vmem:[#allocation3 + $0xe0] sm:$0xff]
        %v4507 = vld [vmem:[#allocation3 + $0xe8] sm:$0xff]
        %v4508 = vld [vmem:[#allocation3 + $0xf0] sm:$0xff]
        %v4509 = vld [vmem:[#allocation3 + $0xf8] sm:$0xff]
        %v4510 = vld [vmem:[#allocation3 + $0x100] sm:$0xff]
        %v4511 = vld [vmem:[#allocation3 + $0x108] sm:$0xff]
        %v4512 = vld [vmem:[#allocation3 + $0x110] sm:$0xff]
        %v4513 = vld [vmem:[#allocation3 + $0x118] sm:$0xff]
        %v4514 = vld [vmem:[#allocation3 + $0x120] sm:$0xff]
        %v4515 = vld [vmem:[#allocation3 + $0x128] sm:$0xff]
        %v4516 = vld [vmem:[#allocation3 + $0x130] sm:$0xff]
        %v4517 = vld [vmem:[#allocation3 + $0x138] sm:$0xff]
        %v4518 = vld [vmem:[#allocation3 + $0x140] sm:$0xff]
        %v4519 = vld [vmem:[#allocation3 + $0x148] sm:$0xff]
        %v4520 = vld [vmem:[#allocation3 + $0x150] sm:$0xff]
        %v4521 = vld [vmem:[#allocation3 + $0x158] sm:$0xff]
        %v4522 = vadd.f32 %v4478, %v4304
        %v4523 = vadd.f32 %v4479, %v4307
        %v4524 = vadd.f32 %v4480, %v4312
        %v4525 = vadd.f32 %v4481, %v4315
        %v4526 = vadd.f32 %v4482, %v4320
        %v4527 = vadd.f32 %v4483, %v4323
        %v4528 = vadd.f32 %v4484, %v4328
        %v4529 = vadd.f32 %v4485, %v4331
        %v4530 = vadd.f32 %v4486, %v4336
        %v4531 = vadd.f32 %v4487, %v4339
        %v4532 = vadd.f32 %v4488, %v4344
        %v4533 = vadd.f32 %v4489, %v4347
        %v4534 = vadd.f32 %v4490, %v4352
        %v4535 = vadd.f32 %v4491, %v4355
        %v4536 = vadd.f32 %v4492, %v4360
        %v4537 = vadd.f32 %v4493, %v4363
        %v4538 = vadd.f32 %v4494, %v4368
        %v4539 = vadd.f32 %v4495, %v4371
        %v4540 = vadd.f32 %v4496, %v4376
        %v4541 = vadd.f32 %v4497, %v4379
        %v4542 = vadd.f32 %v4498, %v4384
        %v4543 = vadd.f32 %v4499, %v4387
        %v4544 = vadd.f32 %v4500, %v4392
        %v4545 = vadd.f32 %v4501, %v4395
        %v4546 = vadd.f32 %v4502, %v4400
        %v4547 = vadd.f32 %v4503, %v4403
        %v4548 = vadd.f32 %v4504, %v4408
        %v4549 = vadd.f32 %v4505, %v4411
        %v4550 = vadd.f32 %v4506, %v4416
        %v4551 = vadd.f32 %v4507, %v4419
        %v4552 = vadd.f32 %v4508, %v4424
        %v4553 = vadd.f32 %v4509, %v4427
        %v4554 = vadd.f32 %v4510, %v4432
        %v4555 = vadd.f32 %v4511, %v4435
        %v4556 = vadd.f32 %v4512, %v4440
        %v4557 = vadd.f32 %v4513, %v4443
        %v4558 = vadd.f32 %v4514, %v4448
        %v4559 = vadd.f32 %v4515, %v4451
        %v4560 = vadd.f32 %v4516, %v4456
        %v4561 = vadd.f32 %v4517, %v4459
        %v4562 = vadd.f32 %v4518, %v4464
        %v4563 = vadd.f32 %v4519, %v4467
        %v4564 = vadd.f32 %v4520, %v4472
        %v4565 = vadd.f32 %v4521, %v4475
        %4566 = vst [vmem:[#allocation3] sm:$0xff] %v4522
        %4567 = vst [vmem:[#allocation3 + $0x8] sm:$0xff] %v4523
        %4568 = vst [vmem:[#allocation3 + $0x10] sm:$0xff] %v4524
        %4569 = vst [vmem:[#allocation3 + $0x18] sm:$0xff] %v4525
        %4570 = vst [vmem:[#allocation3 + $0x20] sm:$0xff] %v4526
        %4571 = vst [vmem:[#allocation3 + $0x28] sm:$0xff] %v4527
        %4572 = vst [vmem:[#allocation3 + $0x30] sm:$0xff] %v4528
        %4573 = vst [vmem:[#allocation3 + $0x38] sm:$0xff] %v4529
        %4574 = vst [vmem:[#allocation3 + $0x40] sm:$0xff] %v4530
        %4575 = vst [vmem:[#allocation3 + $0x48] sm:$0xff] %v4531
        %4576 = vst [vmem:[#allocation3 + $0x50] sm:$0xff] %v4532
        %4577 = vst [vmem:[#allocation3 + $0x58] sm:$0xff] %v4533
        %4578 = vst [vmem:[#allocation3 + $0x60] sm:$0xff] %v4534
        %4579 = vst [vmem:[#allocation3 + $0x68] sm:$0xff] %v4535
        %4580 = vst [vmem:[#allocation3 + $0x70] sm:$0xff] %v4536
        %4581 = vst [vmem:[#allocation3 + $0x78] sm:$0xff] %v4537
        %4582 = vst [vmem:[#allocation3 + $0x80] sm:$0xff] %v4538
        %4583 = vst [vmem:[#allocation3 + $0x88] sm:$0xff] %v4539
        %4584 = vst [vmem:[#allocation3 + $0x90] sm:$0xff] %v4540
        %4585 = vst [vmem:[#allocation3 + $0x98] sm:$0xff] %v4541
        %4586 = vst [vmem:[#allocation3 + $0xa0] sm:$0xff] %v4542
        %4587 = vst [vmem:[#allocation3 + $0xa8] sm:$0xff] %v4543
        %4588 = vst [vmem:[#allocation3 + $0xb0] sm:$0xff] %v4544
        %4589 = vst [vmem:[#allocation3 + $0xb8] sm:$0xff] %v4545
        %4590 = vst [vmem:[#allocation3 + $0xc0] sm:$0xff] %v4546
        %4591 = vst [vmem:[#allocation3 + $0xc8] sm:$0xff] %v4547
        %4592 = vst [vmem:[#allocation3 + $0xd0] sm:$0xff] %v4548
        %4593 = vst [vmem:[#allocation3 + $0xd8] sm:$0xff] %v4549
        %4594 = vst [vmem:[#allocation3 + $0xe0] sm:$0xff] %v4550
        %4595 = vst [vmem:[#allocation3 + $0xe8] sm:$0xff] %v4551
        %4596 = vst [vmem:[#allocation3 + $0xf0] sm:$0xff] %v4552
        %4597 = vst [vmem:[#allocation3 + $0xf8] sm:$0xff] %v4553
        %4598 = vst [vmem:[#allocation3 + $0x100] sm:$0xff] %v4554
        %4599 = vst [vmem:[#allocation3 + $0x108] sm:$0xff] %v4555
        %4600 = vst [vmem:[#allocation3 + $0x110] sm:$0xff] %v4556
        %4601 = vst [vmem:[#allocation3 + $0x118] sm:$0xff] %v4557
        %4602 = vst [vmem:[#allocation3 + $0x120] sm:$0xff] %v4558
        %4603 = vst [vmem:[#allocation3 + $0x128] sm:$0xff] %v4559
        %4604 = vst [vmem:[#allocation3 + $0x130] sm:$0xff] %v4560
        %4605 = vst [vmem:[#allocation3 + $0x138] sm:$0xff] %v4561
        %4606 = vst [vmem:[#allocation3 + $0x140] sm:$0xff] %v4562
        %4607 = vst [vmem:[#allocation3 + $0x148] sm:$0xff] %v4563
        %4608 = vst [vmem:[#allocation3 + $0x150] sm:$0xff] %v4564
        %4609 = vst [vmem:[#allocation3 + $0x158] sm:$0xff] %v4565
        %v4610 = vld [vmem:[#allocation2 + $0x18] sm:$0xfe]
        %v4611 = vld [vmem:[#allocation2 + $0x20] sm:$0xff]
        %v4612 = vld [vmem:[#allocation2 + $0x28] sm:$0xff]
        %v4613 = vld [vmem:[#allocation2 + $0x30] sm:$0xff]
        %v4614 = vld [vmem:[#allocation2 + $0x38] sm:$0xff]
        %v4615 = vld [vmem:[#allocation2 + $0x40] sm:$0xff]
        %v4616 = vld [vmem:[#allocation2 + $0x48] sm:$0xff]
        %v4617 = vld [vmem:[#allocation2 + $0x50] sm:$0xff]
        %v4618 = vld [vmem:[#allocation2 + $0x58] sm:$0xff]
        %v4619 = vld [vmem:[#allocation2 + $0x60] sm:$0xff]
        %v4620 = vld [vmem:[#allocation2 + $0x68] sm:$0xff]
        %v4621 = vld [vmem:[#allocation2 + $0x70] sm:$0xff]
        %v4622 = vld [vmem:[#allocation2 + $0x78] sm:$0xff]
        %v4623 = vld [vmem:[#allocation2 + $0x80] sm:$0xff]
        %v4624 = vld [vmem:[#allocation2 + $0x88] sm:$0xff]
        %v4625 = vld [vmem:[#allocation2 + $0x90] sm:$0xff]
        %v4626 = vld [vmem:[#allocation2 + $0x98] sm:$0xff]
        %v4627 = vld [vmem:[#allocation2 + $0xa0] sm:$0xff]
        %v4628 = vld [vmem:[#allocation2 + $0xa8] sm:$0xff]
        %v4629 = vld [vmem:[#allocation2 + $0xb0] sm:$0xff]
        %v4630 = vld [vmem:[#allocation2 + $0xb8] sm:$0xff]
        %v4631 = vld [vmem:[#allocation2 + $0xc0] sm:$0xff]
        %v4632 = vld [vmem:[#allocation2 + $0xc8] sm:$0x1]
        %s4633 = scalar_lea.vmem %s3, 14
        %v4634 = vld [vmem:[%s4633] sm:$0x3]
        %vm4658 = vcmask 1046528
        %v4659 = vrot.slane %v4610, 1
        %v4660 = vrot.slane %v4611, 1
        %v4661 = vsel %vm4658, %v4659, %v4660
        %v4662 = vrot.slane %v4612, 1
        %v4663 = vsel %vm4658, %v4660, %v4662
        %v4664 = vrot.slane %v4613, 1
        %v4665 = vsel %vm4658, %v4662, %v4664
        %v4666 = vrot.slane %v4614, 1
        %v4667 = vsel %vm4658, %v4664, %v4666
        %v4668 = vrot.slane %v4615, 1
        %v4669 = vsel %vm4658, %v4666, %v4668
        %v4670 = vrot.slane %v4616, 1
        %v4671 = vsel %vm4658, %v4668, %v4670
        %v4672 = vrot.slane %v4617, 1
        %v4673 = vsel %vm4658, %v4670, %v4672
        %v4674 = vrot.slane %v4618, 1
        %v4675 = vsel %vm4658, %v4672, %v4674
        %v4676 = vrot.slane %v4619, 1
        %v4677 = vsel %vm4658, %v4674, %v4676
        %v4678 = vrot.slane %v4620, 1
        %v4679 = vsel %vm4658, %v4676, %v4678
        %v4680 = vrot.slane %v4621, 1
        %v4681 = vsel %vm4658, %v4678, %v4680
        %v4682 = vrot.slane %v4622, 1
        %v4683 = vsel %vm4658, %v4680, %v4682
        %v4684 = vrot.slane %v4623, 1
        %v4685 = vsel %vm4658, %v4682, %v4684
        %v4686 = vrot.slane %v4624, 1
        %v4687 = vsel %vm4658, %v4684, %v4686
        %v4688 = vrot.slane %v4625, 1
        %v4689 = vsel %vm4658, %v4686, %v4688
        %v4690 = vrot.slane %v4626, 1
        %v4691 = vsel %vm4658, %v4688, %v4690
        %v4692 = vrot.slane %v4627, 1
        %v4693 = vsel %vm4658, %v4690, %v4692
        %v4694 = vrot.slane %v4628, 1
        %v4695 = vsel %vm4658, %v4692, %v4694
        %v4696 = vrot.slane %v4629, 1
        %v4697 = vsel %vm4658, %v4694, %v4696
        %v4698 = vrot.slane %v4630, 1
        %v4699 = vsel %vm4658, %v4696, %v4698
        %v4700 = vrot.slane %v4631, 1
        %v4701 = vsel %vm4658, %v4698, %v4700
        %v4702 = vrot.slane %v4632, 1
        %v4703 = vsel %vm4658, %v4700, %v4702
        %v4705 = vsel %vm434, %v4661, 0
        %v4708 = vsel %vm434, %v4663, 0
        %v4711 = vsel %vm434, %v4665, 0
        %v4714 = vsel %vm434, %v4667, 0
        %v4717 = vsel %vm434, %v4669, 0
        %v4720 = vsel %vm434, %v4671, 0
        %v4723 = vsel %vm434, %v4673, 0
        %v4726 = vsel %vm434, %v4675, 0
        %v4729 = vsel %vm434, %v4677, 0
        %v4732 = vsel %vm434, %v4679, 0
        %v4735 = vsel %vm434, %v4681, 0
        %v4738 = vsel %vm434, %v4683, 0
        %v4741 = vsel %vm434, %v4685, 0
        %v4744 = vsel %vm434, %v4687, 0
        %v4747 = vsel %vm434, %v4689, 0
        %v4750 = vsel %vm434, %v4691, 0
        %v4753 = vsel %vm434, %v4693, 0
        %v4756 = vsel %vm434, %v4695, 0
        %v4759 = vsel %vm434, %v4697, 0
        %v4762 = vsel %vm434, %v4699, 0
        %v4765 = vsel %vm434, %v4701, 0
        %v4768 = vsel %vm434, %v4703, 0
        %v4771 = vand.u32 %v4634, %v953
        %4773 = vmatprep.subr.bf16.mxu0 0
        %4774 = vmatpush1.bf16.msra.mxu0 %v4771
        %4775 = vmatprep.subr.bf16.mxu0 0
        %4776 = vmatpush1.bf16.msra.mxu0 0
        %4777 = vmatprep.subr.bf16.mxu0 0
        %4778 = vmatpush1.bf16.msra.mxu0 0
        %4779 = vmatprep.subr.bf16.mxu0 0
        %4780 = vmatpush1.bf16.msra.mxu0 0
        %4781 = vmatprep.subr.bf16.mxu0 0
        %4782 = vmatpush1.bf16.msra.mxu0 0
        %4783 = vmatprep.subr.bf16.mxu0 0
        %4784 = vmatpush1.bf16.msra.mxu0 0
        %4785 = vmatprep.subr.bf16.mxu0 0
        %4786 = vmatpush1.bf16.msra.mxu0 0
        %4787 = vmatprep.subr.bf16.mxu0 0
        %4788 = vmatpush1.bf16.msra.mxu0 0
        %4789 = vmatprep.subr.bf16.mxu0 0
        %4790 = vmatpush1.bf16.msra.mxu0 0
        %4791 = vmatprep.subr.bf16.mxu0 0
        %4792 = vmatpush1.bf16.msra.mxu0 0
        %4793 = vmatprep.subr.bf16.mxu0 0
        %4794 = vmatpush1.bf16.msra.mxu0 0
        %4795 = vmatprep.subr.bf16.mxu0 0
        %4796 = vmatpush1.bf16.msra.mxu0 0
        %4797 = vmatprep.subr.bf16.mxu0 0
        %4798 = vmatpush1.bf16.msra.mxu0 0
        %4799 = vmatprep.subr.bf16.mxu0 0
        %4800 = vmatpush1.bf16.msra.mxu0 0
        %4801 = vmatprep.subr.bf16.mxu0 0
        %4802 = vmatpush1.bf16.msra.mxu0 0
        %4803 = vmatprep.subr.bf16.mxu0 0
        %4804 = vmatpush1.bf16.msra.mxu0 0
        %4805 = vmatprep.mubr.bf16.mxu0 0
        %4806 = vmatmul.mubr.bf16.gmra.mrb[0].mxu0 %v4705
        %v4807 = vpop.f32.mrb[0].mxu0
        %v4808 = vadd.f32 0.0, %v4807
        %v4809 = vpop.f32.mrb[0].mxu0
        %v4810 = vpop.f32.mrb[0].mxu0
        %v4811 = vadd.f32 0.0, %v4810
        %v4812 = vpop.f32.mrb[0].mxu0
        %4813 = vmatprep.mubr.bf16.mxu0 0
        %4814 = vmatmul.mubr.bf16.gmra.mrb[0].mxu0 %v4708
        %v4815 = vpop.f32.mrb[0].mxu0
        %v4816 = vadd.f32 0.0, %v4815
        %v4817 = vpop.f32.mrb[0].mxu0
        %v4818 = vpop.f32.mrb[0].mxu0
        %v4819 = vadd.f32 0.0, %v4818
        %v4820 = vpop.f32.mrb[0].mxu0
        %4821 = vmatprep.mubr.bf16.mxu0 0
        %4822 = vmatmul.mubr.bf16.gmra.mrb[0].mxu0 %v4711
        %v4823 = vpop.f32.mrb[0].mxu0
        %v4824 = vadd.f32 0.0, %v4823
        %v4825 = vpop.f32.mrb[0].mxu0
        %v4826 = vpop.f32.mrb[0].mxu0
        %v4827 = vadd.f32 0.0, %v4826
        %v4828 = vpop.f32.mrb[0].mxu0
        %4829 = vmatprep.mubr.bf16.mxu0 0
        %4830 = vmatmul.mubr.bf16.gmra.mrb[0].mxu0 %v4714
        %v4831 = vpop.f32.mrb[0].mxu0
        %v4832 = vadd.f32 0.0, %v4831
        %v4833 = vpop.f32.mrb[0].mxu0
        %v4834 = vpop.f32.mrb[0].mxu0
        %v4835 = vadd.f32 0.0, %v4834
        %v4836 = vpop.f32.mrb[0].mxu0
        %4837 = vmatprep.mubr.bf16.mxu0 0
        %4838 = vmatmul.mubr.bf16.gmra.mrb[0].mxu0 %v4717
        %v4839 = vpop.f32.mrb[0].mxu0
        %v4840 = vadd.f32 0.0, %v4839
        %v4841 = vpop.f32.mrb[0].mxu0
        %v4842 = vpop.f32.mrb[0].mxu0
        %v4843 = vadd.f32 0.0, %v4842
        %v4844 = vpop.f32.mrb[0].mxu0
        %4845 = vmatprep.mubr.bf16.mxu0 0
        %4846 = vmatmul.mubr.bf16.gmra.mrb[0].mxu0 %v4720
        %v4847 = vpop.f32.mrb[0].mxu0
        %v4848 = vadd.f32 0.0, %v4847
        %v4849 = vpop.f32.mrb[0].mxu0
        %v4850 = vpop.f32.mrb[0].mxu0
        %v4851 = vadd.f32 0.0, %v4850
        %v4852 = vpop.f32.mrb[0].mxu0
        %4853 = vmatprep.mubr.bf16.mxu0 0
        %4854 = vmatmul.mubr.bf16.gmra.mrb[0].mxu0 %v4723
        %v4855 = vpop.f32.mrb[0].mxu0
        %v4856 = vadd.f32 0.0, %v4855
        %v4857 = vpop.f32.mrb[0].mxu0
        %v4858 = vpop.f32.mrb[0].mxu0
        %v4859 = vadd.f32 0.0, %v4858
        %v4860 = vpop.f32.mrb[0].mxu0
        %4861 = vmatprep.mubr.bf16.mxu0 0
        %4862 = vmatmul.mubr.bf16.gmra.mrb[0].mxu0 %v4726
        %v4863 = vpop.f32.mrb[0].mxu0
        %v4864 = vadd.f32 0.0, %v4863
        %v4865 = vpop.f32.mrb[0].mxu0
        %v4866 = vpop.f32.mrb[0].mxu0
        %v4867 = vadd.f32 0.0, %v4866
        %v4868 = vpop.f32.mrb[0].mxu0
        %4869 = vmatprep.mubr.bf16.mxu0 0
        %4870 = vmatmul.mubr.bf16.gmra.mrb[0].mxu0 %v4729
        %v4871 = vpop.f32.mrb[0].mxu0
        %v4872 = vadd.f32 0.0, %v4871
        %v4873 = vpop.f32.mrb[0].mxu0
        %v4874 = vpop.f32.mrb[0].mxu0
        %v4875 = vadd.f32 0.0, %v4874
        %v4876 = vpop.f32.mrb[0].mxu0
        %4877 = vmatprep.mubr.bf16.mxu0 0
        %4878 = vmatmul.mubr.bf16.gmra.mrb[0].mxu0 %v4732
        %v4879 = vpop.f32.mrb[0].mxu0
        %v4880 = vadd.f32 0.0, %v4879
        %v4881 = vpop.f32.mrb[0].mxu0
        %v4882 = vpop.f32.mrb[0].mxu0
        %v4883 = vadd.f32 0.0, %v4882
        %v4884 = vpop.f32.mrb[0].mxu0
        %4885 = vmatprep.mubr.bf16.mxu0 0
        %4886 = vmatmul.mubr.bf16.gmra.mrb[0].mxu0 %v4735
        %v4887 = vpop.f32.mrb[0].mxu0
        %v4888 = vadd.f32 0.0, %v4887
        %v4889 = vpop.f32.mrb[0].mxu0
        %v4890 = vpop.f32.mrb[0].mxu0
        %v4891 = vadd.f32 0.0, %v4890
        %v4892 = vpop.f32.mrb[0].mxu0
        %4893 = vmatprep.mubr.bf16.mxu0 0
        %4894 = vmatmul.mubr.bf16.gmra.mrb[0].mxu0 %v4738
        %v4895 = vpop.f32.mrb[0].mxu0
        %v4896 = vadd.f32 0.0, %v4895
        %v4897 = vpop.f32.mrb[0].mxu0
        %v4898 = vpop.f32.mrb[0].mxu0
        %v4899 = vadd.f32 0.0, %v4898
        %v4900 = vpop.f32.mrb[0].mxu0
        %4901 = vmatprep.mubr.bf16.mxu0 0
        %4902 = vmatmul.mubr.bf16.gmra.mrb[0].mxu0 %v4741
        %v4903 = vpop.f32.mrb[0].mxu0
        %v4904 = vadd.f32 0.0, %v4903
        %v4905 = vpop.f32.mrb[0].mxu0
        %v4906 = vpop.f32.mrb[0].mxu0
        %v4907 = vadd.f32 0.0, %v4906
        %v4908 = vpop.f32.mrb[0].mxu0
        %4909 = vmatprep.mubr.bf16.mxu0 0
        %4910 = vmatmul.mubr.bf16.gmra.mrb[0].mxu0 %v4744
        %v4911 = vpop.f32.mrb[0].mxu0
        %v4912 = vadd.f32 0.0, %v4911
        %v4913 = vpop.f32.mrb[0].mxu0
        %v4914 = vpop.f32.mrb[0].mxu0
        %v4915 = vadd.f32 0.0, %v4914
        %v4916 = vpop.f32.mrb[0].mxu0
        %4917 = vmatprep.mubr.bf16.mxu0 0
        %4918 = vmatmul.mubr.bf16.gmra.mrb[0].mxu0 %v4747
        %v4919 = vpop.f32.mrb[0].mxu0
        %v4920 = vadd.f32 0.0, %v4919
        %v4921 = vpop.f32.mrb[0].mxu0
        %v4922 = vpop.f32.mrb[0].mxu0
        %v4923 = vadd.f32 0.0, %v4922
        %v4924 = vpop.f32.mrb[0].mxu0
        %4925 = vmatprep.mubr.bf16.mxu0 0
        %4926 = vmatmul.mubr.bf16.gmra.mrb[0].mxu0 %v4750
        %v4927 = vpop.f32.mrb[0].mxu0
        %v4928 = vadd.f32 0.0, %v4927
        %v4929 = vpop.f32.mrb[0].mxu0
        %v4930 = vpop.f32.mrb[0].mxu0
        %v4931 = vadd.f32 0.0, %v4930
        %v4932 = vpop.f32.mrb[0].mxu0
        %4933 = vmatprep.mubr.bf16.mxu0 0
        %4934 = vmatmul.mubr.bf16.gmra.mrb[0].mxu0 %v4753
        %v4935 = vpop.f32.mrb[0].mxu0
        %v4936 = vadd.f32 0.0, %v4935
        %v4937 = vpop.f32.mrb[0].mxu0
        %v4938 = vpop.f32.mrb[0].mxu0
        %v4939 = vadd.f32 0.0, %v4938
        %v4940 = vpop.f32.mrb[0].mxu0
        %4941 = vmatprep.mubr.bf16.mxu0 0
        %4942 = vmatmul.mubr.bf16.gmra.mrb[0].mxu0 %v4756
        %v4943 = vpop.f32.mrb[0].mxu0
        %v4944 = vadd.f32 0.0, %v4943
        %v4945 = vpop.f32.mrb[0].mxu0
        %v4946 = vpop.f32.mrb[0].mxu0
        %v4947 = vadd.f32 0.0, %v4946
        %v4948 = vpop.f32.mrb[0].mxu0
        %4949 = vmatprep.mubr.bf16.mxu0 0
        %4950 = vmatmul.mubr.bf16.gmra.mrb[0].mxu0 %v4759
        %v4951 = vpop.f32.mrb[0].mxu0
        %v4952 = vadd.f32 0.0, %v4951
        %v4953 = vpop.f32.mrb[0].mxu0
        %v4954 = vpop.f32.mrb[0].mxu0
        %v4955 = vadd.f32 0.0, %v4954
        %v4956 = vpop.f32.mrb[0].mxu0
        %4957 = vmatprep.mubr.bf16.mxu0 0
        %4958 = vmatmul.mubr.bf16.gmra.mrb[0].mxu0 %v4762
        %v4959 = vpop.f32.mrb[0].mxu0
        %v4960 = vadd.f32 0.0, %v4959
        %v4961 = vpop.f32.mrb[0].mxu0
        %v4962 = vpop.f32.mrb[0].mxu0
        %v4963 = vadd.f32 0.0, %v4962
        %v4964 = vpop.f32.mrb[0].mxu0
        %4965 = vmatprep.mubr.bf16.mxu0 0
        %4966 = vmatmul.mubr.bf16.gmra.mrb[0].mxu0 %v4765
        %v4967 = vpop.f32.mrb[0].mxu0
        %v4968 = vadd.f32 0.0, %v4967
        %v4969 = vpop.f32.mrb[0].mxu0
        %v4970 = vpop.f32.mrb[0].mxu0
        %v4971 = vadd.f32 0.0, %v4970
        %v4972 = vpop.f32.mrb[0].mxu0
        %4973 = vmatprep.mubr.bf16.mxu0 0
        %4974 = vmatmul.mubr.bf16.gmra.mrb[0].mxu0 %v4768
        %v4975 = vpop.f32.mrb[0].mxu0
        %v4976 = vadd.f32 0.0, %v4975
        %v4977 = vpop.f32.mrb[0].mxu0
        %v4978 = vpop.f32.mrb[0].mxu0
        %v4979 = vadd.f32 0.0, %v4978
        %v4980 = vpop.f32.mrb[0].mxu0
        %4981 = vdwg.mxu0
        %v4982 = vld [vmem:[#allocation3] sm:$0xff]
        %v4983 = vld [vmem:[#allocation3 + $0x8] sm:$0xff]
        %v4984 = vld [vmem:[#allocation3 + $0x10] sm:$0xff]
        %v4985 = vld [vmem:[#allocation3 + $0x18] sm:$0xff]
        %v4986 = vld [vmem:[#allocation3 + $0x20] sm:$0xff]
        %v4987 = vld [vmem:[#allocation3 + $0x28] sm:$0xff]
        %v4988 = vld [vmem:[#allocation3 + $0x30] sm:$0xff]
        %v4989 = vld [vmem:[#allocation3 + $0x38] sm:$0xff]
        %v4990 = vld [vmem:[#allocation3 + $0x40] sm:$0xff]
        %v4991 = vld [vmem:[#allocation3 + $0x48] sm:$0xff]
        %v4992 = vld [vmem:[#allocation3 + $0x50] sm:$0xff]
        %v4993 = vld [vmem:[#allocation3 + $0x58] sm:$0xff]
        %v4994 = vld [vmem:[#allocation3 + $0x60] sm:$0xff]
        %v4995 = vld [vmem:[#allocation3 + $0x68] sm:$0xff]
        %v4996 = vld [vmem:[#allocation3 + $0x70] sm:$0xff]
        %v4997 = vld [vmem:[#allocation3 + $0x78] sm:$0xff]
        %v4998 = vld [vmem:[#allocation3 + $0x80] sm:$0xff]
        %v4999 = vld [vmem:[#allocation3 + $0x88] sm:$0xff]
        %v5000 = vld [vmem:[#allocation3 + $0x90] sm:$0xff]
        %v5001 = vld [vmem:[#allocation3 + $0x98] sm:$0xff]
        %v5002 = vld [vmem:[#allocation3 + $0xa0] sm:$0xff]
        %v5003 = vld [vmem:[#allocation3 + $0xa8] sm:$0xff]
        %v5004 = vld [vmem:[#allocation3 + $0xb0] sm:$0xff]
        %v5005 = vld [vmem:[#allocation3 + $0xb8] sm:$0xff]
        %v5006 = vld [vmem:[#allocation3 + $0xc0] sm:$0xff]
        %v5007 = vld [vmem:[#allocation3 + $0xc8] sm:$0xff]
        %v5008 = vld [vmem:[#allocation3 + $0xd0] sm:$0xff]
        %v5009 = vld [vmem:[#allocation3 + $0xd8] sm:$0xff]
        %v5010 = vld [vmem:[#allocation3 + $0xe0] sm:$0xff]
        %v5011 = vld [vmem:[#allocation3 + $0xe8] sm:$0xff]
        %v5012 = vld [vmem:[#allocation3 + $0xf0] sm:$0xff]
        %v5013 = vld [vmem:[#allocation3 + $0xf8] sm:$0xff]
        %v5014 = vld [vmem:[#allocation3 + $0x100] sm:$0xff]
        %v5015 = vld [vmem:[#allocation3 + $0x108] sm:$0xff]
        %v5016 = vld [vmem:[#allocation3 + $0x110] sm:$0xff]
        %v5017 = vld [vmem:[#allocation3 + $0x118] sm:$0xff]
        %v5018 = vld [vmem:[#allocation3 + $0x120] sm:$0xff]
        %v5019 = vld [vmem:[#allocation3 + $0x128] sm:$0xff]
        %v5020 = vld [vmem:[#allocation3 + $0x130] sm:$0xff]
        %v5021 = vld [vmem:[#allocation3 + $0x138] sm:$0xff]
        %v5022 = vld [vmem:[#allocation3 + $0x140] sm:$0xff]
        %v5023 = vld [vmem:[#allocation3 + $0x148] sm:$0xff]
        %v5024 = vld [vmem:[#allocation3 + $0x150] sm:$0xff]
        %v5025 = vld [vmem:[#allocation3 + $0x158] sm:$0xff]
        %v5026 = vadd.f32 %v4982, %v4808
        %v5027 = vadd.f32 %v4983, %v4811
        %v5028 = vadd.f32 %v4984, %v4816
        %v5029 = vadd.f32 %v4985, %v4819
        %v5030 = vadd.f32 %v4986, %v4824
        %v5031 = vadd.f32 %v4987, %v4827
        %v5032 = vadd.f32 %v4988, %v4832
        %v5033 = vadd.f32 %v4989, %v4835
        %v5034 = vadd.f32 %v4990, %v4840
        %v5035 = vadd.f32 %v4991, %v4843
        %v5036 = vadd.f32 %v4992, %v4848
        %v5037 = vadd.f32 %v4993, %v4851
        %v5038 = vadd.f32 %v4994, %v4856
        %v5039 = vadd.f32 %v4995, %v4859
        %v5040 = vadd.f32 %v4996, %v4864
        %v5041 = vadd.f32 %v4997, %v4867
        %v5042 = vadd.f32 %v4998, %v4872
        %v5043 = vadd.f32 %v4999, %v4875
        %v5044 = vadd.f32 %v5000, %v4880
        %v5045 = vadd.f32 %v5001, %v4883
        %v5046 = vadd.f32 %v5002, %v4888
        %v5047 = vadd.f32 %v5003, %v4891
        %v5048 = vadd.f32 %v5004, %v4896
        %v5049 = vadd.f32 %v5005, %v4899
        %v5050 = vadd.f32 %v5006, %v4904
        %v5051 = vadd.f32 %v5007, %v4907
        %v5052 = vadd.f32 %v5008, %v4912
        %v5053 = vadd.f32 %v5009, %v4915
        %v5054 = vadd.f32 %v5010, %v4920
        %v5055 = vadd.f32 %v5011, %v4923
        %v5056 = vadd.f32 %v5012, %v4928
        %v5057 = vadd.f32 %v5013, %v4931
        %v5058 = vadd.f32 %v5014, %v4936
        %v5059 = vadd.f32 %v5015, %v4939
        %v5060 = vadd.f32 %v5016, %v4944
        %v5061 = vadd.f32 %v5017, %v4947
        %v5062 = vadd.f32 %v5018, %v4952
        %v5063 = vadd.f32 %v5019, %v4955
        %v5064 = vadd.f32 %v5020, %v4960
        %v5065 = vadd.f32 %v5021, %v4963
        %v5066 = vadd.f32 %v5022, %v4968
        %v5067 = vadd.f32 %v5023, %v4971
        %v5068 = vadd.f32 %v5024, %v4976
        %v5069 = vadd.f32 %v5025, %v4979
        %5070 = vst [vmem:[#allocation3] sm:$0xff] %v5026
        %5071 = vst [vmem:[#allocation3 + $0x8] sm:$0xff] %v5027
        %5072 = vst [vmem:[#allocation3 + $0x10] sm:$0xff] %v5028
        %5073 = vst [vmem:[#allocation3 + $0x18] sm:$0xff] %v5029
        %5074 = vst [vmem:[#allocation3 + $0x20] sm:$0xff] %v5030
        %5075 = vst [vmem:[#allocation3 + $0x28] sm:$0xff] %v5031
        %5076 = vst [vmem:[#allocation3 + $0x30] sm:$0xff] %v5032
        %5077 = vst [vmem:[#allocation3 + $0x38] sm:$0xff] %v5033
        %5078 = vst [vmem:[#allocation3 + $0x40] sm:$0xff] %v5034
        %5079 = vst [vmem:[#allocation3 + $0x48] sm:$0xff] %v5035
        %5080 = vst [vmem:[#allocation3 + $0x50] sm:$0xff] %v5036
        %5081 = vst [vmem:[#allocation3 + $0x58] sm:$0xff] %v5037
        %5082 = vst [vmem:[#allocation3 + $0x60] sm:$0xff] %v5038
        %5083 = vst [vmem:[#allocation3 + $0x68] sm:$0xff] %v5039
        %5084 = vst [vmem:[#allocation3 + $0x70] sm:$0xff] %v5040
        %5085 = vst [vmem:[#allocation3 + $0x78] sm:$0xff] %v5041
        %5086 = vst [vmem:[#allocation3 + $0x80] sm:$0xff] %v5042
        %5087 = vst [vmem:[#allocation3 + $0x88] sm:$0xff] %v5043
        %5088 = vst [vmem:[#allocation3 + $0x90] sm:$0xff] %v5044
        %5089 = vst [vmem:[#allocation3 + $0x98] sm:$0xff] %v5045
        %5090 = vst [vmem:[#allocation3 + $0xa0] sm:$0xff] %v5046
        %5091 = vst [vmem:[#allocation3 + $0xa8] sm:$0xff] %v5047
        %5092 = vst [vmem:[#allocation3 + $0xb0] sm:$0xff] %v5048
        %5093 = vst [vmem:[#allocation3 + $0xb8] sm:$0xff] %v5049
        %5094 = vst [vmem:[#allocation3 + $0xc0] sm:$0xff] %v5050
        %5095 = vst [vmem:[#allocation3 + $0xc8] sm:$0xff] %v5051
        %5096 = vst [vmem:[#allocation3 + $0xd0] sm:$0xff] %v5052
        %5097 = vst [vmem:[#allocation3 + $0xd8] sm:$0xff] %v5053
        %5098 = vst [vmem:[#allocation3 + $0xe0] sm:$0xff] %v5054
        %5099 = vst [vmem:[#allocation3 + $0xe8] sm:$0xff] %v5055
        %5100 = vst [vmem:[#allocation3 + $0xf0] sm:$0xff] %v5056
        %5101 = vst [vmem:[#allocation3 + $0xf8] sm:$0xff] %v5057
        %5102 = vst [vmem:[#allocation3 + $0x100] sm:$0xff] %v5058
        %5103 = vst [vmem:[#allocation3 + $0x108] sm:$0xff] %v5059
        %5104 = vst [vmem:[#allocation3 + $0x110] sm:$0xff] %v5060
        %5105 = vst [vmem:[#allocation3 + $0x118] sm:$0xff] %v5061
        %5106 = vst [vmem:[#allocation3 + $0x120] sm:$0xff] %v5062
        %5107 = vst [vmem:[#allocation3 + $0x128] sm:$0xff] %v5063
        %5108 = vst [vmem:[#allocation3 + $0x130] sm:$0xff] %v5064
        %5109 = vst [vmem:[#allocation3 + $0x138] sm:$0xff] %v5065
        %5110 = vst [vmem:[#allocation3 + $0x140] sm:$0xff] %v5066
        %5111 = vst [vmem:[#allocation3 + $0x148] sm:$0xff] %v5067
        %5112 = vst [vmem:[#allocation3 + $0x150] sm:$0xff] %v5068
        %5113 = vst [vmem:[#allocation3 + $0x158] sm:$0xff] %v5069
        %v5114 = vld [vmem:[#allocation2 + $0x18] sm:$0xfe]
        %v5115 = vld [vmem:[#allocation2 + $0x20] sm:$0xff]
        %v5116 = vld [vmem:[#allocation2 + $0x28] sm:$0xff]
        %v5117 = vld [vmem:[#allocation2 + $0x30] sm:$0xff]
        %v5118 = vld [vmem:[#allocation2 + $0x38] sm:$0xff]
        %v5119 = vld [vmem:[#allocation2 + $0x40] sm:$0xff]
        %v5120 = vld [vmem:[#allocation2 + $0x48] sm:$0xff]
        %v5121 = vld [vmem:[#allocation2 + $0x50] sm:$0xff]
        %v5122 = vld [vmem:[#allocation2 + $0x58] sm:$0xff]
        %v5123 = vld [vmem:[#allocation2 + $0x60] sm:$0xff]
        %v5124 = vld [vmem:[#allocation2 + $0x68] sm:$0xff]
        %v5125 = vld [vmem:[#allocation2 + $0x70] sm:$0xff]
        %v5126 = vld [vmem:[#allocation2 + $0x78] sm:$0xff]
        %v5127 = vld [vmem:[#allocation2 + $0x80] sm:$0xff]
        %v5128 = vld [vmem:[#allocation2 + $0x88] sm:$0xff]
        %v5129 = vld [vmem:[#allocation2 + $0x90] sm:$0xff]
        %v5130 = vld [vmem:[#allocation2 + $0x98] sm:$0xff]
        %v5131 = vld [vmem:[#allocation2 + $0xa0] sm:$0xff]
        %v5132 = vld [vmem:[#allocation2 + $0xa8] sm:$0xff]
        %v5133 = vld [vmem:[#allocation2 + $0xb0] sm:$0xff]
        %v5134 = vld [vmem:[#allocation2 + $0xb8] sm:$0xff]
        %v5135 = vld [vmem:[#allocation2 + $0xc0] sm:$0xff]
        %v5136 = vld [vmem:[#allocation2 + $0xc8] sm:$0x3]
        %s5137 = scalar_lea.vmem %s3, 16
        %v5138 = vld [vmem:[%s5137] sm:$0x3]
        %vm5139 = vsmask.f32 6400
        %v5141 = vshrl.u32 %v5114, 16
        %v5143 = vrot.slane %v5141, 1
        %v5144 = vshll.u32 %v5114, 16
        %v5146 = vrot.slane %v5144, 2
        %v5147 = vor.u32 %v5143, %v5146
        %v5149 = vshrl.u32 %v5115, 16
        %v5151 = vrot.slane %v5149, 1
        %v5152 = vshll.u32 %v5115, 16
        %v5154 = vrot.slane %v5152, 2
        %v5155 = vor.u32 %v5151, %v5154
        %v5156 = vsel %vm5139, %v5147, %v5155
        %v5158 = vshrl.u32 %v5116, 16
        %v5160 = vrot.slane %v5158, 1
        %v5161 = vshll.u32 %v5116, 16
        %v5163 = vrot.slane %v5161, 2
        %v5164 = vor.u32 %v5160, %v5163
        %v5165 = vsel %vm5139, %v5155, %v5164
        %v5167 = vshrl.u32 %v5117, 16
        %v5169 = vrot.slane %v5167, 1
        %v5170 = vshll.u32 %v5117, 16
        %v5172 = vrot.slane %v5170, 2
        %v5173 = vor.u32 %v5169, %v5172
        %v5174 = vsel %vm5139, %v5164, %v5173
        %v5176 = vshrl.u32 %v5118, 16
        %v5178 = vrot.slane %v5176, 1
        %v5179 = vshll.u32 %v5118, 16
        %v5181 = vrot.slane %v5179, 2
        %v5182 = vor.u32 %v5178, %v5181
        %v5183 = vsel %vm5139, %v5173, %v5182
        %v5185 = vshrl.u32 %v5119, 16
        %v5187 = vrot.slane %v5185, 1
        %v5188 = vshll.u32 %v5119, 16
        %v5190 = vrot.slane %v5188, 2
        %v5191 = vor.u32 %v5187, %v5190
        %v5192 = vsel %vm5139, %v5182, %v5191
        %v5194 = vshrl.u32 %v5120, 16
        %v5196 = vrot.slane %v5194, 1
        %v5197 = vshll.u32 %v5120, 16
        %v5199 = vrot.slane %v5197, 2
        %v5200 = vor.u32 %v5196, %v5199
        %v5201 = vsel %vm5139, %v5191, %v5200
        %v5203 = vshrl.u32 %v5121, 16
        %v5205 = vrot.slane %v5203, 1
        %v5206 = vshll.u32 %v5121, 16
        %v5208 = vrot.slane %v5206, 2
        %v5209 = vor.u32 %v5205, %v5208
        %v5210 = vsel %vm5139, %v5200, %v5209
        %v5212 = vshrl.u32 %v5122, 16
        %v5214 = vrot.slane %v5212, 1
        %v5215 = vshll.u32 %v5122, 16
        %v5217 = vrot.slane %v5215, 2
        %v5218 = vor.u32 %v5214, %v5217
        %v5219 = vsel %vm5139, %v5209, %v5218
        %v5221 = vshrl.u32 %v5123, 16
        %v5223 = vrot.slane %v5221, 1
        %v5224 = vshll.u32 %v5123, 16
        %v5226 = vrot.slane %v5224, 2
        %v5227 = vor.u32 %v5223, %v5226
        %v5228 = vsel %vm5139, %v5218, %v5227
        %v5230 = vshrl.u32 %v5124, 16
        %v5232 = vrot.slane %v5230, 1
        %v5233 = vshll.u32 %v5124, 16
        %v5235 = vrot.slane %v5233, 2
        %v5236 = vor.u32 %v5232, %v5235
        %v5237 = vsel %vm5139, %v5227, %v5236
        %v5239 = vshrl.u32 %v5125, 16
        %v5241 = vrot.slane %v5239, 1
        %v5242 = vshll.u32 %v5125, 16
        %v5244 = vrot.slane %v5242, 2
        %v5245 = vor.u32 %v5241, %v5244
        %v5246 = vsel %vm5139, %v5236, %v5245
        %v5248 = vshrl.u32 %v5126, 16
        %v5250 = vrot.slane %v5248, 1
        %v5251 = vshll.u32 %v5126, 16
        %v5253 = vrot.slane %v5251, 2
        %v5254 = vor.u32 %v5250, %v5253
        %v5255 = vsel %vm5139, %v5245, %v5254
        %v5257 = vshrl.u32 %v5127, 16
        %v5259 = vrot.slane %v5257, 1
        %v5260 = vshll.u32 %v5127, 16
        %v5262 = vrot.slane %v5260, 2
        %v5263 = vor.u32 %v5259, %v5262
        %v5264 = vsel %vm5139, %v5254, %v5263
        %v5266 = vshrl.u32 %v5128, 16
        %v5268 = vrot.slane %v5266, 1
        %v5269 = vshll.u32 %v5128, 16
        %v5271 = vrot.slane %v5269, 2
        %v5272 = vor.u32 %v5268, %v5271
        %v5273 = vsel %vm5139, %v5263, %v5272
        %v5275 = vshrl.u32 %v5129, 16
        %v5277 = vrot.slane %v5275, 1
        %v5278 = vshll.u32 %v5129, 16
        %v5280 = vrot.slane %v5278, 2
        %v5281 = vor.u32 %v5277, %v5280
        %v5282 = vsel %vm5139, %v5272, %v5281
        %v5284 = vshrl.u32 %v5130, 16
        %v5286 = vrot.slane %v5284, 1
        %v5287 = vshll.u32 %v5130, 16
        %v5289 = vrot.slane %v5287, 2
        %v5290 = vor.u32 %v5286, %v5289
        %v5291 = vsel %vm5139, %v5281, %v5290
        %v5293 = vshrl.u32 %v5131, 16
        %v5295 = vrot.slane %v5293, 1
        %v5296 = vshll.u32 %v5131, 16
        %v5298 = vrot.slane %v5296, 2
        %v5299 = vor.u32 %v5295, %v5298
        %v5300 = vsel %vm5139, %v5290, %v5299
        %v5302 = vshrl.u32 %v5132, 16
        %v5304 = vrot.slane %v5302, 1
        %v5305 = vshll.u32 %v5132, 16
        %v5307 = vrot.slane %v5305, 2
        %v5308 = vor.u32 %v5304, %v5307
        %v5309 = vsel %vm5139, %v5299, %v5308
        %v5311 = vshrl.u32 %v5133, 16
        %v5313 = vrot.slane %v5311, 1
        %v5314 = vshll.u32 %v5133, 16
        %v5316 = vrot.slane %v5314, 2
        %v5317 = vor.u32 %v5313, %v5316
        %v5318 = vsel %vm5139, %v5308, %v5317
        %v5320 = vshrl.u32 %v5134, 16
        %v5322 = vrot.slane %v5320, 1
        %v5323 = vshll.u32 %v5134, 16
        %v5325 = vrot.slane %v5323, 2
        %v5326 = vor.u32 %v5322, %v5325
        %v5327 = vsel %vm5139, %v5317, %v5326
        %v5329 = vshrl.u32 %v5135, 16
        %v5331 = vrot.slane %v5329, 1
        %v5332 = vshll.u32 %v5135, 16
        %v5334 = vrot.slane %v5332, 2
        %v5335 = vor.u32 %v5331, %v5334
        %v5336 = vsel %vm5139, %v5326, %v5335
        %v5338 = vshrl.u32 %v5136, 16
        %v5340 = vrot.slane %v5338, 1
        %v5341 = vshll.u32 %v5136, 16
        %v5343 = vrot.slane %v5341, 2
        %v5344 = vor.u32 %v5340, %v5343
        %v5345 = vsel %vm5139, %v5335, %v5344
        %v5347 = vsel %vm434, %v5156, 0
        %v5350 = vsel %vm434, %v5165, 0
        %v5353 = vsel %vm434, %v5174, 0
        %v5356 = vsel %vm434, %v5183, 0
        %v5359 = vsel %vm434, %v5192, 0
        %v5362 = vsel %vm434, %v5201, 0
        %v5365 = vsel %vm434, %v5210, 0
        %v5368 = vsel %vm434, %v5219, 0
        %v5371 = vsel %vm434, %v5228, 0
        %v5374 = vsel %vm434, %v5237, 0
        %v5377 = vsel %vm434, %v5246, 0
        %v5380 = vsel %vm434, %v5255, 0
        %v5383 = vsel %vm434, %v5264, 0
        %v5386 = vsel %vm434, %v5273, 0
        %v5389 = vsel %vm434, %v5282, 0
        %v5392 = vsel %vm434, %v5291, 0
        %v5395 = vsel %vm434, %v5300, 0
        %v5398 = vsel %vm434, %v5309, 0
        %v5401 = vsel %vm434, %v5318, 0
        %v5404 = vsel %vm434, %v5327, 0
        %v5407 = vsel %vm434, %v5336, 0
        %v5410 = vsel %vm434, %v5345, 0
        %v5413 = vand.u32 %v5138, %v953
        %5415 = vmatprep.subr.bf16.mxu0 0
        %5416 = vmatpush1.bf16.msra.mxu0 %v5413
        %5417 = vmatprep.subr.bf16.mxu0 0
        %5418 = vmatpush1.bf16.msra.mxu0 0
        %5419 = vmatprep.subr.bf16.mxu0 0
        %5420 = vmatpush1.bf16.msra.mxu0 0
        %5421 = vmatprep.subr.bf16.mxu0 0
        %5422 = vmatpush1.bf16.msra.mxu0 0
        %5423 = vmatprep.subr.bf16.mxu0 0
        %5424 = vmatpush1.bf16.msra.mxu0 0
        %5425 = vmatprep.subr.bf16.mxu0 0
        %5426 = vmatpush1.bf16.msra.mxu0 0
        %5427 = vmatprep.subr.bf16.mxu0 0
        %5428 = vmatpush1.bf16.msra.mxu0 0
        %5429 = vmatprep.subr.bf16.mxu0 0
        %5430 = vmatpush1.bf16.msra.mxu0 0
        %5431 = vmatprep.subr.bf16.mxu0 0
        %5432 = vmatpush1.bf16.msra.mxu0 0
        %5433 = vmatprep.subr.bf16.mxu0 0
        %5434 = vmatpush1.bf16.msra.mxu0 0
        %5435 = vmatprep.subr.bf16.mxu0 0
        %5436 = vmatpush1.bf16.msra.mxu0 0
        %5437 = vmatprep.subr.bf16.mxu0 0
        %5438 = vmatpush1.bf16.msra.mxu0 0
        %5439 = vmatprep.subr.bf16.mxu0 0
        %5440 = vmatpush1.bf16.msra.mxu0 0
        %5441 = vmatprep.subr.bf16.mxu0 0
        %5442 = vmatpush1.bf16.msra.mxu0 0
        %5443 = vmatprep.subr.bf16.mxu0 0
        %5444 = vmatpush1.bf16.msra.mxu0 0
        %5445 = vmatprep.subr.bf16.mxu0 0
        %5446 = vmatpush1.bf16.msra.mxu0 0
        %5447 = vmatprep.mubr.bf16.mxu0 0
        %5448 = vmatmul.mubr.bf16.gmra.mrb[0].mxu0 %v5347
        %v5449 = vpop.f32.mrb[0].mxu0
        %v5450 = vadd.f32 0.0, %v5449
        %v5451 = vpop.f32.mrb[0].mxu0
        %v5452 = vpop.f32.mrb[0].mxu0
        %v5453 = vadd.f32 0.0, %v5452
        %v5454 = vpop.f32.mrb[0].mxu0
        %5455 = vmatprep.mubr.bf16.mxu0 0
        %5456 = vmatmul.mubr.bf16.gmra.mrb[0].mxu0 %v5350
        %v5457 = vpop.f32.mrb[0].mxu0
        %v5458 = vadd.f32 0.0, %v5457
        %v5459 = vpop.f32.mrb[0].mxu0
        %v5460 = vpop.f32.mrb[0].mxu0
        %v5461 = vadd.f32 0.0, %v5460
        %v5462 = vpop.f32.mrb[0].mxu0
        %5463 = vmatprep.mubr.bf16.mxu0 0
        %5464 = vmatmul.mubr.bf16.gmra.mrb[0].mxu0 %v5353
        %v5465 = vpop.f32.mrb[0].mxu0
        %v5466 = vadd.f32 0.0, %v5465
        %v5467 = vpop.f32.mrb[0].mxu0
        %v5468 = vpop.f32.mrb[0].mxu0
        %v5469 = vadd.f32 0.0, %v5468
        %v5470 = vpop.f32.mrb[0].mxu0
        %5471 = vmatprep.mubr.bf16.mxu0 0
        %5472 = vmatmul.mubr.bf16.gmra.mrb[0].mxu0 %v5356
        %v5473 = vpop.f32.mrb[0].mxu0
        %v5474 = vadd.f32 0.0, %v5473
        %v5475 = vpop.f32.mrb[0].mxu0
        %v5476 = vpop.f32.mrb[0].mxu0
        %v5477 = vadd.f32 0.0, %v5476
        %v5478 = vpop.f32.mrb[0].mxu0
        %5479 = vmatprep.mubr.bf16.mxu0 0
        %5480 = vmatmul.mubr.bf16.gmra.mrb[0].mxu0 %v5359
        %v5481 = vpop.f32.mrb[0].mxu0
        %v5482 = vadd.f32 0.0, %v5481
        %v5483 = vpop.f32.mrb[0].mxu0
        %v5484 = vpop.f32.mrb[0].mxu0
        %v5485 = vadd.f32 0.0, %v5484
        %v5486 = vpop.f32.mrb[0].mxu0
        %5487 = vmatprep.mubr.bf16.mxu0 0
        %5488 = vmatmul.mubr.bf16.gmra.mrb[0].mxu0 %v5362
        %v5489 = vpop.f32.mrb[0].mxu0
        %v5490 = vadd.f32 0.0, %v5489
        %v5491 = vpop.f32.mrb[0].mxu0
        %v5492 = vpop.f32.mrb[0].mxu0
        %v5493 = vadd.f32 0.0, %v5492
        %v5494 = vpop.f32.mrb[0].mxu0
        %5495 = vmatprep.mubr.bf16.mxu0 0
        %5496 = vmatmul.mubr.bf16.gmra.mrb[0].mxu0 %v5365
        %v5497 = vpop.f32.mrb[0].mxu0
        %v5498 = vadd.f32 0.0, %v5497
        %v5499 = vpop.f32.mrb[0].mxu0
        %v5500 = vpop.f32.mrb[0].mxu0
        %v5501 = vadd.f32 0.0, %v5500
        %v5502 = vpop.f32.mrb[0].mxu0
        %5503 = vmatprep.mubr.bf16.mxu0 0
        %5504 = vmatmul.mubr.bf16.gmra.mrb[0].mxu0 %v5368
        %v5505 = vpop.f32.mrb[0].mxu0
        %v5506 = vadd.f32 0.0, %v5505
        %v5507 = vpop.f32.mrb[0].mxu0
        %v5508 = vpop.f32.mrb[0].mxu0
        %v5509 = vadd.f32 0.0, %v5508
        %v5510 = vpop.f32.mrb[0].mxu0
        %5511 = vmatprep.mubr.bf16.mxu0 0
        %5512 = vmatmul.mubr.bf16.gmra.mrb[0].mxu0 %v5371
        %v5513 = vpop.f32.mrb[0].mxu0
        %v5514 = vadd.f32 0.0, %v5513
        %v5515 = vpop.f32.mrb[0].mxu0
        %v5516 = vpop.f32.mrb[0].mxu0
        %v5517 = vadd.f32 0.0, %v5516
        %v5518 = vpop.f32.mrb[0].mxu0
        %5519 = vmatprep.mubr.bf16.mxu0 0
        %5520 = vmatmul.mubr.bf16.gmra.mrb[0].mxu0 %v5374
        %v5521 = vpop.f32.mrb[0].mxu0
        %v5522 = vadd.f32 0.0, %v5521
        %v5523 = vpop.f32.mrb[0].mxu0
        %v5524 = vpop.f32.mrb[0].mxu0
        %v5525 = vadd.f32 0.0, %v5524
        %v5526 = vpop.f32.mrb[0].mxu0
        %5527 = vmatprep.mubr.bf16.mxu0 0
        %5528 = vmatmul.mubr.bf16.gmra.mrb[0].mxu0 %v5377
        %v5529 = vpop.f32.mrb[0].mxu0
        %v5530 = vadd.f32 0.0, %v5529
        %v5531 = vpop.f32.mrb[0].mxu0
        %v5532 = vpop.f32.mrb[0].mxu0
        %v5533 = vadd.f32 0.0, %v5532
        %v5534 = vpop.f32.mrb[0].mxu0
        %5535 = vmatprep.mubr.bf16.mxu0 0
        %5536 = vmatmul.mubr.bf16.gmra.mrb[0].mxu0 %v5380
        %v5537 = vpop.f32.mrb[0].mxu0
        %v5538 = vadd.f32 0.0, %v5537
        %v5539 = vpop.f32.mrb[0].mxu0
        %v5540 = vpop.f32.mrb[0].mxu0
        %v5541 = vadd.f32 0.0, %v5540
        %v5542 = vpop.f32.mrb[0].mxu0
        %5543 = vmatprep.mubr.bf16.mxu0 0
        %5544 = vmatmul.mubr.bf16.gmra.mrb[0].mxu0 %v5383
        %v5545 = vpop.f32.mrb[0].mxu0
        %v5546 = vadd.f32 0.0, %v5545
        %v5547 = vpop.f32.mrb[0].mxu0
        %v5548 = vpop.f32.mrb[0].mxu0
        %v5549 = vadd.f32 0.0, %v5548
        %v5550 = vpop.f32.mrb[0].mxu0
        %5551 = vmatprep.mubr.bf16.mxu0 0
        %5552 = vmatmul.mubr.bf16.gmra.mrb[0].mxu0 %v5386
        %v5553 = vpop.f32.mrb[0].mxu0
        %v5554 = vadd.f32 0.0, %v5553
        %v5555 = vpop.f32.mrb[0].mxu0
        %v5556 = vpop.f32.mrb[0].mxu0
        %v5557 = vadd.f32 0.0, %v5556
        %v5558 = vpop.f32.mrb[0].mxu0
        %5559 = vmatprep.mubr.bf16.mxu0 0
        %5560 = vmatmul.mubr.bf16.gmra.mrb[0].mxu0 %v5389
        %v5561 = vpop.f32.mrb[0].mxu0
        %v5562 = vadd.f32 0.0, %v5561
        %v5563 = vpop.f32.mrb[0].mxu0
        %v5564 = vpop.f32.mrb[0].mxu0
        %v5565 = vadd.f32 0.0, %v5564
        %v5566 = vpop.f32.mrb[0].mxu0
        %5567 = vmatprep.mubr.bf16.mxu0 0
        %5568 = vmatmul.mubr.bf16.gmra.mrb[0].mxu0 %v5392
        %v5569 = vpop.f32.mrb[0].mxu0
        %v5570 = vadd.f32 0.0, %v5569
        %v5571 = vpop.f32.mrb[0].mxu0
        %v5572 = vpop.f32.mrb[0].mxu0
        %v5573 = vadd.f32 0.0, %v5572
        %v5574 = vpop.f32.mrb[0].mxu0
        %5575 = vmatprep.mubr.bf16.mxu0 0
        %5576 = vmatmul.mubr.bf16.gmra.mrb[0].mxu0 %v5395
        %v5577 = vpop.f32.mrb[0].mxu0
        %v5578 = vadd.f32 0.0, %v5577
        %v5579 = vpop.f32.mrb[0].mxu0
        %v5580 = vpop.f32.mrb[0].mxu0
        %v5581 = vadd.f32 0.0, %v5580
        %v5582 = vpop.f32.mrb[0].mxu0
        %5583 = vmatprep.mubr.bf16.mxu0 0
        %5584 = vmatmul.mubr.bf16.gmra.mrb[0].mxu0 %v5398
        %v5585 = vpop.f32.mrb[0].mxu0
        %v5586 = vadd.f32 0.0, %v5585
        %v5587 = vpop.f32.mrb[0].mxu0
        %v5588 = vpop.f32.mrb[0].mxu0
        %v5589 = vadd.f32 0.0, %v5588
        %v5590 = vpop.f32.mrb[0].mxu0
        %5591 = vmatprep.mubr.bf16.mxu0 0
        %5592 = vmatmul.mubr.bf16.gmra.mrb[0].mxu0 %v5401
        %v5593 = vpop.f32.mrb[0].mxu0
        %v5594 = vadd.f32 0.0, %v5593
        %v5595 = vpop.f32.mrb[0].mxu0
        %v5596 = vpop.f32.mrb[0].mxu0
        %v5597 = vadd.f32 0.0, %v5596
        %v5598 = vpop.f32.mrb[0].mxu0
        %5599 = vmatprep.mubr.bf16.mxu0 0
        %5600 = vmatmul.mubr.bf16.gmra.mrb[0].mxu0 %v5404
        %v5601 = vpop.f32.mrb[0].mxu0
        %v5602 = vadd.f32 0.0, %v5601
        %v5603 = vpop.f32.mrb[0].mxu0
        %v5604 = vpop.f32.mrb[0].mxu0
        %v5605 = vadd.f32 0.0, %v5604
        %v5606 = vpop.f32.mrb[0].mxu0
        %5607 = vmatprep.mubr.bf16.mxu0 0
        %5608 = vmatmul.mubr.bf16.gmra.mrb[0].mxu0 %v5407
        %v5609 = vpop.f32.mrb[0].mxu0
        %v5610 = vadd.f32 0.0, %v5609
        %v5611 = vpop.f32.mrb[0].mxu0
        %v5612 = vpop.f32.mrb[0].mxu0
        %v5613 = vadd.f32 0.0, %v5612
        %v5614 = vpop.f32.mrb[0].mxu0
        %5615 = vmatprep.mubr.bf16.mxu0 0
        %5616 = vmatmul.mubr.bf16.gmra.mrb[0].mxu0 %v5410
        %v5617 = vpop.f32.mrb[0].mxu0
        %v5618 = vadd.f32 0.0, %v5617
        %v5619 = vpop.f32.mrb[0].mxu0
        %v5620 = vpop.f32.mrb[0].mxu0
        %v5621 = vadd.f32 0.0, %v5620
        %v5622 = vpop.f32.mrb[0].mxu0
        %5623 = vdwg.mxu0
        %v5624 = vld [vmem:[#allocation3] sm:$0xff]
        %v5625 = vld [vmem:[#allocation3 + $0x8] sm:$0xff]
        %v5626 = vld [vmem:[#allocation3 + $0x10] sm:$0xff]
        %v5627 = vld [vmem:[#allocation3 + $0x18] sm:$0xff]
        %v5628 = vld [vmem:[#allocation3 + $0x20] sm:$0xff]
        %v5629 = vld [vmem:[#allocation3 + $0x28] sm:$0xff]
        %v5630 = vld [vmem:[#allocation3 + $0x30] sm:$0xff]
        %v5631 = vld [vmem:[#allocation3 + $0x38] sm:$0xff]
        %v5632 = vld [vmem:[#allocation3 + $0x40] sm:$0xff]
        %v5633 = vld [vmem:[#allocation3 + $0x48] sm:$0xff]
        %v5634 = vld [vmem:[#allocation3 + $0x50] sm:$0xff]
        %v5635 = vld [vmem:[#allocation3 + $0x58] sm:$0xff]
        %v5636 = vld [vmem:[#allocation3 + $0x60] sm:$0xff]
        %v5637 = vld [vmem:[#allocation3 + $0x68] sm:$0xff]
        %v5638 = vld [vmem:[#allocation3 + $0x70] sm:$0xff]
        %v5639 = vld [vmem:[#allocation3 + $0x78] sm:$0xff]
        %v5640 = vld [vmem:[#allocation3 + $0x80] sm:$0xff]
        %v5641 = vld [vmem:[#allocation3 + $0x88] sm:$0xff]
        %v5642 = vld [vmem:[#allocation3 + $0x90] sm:$0xff]
        %v5643 = vld [vmem:[#allocation3 + $0x98] sm:$0xff]
        %v5644 = vld [vmem:[#allocation3 + $0xa0] sm:$0xff]
        %v5645 = vld [vmem:[#allocation3 + $0xa8] sm:$0xff]
        %v5646 = vld [vmem:[#allocation3 + $0xb0] sm:$0xff]
        %v5647 = vld [vmem:[#allocation3 + $0xb8] sm:$0xff]
        %v5648 = vld [vmem:[#allocation3 + $0xc0] sm:$0xff]
        %v5649 = vld [vmem:[#allocation3 + $0xc8] sm:$0xff]
        %v5650 = vld [vmem:[#allocation3 + $0xd0] sm:$0xff]
        %v5651 = vld [vmem:[#allocation3 + $0xd8] sm:$0xff]
        %v5652 = vld [vmem:[#allocation3 + $0xe0] sm:$0xff]
        %v5653 = vld [vmem:[#allocation3 + $0xe8] sm:$0xff]
        %v5654 = vld [vmem:[#allocation3 + $0xf0] sm:$0xff]
        %v5655 = vld [vmem:[#allocation3 + $0xf8] sm:$0xff]
        %v5656 = vld [vmem:[#allocation3 + $0x100] sm:$0xff]
        %v5657 = vld [vmem:[#allocation3 + $0x108] sm:$0xff]
        %v5658 = vld [vmem:[#allocation3 + $0x110] sm:$0xff]
        %v5659 = vld [vmem:[#allocation3 + $0x118] sm:$0xff]
        %v5660 = vld [vmem:[#allocation3 + $0x120] sm:$0xff]
        %v5661 = vld [vmem:[#allocation3 + $0x128] sm:$0xff]
        %v5662 = vld [vmem:[#allocation3 + $0x130] sm:$0xff]
        %v5663 = vld [vmem:[#allocation3 + $0x138] sm:$0xff]
        %v5664 = vld [vmem:[#allocation3 + $0x140] sm:$0xff]
        %v5665 = vld [vmem:[#allocation3 + $0x148] sm:$0xff]
        %v5666 = vld [vmem:[#allocation3 + $0x150] sm:$0xff]
        %v5667 = vld [vmem:[#allocation3 + $0x158] sm:$0xff]
        %v5668 = vadd.f32 %v5624, %v5450
        %v5669 = vadd.f32 %v5625, %v5453
        %v5670 = vadd.f32 %v5626, %v5458
        %v5671 = vadd.f32 %v5627, %v5461
        %v5672 = vadd.f32 %v5628, %v5466
        %v5673 = vadd.f32 %v5629, %v5469
        %v5674 = vadd.f32 %v5630, %v5474
        %v5675 = vadd.f32 %v5631, %v5477
        %v5676 = vadd.f32 %v5632, %v5482
        %v5677 = vadd.f32 %v5633, %v5485
        %v5678 = vadd.f32 %v5634, %v5490
        %v5679 = vadd.f32 %v5635, %v5493
        %v5680 = vadd.f32 %v5636, %v5498
        %v5681 = vadd.f32 %v5637, %v5501
        %v5682 = vadd.f32 %v5638, %v5506
        %v5683 = vadd.f32 %v5639, %v5509
        %v5684 = vadd.f32 %v5640, %v5514
        %v5685 = vadd.f32 %v5641, %v5517
        %v5686 = vadd.f32 %v5642, %v5522
        %v5687 = vadd.f32 %v5643, %v5525
        %v5688 = vadd.f32 %v5644, %v5530
        %v5689 = vadd.f32 %v5645, %v5533
        %v5690 = vadd.f32 %v5646, %v5538
        %v5691 = vadd.f32 %v5647, %v5541
        %v5692 = vadd.f32 %v5648, %v5546
        %v5693 = vadd.f32 %v5649, %v5549
        %v5694 = vadd.f32 %v5650, %v5554
        %v5695 = vadd.f32 %v5651, %v5557
        %v5696 = vadd.f32 %v5652, %v5562
        %v5697 = vadd.f32 %v5653, %v5565
        %v5698 = vadd.f32 %v5654, %v5570
        %v5699 = vadd.f32 %v5655, %v5573
        %v5700 = vadd.f32 %v5656, %v5578
        %v5701 = vadd.f32 %v5657, %v5581
        %v5702 = vadd.f32 %v5658, %v5586
        %v5703 = vadd.f32 %v5659, %v5589
        %v5704 = vadd.f32 %v5660, %v5594
        %v5705 = vadd.f32 %v5661, %v5597
        %v5706 = vadd.f32 %v5662, %v5602
        %v5707 = vadd.f32 %v5663, %v5605
        %v5708 = vadd.f32 %v5664, %v5610
        %v5709 = vadd.f32 %v5665, %v5613
        %v5710 = vadd.f32 %v5666, %v5618
        %v5711 = vadd.f32 %v5667, %v5621
        %5712 = vst [vmem:[#allocation3] sm:$0xff] %v5668
        %5713 = vst [vmem:[#allocation3 + $0x8] sm:$0xff] %v5669
        %5714 = vst [vmem:[#allocation3 + $0x10] sm:$0xff] %v5670
        %5715 = vst [vmem:[#allocation3 + $0x18] sm:$0xff] %v5671
        %5716 = vst [vmem:[#allocation3 + $0x20] sm:$0xff] %v5672
        %5717 = vst [vmem:[#allocation3 + $0x28] sm:$0xff] %v5673
        %5718 = vst [vmem:[#allocation3 + $0x30] sm:$0xff] %v5674
        %5719 = vst [vmem:[#allocation3 + $0x38] sm:$0xff] %v5675
        %5720 = vst [vmem:[#allocation3 + $0x40] sm:$0xff] %v5676
        %5721 = vst [vmem:[#allocation3 + $0x48] sm:$0xff] %v5677
        %5722 = vst [vmem:[#allocation3 + $0x50] sm:$0xff] %v5678
        %5723 = vst [vmem:[#allocation3 + $0x58] sm:$0xff] %v5679
        %5724 = vst [vmem:[#allocation3 + $0x60] sm:$0xff] %v5680
        %5725 = vst [vmem:[#allocation3 + $0x68] sm:$0xff] %v5681
        %5726 = vst [vmem:[#allocation3 + $0x70] sm:$0xff] %v5682
        %5727 = vst [vmem:[#allocation3 + $0x78] sm:$0xff] %v5683
        %5728 = vst [vmem:[#allocation3 + $0x80] sm:$0xff] %v5684
        %5729 = vst [vmem:[#allocation3 + $0x88] sm:$0xff] %v5685
        %5730 = vst [vmem:[#allocation3 + $0x90] sm:$0xff] %v5686
        %5731 = vst [vmem:[#allocation3 + $0x98] sm:$0xff] %v5687
        %5732 = vst [vmem:[#allocation3 + $0xa0] sm:$0xff] %v5688
        %5733 = vst [vmem:[#allocation3 + $0xa8] sm:$0xff] %v5689
        %5734 = vst [vmem:[#allocation3 + $0xb0] sm:$0xff] %v5690
        %5735 = vst [vmem:[#allocation3 + $0xb8] sm:$0xff] %v5691
        %5736 = vst [vmem:[#allocation3 + $0xc0] sm:$0xff] %v5692
        %5737 = vst [vmem:[#allocation3 + $0xc8] sm:$0xff] %v5693
        %5738 = vst [vmem:[#allocation3 + $0xd0] sm:$0xff] %v5694
        %5739 = vst [vmem:[#allocation3 + $0xd8] sm:$0xff] %v5695
        %5740 = vst [vmem:[#allocation3 + $0xe0] sm:$0xff] %v5696
        %5741 = vst [vmem:[#allocation3 + $0xe8] sm:$0xff] %v5697
        %5742 = vst [vmem:[#allocation3 + $0xf0] sm:$0xff] %v5698
        %5743 = vst [vmem:[#allocation3 + $0xf8] sm:$0xff] %v5699
        %5744 = vst [vmem:[#allocation3 + $0x100] sm:$0xff] %v5700
        %5745 = vst [vmem:[#allocation3 + $0x108] sm:$0xff] %v5701
        %5746 = vst [vmem:[#allocation3 + $0x110] sm:$0xff] %v5702
        %5747 = vst [vmem:[#allocation3 + $0x118] sm:$0xff] %v5703
        %5748 = vst [vmem:[#allocation3 + $0x120] sm:$0xff] %v5704
        %5749 = vst [vmem:[#allocation3 + $0x128] sm:$0xff] %v5705
        %5750 = vst [vmem:[#allocation3 + $0x130] sm:$0xff] %v5706
        %5751 = vst [vmem:[#allocation3 + $0x138] sm:$0xff] %v5707
        %5752 = vst [vmem:[#allocation3 + $0x140] sm:$0xff] %v5708
        %5753 = vst [vmem:[#allocation3 + $0x148] sm:$0xff] %v5709
        %5754 = vst [vmem:[#allocation3 + $0x150] sm:$0xff] %v5710
        %5755 = vst [vmem:[#allocation3 + $0x158] sm:$0xff] %v5711
        %v5756 = vld [vmem:[#allocation3] sm:$0xff]
        %v5757 = vld [vmem:[#allocation3 + $0x8] sm:$0xff]
        %v5758 = vld [vmem:[#allocation3 + $0x10] sm:$0xff]
        %v5759 = vld [vmem:[#allocation3 + $0x18] sm:$0xff]
        %v5760 = vld [vmem:[#allocation3 + $0x20] sm:$0xff]
        %v5761 = vld [vmem:[#allocation3 + $0x28] sm:$0xff]
        %v5762 = vld [vmem:[#allocation3 + $0x30] sm:$0xff]
        %v5763 = vld [vmem:[#allocation3 + $0x38] sm:$0xff]
        %v5764 = vld [vmem:[#allocation3 + $0x40] sm:$0xff]
        %v5765 = vld [vmem:[#allocation3 + $0x48] sm:$0xff]
        %v5766 = vld [vmem:[#allocation3 + $0x50] sm:$0xff]
        %v5767 = vld [vmem:[#allocation3 + $0x58] sm:$0xff]
        %v5768 = vld [vmem:[#allocation3 + $0x60] sm:$0xff]
        %v5769 = vld [vmem:[#allocation3 + $0x68] sm:$0xff]
        %v5770 = vld [vmem:[#allocation3 + $0x70] sm:$0xff]
        %v5771 = vld [vmem:[#allocation3 + $0x78] sm:$0xff]
        %v5772 = vld [vmem:[#allocation3 + $0x80] sm:$0xff]
        %v5773 = vld [vmem:[#allocation3 + $0x88] sm:$0xff]
        %v5774 = vld [vmem:[#allocation3 + $0x90] sm:$0xff]
        %v5775 = vld [vmem:[#allocation3 + $0x98] sm:$0xff]
        %v5776 = vld [vmem:[#allocation3 + $0xa0] sm:$0xff]
        %v5777 = vld [vmem:[#allocation3 + $0xa8] sm:$0xff]
        %v5778 = vld [vmem:[#allocation3 + $0xb0] sm:$0xff]
        %v5779 = vld [vmem:[#allocation3 + $0xb8] sm:$0xff]
        %v5780 = vld [vmem:[#allocation3 + $0xc0] sm:$0xff]
        %v5781 = vld [vmem:[#allocation3 + $0xc8] sm:$0xff]
        %v5782 = vld [vmem:[#allocation3 + $0xd0] sm:$0xff]
        %v5783 = vld [vmem:[#allocation3 + $0xd8] sm:$0xff]
        %v5784 = vld [vmem:[#allocation3 + $0xe0] sm:$0xff]
        %v5785 = vld [vmem:[#allocation3 + $0xe8] sm:$0xff]
        %v5786 = vld [vmem:[#allocation3 + $0xf0] sm:$0xff]
        %v5787 = vld [vmem:[#allocation3 + $0xf8] sm:$0xff]
        %v5788 = vld [vmem:[#allocation3 + $0x100] sm:$0xff]
        %v5789 = vld [vmem:[#allocation3 + $0x108] sm:$0xff]
        %v5790 = vld [vmem:[#allocation3 + $0x110] sm:$0xff]
        %v5791 = vld [vmem:[#allocation3 + $0x118] sm:$0xff]
        %v5792 = vld [vmem:[#allocation3 + $0x120] sm:$0xff]
        %v5793 = vld [vmem:[#allocation3 + $0x128] sm:$0xff]
        %v5794 = vld [vmem:[#allocation3 + $0x130] sm:$0xff]
        %v5795 = vld [vmem:[#allocation3 + $0x138] sm:$0xff]
        %v5796 = vld [vmem:[#allocation3 + $0x140] sm:$0xff]
        %v5797 = vld [vmem:[#allocation3 + $0x148] sm:$0xff]
        %v5798 = vld [vmem:[#allocation3 + $0x150] sm:$0xff]
        %v5799 = vld [vmem:[#allocation3 + $0x158] sm:$0xff]
        %v5800 = vld [vmem:[%s4] sm:$0x1]
        %v5802 = vlaneseq
        %v5803 = vshrl.u32 %v5802, 7
        %v5804 = vsub.s32 0, %v5803
        %v5805 = vrot.slane %v5800, %v5804
        %v5807 = vadd.f32 %v5756, %v5805
        %v5808 = vadd.f32 %v5757, %v5805
        %v5809 = vadd.f32 %v5758, %v5805
        %v5810 = vadd.f32 %v5759, %v5805
        %v5811 = vadd.f32 %v5760, %v5805
        %v5812 = vadd.f32 %v5761, %v5805
        %v5813 = vadd.f32 %v5762, %v5805
        %v5814 = vadd.f32 %v5763, %v5805
        %v5815 = vadd.f32 %v5764, %v5805
        %v5816 = vadd.f32 %v5765, %v5805
        %v5817 = vadd.f32 %v5766, %v5805
        %v5818 = vadd.f32 %v5767, %v5805
        %v5819 = vadd.f32 %v5768, %v5805
        %v5820 = vadd.f32 %v5769, %v5805
        %v5821 = vadd.f32 %v5770, %v5805
        %v5822 = vadd.f32 %v5771, %v5805
        %v5823 = vadd.f32 %v5772, %v5805
        %v5824 = vadd.f32 %v5773, %v5805
        %v5825 = vadd.f32 %v5774, %v5805
        %v5826 = vadd.f32 %v5775, %v5805
        %v5827 = vadd.f32 %v5776, %v5805
        %v5828 = vadd.f32 %v5777, %v5805
        %v5829 = vadd.f32 %v5778, %v5805
        %v5830 = vadd.f32 %v5779, %v5805
        %v5831 = vadd.f32 %v5780, %v5805
        %v5832 = vadd.f32 %v5781, %v5805
        %v5833 = vadd.f32 %v5782, %v5805
        %v5834 = vadd.f32 %v5783, %v5805
        %v5835 = vadd.f32 %v5784, %v5805
        %v5836 = vadd.f32 %v5785, %v5805
        %v5837 = vadd.f32 %v5786, %v5805
        %v5838 = vadd.f32 %v5787, %v5805
        %v5839 = vadd.f32 %v5788, %v5805
        %v5840 = vadd.f32 %v5789, %v5805
        %v5841 = vadd.f32 %v5790, %v5805
        %v5842 = vadd.f32 %v5791, %v5805
        %v5843 = vadd.f32 %v5792, %v5805
        %v5844 = vadd.f32 %v5793, %v5805
        %v5845 = vadd.f32 %v5794, %v5805
        %v5846 = vadd.f32 %v5795, %v5805
        %v5847 = vadd.f32 %v5796, %v5805
        %v5848 = vadd.f32 %v5797, %v5805
        %v5849 = vadd.f32 %v5798, %v5805
        %v5850 = vadd.f32 %v5799, %v5805
        %v5851 = vmax.f32 %v5807, 0.0
        %v5852 = vmax.f32 %v5808, 0.0
        %v5853 = vmax.f32 %v5809, 0.0
        %v5854 = vmax.f32 %v5810, 0.0
        %v5855 = vmax.f32 %v5811, 0.0
        %v5856 = vmax.f32 %v5812, 0.0
        %v5857 = vmax.f32 %v5813, 0.0
        %v5858 = vmax.f32 %v5814, 0.0
        %v5859 = vmax.f32 %v5815, 0.0
        %v5860 = vmax.f32 %v5816, 0.0
        %v5861 = vmax.f32 %v5817, 0.0
        %v5862 = vmax.f32 %v5818, 0.0
        %v5863 = vmax.f32 %v5819, 0.0
        %v5864 = vmax.f32 %v5820, 0.0
        %v5865 = vmax.f32 %v5821, 0.0
        %v5866 = vmax.f32 %v5822, 0.0
        %v5867 = vmax.f32 %v5823, 0.0
        %v5868 = vmax.f32 %v5824, 0.0
        %v5869 = vmax.f32 %v5825, 0.0
        %v5870 = vmax.f32 %v5826, 0.0
        %v5871 = vmax.f32 %v5827, 0.0
        %v5872 = vmax.f32 %v5828, 0.0
        %v5873 = vmax.f32 %v5829, 0.0
        %v5874 = vmax.f32 %v5830, 0.0
        %v5875 = vmax.f32 %v5831, 0.0
        %v5876 = vmax.f32 %v5832, 0.0
        %v5877 = vmax.f32 %v5833, 0.0
        %v5878 = vmax.f32 %v5834, 0.0
        %v5879 = vmax.f32 %v5835, 0.0
        %v5880 = vmax.f32 %v5836, 0.0
        %v5881 = vmax.f32 %v5837, 0.0
        %v5882 = vmax.f32 %v5838, 0.0
        %v5883 = vmax.f32 %v5839, 0.0
        %v5884 = vmax.f32 %v5840, 0.0
        %v5885 = vmax.f32 %v5841, 0.0
        %v5886 = vmax.f32 %v5842, 0.0
        %v5887 = vmax.f32 %v5843, 0.0
        %v5888 = vmax.f32 %v5844, 0.0
        %v5889 = vmax.f32 %v5845, 0.0
        %v5890 = vmax.f32 %v5846, 0.0
        %v5891 = vmax.f32 %v5847, 0.0
        %v5892 = vmax.f32 %v5848, 0.0
        %v5893 = vmax.f32 %v5849, 0.0
        %v5894 = vmax.f32 %v5850, 0.0
        %s5895 = smul.u32 %s20, 352
        %v5896 = vlaneseq
        %v5897 = vshrl.u32 %v5896, 7
        %v5898 = vadd.s32 %v5897, 8
        %v5899 = vadd.s32 %v5897, 16
        %v5900 = vadd.s32 %v5897, 24
        %v5901 = vadd.s32 %v5897, 32
        %v5902 = vadd.s32 %v5897, 40
        %v5903 = vadd.s32 %v5897, 48
        %v5904 = vadd.s32 %v5897, 56
        %v5905 = vadd.s32 %v5897, 64
        %v5906 = vadd.s32 %v5897, 72
        %v5907 = vadd.s32 %v5897, 80
        %v5908 = vadd.s32 %v5897, 88
        %v5909 = vadd.s32 %v5897, 96
        %v5910 = vadd.s32 %v5897, 104
        %v5911 = vadd.s32 %v5897, 112
        %v5912 = vadd.s32 %v5897, 120
        %v5913 = vadd.s32 %v5897, 128
        %v5914 = vadd.s32 %v5897, 136
        %v5915 = vadd.s32 %v5897, 144
        %v5916 = vadd.s32 %v5897, 152
        %v5917 = vadd.s32 %v5897, 160
        %v5918 = vadd.s32 %v5897, 168
        %v5919 = vadd.s32 %v5897, 176
        %v5920 = vadd.s32 %v5897, 184
        %v5921 = vadd.s32 %v5897, 192
        %v5922 = vadd.s32 %v5897, 200
        %v5923 = vadd.s32 %v5897, 208
        %v5924 = vadd.s32 %v5897, 216
        %v5925 = vadd.s32 %v5897, 224
        %v5926 = vadd.s32 %v5897, 232
        %v5927 = vadd.s32 %v5897, 240
        %v5928 = vadd.s32 %v5897, 248
        %v5929 = vadd.s32 %v5897, 256
        %v5930 = vadd.s32 %v5897, 264
        %v5931 = vadd.s32 %v5897, 272
        %v5932 = vadd.s32 %v5897, 280
        %v5933 = vadd.s32 %v5897, 288
        %v5934 = vadd.s32 %v5897, 296
        %v5935 = vadd.s32 %v5897, 304
        %v5936 = vadd.s32 %v5897, 312
        %v5937 = vadd.s32 %v5897, 320
        %v5938 = vadd.s32 %v5897, 328
        %v5939 = vadd.s32 %v5897, 336
        %v5940 = vadd.s32 %v5897, 344
        %v5941 = vstv %s5895
        %v5942 = vadd.s32 %v5941, %v5897
        %v5943 = vadd.s32 %v5941, %v5898
        %v5944 = vadd.s32 %v5941, %v5899
        %v5945 = vadd.s32 %v5941, %v5900
        %v5946 = vadd.s32 %v5941, %v5901
        %v5947 = vadd.s32 %v5941, %v5902
        %v5948 = vadd.s32 %v5941, %v5903
        %v5949 = vadd.s32 %v5941, %v5904
        %v5950 = vadd.s32 %v5941, %v5905
        %v5951 = vadd.s32 %v5941, %v5906
        %v5952 = vadd.s32 %v5941, %v5907
        %v5953 = vadd.s32 %v5941, %v5908
        %v5954 = vadd.s32 %v5941, %v5909
        %v5955 = vadd.s32 %v5941, %v5910
        %v5956 = vadd.s32 %v5941, %v5911
        %v5957 = vadd.s32 %v5941, %v5912
        %v5958 = vadd.s32 %v5941, %v5913
        %v5959 = vadd.s32 %v5941, %v5914
        %v5960 = vadd.s32 %v5941, %v5915
        %v5961 = vadd.s32 %v5941, %v5916
        %v5962 = vadd.s32 %v5941, %v5917
        %v5963 = vadd.s32 %v5941, %v5918
        %v5964 = vadd.s32 %v5941, %v5919
        %v5965 = vadd.s32 %v5941, %v5920
        %v5966 = vadd.s32 %v5941, %v5921
        %v5967 = vadd.s32 %v5941, %v5922
        %v5968 = vadd.s32 %v5941, %v5923
        %v5969 = vadd.s32 %v5941, %v5924
        %v5970 = vadd.s32 %v5941, %v5925
        %v5971 = vadd.s32 %v5941, %v5926
        %v5972 = vadd.s32 %v5941, %v5927
        %v5973 = vadd.s32 %v5941, %v5928
        %v5974 = vadd.s32 %v5941, %v5929
        %v5975 = vadd.s32 %v5941, %v5930
        %v5976 = vadd.s32 %v5941, %v5931
        %v5977 = vadd.s32 %v5941, %v5932
        %v5978 = vadd.s32 %v5941, %v5933
        %v5979 = vadd.s32 %v5941, %v5934
        %v5980 = vadd.s32 %v5941, %v5935
        %v5981 = vadd.s32 %v5941, %v5936
        %v5982 = vadd.s32 %v5941, %v5937
        %v5983 = vadd.s32 %v5941, %v5938
        %v5984 = vadd.s32 %v5941, %v5939
        %v5985 = vadd.s32 %v5941, %v5940
        %v5986 = vcvt.s32.f32 %v5942
        %v5987 = vcvt.s32.f32 %v5943
        %v5988 = vcvt.s32.f32 %v5944
        %v5989 = vcvt.s32.f32 %v5945
        %v5990 = vcvt.s32.f32 %v5946
        %v5991 = vcvt.s32.f32 %v5947
        %v5992 = vcvt.s32.f32 %v5948
        %v5993 = vcvt.s32.f32 %v5949
        %v5994 = vcvt.s32.f32 %v5950
        %v5995 = vcvt.s32.f32 %v5951
        %v5996 = vcvt.s32.f32 %v5952
        %v5997 = vcvt.s32.f32 %v5953
        %v5998 = vcvt.s32.f32 %v5954
        %v5999 = vcvt.s32.f32 %v5955
        %v6000 = vcvt.s32.f32 %v5956
        %v6001 = vcvt.s32.f32 %v5957
        %v6002 = vcvt.s32.f32 %v5958
        %v6003 = vcvt.s32.f32 %v5959
        %v6004 = vcvt.s32.f32 %v5960
        %v6005 = vcvt.s32.f32 %v5961
        %v6006 = vcvt.s32.f32 %v5962
        %v6007 = vcvt.s32.f32 %v5963
        %v6008 = vcvt.s32.f32 %v5964
        %v6009 = vcvt.s32.f32 %v5965
        %v6010 = vcvt.s32.f32 %v5966
        %v6011 = vcvt.s32.f32 %v5967
        %v6012 = vcvt.s32.f32 %v5968
        %v6013 = vcvt.s32.f32 %v5969
        %v6014 = vcvt.s32.f32 %v5970
        %v6015 = vcvt.s32.f32 %v5971
        %v6016 = vcvt.s32.f32 %v5972
        %v6017 = vcvt.s32.f32 %v5973
        %v6018 = vcvt.s32.f32 %v5974
        %v6019 = vcvt.s32.f32 %v5975
        %v6020 = vcvt.s32.f32 %v5976
        %v6021 = vcvt.s32.f32 %v5977
        %v6022 = vcvt.s32.f32 %v5978
        %v6023 = vcvt.s32.f32 %v5979
        %v6024 = vcvt.s32.f32 %v5980
        %v6025 = vcvt.s32.f32 %v5981
        %v6026 = vcvt.s32.f32 %v5982
        %v6027 = vcvt.s32.f32 %v5983
        %v6028 = vcvt.s32.f32 %v5984
        %v6029 = vcvt.s32.f32 %v5985
        %v6030 = vrcp.pop 18.0
        %v6031 = vmul.f32 %v5986, %v6030
        %v6032 = vmul.f32 %v5987, %v6030
        %v6033 = vmul.f32 %v5988, %v6030
        %v6034 = vmul.f32 %v5989, %v6030
        %v6035 = vmul.f32 %v5990, %v6030
        %v6036 = vmul.f32 %v5991, %v6030
        %v6037 = vmul.f32 %v5992, %v6030
        %v6038 = vmul.f32 %v5993, %v6030
        %v6039 = vmul.f32 %v5994, %v6030
        %v6040 = vmul.f32 %v5995, %v6030
        %v6041 = vmul.f32 %v5996, %v6030
        %v6042 = vmul.f32 %v5997, %v6030
        %v6043 = vmul.f32 %v5998, %v6030
        %v6044 = vmul.f32 %v5999, %v6030
        %v6045 = vmul.f32 %v6000, %v6030
        %v6046 = vmul.f32 %v6001, %v6030
        %v6047 = vmul.f32 %v6002, %v6030
        %v6048 = vmul.f32 %v6003, %v6030
        %v6049 = vmul.f32 %v6004, %v6030
        %v6050 = vmul.f32 %v6005, %v6030
        %v6051 = vmul.f32 %v6006, %v6030
        %v6052 = vmul.f32 %v6007, %v6030
        %v6053 = vmul.f32 %v6008, %v6030
        %v6054 = vmul.f32 %v6009, %v6030
        %v6055 = vmul.f32 %v6010, %v6030
        %v6056 = vmul.f32 %v6011, %v6030
        %v6057 = vmul.f32 %v6012, %v6030
        %v6058 = vmul.f32 %v6013, %v6030
        %v6059 = vmul.f32 %v6014, %v6030
        %v6060 = vmul.f32 %v6015, %v6030
        %v6061 = vmul.f32 %v6016, %v6030
        %v6062 = vmul.f32 %v6017, %v6030
        %v6063 = vmul.f32 %v6018, %v6030
        %v6064 = vmul.f32 %v6019, %v6030
        %v6065 = vmul.f32 %v6020, %v6030
        %v6066 = vmul.f32 %v6021, %v6030
        %v6067 = vmul.f32 %v6022, %v6030
        %v6068 = vmul.f32 %v6023, %v6030
        %v6069 = vmul.f32 %v6024, %v6030
        %v6070 = vmul.f32 %v6025, %v6030
        %v6071 = vmul.f32 %v6026, %v6030
        %v6072 = vmul.f32 %v6027, %v6030
        %v6073 = vmul.f32 %v6028, %v6030
        %v6074 = vmul.f32 %v6029, %v6030
        %v6075 = vfloor.f32 %v6031
        %v6076 = vfloor.f32 %v6032
        %v6077 = vfloor.f32 %v6033
        %v6078 = vfloor.f32 %v6034
        %v6079 = vfloor.f32 %v6035
        %v6080 = vfloor.f32 %v6036
        %v6081 = vfloor.f32 %v6037
        %v6082 = vfloor.f32 %v6038
        %v6083 = vfloor.f32 %v6039
        %v6084 = vfloor.f32 %v6040
        %v6085 = vfloor.f32 %v6041
        %v6086 = vfloor.f32 %v6042
        %v6087 = vfloor.f32 %v6043
        %v6088 = vfloor.f32 %v6044
        %v6089 = vfloor.f32 %v6045
        %v6090 = vfloor.f32 %v6046
        %v6091 = vfloor.f32 %v6047
        %v6092 = vfloor.f32 %v6048
        %v6093 = vfloor.f32 %v6049
        %v6094 = vfloor.f32 %v6050
        %v6095 = vfloor.f32 %v6051
        %v6096 = vfloor.f32 %v6052
        %v6097 = vfloor.f32 %v6053
        %v6098 = vfloor.f32 %v6054
        %v6099 = vfloor.f32 %v6055
        %v6100 = vfloor.f32 %v6056
        %v6101 = vfloor.f32 %v6057
        %v6102 = vfloor.f32 %v6058
        %v6103 = vfloor.f32 %v6059
        %v6104 = vfloor.f32 %v6060
        %v6105 = vfloor.f32 %v6061
        %v6106 = vfloor.f32 %v6062
        %v6107 = vfloor.f32 %v6063
        %v6108 = vfloor.f32 %v6064
        %v6109 = vfloor.f32 %v6065
        %v6110 = vfloor.f32 %v6066
        %v6111 = vfloor.f32 %v6067
        %v6112 = vfloor.f32 %v6068
        %v6113 = vfloor.f32 %v6069
        %v6114 = vfloor.f32 %v6070
        %v6115 = vfloor.f32 %v6071
        %v6116 = vfloor.f32 %v6072
        %v6117 = vfloor.f32 %v6073
        %v6118 = vfloor.f32 %v6074
        %v6119 = vmul.f32 %v6075, 18.0
        %v6120 = vmul.f32 %v6076, 18.0
        %v6121 = vmul.f32 %v6077, 18.0
        %v6122 = vmul.f32 %v6078, 18.0
        %v6123 = vmul.f32 %v6079, 18.0
        %v6124 = vmul.f32 %v6080, 18.0
        %v6125 = vmul.f32 %v6081, 18.0
        %v6126 = vmul.f32 %v6082, 18.0
        %v6127 = vmul.f32 %v6083, 18.0
        %v6128 = vmul.f32 %v6084, 18.0
        %v6129 = vmul.f32 %v6085, 18.0
        %v6130 = vmul.f32 %v6086, 18.0
        %v6131 = vmul.f32 %v6087, 18.0
        %v6132 = vmul.f32 %v6088, 18.0
        %v6133 = vmul.f32 %v6089, 18.0
        %v6134 = vmul.f32 %v6090, 18.0
        %v6135 = vmul.f32 %v6091, 18.0
        %v6136 = vmul.f32 %v6092, 18.0
        %v6137 = vmul.f32 %v6093, 18.0
        %v6138 = vmul.f32 %v6094, 18.0
        %v6139 = vmul.f32 %v6095, 18.0
        %v6140 = vmul.f32 %v6096, 18.0
        %v6141 = vmul.f32 %v6097, 18.0
        %v6142 = vmul.f32 %v6098, 18.0
        %v6143 = vmul.f32 %v6099, 18.0
        %v6144 = vmul.f32 %v6100, 18.0
        %v6145 = vmul.f32 %v6101, 18.0
        %v6146 = vmul.f32 %v6102, 18.0
        %v6147 = vmul.f32 %v6103, 18.0
        %v6148 = vmul.f32 %v6104, 18.0
        %v6149 = vmul.f32 %v6105, 18.0
        %v6150 = vmul.f32 %v6106, 18.0
        %v6151 = vmul.f32 %v6107, 18.0
        %v6152 = vmul.f32 %v6108, 18.0
        %v6153 = vmul.f32 %v6109, 18.0
        %v6154 = vmul.f32 %v6110, 18.0
        %v6155 = vmul.f32 %v6111, 18.0
        %v6156 = vmul.f32 %v6112, 18.0
        %v6157 = vmul.f32 %v6113, 18.0
        %v6158 = vmul.f32 %v6114, 18.0
        %v6159 = vmul.f32 %v6115, 18.0
        %v6160 = vmul.f32 %v6116, 18.0
        %v6161 = vmul.f32 %v6117, 18.0
        %v6162 = vmul.f32 %v6118, 18.0
        %v6163 = vsub.f32 %v5986, %v6119
        %v6164 = vsub.f32 %v5987, %v6120
        %v6165 = vsub.f32 %v5988, %v6121
        %v6166 = vsub.f32 %v5989, %v6122
        %v6167 = vsub.f32 %v5990, %v6123
        %v6168 = vsub.f32 %v5991, %v6124
        %v6169 = vsub.f32 %v5992, %v6125
        %v6170 = vsub.f32 %v5993, %v6126
        %v6171 = vsub.f32 %v5994, %v6127
        %v6172 = vsub.f32 %v5995, %v6128
        %v6173 = vsub.f32 %v5996, %v6129
        %v6174 = vsub.f32 %v5997, %v6130
        %v6175 = vsub.f32 %v5998, %v6131
        %v6176 = vsub.f32 %v5999, %v6132
        %v6177 = vsub.f32 %v6000, %v6133
        %v6178 = vsub.f32 %v6001, %v6134
        %v6179 = vsub.f32 %v6002, %v6135
        %v6180 = vsub.f32 %v6003, %v6136
        %v6181 = vsub.f32 %v6004, %v6137
        %v6182 = vsub.f32 %v6005, %v6138
        %v6183 = vsub.f32 %v6006, %v6139
        %v6184 = vsub.f32 %v6007, %v6140
        %v6185 = vsub.f32 %v6008, %v6141
        %v6186 = vsub.f32 %v6009, %v6142
        %v6187 = vsub.f32 %v6010, %v6143
        %v6188 = vsub.f32 %v6011, %v6144
        %v6189 = vsub.f32 %v6012, %v6145
        %v6190 = vsub.f32 %v6013, %v6146
        %v6191 = vsub.f32 %v6014, %v6147
        %v6192 = vsub.f32 %v6015, %v6148
        %v6193 = vsub.f32 %v6016, %v6149
        %v6194 = vsub.f32 %v6017, %v6150
        %v6195 = vsub.f32 %v6018, %v6151
        %v6196 = vsub.f32 %v6019, %v6152
        %v6197 = vsub.f32 %v6020, %v6153
        %v6198 = vsub.f32 %v6021, %v6154
        %v6199 = vsub.f32 %v6022, %v6155
        %v6200 = vsub.f32 %v6023, %v6156
        %v6201 = vsub.f32 %v6024, %v6157
        %v6202 = vsub.f32 %v6025, %v6158
        %v6203 = vsub.f32 %v6026, %v6159
        %v6204 = vsub.f32 %v6027, %v6160
        %v6205 = vsub.f32 %v6028, %v6161
        %v6206 = vsub.f32 %v6029, %v6162
        %v6207 = vmul.f32 %v6075, %v6030
        %v6208 = vmul.f32 %v6076, %v6030
        %v6209 = vmul.f32 %v6077, %v6030
        %v6210 = vmul.f32 %v6078, %v6030
        %v6211 = vmul.f32 %v6079, %v6030
        %v6212 = vmul.f32 %v6080, %v6030
        %v6213 = vmul.f32 %v6081, %v6030
        %v6214 = vmul.f32 %v6082, %v6030
        %v6215 = vmul.f32 %v6083, %v6030
        %v6216 = vmul.f32 %v6084, %v6030
        %v6217 = vmul.f32 %v6085, %v6030
        %v6218 = vmul.f32 %v6086, %v6030
        %v6219 = vmul.f32 %v6087, %v6030
        %v6220 = vmul.f32 %v6088, %v6030
        %v6221 = vmul.f32 %v6089, %v6030
        %v6222 = vmul.f32 %v6090, %v6030
        %v6223 = vmul.f32 %v6091, %v6030
        %v6224 = vmul.f32 %v6092, %v6030
        %v6225 = vmul.f32 %v6093, %v6030
        %v6226 = vmul.f32 %v6094, %v6030
        %v6227 = vmul.f32 %v6095, %v6030
        %v6228 = vmul.f32 %v6096, %v6030
        %v6229 = vmul.f32 %v6097, %v6030
        %v6230 = vmul.f32 %v6098, %v6030
        %v6231 = vmul.f32 %v6099, %v6030
        %v6232 = vmul.f32 %v6100, %v6030
        %v6233 = vmul.f32 %v6101, %v6030
        %v6234 = vmul.f32 %v6102, %v6030
        %v6235 = vmul.f32 %v6103, %v6030
        %v6236 = vmul.f32 %v6104, %v6030
        %v6237 = vmul.f32 %v6105, %v6030
        %v6238 = vmul.f32 %v6106, %v6030
        %v6239 = vmul.f32 %v6107, %v6030
        %v6240 = vmul.f32 %v6108, %v6030
        %v6241 = vmul.f32 %v6109, %v6030
        %v6242 = vmul.f32 %v6110, %v6030
        %v6243 = vmul.f32 %v6111, %v6030
        %v6244 = vmul.f32 %v6112, %v6030
        %v6245 = vmul.f32 %v6113, %v6030
        %v6246 = vmul.f32 %v6114, %v6030
        %v6247 = vmul.f32 %v6115, %v6030
        %v6248 = vmul.f32 %v6116, %v6030
        %v6249 = vmul.f32 %v6117, %v6030
        %v6250 = vmul.f32 %v6118, %v6030
        %v6251 = vfloor.f32 %v6207
        %v6252 = vfloor.f32 %v6208
        %v6253 = vfloor.f32 %v6209
        %v6254 = vfloor.f32 %v6210
        %v6255 = vfloor.f32 %v6211
        %v6256 = vfloor.f32 %v6212
        %v6257 = vfloor.f32 %v6213
        %v6258 = vfloor.f32 %v6214
        %v6259 = vfloor.f32 %v6215
        %v6260 = vfloor.f32 %v6216
        %v6261 = vfloor.f32 %v6217
        %v6262 = vfloor.f32 %v6218
        %v6263 = vfloor.f32 %v6219
        %v6264 = vfloor.f32 %v6220
        %v6265 = vfloor.f32 %v6221
        %v6266 = vfloor.f32 %v6222
        %v6267 = vfloor.f32 %v6223
        %v6268 = vfloor.f32 %v6224
        %v6269 = vfloor.f32 %v6225
        %v6270 = vfloor.f32 %v6226
        %v6271 = vfloor.f32 %v6227
        %v6272 = vfloor.f32 %v6228
        %v6273 = vfloor.f32 %v6229
        %v6274 = vfloor.f32 %v6230
        %v6275 = vfloor.f32 %v6231
        %v6276 = vfloor.f32 %v6232
        %v6277 = vfloor.f32 %v6233
        %v6278 = vfloor.f32 %v6234
        %v6279 = vfloor.f32 %v6235
        %v6280 = vfloor.f32 %v6236
        %v6281 = vfloor.f32 %v6237
        %v6282 = vfloor.f32 %v6238
        %v6283 = vfloor.f32 %v6239
        %v6284 = vfloor.f32 %v6240
        %v6285 = vfloor.f32 %v6241
        %v6286 = vfloor.f32 %v6242
        %v6287 = vfloor.f32 %v6243
        %v6288 = vfloor.f32 %v6244
        %v6289 = vfloor.f32 %v6245
        %v6290 = vfloor.f32 %v6246
        %v6291 = vfloor.f32 %v6247
        %v6292 = vfloor.f32 %v6248
        %v6293 = vfloor.f32 %v6249
        %v6294 = vfloor.f32 %v6250
        %v6295 = vmul.f32 %v6251, 18.0
        %v6296 = vmul.f32 %v6252, 18.0
        %v6297 = vmul.f32 %v6253, 18.0
        %v6298 = vmul.f32 %v6254, 18.0
        %v6299 = vmul.f32 %v6255, 18.0
        %v6300 = vmul.f32 %v6256, 18.0
        %v6301 = vmul.f32 %v6257, 18.0
        %v6302 = vmul.f32 %v6258, 18.0
        %v6303 = vmul.f32 %v6259, 18.0
        %v6304 = vmul.f32 %v6260, 18.0
        %v6305 = vmul.f32 %v6261, 18.0
        %v6306 = vmul.f32 %v6262, 18.0
        %v6307 = vmul.f32 %v6263, 18.0
        %v6308 = vmul.f32 %v6264, 18.0
        %v6309 = vmul.f32 %v6265, 18.0
        %v6310 = vmul.f32 %v6266, 18.0
        %v6311 = vmul.f32 %v6267, 18.0
        %v6312 = vmul.f32 %v6268, 18.0
        %v6313 = vmul.f32 %v6269, 18.0
        %v6314 = vmul.f32 %v6270, 18.0
        %v6315 = vmul.f32 %v6271, 18.0
        %v6316 = vmul.f32 %v6272, 18.0
        %v6317 = vmul.f32 %v6273, 18.0
        %v6318 = vmul.f32 %v6274, 18.0
        %v6319 = vmul.f32 %v6275, 18.0
        %v6320 = vmul.f32 %v6276, 18.0
        %v6321 = vmul.f32 %v6277, 18.0
        %v6322 = vmul.f32 %v6278, 18.0
        %v6323 = vmul.f32 %v6279, 18.0
        %v6324 = vmul.f32 %v6280, 18.0
        %v6325 = vmul.f32 %v6281, 18.0
        %v6326 = vmul.f32 %v6282, 18.0
        %v6327 = vmul.f32 %v6283, 18.0
        %v6328 = vmul.f32 %v6284, 18.0
        %v6329 = vmul.f32 %v6285, 18.0
        %v6330 = vmul.f32 %v6286, 18.0
        %v6331 = vmul.f32 %v6287, 18.0
        %v6332 = vmul.f32 %v6288, 18.0
        %v6333 = vmul.f32 %v6289, 18.0
        %v6334 = vmul.f32 %v6290, 18.0
        %v6335 = vmul.f32 %v6291, 18.0
        %v6336 = vmul.f32 %v6292, 18.0
        %v6337 = vmul.f32 %v6293, 18.0
        %v6338 = vmul.f32 %v6294, 18.0
        %v6339 = vsub.f32 %v6075, %v6295
        %v6340 = vsub.f32 %v6076, %v6296
        %v6341 = vsub.f32 %v6077, %v6297
        %v6342 = vsub.f32 %v6078, %v6298
        %v6343 = vsub.f32 %v6079, %v6299
        %v6344 = vsub.f32 %v6080, %v6300
        %v6345 = vsub.f32 %v6081, %v6301
        %v6346 = vsub.f32 %v6082, %v6302
        %v6347 = vsub.f32 %v6083, %v6303
        %v6348 = vsub.f32 %v6084, %v6304
        %v6349 = vsub.f32 %v6085, %v6305
        %v6350 = vsub.f32 %v6086, %v6306
        %v6351 = vsub.f32 %v6087, %v6307
        %v6352 = vsub.f32 %v6088, %v6308
        %v6353 = vsub.f32 %v6089, %v6309
        %v6354 = vsub.f32 %v6090, %v6310
        %v6355 = vsub.f32 %v6091, %v6311
        %v6356 = vsub.f32 %v6092, %v6312
        %v6357 = vsub.f32 %v6093, %v6313
        %v6358 = vsub.f32 %v6094, %v6314
        %v6359 = vsub.f32 %v6095, %v6315
        %v6360 = vsub.f32 %v6096, %v6316
        %v6361 = vsub.f32 %v6097, %v6317
        %v6362 = vsub.f32 %v6098, %v6318
        %v6363 = vsub.f32 %v6099, %v6319
        %v6364 = vsub.f32 %v6100, %v6320
        %v6365 = vsub.f32 %v6101, %v6321
        %v6366 = vsub.f32 %v6102, %v6322
        %v6367 = vsub.f32 %v6103, %v6323
        %v6368 = vsub.f32 %v6104, %v6324
        %v6369 = vsub.f32 %v6105, %v6325
        %v6370 = vsub.f32 %v6106, %v6326
        %v6371 = vsub.f32 %v6107, %v6327
        %v6372 = vsub.f32 %v6108, %v6328
        %v6373 = vsub.f32 %v6109, %v6329
        %v6374 = vsub.f32 %v6110, %v6330
        %v6375 = vsub.f32 %v6111, %v6331
        %v6376 = vsub.f32 %v6112, %v6332
        %v6377 = vsub.f32 %v6113, %v6333
        %v6378 = vsub.f32 %v6114, %v6334
        %v6379 = vsub.f32 %v6115, %v6335
        %v6380 = vsub.f32 %v6116, %v6336
        %v6381 = vsub.f32 %v6117, %v6337
        %v6382 = vsub.f32 %v6118, %v6338
        %vm6383 = vcmp.ge.f32.partialorder %v6163, 1.0
        %vm6384 = vcmp.ge.f32.partialorder %v6164, 1.0
        %vm6385 = vcmp.ge.f32.partialorder %v6165, 1.0
        %vm6386 = vcmp.ge.f32.partialorder %v6166, 1.0
        %vm6387 = vcmp.ge.f32.partialorder %v6167, 1.0
        %vm6388 = vcmp.ge.f32.partialorder %v6168, 1.0
        %vm6389 = vcmp.ge.f32.partialorder %v6169, 1.0
        %vm6390 = vcmp.ge.f32.partialorder %v6170, 1.0
        %vm6391 = vcmp.ge.f32.partialorder %v6171, 1.0
        %vm6392 = vcmp.ge.f32.partialorder %v6172, 1.0
        %vm6393 = vcmp.ge.f32.partialorder %v6173, 1.0
        %vm6394 = vcmp.ge.f32.partialorder %v6174, 1.0
        %vm6395 = vcmp.ge.f32.partialorder %v6175, 1.0
        %vm6396 = vcmp.ge.f32.partialorder %v6176, 1.0
        %vm6397 = vcmp.ge.f32.partialorder %v6177, 1.0
        %vm6398 = vcmp.ge.f32.partialorder %v6178, 1.0
        %vm6399 = vcmp.ge.f32.partialorder %v6179, 1.0
        %vm6400 = vcmp.ge.f32.partialorder %v6180, 1.0
        %vm6401 = vcmp.ge.f32.partialorder %v6181, 1.0
        %vm6402 = vcmp.ge.f32.partialorder %v6182, 1.0
        %vm6403 = vcmp.ge.f32.partialorder %v6183, 1.0
        %vm6404 = vcmp.ge.f32.partialorder %v6184, 1.0
        %vm6405 = vcmp.ge.f32.partialorder %v6185, 1.0
        %vm6406 = vcmp.ge.f32.partialorder %v6186, 1.0
        %vm6407 = vcmp.ge.f32.partialorder %v6187, 1.0
        %vm6408 = vcmp.ge.f32.partialorder %v6188, 1.0
        %vm6409 = vcmp.ge.f32.partialorder %v6189, 1.0
        %vm6410 = vcmp.ge.f32.partialorder %v6190, 1.0
        %vm6411 = vcmp.ge.f32.partialorder %v6191, 1.0
        %vm6412 = vcmp.ge.f32.partialorder %v6192, 1.0
        %vm6413 = vcmp.ge.f32.partialorder %v6193, 1.0
        %vm6414 = vcmp.ge.f32.partialorder %v6194, 1.0
        %vm6415 = vcmp.ge.f32.partialorder %v6195, 1.0
        %vm6416 = vcmp.ge.f32.partialorder %v6196, 1.0
        %vm6417 = vcmp.ge.f32.partialorder %v6197, 1.0
        %vm6418 = vcmp.ge.f32.partialorder %v6198, 1.0
        %vm6419 = vcmp.ge.f32.partialorder %v6199, 1.0
        %vm6420 = vcmp.ge.f32.partialorder %v6200, 1.0
        %vm6421 = vcmp.ge.f32.partialorder %v6201, 1.0
        %vm6422 = vcmp.ge.f32.partialorder %v6202, 1.0
        %vm6423 = vcmp.ge.f32.partialorder %v6203, 1.0
        %vm6424 = vcmp.ge.f32.partialorder %v6204, 1.0
        %vm6425 = vcmp.ge.f32.partialorder %v6205, 1.0
        %vm6426 = vcmp.ge.f32.partialorder %v6206, 1.0
        %vm6427 = vcmp.le.f32.partialorder %v6163, 16.0
        %vm6428 = vcmp.le.f32.partialorder %v6164, 16.0
        %vm6429 = vcmp.le.f32.partialorder %v6165, 16.0
        %vm6430 = vcmp.le.f32.partialorder %v6166, 16.0
        %vm6431 = vcmp.le.f32.partialorder %v6167, 16.0
        %vm6432 = vcmp.le.f32.partialorder %v6168, 16.0
        %vm6433 = vcmp.le.f32.partialorder %v6169, 16.0
        %vm6434 = vcmp.le.f32.partialorder %v6170, 16.0
        %vm6435 = vcmp.le.f32.partialorder %v6171, 16.0
        %vm6436 = vcmp.le.f32.partialorder %v6172, 16.0
        %vm6437 = vcmp.le.f32.partialorder %v6173, 16.0
        %vm6438 = vcmp.le.f32.partialorder %v6174, 16.0
        %vm6439 = vcmp.le.f32.partialorder %v6175, 16.0
        %vm6440 = vcmp.le.f32.partialorder %v6176, 16.0
        %vm6441 = vcmp.le.f32.partialorder %v6177, 16.0
        %vm6442 = vcmp.le.f32.partialorder %v6178, 16.0
        %vm6443 = vcmp.le.f32.partialorder %v6179, 16.0
        %vm6444 = vcmp.le.f32.partialorder %v6180, 16.0
        %vm6445 = vcmp.le.f32.partialorder %v6181, 16.0
        %vm6446 = vcmp.le.f32.partialorder %v6182, 16.0
        %vm6447 = vcmp.le.f32.partialorder %v6183, 16.0
        %vm6448 = vcmp.le.f32.partialorder %v6184, 16.0
        %vm6449 = vcmp.le.f32.partialorder %v6185, 16.0
        %vm6450 = vcmp.le.f32.partialorder %v6186, 16.0
        %vm6451 = vcmp.le.f32.partialorder %v6187, 16.0
        %vm6452 = vcmp.le.f32.partialorder %v6188, 16.0
        %vm6453 = vcmp.le.f32.partialorder %v6189, 16.0
        %vm6454 = vcmp.le.f32.partialorder %v6190, 16.0
        %vm6455 = vcmp.le.f32.partialorder %v6191, 16.0
        %vm6456 = vcmp.le.f32.partialorder %v6192, 16.0
        %vm6457 = vcmp.le.f32.partialorder %v6193, 16.0
        %vm6458 = vcmp.le.f32.partialorder %v6194, 16.0
        %vm6459 = vcmp.le.f32.partialorder %v6195, 16.0
        %vm6460 = vcmp.le.f32.partialorder %v6196, 16.0
        %vm6461 = vcmp.le.f32.partialorder %v6197, 16.0
        %vm6462 = vcmp.le.f32.partialorder %v6198, 16.0
        %vm6463 = vcmp.le.f32.partialorder %v6199, 16.0
        %vm6464 = vcmp.le.f32.partialorder %v6200, 16.0
        %vm6465 = vcmp.le.f32.partialorder %v6201, 16.0
        %vm6466 = vcmp.le.f32.partialorder %v6202, 16.0
        %vm6467 = vcmp.le.f32.partialorder %v6203, 16.0
        %vm6468 = vcmp.le.f32.partialorder %v6204, 16.0
        %vm6469 = vcmp.le.f32.partialorder %v6205, 16.0
        %vm6470 = vcmp.le.f32.partialorder %v6206, 16.0
        %vm6471 = vmand %vm6383, %vm6427
        %vm6472 = vmand %vm6384, %vm6428
        %vm6473 = vmand %vm6385, %vm6429
        %vm6474 = vmand %vm6386, %vm6430
        %vm6475 = vmand %vm6387, %vm6431
        %vm6476 = vmand %vm6388, %vm6432
        %vm6477 = vmand %vm6389, %vm6433
        %vm6478 = vmand %vm6390, %vm6434
        %vm6479 = vmand %vm6391, %vm6435
        %vm6480 = vmand %vm6392, %vm6436
        %vm6481 = vmand %vm6393, %vm6437
        %vm6482 = vmand %vm6394, %vm6438
        %vm6483 = vmand %vm6395, %vm6439
        %vm6484 = vmand %vm6396, %vm6440
        %vm6485 = vmand %vm6397, %vm6441
        %vm6486 = vmand %vm6398, %vm6442
        %vm6487 = vmand %vm6399, %vm6443
        %vm6488 = vmand %vm6400, %vm6444
        %vm6489 = vmand %vm6401, %vm6445
        %vm6490 = vmand %vm6402, %vm6446
        %vm6491 = vmand %vm6403, %vm6447
        %vm6492 = vmand %vm6404, %vm6448
        %vm6493 = vmand %vm6405, %vm6449
        %vm6494 = vmand %vm6406, %vm6450
        %vm6495 = vmand %vm6407, %vm6451
        %vm6496 = vmand %vm6408, %vm6452
        %vm6497 = vmand %vm6409, %vm6453
        %vm6498 = vmand %vm6410, %vm6454
        %vm6499 = vmand %vm6411, %vm6455
        %vm6500 = vmand %vm6412, %vm6456
        %vm6501 = vmand %vm6413, %vm6457
        %vm6502 = vmand %vm6414, %vm6458
        %vm6503 = vmand %vm6415, %vm6459
        %vm6504 = vmand %vm6416, %vm6460
        %vm6505 = vmand %vm6417, %vm6461
        %vm6506 = vmand %vm6418, %vm6462
        %vm6507 = vmand %vm6419, %vm6463
        %vm6508 = vmand %vm6420, %vm6464
        %vm6509 = vmand %vm6421, %vm6465
        %vm6510 = vmand %vm6422, %vm6466
        %vm6511 = vmand %vm6423, %vm6467
        %vm6512 = vmand %vm6424, %vm6468
        %vm6513 = vmand %vm6425, %vm6469
        %vm6514 = vmand %vm6426, %vm6470
        %vm6515 = vcmp.ge.f32.partialorder %v6339, 1.0
        %vm6516 = vcmp.ge.f32.partialorder %v6340, 1.0
        %vm6517 = vcmp.ge.f32.partialorder %v6341, 1.0
        %vm6518 = vcmp.ge.f32.partialorder %v6342, 1.0
        %vm6519 = vcmp.ge.f32.partialorder %v6343, 1.0
        %vm6520 = vcmp.ge.f32.partialorder %v6344, 1.0
        %vm6521 = vcmp.ge.f32.partialorder %v6345, 1.0
        %vm6522 = vcmp.ge.f32.partialorder %v6346, 1.0
        %vm6523 = vcmp.ge.f32.partialorder %v6347, 1.0
        %vm6524 = vcmp.ge.f32.partialorder %v6348, 1.0
        %vm6525 = vcmp.ge.f32.partialorder %v6349, 1.0
        %vm6526 = vcmp.ge.f32.partialorder %v6350, 1.0
        %vm6527 = vcmp.ge.f32.partialorder %v6351, 1.0
        %vm6528 = vcmp.ge.f32.partialorder %v6352, 1.0
        %vm6529 = vcmp.ge.f32.partialorder %v6353, 1.0
        %vm6530 = vcmp.ge.f32.partialorder %v6354, 1.0
        %vm6531 = vcmp.ge.f32.partialorder %v6355, 1.0
        %vm6532 = vcmp.ge.f32.partialorder %v6356, 1.0
        %vm6533 = vcmp.ge.f32.partialorder %v6357, 1.0
        %vm6534 = vcmp.ge.f32.partialorder %v6358, 1.0
        %vm6535 = vcmp.ge.f32.partialorder %v6359, 1.0
        %vm6536 = vcmp.ge.f32.partialorder %v6360, 1.0
        %vm6537 = vcmp.ge.f32.partialorder %v6361, 1.0
        %vm6538 = vcmp.ge.f32.partialorder %v6362, 1.0
        %vm6539 = vcmp.ge.f32.partialorder %v6363, 1.0
        %vm6540 = vcmp.ge.f32.partialorder %v6364, 1.0
        %vm6541 = vcmp.ge.f32.partialorder %v6365, 1.0
        %vm6542 = vcmp.ge.f32.partialorder %v6366, 1.0
        %vm6543 = vcmp.ge.f32.partialorder %v6367, 1.0
        %vm6544 = vcmp.ge.f32.partialorder %v6368, 1.0
        %vm6545 = vcmp.ge.f32.partialorder %v6369, 1.0
        %vm6546 = vcmp.ge.f32.partialorder %v6370, 1.0
        %vm6547 = vcmp.ge.f32.partialorder %v6371, 1.0
        %vm6548 = vcmp.ge.f32.partialorder %v6372, 1.0
        %vm6549 = vcmp.ge.f32.partialorder %v6373, 1.0
        %vm6550 = vcmp.ge.f32.partialorder %v6374, 1.0
        %vm6551 = vcmp.ge.f32.partialorder %v6375, 1.0
        %vm6552 = vcmp.ge.f32.partialorder %v6376, 1.0
        %vm6553 = vcmp.ge.f32.partialorder %v6377, 1.0
        %vm6554 = vcmp.ge.f32.partialorder %v6378, 1.0
        %vm6555 = vcmp.ge.f32.partialorder %v6379, 1.0
        %vm6556 = vcmp.ge.f32.partialorder %v6380, 1.0
        %vm6557 = vcmp.ge.f32.partialorder %v6381, 1.0
        %vm6558 = vcmp.ge.f32.partialorder %v6382, 1.0
        %vm6559 = vmand %vm6471, %vm6515
        %vm6560 = vmand %vm6472, %vm6516
        %vm6561 = vmand %vm6473, %vm6517
        %vm6562 = vmand %vm6474, %vm6518
        %vm6563 = vmand %vm6475, %vm6519
        %vm6564 = vmand %vm6476, %vm6520
        %vm6565 = vmand %vm6477, %vm6521
        %vm6566 = vmand %vm6478, %vm6522
        %vm6567 = vmand %vm6479, %vm6523
        %vm6568 = vmand %vm6480, %vm6524
        %vm6569 = vmand %vm6481, %vm6525
        %vm6570 = vmand %vm6482, %vm6526
        %vm6571 = vmand %vm6483, %vm6527
        %vm6572 = vmand %vm6484, %vm6528
        %vm6573 = vmand %vm6485, %vm6529
        %vm6574 = vmand %vm6486, %vm6530
        %vm6575 = vmand %vm6487, %vm6531
        %vm6576 = vmand %vm6488, %vm6532
        %vm6577 = vmand %vm6489, %vm6533
        %vm6578 = vmand %vm6490, %vm6534
        %vm6579 = vmand %vm6491, %vm6535
        %vm6580 = vmand %vm6492, %vm6536
        %vm6581 = vmand %vm6493, %vm6537
        %vm6582 = vmand %vm6494, %vm6538
        %vm6583 = vmand %vm6495, %vm6539
        %vm6584 = vmand %vm6496, %vm6540
        %vm6585 = vmand %vm6497, %vm6541
        %vm6586 = vmand %vm6498, %vm6542
        %vm6587 = vmand %vm6499, %vm6543
        %vm6588 = vmand %vm6500, %vm6544
        %vm6589 = vmand %vm6501, %vm6545
        %vm6590 = vmand %vm6502, %vm6546
        %vm6591 = vmand %vm6503, %vm6547
        %vm6592 = vmand %vm6504, %vm6548
        %vm6593 = vmand %vm6505, %vm6549
        %vm6594 = vmand %vm6506, %vm6550
        %vm6595 = vmand %vm6507, %vm6551
        %vm6596 = vmand %vm6508, %vm6552
        %vm6597 = vmand %vm6509, %vm6553
        %vm6598 = vmand %vm6510, %vm6554
        %vm6599 = vmand %vm6511, %vm6555
        %vm6600 = vmand %vm6512, %vm6556
        %vm6601 = vmand %vm6513, %vm6557
        %vm6602 = vmand %vm6514, %vm6558
        %vm6603 = vcmp.le.f32.partialorder %v6339, 16.0
        %vm6604 = vcmp.le.f32.partialorder %v6340, 16.0
        %vm6605 = vcmp.le.f32.partialorder %v6341, 16.0
        %vm6606 = vcmp.le.f32.partialorder %v6342, 16.0
        %vm6607 = vcmp.le.f32.partialorder %v6343, 16.0
        %vm6608 = vcmp.le.f32.partialorder %v6344, 16.0
        %vm6609 = vcmp.le.f32.partialorder %v6345, 16.0
        %vm6610 = vcmp.le.f32.partialorder %v6346, 16.0
        %vm6611 = vcmp.le.f32.partialorder %v6347, 16.0
        %vm6612 = vcmp.le.f32.partialorder %v6348, 16.0
        %vm6613 = vcmp.le.f32.partialorder %v6349, 16.0
        %vm6614 = vcmp.le.f32.partialorder %v6350, 16.0
        %vm6615 = vcmp.le.f32.partialorder %v6351, 16.0
        %vm6616 = vcmp.le.f32.partialorder %v6352, 16.0
        %vm6617 = vcmp.le.f32.partialorder %v6353, 16.0
        %vm6618 = vcmp.le.f32.partialorder %v6354, 16.0
        %vm6619 = vcmp.le.f32.partialorder %v6355, 16.0
        %vm6620 = vcmp.le.f32.partialorder %v6356, 16.0
        %vm6621 = vcmp.le.f32.partialorder %v6357, 16.0
        %vm6622 = vcmp.le.f32.partialorder %v6358, 16.0
        %vm6623 = vcmp.le.f32.partialorder %v6359, 16.0
        %vm6624 = vcmp.le.f32.partialorder %v6360, 16.0
        %vm6625 = vcmp.le.f32.partialorder %v6361, 16.0
        %vm6626 = vcmp.le.f32.partialorder %v6362, 16.0
        %vm6627 = vcmp.le.f32.partialorder %v6363, 16.0
        %vm6628 = vcmp.le.f32.partialorder %v6364, 16.0
        %vm6629 = vcmp.le.f32.partialorder %v6365, 16.0
        %vm6630 = vcmp.le.f32.partialorder %v6366, 16.0
        %vm6631 = vcmp.le.f32.partialorder %v6367, 16.0
        %vm6632 = vcmp.le.f32.partialorder %v6368, 16.0
        %vm6633 = vcmp.le.f32.partialorder %v6369, 16.0
        %vm6634 = vcmp.le.f32.partialorder %v6370, 16.0
        %vm6635 = vcmp.le.f32.partialorder %v6371, 16.0
        %vm6636 = vcmp.le.f32.partialorder %v6372, 16.0
        %vm6637 = vcmp.le.f32.partialorder %v6373, 16.0
        %vm6638 = vcmp.le.f32.partialorder %v6374, 16.0
        %vm6639 = vcmp.le.f32.partialorder %v6375, 16.0
        %vm6640 = vcmp.le.f32.partialorder %v6376, 16.0
        %vm6641 = vcmp.le.f32.partialorder %v6377, 16.0
        %vm6642 = vcmp.le.f32.partialorder %v6378, 16.0
        %vm6643 = vcmp.le.f32.partialorder %v6379, 16.0
        %vm6644 = vcmp.le.f32.partialorder %v6380, 16.0
        %vm6645 = vcmp.le.f32.partialorder %v6381, 16.0
        %vm6646 = vcmp.le.f32.partialorder %v6382, 16.0
        %vm6647 = vmand %vm6559, %vm6603
        %vm6648 = vmand %vm6560, %vm6604
        %vm6649 = vmand %vm6561, %vm6605
        %vm6650 = vmand %vm6562, %vm6606
        %vm6651 = vmand %vm6563, %vm6607
        %vm6652 = vmand %vm6564, %vm6608
        %vm6653 = vmand %vm6565, %vm6609
        %vm6654 = vmand %vm6566, %vm6610
        %vm6655 = vmand %vm6567, %vm6611
        %vm6656 = vmand %vm6568, %vm6612
        %vm6657 = vmand %vm6569, %vm6613
        %vm6658 = vmand %vm6570, %vm6614
        %vm6659 = vmand %vm6571, %vm6615
        %vm6660 = vmand %vm6572, %vm6616
        %vm6661 = vmand %vm6573, %vm6617
        %vm6662 = vmand %vm6574, %vm6618
        %vm6663 = vmand %vm6575, %vm6619
        %vm6664 = vmand %vm6576, %vm6620
        %vm6665 = vmand %vm6577, %vm6621
        %vm6666 = vmand %vm6578, %vm6622
        %vm6667 = vmand %vm6579, %vm6623
        %vm6668 = vmand %vm6580, %vm6624
        %vm6669 = vmand %vm6581, %vm6625
        %vm6670 = vmand %vm6582, %vm6626
        %vm6671 = vmand %vm6583, %vm6627
        %vm6672 = vmand %vm6584, %vm6628
        %vm6673 = vmand %vm6585, %vm6629
        %vm6674 = vmand %vm6586, %vm6630
        %vm6675 = vmand %vm6587, %vm6631
        %vm6676 = vmand %vm6588, %vm6632
        %vm6677 = vmand %vm6589, %vm6633
        %vm6678 = vmand %vm6590, %vm6634
        %vm6679 = vmand %vm6591, %vm6635
        %vm6680 = vmand %vm6592, %vm6636
        %vm6681 = vmand %vm6593, %vm6637
        %vm6682 = vmand %vm6594, %vm6638
        %vm6683 = vmand %vm6595, %vm6639
        %vm6684 = vmand %vm6596, %vm6640
        %vm6685 = vmand %vm6597, %vm6641
        %vm6686 = vmand %vm6598, %vm6642
        %vm6687 = vmand %vm6599, %vm6643
        %vm6688 = vmand %vm6600, %vm6644
        %vm6689 = vmand %vm6601, %vm6645
        %vm6690 = vmand %vm6602, %vm6646
        %v6691 = vsel %vm6647, 1, 0
        %v6692 = vsel %vm6648, 1, 0
        %v6693 = vsel %vm6649, 1, 0
        %v6694 = vsel %vm6650, 1, 0
        %v6695 = vsel %vm6651, 1, 0
        %v6696 = vsel %vm6652, 1, 0
        %v6697 = vsel %vm6653, 1, 0
        %v6698 = vsel %vm6654, 1, 0
        %v6699 = vsel %vm6655, 1, 0
        %v6700 = vsel %vm6656, 1, 0
        %v6701 = vsel %vm6657, 1, 0
        %v6702 = vsel %vm6658, 1, 0
        %v6703 = vsel %vm6659, 1, 0
        %v6704 = vsel %vm6660, 1, 0
        %v6705 = vsel %vm6661, 1, 0
        %v6706 = vsel %vm6662, 1, 0
        %v6707 = vsel %vm6663, 1, 0
        %v6708 = vsel %vm6664, 1, 0
        %v6709 = vsel %vm6665, 1, 0
        %v6710 = vsel %vm6666, 1, 0
        %v6711 = vsel %vm6667, 1, 0
        %v6712 = vsel %vm6668, 1, 0
        %v6713 = vsel %vm6669, 1, 0
        %v6714 = vsel %vm6670, 1, 0
        %v6715 = vsel %vm6671, 1, 0
        %v6716 = vsel %vm6672, 1, 0
        %v6717 = vsel %vm6673, 1, 0
        %v6718 = vsel %vm6674, 1, 0
        %v6719 = vsel %vm6675, 1, 0
        %v6720 = vsel %vm6676, 1, 0
        %v6721 = vsel %vm6677, 1, 0
        %v6722 = vsel %vm6678, 1, 0
        %v6723 = vsel %vm6679, 1, 0
        %v6724 = vsel %vm6680, 1, 0
        %v6725 = vsel %vm6681, 1, 0
        %v6726 = vsel %vm6682, 1, 0
        %v6727 = vsel %vm6683, 1, 0
        %v6728 = vsel %vm6684, 1, 0
        %v6729 = vsel %vm6685, 1, 0
        %v6730 = vsel %vm6686, 1, 0
        %v6731 = vsel %vm6687, 1, 0
        %v6732 = vsel %vm6688, 1, 0
        %v6733 = vsel %vm6689, 1, 0
        %v6734 = vsel %vm6690, 1, 0
        %vm6735 = vcmp.eq.s32.totalorder %v6691, 1
        %vm6736 = vcmp.eq.s32.totalorder %v6692, 1
        %vm6737 = vcmp.eq.s32.totalorder %v6693, 1
        %vm6738 = vcmp.eq.s32.totalorder %v6694, 1
        %vm6739 = vcmp.eq.s32.totalorder %v6695, 1
        %vm6740 = vcmp.eq.s32.totalorder %v6696, 1
        %vm6741 = vcmp.eq.s32.totalorder %v6697, 1
        %vm6742 = vcmp.eq.s32.totalorder %v6698, 1
        %vm6743 = vcmp.eq.s32.totalorder %v6699, 1
        %vm6744 = vcmp.eq.s32.totalorder %v6700, 1
        %vm6745 = vcmp.eq.s32.totalorder %v6701, 1
        %vm6746 = vcmp.eq.s32.totalorder %v6702, 1
        %vm6747 = vcmp.eq.s32.totalorder %v6703, 1
        %vm6748 = vcmp.eq.s32.totalorder %v6704, 1
        %vm6749 = vcmp.eq.s32.totalorder %v6705, 1
        %vm6750 = vcmp.eq.s32.totalorder %v6706, 1
        %vm6751 = vcmp.eq.s32.totalorder %v6707, 1
        %vm6752 = vcmp.eq.s32.totalorder %v6708, 1
        %vm6753 = vcmp.eq.s32.totalorder %v6709, 1
        %vm6754 = vcmp.eq.s32.totalorder %v6710, 1
        %vm6755 = vcmp.eq.s32.totalorder %v6711, 1
        %vm6756 = vcmp.eq.s32.totalorder %v6712, 1
        %vm6757 = vcmp.eq.s32.totalorder %v6713, 1
        %vm6758 = vcmp.eq.s32.totalorder %v6714, 1
        %vm6759 = vcmp.eq.s32.totalorder %v6715, 1
        %vm6760 = vcmp.eq.s32.totalorder %v6716, 1
        %vm6761 = vcmp.eq.s32.totalorder %v6717, 1
        %vm6762 = vcmp.eq.s32.totalorder %v6718, 1
        %vm6763 = vcmp.eq.s32.totalorder %v6719, 1
        %vm6764 = vcmp.eq.s32.totalorder %v6720, 1
        %vm6765 = vcmp.eq.s32.totalorder %v6721, 1
        %vm6766 = vcmp.eq.s32.totalorder %v6722, 1
        %vm6767 = vcmp.eq.s32.totalorder %v6723, 1
        %vm6768 = vcmp.eq.s32.totalorder %v6724, 1
        %vm6769 = vcmp.eq.s32.totalorder %v6725, 1
        %vm6770 = vcmp.eq.s32.totalorder %v6726, 1
        %vm6771 = vcmp.eq.s32.totalorder %v6727, 1
        %vm6772 = vcmp.eq.s32.totalorder %v6728, 1
        %vm6773 = vcmp.eq.s32.totalorder %v6729, 1
        %vm6774 = vcmp.eq.s32.totalorder %v6730, 1
        %vm6775 = vcmp.eq.s32.totalorder %v6731, 1
        %vm6776 = vcmp.eq.s32.totalorder %v6732, 1
        %vm6777 = vcmp.eq.s32.totalorder %v6733, 1
        %vm6778 = vcmp.eq.s32.totalorder %v6734, 1
        %v6779 = vsel %vm6735, %v5851, 0.0
        %v6780 = vsel %vm6736, %v5852, 0.0
        %v6781 = vsel %vm6737, %v5853, 0.0
        %v6782 = vsel %vm6738, %v5854, 0.0
        %v6783 = vsel %vm6739, %v5855, 0.0
        %v6784 = vsel %vm6740, %v5856, 0.0
        %v6785 = vsel %vm6741, %v5857, 0.0
        %v6786 = vsel %vm6742, %v5858, 0.0
        %v6787 = vsel %vm6743, %v5859, 0.0
        %v6788 = vsel %vm6744, %v5860, 0.0
        %v6789 = vsel %vm6745, %v5861, 0.0
        %v6790 = vsel %vm6746, %v5862, 0.0
        %v6791 = vsel %vm6747, %v5863, 0.0
        %v6792 = vsel %vm6748, %v5864, 0.0
        %v6793 = vsel %vm6749, %v5865, 0.0
        %v6794 = vsel %vm6750, %v5866, 0.0
        %v6795 = vsel %vm6751, %v5867, 0.0
        %v6796 = vsel %vm6752, %v5868, 0.0
        %v6797 = vsel %vm6753, %v5869, 0.0
        %v6798 = vsel %vm6754, %v5870, 0.0
        %v6799 = vsel %vm6755, %v5871, 0.0
        %v6800 = vsel %vm6756, %v5872, 0.0
        %v6801 = vsel %vm6757, %v5873, 0.0
        %v6802 = vsel %vm6758, %v5874, 0.0
        %v6803 = vsel %vm6759, %v5875, 0.0
        %v6804 = vsel %vm6760, %v5876, 0.0
        %v6805 = vsel %vm6761, %v5877, 0.0
        %v6806 = vsel %vm6762, %v5878, 0.0
        %v6807 = vsel %vm6763, %v5879, 0.0
        %v6808 = vsel %vm6764, %v5880, 0.0
        %v6809 = vsel %vm6765, %v5881, 0.0
        %v6810 = vsel %vm6766, %v5882, 0.0
        %v6811 = vsel %vm6767, %v5883, 0.0
        %v6812 = vsel %vm6768, %v5884, 0.0
        %v6813 = vsel %vm6769, %v5885, 0.0
        %v6814 = vsel %vm6770, %v5886, 0.0
        %v6815 = vsel %vm6771, %v5887, 0.0
        %v6816 = vsel %vm6772, %v5888, 0.0
        %v6817 = vsel %vm6773, %v5889, 0.0
        %v6818 = vsel %vm6774, %v5890, 0.0
        %v6819 = vsel %vm6775, %v5891, 0.0
        %v6820 = vsel %vm6776, %v5892, 0.0
        %v6821 = vsel %vm6777, %v5893, 0.0
        %v6822 = vsel %vm6778, %v5894, 0.0
        %v6823 = vpack.c.bf16 %v6780, %v6779
        %v6824 = vpack.c.bf16 %v6782, %v6781
        %v6825 = vpack.c.bf16 %v6784, %v6783
        %v6826 = vpack.c.bf16 %v6786, %v6785
        %v6827 = vpack.c.bf16 %v6788, %v6787
        %v6828 = vpack.c.bf16 %v6790, %v6789
        %v6829 = vpack.c.bf16 %v6792, %v6791
        %v6830 = vpack.c.bf16 %v6794, %v6793
        %v6831 = vpack.c.bf16 %v6796, %v6795
        %v6832 = vpack.c.bf16 %v6798, %v6797
        %v6833 = vpack.c.bf16 %v6800, %v6799
        %v6834 = vpack.c.bf16 %v6802, %v6801
        %v6835 = vpack.c.bf16 %v6804, %v6803
        %v6836 = vpack.c.bf16 %v6806, %v6805
        %v6837 = vpack.c.bf16 %v6808, %v6807
        %v6838 = vpack.c.bf16 %v6810, %v6809
        %v6839 = vpack.c.bf16 %v6812, %v6811
        %v6840 = vpack.c.bf16 %v6814, %v6813
        %v6841 = vpack.c.bf16 %v6816, %v6815
        %v6842 = vpack.c.bf16 %v6818, %v6817
        %v6843 = vpack.c.bf16 %v6820, %v6819
        %v6844 = vpack.c.bf16 %v6822, %v6821
        %v6867 = vunpack.c.l.b16 %v6823
        %v6868 = vunpack.c.h.b16 %v6823
        %v6869 = vunpack.c.l.b16 %v6824
        %v6870 = vunpack.c.h.b16 %v6824
        %v6871 = vunpack.c.l.b16 %v6825
        %v6872 = vunpack.c.h.b16 %v6825
        %v6873 = vunpack.c.l.b16 %v6826
        %v6874 = vunpack.c.h.b16 %v6826
        %v6875 = vunpack.c.l.b16 %v6827
        %v6876 = vunpack.c.h.b16 %v6827
        %v6877 = vunpack.c.l.b16 %v6828
        %v6878 = vunpack.c.h.b16 %v6828
        %v6879 = vunpack.c.l.b16 %v6829
        %v6880 = vunpack.c.h.b16 %v6829
        %v6881 = vunpack.c.l.b16 %v6830
        %v6882 = vunpack.c.h.b16 %v6830
        %v6883 = vunpack.c.l.b16 %v6831
        %v6884 = vunpack.c.h.b16 %v6831
        %v6885 = vunpack.c.l.b16 %v6832
        %v6886 = vunpack.c.h.b16 %v6832
        %v6887 = vunpack.c.l.b16 %v6833
        %v6888 = vunpack.c.h.b16 %v6833
        %v6889 = vunpack.c.l.b16 %v6834
        %v6890 = vunpack.c.h.b16 %v6834
        %v6891 = vunpack.c.l.b16 %v6835
        %v6892 = vunpack.c.h.b16 %v6835
        %v6893 = vunpack.c.l.b16 %v6836
        %v6894 = vunpack.c.h.b16 %v6836
        %v6895 = vunpack.c.l.b16 %v6837
        %v6896 = vunpack.c.h.b16 %v6837
        %v6897 = vunpack.c.l.b16 %v6838
        %v6898 = vunpack.c.h.b16 %v6838
        %v6899 = vunpack.c.l.b16 %v6839
        %v6900 = vunpack.c.h.b16 %v6839
        %v6901 = vunpack.c.l.b16 %v6840
        %v6902 = vunpack.c.h.b16 %v6840
        %v6903 = vunpack.c.l.b16 %v6841
        %v6904 = vunpack.c.h.b16 %v6841
        %v6905 = vunpack.c.l.b16 %v6842
        %v6906 = vunpack.c.h.b16 %v6842
        %v6907 = vunpack.c.l.b16 %v6843
        %v6908 = vunpack.c.h.b16 %v6843
        %v6909 = vunpack.c.l.b16 %v6844
        %v6910 = vunpack.c.h.b16 %v6844
        %v6911 = vpack.c.b16 %v6867, %v6867
        %v6912 = vpack.c.b16 %v6868, %v6868
        %v6913 = vpack.c.b16 %v6869, %v6869
        %v6914 = vpack.c.b16 %v6870, %v6870
        %v6915 = vpack.c.b16 %v6871, %v6871
        %v6916 = vpack.c.b16 %v6872, %v6872
        %v6917 = vpack.c.b16 %v6873, %v6873
        %v6918 = vpack.c.b16 %v6874, %v6874
        %v6919 = vpack.c.b16 %v6875, %v6875
        %v6920 = vpack.c.b16 %v6876, %v6876
        %v6921 = vpack.c.b16 %v6877, %v6877
        %v6922 = vpack.c.b16 %v6878, %v6878
        %v6923 = vpack.c.b16 %v6879, %v6879
        %v6924 = vpack.c.b16 %v6880, %v6880
        %v6925 = vpack.c.b16 %v6881, %v6881
        %v6926 = vpack.c.b16 %v6882, %v6882
        %v6927 = vpack.c.b16 %v6883, %v6883
        %v6928 = vpack.c.b16 %v6884, %v6884
        %v6929 = vpack.c.b16 %v6885, %v6885
        %v6930 = vpack.c.b16 %v6886, %v6886
        %v6931 = vpack.c.b16 %v6887, %v6887
        %v6932 = vpack.c.b16 %v6888, %v6888
        %v6933 = vpack.c.b16 %v6889, %v6889
        %v6934 = vpack.c.b16 %v6890, %v6890
        %v6935 = vpack.c.b16 %v6891, %v6891
        %v6936 = vpack.c.b16 %v6892, %v6892
        %v6937 = vpack.c.b16 %v6893, %v6893
        %v6938 = vpack.c.b16 %v6894, %v6894
        %v6939 = vpack.c.b16 %v6895, %v6895
        %v6940 = vpack.c.b16 %v6896, %v6896
        %v6941 = vpack.c.b16 %v6897, %v6897
        %v6942 = vpack.c.b16 %v6898, %v6898
        %v6943 = vpack.c.b16 %v6899, %v6899
        %v6944 = vpack.c.b16 %v6900, %v6900
        %v6945 = vpack.c.b16 %v6901, %v6901
        %v6946 = vpack.c.b16 %v6902, %v6902
        %v6947 = vpack.c.b16 %v6903, %v6903
        %v6948 = vpack.c.b16 %v6904, %v6904
        %v6949 = vpack.c.b16 %v6905, %v6905
        %v6950 = vpack.c.b16 %v6906, %v6906
        %v6951 = vpack.c.b16 %v6907, %v6907
        %v6952 = vpack.c.b16 %v6908, %v6908
        %v6953 = vpack.c.b16 %v6909, %v6909
        %v6954 = vpack.c.b16 %v6910, %v6910
        %6999 = vst [vmem:[%s353] sm:$0xf] %v6911
        %7000 = vst [vmem:[%s353 + $0x4] sm:$0xf] %v6912
        %7001 = vst [vmem:[%s353 + $0x8] sm:$0xf] %v6913
        %7002 = vst [vmem:[%s353 + $0xc] sm:$0xf] %v6914
        %7003 = vst [vmem:[%s353 + $0x10] sm:$0xf] %v6915
        %7004 = vst [vmem:[%s353 + $0x14] sm:$0xf] %v6916
        %7005 = vst [vmem:[%s353 + $0x18] sm:$0xf] %v6917
        %7006 = vst [vmem:[%s353 + $0x1c] sm:$0xf] %v6918
        %7007 = vst [vmem:[%s353 + $0x20] sm:$0xf] %v6919
        %7008 = vst [vmem:[%s353 + $0x24] sm:$0xf] %v6920
        %7009 = vst [vmem:[%s353 + $0x28] sm:$0xf] %v6921
        %7010 = vst [vmem:[%s353 + $0x2c] sm:$0xf] %v6922
        %7011 = vst [vmem:[%s353 + $0x30] sm:$0xf] %v6923
        %7012 = vst [vmem:[%s353 + $0x34] sm:$0xf] %v6924
        %7013 = vst [vmem:[%s353 + $0x38] sm:$0xf] %v6925
        %7014 = vst [vmem:[%s353 + $0x3c] sm:$0xf] %v6926
        %7015 = vst [vmem:[%s353 + $0x40] sm:$0xf] %v6927
        %7016 = vst [vmem:[%s353 + $0x44] sm:$0xf] %v6928
        %7017 = vst [vmem:[%s353 + $0x48] sm:$0xf] %v6929
        %7018 = vst [vmem:[%s353 + $0x4c] sm:$0xf] %v6930
        %7019 = vst [vmem:[%s353 + $0x50] sm:$0xf] %v6931
        %7020 = vst [vmem:[%s353 + $0x54] sm:$0xf] %v6932
        %7021 = vst [vmem:[%s353 + $0x58] sm:$0xf] %v6933
        %7022 = vst [vmem:[%s353 + $0x5c] sm:$0xf] %v6934
        %7023 = vst [vmem:[%s353 + $0x60] sm:$0xf] %v6935
        %7024 = vst [vmem:[%s353 + $0x64] sm:$0xf] %v6936
        %7025 = vst [vmem:[%s353 + $0x68] sm:$0xf] %v6937
        %7026 = vst [vmem:[%s353 + $0x6c] sm:$0xf] %v6938
        %7027 = vst [vmem:[%s353 + $0x70] sm:$0xf] %v6939
        %7028 = vst [vmem:[%s353 + $0x74] sm:$0xf] %v6940
        %7029 = vst [vmem:[%s353 + $0x78] sm:$0xf] %v6941
        %7030 = vst [vmem:[%s353 + $0x7c] sm:$0xf] %v6942
        %7031 = vst [vmem:[%s353 + $0x80] sm:$0xf] %v6943
        %7032 = vst [vmem:[%s353 + $0x84] sm:$0xf] %v6944
        %7033 = vst [vmem:[%s353 + $0x88] sm:$0xf] %v6945
        %7034 = vst [vmem:[%s353 + $0x8c] sm:$0xf] %v6946
        %7035 = vst [vmem:[%s353 + $0x90] sm:$0xf] %v6947
        %7036 = vst [vmem:[%s353 + $0x94] sm:$0xf] %v6948
        %7037 = vst [vmem:[%s353 + $0x98] sm:$0xf] %v6949
        %7038 = vst [vmem:[%s353 + $0x9c] sm:$0xf] %v6950
        %7039 = vst [vmem:[%s353 + $0xa0] sm:$0xf] %v6951
        %7040 = vst [vmem:[%s353 + $0xa4] sm:$0xf] %v6952
        %7041 = vst [vmem:[%s353 + $0xa8] sm:$0xf] %v6953
        %7042 = vst [vmem:[%s353 + $0xac] sm:$0xf] %v6954
        %s7043 = sand.u32 %s185, 1
        %s7044 = scalar_lea.sflag [#allocation5], %s7043
        %s7045 = sand.u32 %s185, 1
        %s7046 = smul.addr %s7045, 176
        %s7047 = scalar_lea.vmem [#allocation4], %s7046
        // Predicated region
        $region45: #{conv_op.1} parent=43 // pred_check
          %p7048 = pneg %p195
        $region46: #{conv_op.1} parent=43 // pred_check_branch
          %7050 = sbr.rel (%p7048) target = $region48
        $region47: #{conv_op.1} parent=43 // pred_region
          %s7051 = smul.u32 44, %s20
          %s7052 = ssub.s32 81, %s7051
          %p7053 = scmp.lt.s32.totalorder %s7052, 44
          %s7054 = scalar_select %p7053, %s7052, 44
          %s7055 = smul.u32 64, %s7054
          %s7057 = ssub.s32 2816, %s7055
          %7058 = vsyncadd %s7044, %s7057
          %p7059 = scmp.ne.s32.totalorder 0, %s7055
          %s7060 = smul.addr %s7051, 64
          %s7061 = scalar_lea.hbm %s6, %s7060
          %s7062 = smul.u32 4, %s7054
          %s7063 = sshll.u32 %s7047, 4
          %s7064 = int_to_ptr.vmem [resolvable:$true] %s7063
          %s7065 = sshll.u32 %s7062, 4
          %7069 = dma.vmem_to_hbm [thread:$0]  (%p7059), %s7064, %s7065, %s7061, %s7044, 64, 64, 4
        $region48: #{conv_op.1} parent=43 // pred_fallthru
          _
      $region44: #{conv_op.1} parent=5 // pred_fallthru
        _
      %p7070 = scmp.le.s32.totalorder 2, %s15
      // Predicated region
      $region49: #{conv_op.1} parent=5 // pred_check
        %p7071 = pneg %p7070
      $region50: #{conv_op.1} parent=5 // pred_check_branch
        %7073 = sbr.rel (%p7071) target = $region52
      $region51: #{conv_op.1} parent=5 // pred_region
        %s7074 = ssub.s32 %s15, 2
        // Predicated region
        $region53: #{conv_op.1} parent=51 // pred_check
          %p7075 = pneg %p201
        $region54: #{conv_op.1} parent=51 // pred_check_branch
          %7077 = sbr.rel (%p7075) target = $region56
        $region55: #{conv_op.1} parent=51 // pred_region
          %s7078 = sand.u32 %s186, 1
          %s7079 = scalar_lea.sflag [#allocation5], %s7078
          %s7080 = sand.u32 %s186, 1
          %s7081 = smul.addr %s7080, 176
          %s7082 = scalar_lea.vmem [#allocation4], %s7081
          %7083 = dma.done %s7079, 2816
        $region56: #{conv_op.1} parent=51 // pred_fallthru
          _
      $region52: #{conv_op.1} parent=5 // pred_fallthru
        _
    $region6: #{conv_op.1} parent=1 // loop_footer
      %s19 = sadd.s32 1, %s15
    $region7: #{conv_op.1} parent=1 // loop_footer_branch
      %14 = sbr.rel target = $region3
    $region8: #{conv_op.1} parent=1 // loop_exit
      _
    %7084 = vsyncpa [#allocation5], 1
    %s7085 = scalar_lea.sflag [#allocation5], 1
    %7086 = vsyncpa %s7085, 1

</llo_original>
